<compile_context>
chip_gen: v7x
topology: tpu7x:2x2x1
jax: 0.10.0
libtpu: 0.0.40
codegen_flags: <defaults>
</compile_context>

<pallas_src>
import functools

import numpy as np

import jax
import jax.numpy as jnp
from jax import lax
from jax.experimental import pallas as pl
from jax.experimental.pallas import tpu as pltpu


# ----------------------------------------------------------------------------- #
# Layer geometry (input spatial, dilated+padded frame, output spatial)
#   upconv1 : Cin 32, Cout 16, k3 s1 p0 : in 5x5   frame  9x9   out  7x7
#   upconv2 : Cin 16, Cout  8, k3 s1 p1 : in 7x7   frame  9x9   out  7x7
#   upconv3 : Cin  8, Cout  4, k4 s2 p1 : in 7x7   frame 17x17  out 14x14
#   final   : Cin  4, Cout  1, k4 s2 p1 : in 14x14 frame 31x31  out 28x28
# ----------------------------------------------------------------------------- #

B_BLK = 32                         # images per grid step (multiple of 16)
GRP = 384                          # lane-aligned group width for the fused linear

H1, W1 = 9, 9 * 32                 # upconv1 input frame   (288 cols)
H2, W2 = 9, 9 * 16                 # upconv2 input frame   (144 cols)
H3, W3 = 17, 17 * 8                # upconv3 input frame   (136 cols)
H4, W4 = 31, 128                   # final_conv input frame (124 used + 4 pad cols)


# ------------------------------- Pallas kernel -------------------------------- #
def _decoder_kernel(x_ref, w0_ref, b0_ref,
                    t1_ref, c1_ref, t2_ref, c2_ref,
                    t3_ref, c3_ref, t4_ref, c4_ref,
                    out_ref, f1, f2, f3, f4, *, bb):
    f32, bf16 = jnp.float32, jnp.bfloat16

    def mm(a, b):                                     # bf16 x bf16 -> f32 accumulate
        return jnp.dot(a, b, preferred_element_type=f32)

    def zero_rows(frame, rows, width):
        for r0, nr in rows:                           # (per-image row, n rows)
            frame[pl.ds(r0 * bb, nr * bb), :] = jnp.zeros((nr * bb, width), bf16)

    # Permanently-zero rows (frame padding + stride-dilation gaps).  Re-zeroed every
    # step: scratch is per-core and the grid axis is 'parallel', so a one-time init
    # gated on program_id(0)==0 would be wrong on multi-core chips.
    zero_rows(f1, [(0, 2), (7, 2)], W1)
    zero_rows(f2, [(0, 1), (8, 1)], W2)
    zero_rows(f3, [(0, 2)] + [(r, 1) for r in range(3, 15, 2)] + [(15, 2)], W3)
    zero_rows(f4, [(0, 2)] + [(r, 1) for r in range(3, 29, 2)] + [(29, 2)], W4)

    # ---- decoder_lin: one (bb, E) @ (E, 5*GRP) matmul + ReLU.  Group i (lane
    # offset i*GRP, 128-aligned) holds upconv1-frame row (2+i) in frame column
    # coordinates; pad columns are zero in w0/b0, so the stores also write the
    # frame's column padding correctly.
    xb = x_ref[...].astype(bf16)                                      # (bb, E)
    r = jnp.maximum(mm(xb, w0_ref[...]) + b0_ref[...], 0.0).astype(bf16)
    for i in range(5):
        f1[pl.ds((2 + i) * bb, bb), :] = r[:, i * GRP:i * GRP + W1]

    # ---- conv-transpose as k row-shifted Toeplitz matmuls on the VMEM frame ----
    # frame row index = h*bb + b, so slice rows [kh*bb, (kh+oh)*bb) enumerate
    # (y, b) -> output row y*bb + b.  BN scale is folded into the weights; bias row
    # c already sits in the NEXT frame's column coordinates (zeros at pads/gaps).
    def conv(src, t_ref, c_ref, k, oh, relu):
        acc = mm(src[pl.ds(0, oh * bb), :], t_ref[0])
        for kh in range(1, k):
            acc = acc + mm(src[pl.ds(kh * bb, oh * bb), :], t_ref[kh])
        acc = acc + c_ref[...]
        if relu:
            acc = jnp.maximum(acc, 0.0)
        return acc                                                    # (oh*bb, N) f32

    # upconv1 -> f2 rows 1..7 (stride-1 placement: one contiguous store)
    y1 = conv(f1, t1_ref, c1_ref, 3, 7, True).astype(bf16)            # (7*bb, 144)
    f2[pl.ds(1 * bb, 7 * bb), :] = y1

    # upconv2 -> f3 rows 2 + 2y (stride-2 placement: 7 block stores of bb rows)
    y2 = conv(f2, t2_ref, c2_ref, 3, 7, True).astype(bf16)            # (7*bb, 136)
    for y in range(7):
        f3[pl.ds((2 + 2 * y) * bb, bb), :] = y2[y * bb:(y + 1) * bb, :]

    # upconv3 -> f4 rows 2 + 2y (14 block stores, 128-lane dense)
    y3 = conv(f3, t3_ref, c3_ref, 4, 14, True).astype(bf16)           # (14*bb, 128)
    for y in range(14):
        f4[pl.ds((2 + 2 * y) * bb, bb), :] = y3[y * bb:(y + 1) * bb, :]

    # final_conv -> output slab, row index = y*bb + b, 28 columns, no BN / ReLU
    out_ref[...] = conv(f4, t4_ref, c4_ref, 4, 28, False)             # (28*bb, 28) f32


# ------------------------- host-side weight preparation ------------------------ #
def prepare_params(params):
    """Fold BN, flip kernels and expand them into frame-to-frame Toeplitz matmuls."""
    eps = 1e-5
    f = np.float32

    lin_w = np.asarray(params["lin_w"], f)               # (800, E)  (out, in)
    lin_b = np.asarray(params["lin_b"], f)               # (800,)
    E = lin_w.shape[1]

    def fold(w, b, g, bt):
        w = np.asarray(w, f)
        b = np.asarray(b, f)
        if g is None:                                    # no BatchNorm
            return w, b
        g = np.asarray(g, f)
        bt = np.asarray(bt, f)
        s = g / np.sqrt(1.0 + eps)                       # running_var = 1
        return w * s[None, :, None, None], s * b + bt    # running_mean = 0

    def toeplitz(w, k, cin, cout, wd_in, ow, n_cols, col_of_x, k_pad=0):
        # T[kh][wpos*cin + ci, col_of_x(x) + co] = w_flipped[ci, co, kh, wpos - x]
        t = np.zeros((k, wd_in * cin + k_pad, n_cols), f)
        for kh in range(k):
            for x in range(ow):
                base = col_of_x(x)
                for kw in range(k):
                    wpos = x + kw
                    t[kh, wpos * cin:(wpos + 1) * cin, base:base + cout] = \
                        w[:, :, k - 1 - kh, k - 1 - kw]
        return t

    def bias_row(shift, ow, cout, n_cols, col_of_x):
        c = np.zeros((1, n_cols), f)
        for x in range(ow):
            base = col_of_x(x)
            c[0, base:base + cout] = shift
        return c

    # decoder_lin packed into 5 lane-aligned groups (GRP = 384 columns); group i
    # holds upconv1-frame row (2+i) with pixel (i, j), channel c at (2+j)*32 + c.
    w0 = np.zeros((E, 5 * GRP), f)
    b0 = np.zeros((1, 5 * GRP), f)
    for i in range(5):
        for j in range(5):
            rows = np.arange(32) * 25 + i * 5 + j
            base = i * GRP + (2 + j) * 32
            w0[:, base:base + 32] = lin_w[rows, :].T
            b0[0, base:base + 32] = lin_b[rows]

    w1, s1 = fold(params["ct1_w"], params["ct1_b"], params["bn1_g"], params["bn1_b"])
    w2, s2 = fold(params["ct2_w"], params["ct2_b"], params["bn2_g"], params["bn2_b"])
    w3, s3 = fold(params["ct3_w"], params["ct3_b"], params["bn3_g"], params["bn3_b"])
    w4, s4 = fold(params["ct4_w"], params["ct4_b"], None, None)

    # Column maps place outputs directly in the NEXT frame's (pad + stride*x) slots.
    t1 = toeplitz(w1, 3, 32, 16, 9, 7, W2, lambda x: (1 + x) * 16)
    c1 = bias_row(s1, 7, 16, W2, lambda x: (1 + x) * 16)
    t2 = toeplitz(w2, 3, 16, 8, 9, 7, W3, lambda x: (2 + 2 * x) * 8)
    c2 = bias_row(s2, 7, 8, W3, lambda x: (2 + 2 * x) * 8)
    t3 = toeplitz(w3, 4, 8, 4, 17, 14, W4, lambda x: (2 + 2 * x) * 4)   # N padded to 128
    c3 = bias_row(s3, 14, 4, W4, lambda x: (2 + 2 * x) * 4)
    t4 = toeplitz(w4, 4, 4, 1, 31, 28, 28, lambda x: x, k_pad=W4 - 31 * 4)  # K padded to 128
    c4 = bias_row(s4, 28, 1, 28, lambda x: x)

    bf, fp = jnp.bfloat16, jnp.float32
    return {
        "w0": jnp.asarray(w0, bf), "b0": jnp.asarray(b0, fp),
        "t1": jnp.asarray(t1, bf), "c1": jnp.asarray(c1, fp),
        "t2": jnp.asarray(t2, bf), "c2": jnp.asarray(c2, fp),
        "t3": jnp.asarray(t3, bf), "c3": jnp.asarray(c3, fp),
        "t4": jnp.asarray(t4, bf), "c4": jnp.asarray(c4, fp),
    }


# --------------------------------- forward ------------------------------------ #
def decoder2_forward(x, pk, b_blk=B_BLK):
    B, E = x.shape
    f32 = jnp.float32

    nb = -(-B // b_blk)                         # number of batch blocks
    Bp = nb * b_blk
    if Bp != B:
        x = jnp.pad(x, ((0, Bp - B), (0, 0)))   # zero-pad the batch to a full block

    def full(a):
        return pl.BlockSpec(a.shape, lambda ib, _n=a.ndim: (0,) * _n)

    grid_spec = pltpu.PrefetchScalarGridSpec(
        num_scalar_prefetch=0,
        grid=(nb,),
        in_specs=[
            pl.BlockSpec((b_blk, E), lambda ib: (ib, 0)),
            full(pk["w0"]), full(pk["b0"]),
            full(pk["t1"]), full(pk["c1"]),
            full(pk["t2"]), full(pk["c2"]),
            full(pk["t3"]), full(pk["c3"]),
            full(pk["t4"]), full(pk["c4"]),
        ],
        out_specs=pl.BlockSpec((28 * b_blk, 28), lambda ib: (ib, 0)),
        scratch_shapes=[
            pltpu.VMEM((H1 * b_blk, W1), jnp.bfloat16),
            pltpu.VMEM((H2 * b_blk, W2), jnp.bfloat16),
            pltpu.VMEM((H3 * b_blk, W3), jnp.bfloat16),
            pltpu.VMEM((H4 * b_blk, W4), jnp.bfloat16),
        ],
    )

    out = pl.pallas_call(
        functools.partial(_decoder_kernel, bb=b_blk),
        out_shape=jax.ShapeDtypeStruct((28 * Bp, 28), f32),
        grid_spec=grid_spec,
        compiler_params=pltpu.CompilerParams(
            dimension_semantics=("parallel",),     # shards batch blocks across TCs
            vmem_limit_bytes=32 * 1024 * 1024,
        ),
    )(x, pk["w0"], pk["b0"], pk["t1"], pk["c1"], pk["t2"], pk["c2"],
      pk["t3"], pk["c3"], pk["t4"], pk["c4"])

    # kernel row index = block*(28*b_blk) + y*b_blk + b  ->  (B, 1, 28, 28)
    out = out.reshape(nb, 28, b_blk, 28).transpose(0, 2, 1, 3).reshape(Bp, 28, 28)
    return out[:B].reshape(B, 1, 28, 28)


# ------------------------------ pure-JAX reference ----------------------------- #
def _convt_ref(x, w, stride, padding):
    B, Cin, H, W = x.shape
    Cout, k = w.shape[1], w.shape[2]
    pad = k - 1 - padding
    xd = lax.pad(x, jnp.float32(0.0),
                 [(0, 0, 0), (0, 0, 0),
                  (pad, pad, stride - 1), (pad, pad, stride - 1)])
    OH = (H - 1) * stride - 2 * padding + k
    OW = (W - 1) * stride - 2 * padding + k
    wf = w[:, :, ::-1, ::-1]
    out = jnp.zeros((B, Cout, OH, OW), jnp.float32)
    for kh in range(k):
        for kw in range(k):
            patch = lax.slice(xd, (0, 0, kh, kw), (B, Cin, kh + OH, kw + OW))
            out = out + jnp.einsum("bchw,cd->bdhw", patch, wf[:, :, kh, kw],
                                   precision=jax.lax.Precision.HIGHEST)
    return out


def _bn_relu_ref(z, conv_b, gamma, beta):
    eps = 1e-5
    s = gamma / jnp.sqrt(1.0 + eps)
    y = s[None, :, None, None] * (z + conv_b[None, :, None, None]) + beta[None, :, None, None]
    return jnp.maximum(y, 0.0)


def decoder2_reference(x, p):
    hp = jax.lax.Precision.HIGHEST
    h = jnp.dot(x, p["lin_w"].T, precision=hp) + p["lin_b"]
    h = jnp.maximum(h, 0.0).reshape(x.shape[0], 32, 5, 5)
    z = _bn_relu_ref(_convt_ref(h, p["ct1_w"], 1, 0), p["ct1_b"], p["bn1_g"], p["bn1_b"])
    z = _bn_relu_ref(_convt_ref(z, p["ct2_w"], 1, 1), p["ct2_b"], p["bn2_g"], p["bn2_b"])
    z = _bn_relu_ref(_convt_ref(z, p["ct3_w"], 2, 1), p["ct3_b"], p["bn3_g"], p["bn3_b"])
    z = _convt_ref(z, p["ct4_w"], 2, 1) + p["ct4_b"][None, :, None, None]
    return z


# -------------------------------- parameters ----------------------------------- #
def init_params(encoded_space_dim, key):
    ks = jax.random.split(key, 16)
    n = lambda k, shape, s=0.1: s * jax.random.normal(k, shape, dtype=jnp.float32)
    return {
        "lin_w": n(ks[0], (800, encoded_space_dim)),       # (out, in)
        "lin_b": n(ks[1], (800,)),
        "ct1_w": n(ks[2], (32, 16, 3, 3)),                 # (Cin, Cout, k, k)
        "ct1_b": n(ks[3], (16,)),
        "bn1_g": 1.0 + n(ks[4], (16,)),
        "bn1_b": n(ks[5], (16,)),
        "ct2_w": n(ks[6], (16, 8, 3, 3)),
        "ct2_b": n(ks[7], (8,)),
        "bn2_g": 1.0 + n(ks[8], (8,)),
        "bn2_b": n(ks[9], (8,)),
        "ct3_w": n(ks[10], (8, 4, 4, 4)),
        "ct3_b": n(ks[11], (4,)),
        "bn3_g": 1.0 + n(ks[12], (4,)),
        "bn3_b": n(ks[13], (4,)),
        "ct4_w": n(ks[14], (4, 1, 4, 4)),
        "ct4_b": n(ks[15], (1,)),
    }


if __name__ == "__main__":
    ENCODED_DIM = 16
    BATCH = 48          # padded to 64 inside the wrapper -> grid of 2 batch blocks

    key = jax.random.PRNGKey(0)
    k_in, k_p = jax.random.split(key)
    x = jax.random.normal(k_in, (BATCH, ENCODED_DIM), dtype=jnp.float32)
    params = init_params(ENCODED_DIM, k_p)

    packed = prepare_params(params)                     # one-time weight packing
    fwd = jax.jit(decoder2_forward)

    out = jax.block_until_ready(fwd(x, packed))
    assert out.shape == (BATCH, 1, 28, 28), out.shape
    assert bool(jnp.all(jnp.isfinite(out)))

    # correctness vs. a plain-JAX implementation of the same eval-mode module
    ref = jax.block_until_ready(decoder2_reference(x, params))
    max_err = float(jnp.max(jnp.abs(out - ref)))
    max_ref = float(jnp.max(jnp.abs(ref)))
    assert max_err < 0.05 * max_ref + 1e-3, (max_err, max_ref)

    print("KERNEL_OK")
</pallas_src>

<mosaic_0001>
module attributes {stable_mosaic.version = 11 : i64} {
  func.func @_decoder_kernel(%arg0: i32, %arg1: memref<32x16xf32, #tpu.memory_space<vmem>>, %arg2: memref<16x1920xbf16, #tpu.memory_space<vmem>>, %arg3: memref<1x1920xf32, #tpu.memory_space<vmem>>, %arg4: memref<3x288x144xbf16, #tpu.memory_space<vmem>>, %arg5: memref<1x144xf32, #tpu.memory_space<vmem>>, %arg6: memref<3x144x136xbf16, #tpu.memory_space<vmem>>, %arg7: memref<1x136xf32, #tpu.memory_space<vmem>>, %arg8: memref<4x136x128xbf16, #tpu.memory_space<vmem>>, %arg9: memref<1x128xf32, #tpu.memory_space<vmem>>, %arg10: memref<4x128x28xbf16, #tpu.memory_space<vmem>>, %arg11: memref<1x28xf32, #tpu.memory_space<vmem>>, %arg12: memref<896x28xf32, #tpu.memory_space<vmem>>, %arg13: memref<288x288xbf16, #tpu.memory_space<vmem>>, %arg14: memref<288x144xbf16, #tpu.memory_space<vmem>>, %arg15: memref<544x136xbf16, #tpu.memory_space<vmem>>, %arg16: memref<992x128xbf16, #tpu.memory_space<vmem>>) attributes {dimension_semantics = [#tpu.dimension_semantics<parallel>], iteration_bounds = array<i64: 2>, scalar_prefetch = 0 : i64, scratch_operands = 4 : i64, tpu.core_type = #tpu.core_type<tc>, window_params = [{transform_indices = @transform_0, window_bounds = array<i64: 32, 16>}, {pipeline_mode = #tpu.pipeline_mode<synchronous>, transform_indices = @transform_1, window_bounds = array<i64: 16, 1920>}, {pipeline_mode = #tpu.pipeline_mode<synchronous>, transform_indices = @transform_2, window_bounds = array<i64: 1, 1920>}, {pipeline_mode = #tpu.pipeline_mode<synchronous>, transform_indices = @transform_3, window_bounds = array<i64: 3, 288, 144>}, {pipeline_mode = #tpu.pipeline_mode<synchronous>, transform_indices = @transform_4, window_bounds = array<i64: 1, 144>}, {pipeline_mode = #tpu.pipeline_mode<synchronous>, transform_indices = @transform_5, window_bounds = array<i64: 3, 144, 136>}, {pipeline_mode = #tpu.pipeline_mode<synchronous>, transform_indices = @transform_6, window_bounds = array<i64: 1, 136>}, {pipeline_mode = #tpu.pipeline_mode<synchronous>, transform_indices = @transform_7, window_bounds = array<i64: 4, 136, 128>}, {pipeline_mode = #tpu.pipeline_mode<synchronous>, transform_indices = @transform_8, window_bounds = array<i64: 1, 128>}, {pipeline_mode = #tpu.pipeline_mode<synchronous>, transform_indices = @transform_9, window_bounds = array<i64: 4, 128, 28>}, {pipeline_mode = #tpu.pipeline_mode<synchronous>, transform_indices = @transform_10, window_bounds = array<i64: 1, 28>}, {transform_indices = @transform_11, window_bounds = array<i64: 896, 28>}]} {
    %cst = arith.constant 0.000000e+00 : bf16
    %0 = vector.broadcast %cst : bf16 to vector<64x288xbf16>
    %c0 = arith.constant 0 : index
    %c0_0 = arith.constant 0 : index
    %1 = vector.load %arg13[%c0, %c0_0] : memref<288x288xbf16, #tpu.memory_space<vmem>>, vector<64x288xbf16>
    tpu.vector_store %arg13[%c0, %c0_0], %0 {strides = array<i32>} : memref<288x288xbf16, #tpu.memory_space<vmem>>, vector<64x288xbf16>,
    %cst_1 = arith.constant 0.000000e+00 : bf16
    %2 = vector.broadcast %cst_1 : bf16 to vector<64x288xbf16>
    %c224 = arith.constant 224 : index
    %c0_2 = arith.constant 0 : index
    %3 = vector.load %arg13[%c224, %c0_2] : memref<288x288xbf16, #tpu.memory_space<vmem>>, vector<64x288xbf16>
    tpu.vector_store %arg13[%c224, %c0_2], %2 {strides = array<i32>} : memref<288x288xbf16, #tpu.memory_space<vmem>>, vector<64x288xbf16>,
    %cst_3 = arith.constant 0.000000e+00 : bf16
    %4 = vector.broadcast %cst_3 : bf16 to vector<32x144xbf16>
    %c0_4 = arith.constant 0 : index
    %c0_5 = arith.constant 0 : index
    %5 = vector.load %arg14[%c0_4, %c0_5] : memref<288x144xbf16, #tpu.memory_space<vmem>>, vector<32x144xbf16>
    tpu.vector_store %arg14[%c0_4, %c0_5], %4 {strides = array<i32>} : memref<288x144xbf16, #tpu.memory_space<vmem>>, vector<32x144xbf16>,
    %cst_6 = arith.constant 0.000000e+00 : bf16
    %6 = vector.broadcast %cst_6 : bf16 to vector<32x144xbf16>
    %c256 = arith.constant 256 : index
    %c0_7 = arith.constant 0 : index
    %7 = vector.load %arg14[%c256, %c0_7] : memref<288x144xbf16, #tpu.memory_space<vmem>>, vector<32x144xbf16>
    tpu.vector_store %arg14[%c256, %c0_7], %6 {strides = array<i32>} : memref<288x144xbf16, #tpu.memory_space<vmem>>, vector<32x144xbf16>,
    %cst_8 = arith.constant 0.000000e+00 : bf16
    %8 = vector.broadcast %cst_8 : bf16 to vector<64x136xbf16>
    %c0_9 = arith.constant 0 : index
    %c0_10 = arith.constant 0 : index
    %9 = vector.load %arg15[%c0_9, %c0_10] : memref<544x136xbf16, #tpu.memory_space<vmem>>, vector<64x136xbf16>
    tpu.vector_store %arg15[%c0_9, %c0_10], %8 {strides = array<i32>} : memref<544x136xbf16, #tpu.memory_space<vmem>>, vector<64x136xbf16>,
    %cst_11 = arith.constant 0.000000e+00 : bf16
    %10 = vector.broadcast %cst_11 : bf16 to vector<32x136xbf16>
    %c96 = arith.constant 96 : index
    %c0_12 = arith.constant 0 : index
    %11 = vector.load %arg15[%c96, %c0_12] : memref<544x136xbf16, #tpu.memory_space<vmem>>, vector<32x136xbf16>
    tpu.vector_store %arg15[%c96, %c0_12], %10 {strides = array<i32>} : memref<544x136xbf16, #tpu.memory_space<vmem>>, vector<32x136xbf16>,
    %cst_13 = arith.constant 0.000000e+00 : bf16
    %12 = vector.broadcast %cst_13 : bf16 to vector<32x136xbf16>
    %c160 = arith.constant 160 : index
    %c0_14 = arith.constant 0 : index
    %13 = vector.load %arg15[%c160, %c0_14] : memref<544x136xbf16, #tpu.memory_space<vmem>>, vector<32x136xbf16>
    tpu.vector_store %arg15[%c160, %c0_14], %12 {strides = array<i32>} : memref<544x136xbf16, #tpu.memory_space<vmem>>, vector<32x136xbf16>,
    %cst_15 = arith.constant 0.000000e+00 : bf16
    %14 = vector.broadcast %cst_15 : bf16 to vector<32x136xbf16>
    %c224_16 = arith.constant 224 : index
    %c0_17 = arith.constant 0 : index
    %15 = vector.load %arg15[%c224_16, %c0_17] : memref<544x136xbf16, #tpu.memory_space<vmem>>, vector<32x136xbf16>
    tpu.vector_store %arg15[%c224_16, %c0_17], %14 {strides = array<i32>} : memref<544x136xbf16, #tpu.memory_space<vmem>>, vector<32x136xbf16>,
    %cst_18 = arith.constant 0.000000e+00 : bf16
    %16 = vector.broadcast %cst_18 : bf16 to vector<32x136xbf16>
    %c288 = arith.constant 288 : index
    %c0_19 = arith.constant 0 : index
    %17 = vector.load %arg15[%c288, %c0_19] : memref<544x136xbf16, #tpu.memory_space<vmem>>, vector<32x136xbf16>
    tpu.vector_store %arg15[%c288, %c0_19], %16 {strides = array<i32>} : memref<544x136xbf16, #tpu.memory_space<vmem>>, vector<32x136xbf16>,
    %cst_20 = arith.constant 0.000000e+00 : bf16
    %18 = vector.broadcast %cst_20 : bf16 to vector<32x136xbf16>
    %c352 = arith.constant 352 : index
    %c0_21 = arith.constant 0 : index
    %19 = vector.load %arg15[%c352, %c0_21] : memref<544x136xbf16, #tpu.memory_space<vmem>>, vector<32x136xbf16>
    tpu.vector_store %arg15[%c352, %c0_21], %18 {strides = array<i32>} : memref<544x136xbf16, #tpu.memory_space<vmem>>, vector<32x136xbf16>,
    %cst_22 = arith.constant 0.000000e+00 : bf16
    %20 = vector.broadcast %cst_22 : bf16 to vector<32x136xbf16>
    %c416 = arith.constant 416 : index
    %c0_23 = arith.constant 0 : index
    %21 = vector.load %arg15[%c416, %c0_23] : memref<544x136xbf16, #tpu.memory_space<vmem>>, vector<32x136xbf16>
    tpu.vector_store %arg15[%c416, %c0_23], %20 {strides = array<i32>} : memref<544x136xbf16, #tpu.memory_space<vmem>>, vector<32x136xbf16>,
    %cst_24 = arith.constant 0.000000e+00 : bf16
    %22 = vector.broadcast %cst_24 : bf16 to vector<64x136xbf16>
    %c480 = arith.constant 480 : index
    %c0_25 = arith.constant 0 : index
    %23 = vector.load %arg15[%c480, %c0_25] : memref<544x136xbf16, #tpu.memory_space<vmem>>, vector<64x136xbf16>
    tpu.vector_store %arg15[%c480, %c0_25], %22 {strides = array<i32>} : memref<544x136xbf16, #tpu.memory_space<vmem>>, vector<64x136xbf16>,
    %cst_26 = arith.constant 0.000000e+00 : bf16
    %24 = vector.broadcast %cst_26 : bf16 to vector<64x128xbf16>
    %c0_27 = arith.constant 0 : index
    %c0_28 = arith.constant 0 : index
    %25 = vector.load %arg16[%c0_27, %c0_28] : memref<992x128xbf16, #tpu.memory_space<vmem>>, vector<64x128xbf16>
    tpu.vector_store %arg16[%c0_27, %c0_28], %24 {strides = array<i32>} : memref<992x128xbf16, #tpu.memory_space<vmem>>, vector<64x128xbf16>,
    %cst_29 = arith.constant 0.000000e+00 : bf16
    %26 = vector.broadcast %cst_29 : bf16 to vector<32x128xbf16>
    %c96_30 = arith.constant 96 : index
    %c0_31 = arith.constant 0 : index
    %27 = vector.load %arg16[%c96_30, %c0_31] : memref<992x128xbf16, #tpu.memory_space<vmem>>, vector<32x128xbf16>
    tpu.vector_store %arg16[%c96_30, %c0_31], %26 {strides = array<i32>} : memref<992x128xbf16, #tpu.memory_space<vmem>>, vector<32x128xbf16>,
    %cst_32 = arith.constant 0.000000e+00 : bf16
    %28 = vector.broadcast %cst_32 : bf16 to vector<32x128xbf16>
    %c160_33 = arith.constant 160 : index
    %c0_34 = arith.constant 0 : index
    %29 = vector.load %arg16[%c160_33, %c0_34] : memref<992x128xbf16, #tpu.memory_space<vmem>>, vector<32x128xbf16>
    tpu.vector_store %arg16[%c160_33, %c0_34], %28 {strides = array<i32>} : memref<992x128xbf16, #tpu.memory_space<vmem>>, vector<32x128xbf16>,
    %cst_35 = arith.constant 0.000000e+00 : bf16
    %30 = vector.broadcast %cst_35 : bf16 to vector<32x128xbf16>
    %c224_36 = arith.constant 224 : index
    %c0_37 = arith.constant 0 : index
    %31 = vector.load %arg16[%c224_36, %c0_37] : memref<992x128xbf16, #tpu.memory_space<vmem>>, vector<32x128xbf16>
    tpu.vector_store %arg16[%c224_36, %c0_37], %30 {strides = array<i32>} : memref<992x128xbf16, #tpu.memory_space<vmem>>, vector<32x128xbf16>,
    %cst_38 = arith.constant 0.000000e+00 : bf16
    %32 = vector.broadcast %cst_38 : bf16 to vector<32x128xbf16>
    %c288_39 = arith.constant 288 : index
    %c0_40 = arith.constant 0 : index
    %33 = vector.load %arg16[%c288_39, %c0_40] : memref<992x128xbf16, #tpu.memory_space<vmem>>, vector<32x128xbf16>
    tpu.vector_store %arg16[%c288_39, %c0_40], %32 {strides = array<i32>} : memref<992x128xbf16, #tpu.memory_space<vmem>>, vector<32x128xbf16>,
    %cst_41 = arith.constant 0.000000e+00 : bf16
    %34 = vector.broadcast %cst_41 : bf16 to vector<32x128xbf16>
    %c352_42 = arith.constant 352 : index
    %c0_43 = arith.constant 0 : index
    %35 = vector.load %arg16[%c352_42, %c0_43] : memref<992x128xbf16, #tpu.memory_space<vmem>>, vector<32x128xbf16>
    tpu.vector_store %arg16[%c352_42, %c0_43], %34 {strides = array<i32>} : memref<992x128xbf16, #tpu.memory_space<vmem>>, vector<32x128xbf16>,
    %cst_44 = arith.constant 0.000000e+00 : bf16
    %36 = vector.broadcast %cst_44 : bf16 to vector<32x128xbf16>
    %c416_45 = arith.constant 416 : index
    %c0_46 = arith.constant 0 : index
    %37 = vector.load %arg16[%c416_45, %c0_46] : memref<992x128xbf16, #tpu.memory_space<vmem>>, vector<32x128xbf16>
    tpu.vector_store %arg16[%c416_45, %c0_46], %36 {strides = array<i32>} : memref<992x128xbf16, #tpu.memory_space<vmem>>, vector<32x128xbf16>,
    %cst_47 = arith.constant 0.000000e+00 : bf16
    %38 = vector.broadcast %cst_47 : bf16 to vector<32x128xbf16>
    %c480_48 = arith.constant 480 : index
    %c0_49 = arith.constant 0 : index
    %39 = vector.load %arg16[%c480_48, %c0_49] : memref<992x128xbf16, #tpu.memory_space<vmem>>, vector<32x128xbf16>
    tpu.vector_store %arg16[%c480_48, %c0_49], %38 {strides = array<i32>} : memref<992x128xbf16, #tpu.memory_space<vmem>>, vector<32x128xbf16>,
    %cst_50 = arith.constant 0.000000e+00 : bf16
    %40 = vector.broadcast %cst_50 : bf16 to vector<32x128xbf16>
    %c544 = arith.constant 544 : index
    %c0_51 = arith.constant 0 : index
    %41 = vector.load %arg16[%c544, %c0_51] : memref<992x128xbf16, #tpu.memory_space<vmem>>, vector<32x128xbf16>
    tpu.vector_store %arg16[%c544, %c0_51], %40 {strides = array<i32>} : memref<992x128xbf16, #tpu.memory_space<vmem>>, vector<32x128xbf16>,
    %cst_52 = arith.constant 0.000000e+00 : bf16
    %42 = vector.broadcast %cst_52 : bf16 to vector<32x128xbf16>
    %c608 = arith.constant 608 : index
    %c0_53 = arith.constant 0 : index
    %43 = vector.load %arg16[%c608, %c0_53] : memref<992x128xbf16, #tpu.memory_space<vmem>>, vector<32x128xbf16>
    tpu.vector_store %arg16[%c608, %c0_53], %42 {strides = array<i32>} : memref<992x128xbf16, #tpu.memory_space<vmem>>, vector<32x128xbf16>,
    %cst_54 = arith.constant 0.000000e+00 : bf16
    %44 = vector.broadcast %cst_54 : bf16 to vector<32x128xbf16>
    %c672 = arith.constant 672 : index
    %c0_55 = arith.constant 0 : index
    %45 = vector.load %arg16[%c672, %c0_55] : memref<992x128xbf16, #tpu.memory_space<vmem>>, vector<32x128xbf16>
    tpu.vector_store %arg16[%c672, %c0_55], %44 {strides = array<i32>} : memref<992x128xbf16, #tpu.memory_space<vmem>>, vector<32x128xbf16>,
    %cst_56 = arith.constant 0.000000e+00 : bf16
    %46 = vector.broadcast %cst_56 : bf16 to vector<32x128xbf16>
    %c736 = arith.constant 736 : index
    %c0_57 = arith.constant 0 : index
    %47 = vector.load %arg16[%c736, %c0_57] : memref<992x128xbf16, #tpu.memory_space<vmem>>, vector<32x128xbf16>
    tpu.vector_store %arg16[%c736, %c0_57], %46 {strides = array<i32>} : memref<992x128xbf16, #tpu.memory_space<vmem>>, vector<32x128xbf16>,
    %cst_58 = arith.constant 0.000000e+00 : bf16
    %48 = vector.broadcast %cst_58 : bf16 to vector<32x128xbf16>
    %c800 = arith.constant 800 : index
    %c0_59 = arith.constant 0 : index
    %49 = vector.load %arg16[%c800, %c0_59] : memref<992x128xbf16, #tpu.memory_space<vmem>>, vector<32x128xbf16>
    tpu.vector_store %arg16[%c800, %c0_59], %48 {strides = array<i32>} : memref<992x128xbf16, #tpu.memory_space<vmem>>, vector<32x128xbf16>,
    %cst_60 = arith.constant 0.000000e+00 : bf16
    %50 = vector.broadcast %cst_60 : bf16 to vector<32x128xbf16>
    %c864 = arith.constant 864 : index
    %c0_61 = arith.constant 0 : index
    %51 = vector.load %arg16[%c864, %c0_61] : memref<992x128xbf16, #tpu.memory_space<vmem>>, vector<32x128xbf16>
    tpu.vector_store %arg16[%c864, %c0_61], %50 {strides = array<i32>} : memref<992x128xbf16, #tpu.memory_space<vmem>>, vector<32x128xbf16>,
    %cst_62 = arith.constant 0.000000e+00 : bf16
    %52 = vector.broadcast %cst_62 : bf16 to vector<64x128xbf16>
    %c928 = arith.constant 928 : index
    %c0_63 = arith.constant 0 : index
    %53 = vector.load %arg16[%c928, %c0_63] : memref<992x128xbf16, #tpu.memory_space<vmem>>, vector<64x128xbf16>
    tpu.vector_store %arg16[%c928, %c0_63], %52 {strides = array<i32>} : memref<992x128xbf16, #tpu.memory_space<vmem>>, vector<64x128xbf16>,
    %c0_64 = arith.constant 0 : index
    %c0_65 = arith.constant 0 : index
    %54 = vector.load %arg1[%c0_64, %c0_65] : memref<32x16xf32, #tpu.memory_space<vmem>>, vector<32x16xf32>
    %55 = arith.truncf %54 : vector<32x16xf32> to vector<32x16xbf16>
    %c0_66 = arith.constant 0 : index
    %c0_67 = arith.constant 0 : index
    %56 = vector.load %arg2[%c0_66, %c0_67] : memref<16x1920xbf16, #tpu.memory_space<vmem>>, vector<16x1920xbf16>
    %cst_68 = arith.constant dense<0.000000e+00> : vector<32x1920xf32>
    %57 = tpu.matmul %55, %56, %cst_68 {dimension_numbers = #tpu.dot_dimension_numbers<[1], [0], [0], [1], [0, 0, 1, 1], [], []>} : vector<32x16xbf16>, vector<16x1920xbf16>, vector<32x1920xf32> -> vector<32x1920xf32>
    %c0_69 = arith.constant 0 : index
    %c0_70 = arith.constant 0 : index
    %58 = vector.load %arg3[%c0_69, %c0_70] : memref<1x1920xf32, #tpu.memory_space<vmem>>, vector<1x1920xf32>
    %59 = vector.broadcast %58 : vector<1x1920xf32> to vector<32x1920xf32>
    %60 = arith.addf %57, %59 : vector<32x1920xf32>
    %cst_71 = arith.constant 0.000000e+00 : f32
    %61 = vector.broadcast %cst_71 : f32 to vector<32x1920xf32>
    %62 = arith.maximumf %60, %61 : vector<32x1920xf32>
    %63 = arith.truncf %62 : vector<32x1920xf32> to vector<32x1920xbf16>
    %64 = vector.extract_strided_slice %63 {offsets = [0, 0], sizes = [32, 288], strides = [1, 1]} : vector<32x1920xbf16> to vector<32x288xbf16>
    %c64 = arith.constant 64 : index
    %c0_72 = arith.constant 0 : index
    %65 = vector.load %arg13[%c64, %c0_72] : memref<288x288xbf16, #tpu.memory_space<vmem>>, vector<32x288xbf16>
    tpu.vector_store %arg13[%c64, %c0_72], %64 {strides = array<i32>} : memref<288x288xbf16, #tpu.memory_space<vmem>>, vector<32x288xbf16>,
    %66 = vector.extract_strided_slice %63 {offsets = [0, 384], sizes = [32, 288], strides = [1, 1]} : vector<32x1920xbf16> to vector<32x288xbf16>
    %c96_73 = arith.constant 96 : index
    %c0_74 = arith.constant 0 : index
    %67 = vector.load %arg13[%c96_73, %c0_74] : memref<288x288xbf16, #tpu.memory_space<vmem>>, vector<32x288xbf16>
    tpu.vector_store %arg13[%c96_73, %c0_74], %66 {strides = array<i32>} : memref<288x288xbf16, #tpu.memory_space<vmem>>, vector<32x288xbf16>,
    %68 = vector.extract_strided_slice %63 {offsets = [0, 768], sizes = [32, 288], strides = [1, 1]} : vector<32x1920xbf16> to vector<32x288xbf16>
    %c128 = arith.constant 128 : index
    %c0_75 = arith.constant 0 : index
    %69 = vector.load %arg13[%c128, %c0_75] : memref<288x288xbf16, #tpu.memory_space<vmem>>, vector<32x288xbf16>
    tpu.vector_store %arg13[%c128, %c0_75], %68 {strides = array<i32>} : memref<288x288xbf16, #tpu.memory_space<vmem>>, vector<32x288xbf16>,
    %70 = vector.extract_strided_slice %63 {offsets = [0, 1152], sizes = [32, 288], strides = [1, 1]} : vector<32x1920xbf16> to vector<32x288xbf16>
    %c160_76 = arith.constant 160 : index
    %c0_77 = arith.constant 0 : index
    %71 = vector.load %arg13[%c160_76, %c0_77] : memref<288x288xbf16, #tpu.memory_space<vmem>>, vector<32x288xbf16>
    tpu.vector_store %arg13[%c160_76, %c0_77], %70 {strides = array<i32>} : memref<288x288xbf16, #tpu.memory_space<vmem>>, vector<32x288xbf16>,
    %72 = vector.extract_strided_slice %63 {offsets = [0, 1536], sizes = [32, 288], strides = [1, 1]} : vector<32x1920xbf16> to vector<32x288xbf16>
    %c192 = arith.constant 192 : index
    %c0_78 = arith.constant 0 : index
    %73 = vector.load %arg13[%c192, %c0_78] : memref<288x288xbf16, #tpu.memory_space<vmem>>, vector<32x288xbf16>
    tpu.vector_store %arg13[%c192, %c0_78], %72 {strides = array<i32>} : memref<288x288xbf16, #tpu.memory_space<vmem>>, vector<32x288xbf16>,
    %c0_79 = arith.constant 0 : index
    %c0_80 = arith.constant 0 : index
    %74 = vector.load %arg13[%c0_79, %c0_80] : memref<288x288xbf16, #tpu.memory_space<vmem>>, vector<224x288xbf16>
    %c0_81 = arith.constant 0 : index
    %c0_82 = arith.constant 0 : index
    %c0_83 = arith.constant 0 : index
    %75 = vector.load %arg4[%c0_81, %c0_82, %c0_83] : memref<3x288x144xbf16, #tpu.memory_space<vmem>>, vector<1x288x144xbf16>
    %76 = vector.shape_cast %75 : vector<1x288x144xbf16> to vector<288x144xbf16>
    %cst_84 = arith.constant dense<0.000000e+00> : vector<224x144xf32>
    %77 = tpu.matmul %74, %76, %cst_84 {dimension_numbers = #tpu.dot_dimension_numbers<[1], [0], [0], [1], [0, 0, 1, 1], [], []>} : vector<224x288xbf16>, vector<288x144xbf16>, vector<224x144xf32> -> vector<224x144xf32>
    %c32 = arith.constant 32 : index
    %c0_85 = arith.constant 0 : index
    %78 = vector.load %arg13[%c32, %c0_85] : memref<288x288xbf16, #tpu.memory_space<vmem>>, vector<224x288xbf16>
    %c1 = arith.constant 1 : index
    %c0_86 = arith.constant 0 : index
    %c0_87 = arith.constant 0 : index
    %79 = vector.load %arg4[%c1, %c0_86, %c0_87] : memref<3x288x144xbf16, #tpu.memory_space<vmem>>, vector<1x288x144xbf16>
    %80 = vector.shape_cast %79 : vector<1x288x144xbf16> to vector<288x144xbf16>
    %cst_88 = arith.constant dense<0.000000e+00> : vector<224x144xf32>
    %81 = tpu.matmul %78, %80, %cst_88 {dimension_numbers = #tpu.dot_dimension_numbers<[1], [0], [0], [1], [0, 0, 1, 1], [], []>} : vector<224x288xbf16>, vector<288x144xbf16>, vector<224x144xf32> -> vector<224x144xf32>
    %82 = arith.addf %77, %81 : vector<224x144xf32>
    %c64_89 = arith.constant 64 : index
    %c0_90 = arith.constant 0 : index
    %83 = vector.load %arg13[%c64_89, %c0_90] : memref<288x288xbf16, #tpu.memory_space<vmem>>, vector<224x288xbf16>
    %c2 = arith.constant 2 : index
    %c0_91 = arith.constant 0 : index
    %c0_92 = arith.constant 0 : index
    %84 = vector.load %arg4[%c2, %c0_91, %c0_92] : memref<3x288x144xbf16, #tpu.memory_space<vmem>>, vector<1x288x144xbf16>
    %85 = vector.shape_cast %84 : vector<1x288x144xbf16> to vector<288x144xbf16>
    %cst_93 = arith.constant dense<0.000000e+00> : vector<224x144xf32>
    %86 = tpu.matmul %83, %85, %cst_93 {dimension_numbers = #tpu.dot_dimension_numbers<[1], [0], [0], [1], [0, 0, 1, 1], [], []>} : vector<224x288xbf16>, vector<288x144xbf16>, vector<224x144xf32> -> vector<224x144xf32>
    %87 = arith.addf %82, %86 : vector<224x144xf32>
    %c0_94 = arith.constant 0 : index
    %c0_95 = arith.constant 0 : index
    %88 = vector.load %arg5[%c0_94, %c0_95] : memref<1x144xf32, #tpu.memory_space<vmem>>, vector<1x144xf32>
    %89 = vector.broadcast %88 : vector<1x144xf32> to vector<224x144xf32>
    %90 = arith.addf %87, %89 : vector<224x144xf32>
    %cst_96 = arith.constant 0.000000e+00 : f32
    %91 = vector.broadcast %cst_96 : f32 to vector<224x144xf32>
    %92 = arith.maximumf %90, %91 : vector<224x144xf32>
    %93 = arith.truncf %92 : vector<224x144xf32> to vector<224x144xbf16>
    %c32_97 = arith.constant 32 : index
    %c0_98 = arith.constant 0 : index
    %94 = vector.load %arg14[%c32_97, %c0_98] : memref<288x144xbf16, #tpu.memory_space<vmem>>, vector<224x144xbf16>
    tpu.vector_store %arg14[%c32_97, %c0_98], %93 {strides = array<i32>} : memref<288x144xbf16, #tpu.memory_space<vmem>>, vector<224x144xbf16>,
    %c0_99 = arith.constant 0 : index
    %c0_100 = arith.constant 0 : index
    %95 = vector.load %arg14[%c0_99, %c0_100] : memref<288x144xbf16, #tpu.memory_space<vmem>>, vector<224x144xbf16>
    %c0_101 = arith.constant 0 : index
    %c0_102 = arith.constant 0 : index
    %c0_103 = arith.constant 0 : index
    %96 = vector.load %arg6[%c0_101, %c0_102, %c0_103] : memref<3x144x136xbf16, #tpu.memory_space<vmem>>, vector<1x144x136xbf16>
    %97 = vector.shape_cast %96 : vector<1x144x136xbf16> to vector<144x136xbf16>
    %cst_104 = arith.constant dense<0.000000e+00> : vector<224x136xf32>
    %98 = tpu.matmul %95, %97, %cst_104 {dimension_numbers = #tpu.dot_dimension_numbers<[1], [0], [0], [1], [0, 0, 1, 1], [], []>} : vector<224x144xbf16>, vector<144x136xbf16>, vector<224x136xf32> -> vector<224x136xf32>
    %c32_105 = arith.constant 32 : index
    %c0_106 = arith.constant 0 : index
    %99 = vector.load %arg14[%c32_105, %c0_106] : memref<288x144xbf16, #tpu.memory_space<vmem>>, vector<224x144xbf16>
    %c1_107 = arith.constant 1 : index
    %c0_108 = arith.constant 0 : index
    %c0_109 = arith.constant 0 : index
    %100 = vector.load %arg6[%c1_107, %c0_108, %c0_109] : memref<3x144x136xbf16, #tpu.memory_space<vmem>>, vector<1x144x136xbf16>
    %101 = vector.shape_cast %100 : vector<1x144x136xbf16> to vector<144x136xbf16>
    %cst_110 = arith.constant dense<0.000000e+00> : vector<224x136xf32>
    %102 = tpu.matmul %99, %101, %cst_110 {dimension_numbers = #tpu.dot_dimension_numbers<[1], [0], [0], [1], [0, 0, 1, 1], [], []>} : vector<224x144xbf16>, vector<144x136xbf16>, vector<224x136xf32> -> vector<224x136xf32>
    %103 = arith.addf %98, %102 : vector<224x136xf32>
    %c64_111 = arith.constant 64 : index
    %c0_112 = arith.constant 0 : index
    %104 = vector.load %arg14[%c64_111, %c0_112] : memref<288x144xbf16, #tpu.memory_space<vmem>>, vector<224x144xbf16>
    %c2_113 = arith.constant 2 : index
    %c0_114 = arith.constant 0 : index
    %c0_115 = arith.constant 0 : index
    %105 = vector.load %arg6[%c2_113, %c0_114, %c0_115] : memref<3x144x136xbf16, #tpu.memory_space<vmem>>, vector<1x144x136xbf16>
    %106 = vector.shape_cast %105 : vector<1x144x136xbf16> to vector<144x136xbf16>
    %cst_116 = arith.constant dense<0.000000e+00> : vector<224x136xf32>
    %107 = tpu.matmul %104, %106, %cst_116 {dimension_numbers = #tpu.dot_dimension_numbers<[1], [0], [0], [1], [0, 0, 1, 1], [], []>} : vector<224x144xbf16>, vector<144x136xbf16>, vector<224x136xf32> -> vector<224x136xf32>
    %108 = arith.addf %103, %107 : vector<224x136xf32>
    %c0_117 = arith.constant 0 : index
    %c0_118 = arith.constant 0 : index
    %109 = vector.load %arg7[%c0_117, %c0_118] : memref<1x136xf32, #tpu.memory_space<vmem>>, vector<1x136xf32>
    %110 = vector.broadcast %109 : vector<1x136xf32> to vector<224x136xf32>
    %111 = arith.addf %108, %110 : vector<224x136xf32>
    %cst_119 = arith.constant 0.000000e+00 : f32
    %112 = vector.broadcast %cst_119 : f32 to vector<224x136xf32>
    %113 = arith.maximumf %111, %112 : vector<224x136xf32>
    %114 = arith.truncf %113 : vector<224x136xf32> to vector<224x136xbf16>
    %115 = vector.extract_strided_slice %114 {offsets = [0, 0], sizes = [32, 136], strides = [1, 1]} : vector<224x136xbf16> to vector<32x136xbf16>
    %c64_120 = arith.constant 64 : index
    %c0_121 = arith.constant 0 : index
    %116 = vector.load %arg15[%c64_120, %c0_121] : memref<544x136xbf16, #tpu.memory_space<vmem>>, vector<32x136xbf16>
    tpu.vector_store %arg15[%c64_120, %c0_121], %115 {strides = array<i32>} : memref<544x136xbf16, #tpu.memory_space<vmem>>, vector<32x136xbf16>,
    %117 = vector.extract_strided_slice %114 {offsets = [32, 0], sizes = [32, 136], strides = [1, 1]} : vector<224x136xbf16> to vector<32x136xbf16>
    %c128_122 = arith.constant 128 : index
    %c0_123 = arith.constant 0 : index
    %118 = vector.load %arg15[%c128_122, %c0_123] : memref<544x136xbf16, #tpu.memory_space<vmem>>, vector<32x136xbf16>
    tpu.vector_store %arg15[%c128_122, %c0_123], %117 {strides = array<i32>} : memref<544x136xbf16, #tpu.memory_space<vmem>>, vector<32x136xbf16>,
    %119 = vector.extract_strided_slice %114 {offsets = [64, 0], sizes = [32, 136], strides = [1, 1]} : vector<224x136xbf16> to vector<32x136xbf16>
    %c192_124 = arith.constant 192 : index
    %c0_125 = arith.constant 0 : index
    %120 = vector.load %arg15[%c192_124, %c0_125] : memref<544x136xbf16, #tpu.memory_space<vmem>>, vector<32x136xbf16>
    tpu.vector_store %arg15[%c192_124, %c0_125], %119 {strides = array<i32>} : memref<544x136xbf16, #tpu.memory_space<vmem>>, vector<32x136xbf16>,
    %121 = vector.extract_strided_slice %114 {offsets = [96, 0], sizes = [32, 136], strides = [1, 1]} : vector<224x136xbf16> to vector<32x136xbf16>
    %c256_126 = arith.constant 256 : index
    %c0_127 = arith.constant 0 : index
    %122 = vector.load %arg15[%c256_126, %c0_127] : memref<544x136xbf16, #tpu.memory_space<vmem>>, vector<32x136xbf16>
    tpu.vector_store %arg15[%c256_126, %c0_127], %121 {strides = array<i32>} : memref<544x136xbf16, #tpu.memory_space<vmem>>, vector<32x136xbf16>,
    %123 = vector.extract_strided_slice %114 {offsets = [128, 0], sizes = [32, 136], strides = [1, 1]} : vector<224x136xbf16> to vector<32x136xbf16>
    %c320 = arith.constant 320 : index
    %c0_128 = arith.constant 0 : index
    %124 = vector.load %arg15[%c320, %c0_128] : memref<544x136xbf16, #tpu.memory_space<vmem>>, vector<32x136xbf16>
    tpu.vector_store %arg15[%c320, %c0_128], %123 {strides = array<i32>} : memref<544x136xbf16, #tpu.memory_space<vmem>>, vector<32x136xbf16>,
    %125 = vector.extract_strided_slice %114 {offsets = [160, 0], sizes = [32, 136], strides = [1, 1]} : vector<224x136xbf16> to vector<32x136xbf16>
    %c384 = arith.constant 384 : index
    %c0_129 = arith.constant 0 : index
    %126 = vector.load %arg15[%c384, %c0_129] : memref<544x136xbf16, #tpu.memory_space<vmem>>, vector<32x136xbf16>
    tpu.vector_store %arg15[%c384, %c0_129], %125 {strides = array<i32>} : memref<544x136xbf16, #tpu.memory_space<vmem>>, vector<32x136xbf16>,
    %127 = vector.extract_strided_slice %114 {offsets = [192, 0], sizes = [32, 136], strides = [1, 1]} : vector<224x136xbf16> to vector<32x136xbf16>
    %c448 = arith.constant 448 : index
    %c0_130 = arith.constant 0 : index
    %128 = vector.load %arg15[%c448, %c0_130] : memref<544x136xbf16, #tpu.memory_space<vmem>>, vector<32x136xbf16>
    tpu.vector_store %arg15[%c448, %c0_130], %127 {strides = array<i32>} : memref<544x136xbf16, #tpu.memory_space<vmem>>, vector<32x136xbf16>,
    %c0_131 = arith.constant 0 : index
    %c0_132 = arith.constant 0 : index
    %129 = vector.load %arg15[%c0_131, %c0_132] : memref<544x136xbf16, #tpu.memory_space<vmem>>, vector<448x136xbf16>
    %c0_133 = arith.constant 0 : index
    %c0_134 = arith.constant 0 : index
    %c0_135 = arith.constant 0 : index
    %130 = vector.load %arg8[%c0_133, %c0_134, %c0_135] : memref<4x136x128xbf16, #tpu.memory_space<vmem>>, vector<1x136x128xbf16>
    %131 = vector.shape_cast %130 : vector<1x136x128xbf16> to vector<136x128xbf16>
    %cst_136 = arith.constant dense<0.000000e+00> : vector<448x128xf32>
    %132 = tpu.matmul %129, %131, %cst_136 {dimension_numbers = #tpu.dot_dimension_numbers<[1], [0], [0], [1], [0, 0, 1, 1], [], []>} : vector<448x136xbf16>, vector<136x128xbf16>, vector<448x128xf32> -> vector<448x128xf32>
    %c32_137 = arith.constant 32 : index
    %c0_138 = arith.constant 0 : index
    %133 = vector.load %arg15[%c32_137, %c0_138] : memref<544x136xbf16, #tpu.memory_space<vmem>>, vector<448x136xbf16>
    %c1_139 = arith.constant 1 : index
    %c0_140 = arith.constant 0 : index
    %c0_141 = arith.constant 0 : index
    %134 = vector.load %arg8[%c1_139, %c0_140, %c0_141] : memref<4x136x128xbf16, #tpu.memory_space<vmem>>, vector<1x136x128xbf16>
    %135 = vector.shape_cast %134 : vector<1x136x128xbf16> to vector<136x128xbf16>
    %cst_142 = arith.constant dense<0.000000e+00> : vector<448x128xf32>
    %136 = tpu.matmul %133, %135, %cst_142 {dimension_numbers = #tpu.dot_dimension_numbers<[1], [0], [0], [1], [0, 0, 1, 1], [], []>} : vector<448x136xbf16>, vector<136x128xbf16>, vector<448x128xf32> -> vector<448x128xf32>
    %137 = arith.addf %132, %136 : vector<448x128xf32>
    %c64_143 = arith.constant 64 : index
    %c0_144 = arith.constant 0 : index
    %138 = vector.load %arg15[%c64_143, %c0_144] : memref<544x136xbf16, #tpu.memory_space<vmem>>, vector<448x136xbf16>
    %c2_145 = arith.constant 2 : index
    %c0_146 = arith.constant 0 : index
    %c0_147 = arith.constant 0 : index
    %139 = vector.load %arg8[%c2_145, %c0_146, %c0_147] : memref<4x136x128xbf16, #tpu.memory_space<vmem>>, vector<1x136x128xbf16>
    %140 = vector.shape_cast %139 : vector<1x136x128xbf16> to vector<136x128xbf16>
    %cst_148 = arith.constant dense<0.000000e+00> : vector<448x128xf32>
    %141 = tpu.matmul %138, %140, %cst_148 {dimension_numbers = #tpu.dot_dimension_numbers<[1], [0], [0], [1], [0, 0, 1, 1], [], []>} : vector<448x136xbf16>, vector<136x128xbf16>, vector<448x128xf32> -> vector<448x128xf32>
    %142 = arith.addf %137, %141 : vector<448x128xf32>
    %c96_149 = arith.constant 96 : index
    %c0_150 = arith.constant 0 : index
    %143 = vector.load %arg15[%c96_149, %c0_150] : memref<544x136xbf16, #tpu.memory_space<vmem>>, vector<448x136xbf16>
    %c3 = arith.constant 3 : index
    %c0_151 = arith.constant 0 : index
    %c0_152 = arith.constant 0 : index
    %144 = vector.load %arg8[%c3, %c0_151, %c0_152] : memref<4x136x128xbf16, #tpu.memory_space<vmem>>, vector<1x136x128xbf16>
    %145 = vector.shape_cast %144 : vector<1x136x128xbf16> to vector<136x128xbf16>
    %cst_153 = arith.constant dense<0.000000e+00> : vector<448x128xf32>
    %146 = tpu.matmul %143, %145, %cst_153 {dimension_numbers = #tpu.dot_dimension_numbers<[1], [0], [0], [1], [0, 0, 1, 1], [], []>} : vector<448x136xbf16>, vector<136x128xbf16>, vector<448x128xf32> -> vector<448x128xf32>
    %147 = arith.addf %142, %146 : vector<448x128xf32>
    %c0_154 = arith.constant 0 : index
    %c0_155 = arith.constant 0 : index
    %148 = vector.load %arg9[%c0_154, %c0_155] : memref<1x128xf32, #tpu.memory_space<vmem>>, vector<1x128xf32>
    %149 = vector.broadcast %148 : vector<1x128xf32> to vector<448x128xf32>
    %150 = arith.addf %147, %149 : vector<448x128xf32>
    %cst_156 = arith.constant 0.000000e+00 : f32
    %151 = vector.broadcast %cst_156 : f32 to vector<448x128xf32>
    %152 = arith.maximumf %150, %151 : vector<448x128xf32>
    %153 = arith.truncf %152 : vector<448x128xf32> to vector<448x128xbf16>
    %154 = vector.extract_strided_slice %153 {offsets = [0, 0], sizes = [32, 128], strides = [1, 1]} : vector<448x128xbf16> to vector<32x128xbf16>
    %c64_157 = arith.constant 64 : index
    %c0_158 = arith.constant 0 : index
    %155 = vector.load %arg16[%c64_157, %c0_158] : memref<992x128xbf16, #tpu.memory_space<vmem>>, vector<32x128xbf16>
    tpu.vector_store %arg16[%c64_157, %c0_158], %154 {strides = array<i32>} : memref<992x128xbf16, #tpu.memory_space<vmem>>, vector<32x128xbf16>,
    %156 = vector.extract_strided_slice %153 {offsets = [32, 0], sizes = [32, 128], strides = [1, 1]} : vector<448x128xbf16> to vector<32x128xbf16>
    %c128_159 = arith.constant 128 : index
    %c0_160 = arith.constant 0 : index
    %157 = vector.load %arg16[%c128_159, %c0_160] : memref<992x128xbf16, #tpu.memory_space<vmem>>, vector<32x128xbf16>
    tpu.vector_store %arg16[%c128_159, %c0_160], %156 {strides = array<i32>} : memref<992x128xbf16, #tpu.memory_space<vmem>>, vector<32x128xbf16>,
    %158 = vector.extract_strided_slice %153 {offsets = [64, 0], sizes = [32, 128], strides = [1, 1]} : vector<448x128xbf16> to vector<32x128xbf16>
    %c192_161 = arith.constant 192 : index
    %c0_162 = arith.constant 0 : index
    %159 = vector.load %arg16[%c192_161, %c0_162] : memref<992x128xbf16, #tpu.memory_space<vmem>>, vector<32x128xbf16>
    tpu.vector_store %arg16[%c192_161, %c0_162], %158 {strides = array<i32>} : memref<992x128xbf16, #tpu.memory_space<vmem>>, vector<32x128xbf16>,
    %160 = vector.extract_strided_slice %153 {offsets = [96, 0], sizes = [32, 128], strides = [1, 1]} : vector<448x128xbf16> to vector<32x128xbf16>
    %c256_163 = arith.constant 256 : index
    %c0_164 = arith.constant 0 : index
    %161 = vector.load %arg16[%c256_163, %c0_164] : memref<992x128xbf16, #tpu.memory_space<vmem>>, vector<32x128xbf16>
    tpu.vector_store %arg16[%c256_163, %c0_164], %160 {strides = array<i32>} : memref<992x128xbf16, #tpu.memory_space<vmem>>, vector<32x128xbf16>,
    %162 = vector.extract_strided_slice %153 {offsets = [128, 0], sizes = [32, 128], strides = [1, 1]} : vector<448x128xbf16> to vector<32x128xbf16>
    %c320_165 = arith.constant 320 : index
    %c0_166 = arith.constant 0 : index
    %163 = vector.load %arg16[%c320_165, %c0_166] : memref<992x128xbf16, #tpu.memory_space<vmem>>, vector<32x128xbf16>
    tpu.vector_store %arg16[%c320_165, %c0_166], %162 {strides = array<i32>} : memref<992x128xbf16, #tpu.memory_space<vmem>>, vector<32x128xbf16>,
    %164 = vector.extract_strided_slice %153 {offsets = [160, 0], sizes = [32, 128], strides = [1, 1]} : vector<448x128xbf16> to vector<32x128xbf16>
    %c384_167 = arith.constant 384 : index
    %c0_168 = arith.constant 0 : index
    %165 = vector.load %arg16[%c384_167, %c0_168] : memref<992x128xbf16, #tpu.memory_space<vmem>>, vector<32x128xbf16>
    tpu.vector_store %arg16[%c384_167, %c0_168], %164 {strides = array<i32>} : memref<992x128xbf16, #tpu.memory_space<vmem>>, vector<32x128xbf16>,
    %166 = vector.extract_strided_slice %153 {offsets = [192, 0], sizes = [32, 128], strides = [1, 1]} : vector<448x128xbf16> to vector<32x128xbf16>
    %c448_169 = arith.constant 448 : index
    %c0_170 = arith.constant 0 : index
    %167 = vector.load %arg16[%c448_169, %c0_170] : memref<992x128xbf16, #tpu.memory_space<vmem>>, vector<32x128xbf16>
    tpu.vector_store %arg16[%c448_169, %c0_170], %166 {strides = array<i32>} : memref<992x128xbf16, #tpu.memory_space<vmem>>, vector<32x128xbf16>,
    %168 = vector.extract_strided_slice %153 {offsets = [224, 0], sizes = [32, 128], strides = [1, 1]} : vector<448x128xbf16> to vector<32x128xbf16>
    %c512 = arith.constant 512 : index
    %c0_171 = arith.constant 0 : index
    %169 = vector.load %arg16[%c512, %c0_171] : memref<992x128xbf16, #tpu.memory_space<vmem>>, vector<32x128xbf16>
    tpu.vector_store %arg16[%c512, %c0_171], %168 {strides = array<i32>} : memref<992x128xbf16, #tpu.memory_space<vmem>>, vector<32x128xbf16>,
    %170 = vector.extract_strided_slice %153 {offsets = [256, 0], sizes = [32, 128], strides = [1, 1]} : vector<448x128xbf16> to vector<32x128xbf16>
    %c576 = arith.constant 576 : index
    %c0_172 = arith.constant 0 : index
    %171 = vector.load %arg16[%c576, %c0_172] : memref<992x128xbf16, #tpu.memory_space<vmem>>, vector<32x128xbf16>
    tpu.vector_store %arg16[%c576, %c0_172], %170 {strides = array<i32>} : memref<992x128xbf16, #tpu.memory_space<vmem>>, vector<32x128xbf16>,
    %172 = vector.extract_strided_slice %153 {offsets = [288, 0], sizes = [32, 128], strides = [1, 1]} : vector<448x128xbf16> to vector<32x128xbf16>
    %c640 = arith.constant 640 : index
    %c0_173 = arith.constant 0 : index
    %173 = vector.load %arg16[%c640, %c0_173] : memref<992x128xbf16, #tpu.memory_space<vmem>>, vector<32x128xbf16>
    tpu.vector_store %arg16[%c640, %c0_173], %172 {strides = array<i32>} : memref<992x128xbf16, #tpu.memory_space<vmem>>, vector<32x128xbf16>,
    %174 = vector.extract_strided_slice %153 {offsets = [320, 0], sizes = [32, 128], strides = [1, 1]} : vector<448x128xbf16> to vector<32x128xbf16>
    %c704 = arith.constant 704 : index
    %c0_174 = arith.constant 0 : index
    %175 = vector.load %arg16[%c704, %c0_174] : memref<992x128xbf16, #tpu.memory_space<vmem>>, vector<32x128xbf16>
    tpu.vector_store %arg16[%c704, %c0_174], %174 {strides = array<i32>} : memref<992x128xbf16, #tpu.memory_space<vmem>>, vector<32x128xbf16>,
    %176 = vector.extract_strided_slice %153 {offsets = [352, 0], sizes = [32, 128], strides = [1, 1]} : vector<448x128xbf16> to vector<32x128xbf16>
    %c768 = arith.constant 768 : index
    %c0_175 = arith.constant 0 : index
    %177 = vector.load %arg16[%c768, %c0_175] : memref<992x128xbf16, #tpu.memory_space<vmem>>, vector<32x128xbf16>
    tpu.vector_store %arg16[%c768, %c0_175], %176 {strides = array<i32>} : memref<992x128xbf16, #tpu.memory_space<vmem>>, vector<32x128xbf16>,
    %178 = vector.extract_strided_slice %153 {offsets = [384, 0], sizes = [32, 128], strides = [1, 1]} : vector<448x128xbf16> to vector<32x128xbf16>
    %c832 = arith.constant 832 : index
    %c0_176 = arith.constant 0 : index
    %179 = vector.load %arg16[%c832, %c0_176] : memref<992x128xbf16, #tpu.memory_space<vmem>>, vector<32x128xbf16>
    tpu.vector_store %arg16[%c832, %c0_176], %178 {strides = array<i32>} : memref<992x128xbf16, #tpu.memory_space<vmem>>, vector<32x128xbf16>,
    %180 = vector.extract_strided_slice %153 {offsets = [416, 0], sizes = [32, 128], strides = [1, 1]} : vector<448x128xbf16> to vector<32x128xbf16>
    %c896 = arith.constant 896 : index
    %c0_177 = arith.constant 0 : index
    %181 = vector.load %arg16[%c896, %c0_177] : memref<992x128xbf16, #tpu.memory_space<vmem>>, vector<32x128xbf16>
    tpu.vector_store %arg16[%c896, %c0_177], %180 {strides = array<i32>} : memref<992x128xbf16, #tpu.memory_space<vmem>>, vector<32x128xbf16>,
    %c0_178 = arith.constant 0 : index
    %c0_179 = arith.constant 0 : index
    %182 = vector.load %arg16[%c0_178, %c0_179] : memref<992x128xbf16, #tpu.memory_space<vmem>>, vector<896x128xbf16>
    %c0_180 = arith.constant 0 : index
    %c0_181 = arith.constant 0 : index
    %c0_182 = arith.constant 0 : index
    %183 = vector.load %arg10[%c0_180, %c0_181, %c0_182] : memref<4x128x28xbf16, #tpu.memory_space<vmem>>, vector<1x128x28xbf16>
    %184 = vector.shape_cast %183 : vector<1x128x28xbf16> to vector<128x28xbf16>
    %cst_183 = arith.constant dense<0.000000e+00> : vector<896x28xf32>
    %185 = tpu.matmul %182, %184, %cst_183 {dimension_numbers = #tpu.dot_dimension_numbers<[1], [0], [0], [1], [0, 0, 1, 1], [], []>} : vector<896x128xbf16>, vector<128x28xbf16>, vector<896x28xf32> -> vector<896x28xf32>
    %c32_184 = arith.constant 32 : index
    %c0_185 = arith.constant 0 : index
    %186 = vector.load %arg16[%c32_184, %c0_185] : memref<992x128xbf16, #tpu.memory_space<vmem>>, vector<896x128xbf16>
    %c1_186 = arith.constant 1 : index
    %c0_187 = arith.constant 0 : index
    %c0_188 = arith.constant 0 : index
    %187 = vector.load %arg10[%c1_186, %c0_187, %c0_188] : memref<4x128x28xbf16, #tpu.memory_space<vmem>>, vector<1x128x28xbf16>
    %188 = vector.shape_cast %187 : vector<1x128x28xbf16> to vector<128x28xbf16>
    %cst_189 = arith.constant dense<0.000000e+00> : vector<896x28xf32>
    %189 = tpu.matmul %186, %188, %cst_189 {dimension_numbers = #tpu.dot_dimension_numbers<[1], [0], [0], [1], [0, 0, 1, 1], [], []>} : vector<896x128xbf16>, vector<128x28xbf16>, vector<896x28xf32> -> vector<896x28xf32>
    %190 = arith.addf %185, %189 : vector<896x28xf32>
    %c64_190 = arith.constant 64 : index
    %c0_191 = arith.constant 0 : index
    %191 = vector.load %arg16[%c64_190, %c0_191] : memref<992x128xbf16, #tpu.memory_space<vmem>>, vector<896x128xbf16>
    %c2_192 = arith.constant 2 : index
    %c0_193 = arith.constant 0 : index
    %c0_194 = arith.constant 0 : index
    %192 = vector.load %arg10[%c2_192, %c0_193, %c0_194] : memref<4x128x28xbf16, #tpu.memory_space<vmem>>, vector<1x128x28xbf16>
    %193 = vector.shape_cast %192 : vector<1x128x28xbf16> to vector<128x28xbf16>
    %cst_195 = arith.constant dense<0.000000e+00> : vector<896x28xf32>
    %194 = tpu.matmul %191, %193, %cst_195 {dimension_numbers = #tpu.dot_dimension_numbers<[1], [0], [0], [1], [0, 0, 1, 1], [], []>} : vector<896x128xbf16>, vector<128x28xbf16>, vector<896x28xf32> -> vector<896x28xf32>
    %195 = arith.addf %190, %194 : vector<896x28xf32>
    %c96_196 = arith.constant 96 : index
    %c0_197 = arith.constant 0 : index
    %196 = vector.load %arg16[%c96_196, %c0_197] : memref<992x128xbf16, #tpu.memory_space<vmem>>, vector<896x128xbf16>
    %c3_198 = arith.constant 3 : index
    %c0_199 = arith.constant 0 : index
    %c0_200 = arith.constant 0 : index
    %197 = vector.load %arg10[%c3_198, %c0_199, %c0_200] : memref<4x128x28xbf16, #tpu.memory_space<vmem>>, vector<1x128x28xbf16>
    %198 = vector.shape_cast %197 : vector<1x128x28xbf16> to vector<128x28xbf16>
    %cst_201 = arith.constant dense<0.000000e+00> : vector<896x28xf32>
    %199 = tpu.matmul %196, %198, %cst_201 {dimension_numbers = #tpu.dot_dimension_numbers<[1], [0], [0], [1], [0, 0, 1, 1], [], []>} : vector<896x128xbf16>, vector<128x28xbf16>, vector<896x28xf32> -> vector<896x28xf32>
    %200 = arith.addf %195, %199 : vector<896x28xf32>
    %c0_202 = arith.constant 0 : index
    %c0_203 = arith.constant 0 : index
    %201 = vector.load %arg11[%c0_202, %c0_203] : memref<1x28xf32, #tpu.memory_space<vmem>>, vector<1x28xf32>
    %202 = vector.broadcast %201 : vector<1x28xf32> to vector<896x28xf32>
    %203 = arith.addf %200, %202 : vector<896x28xf32>
    %c0_204 = arith.constant 0 : index
    %c0_205 = arith.constant 0 : index
    %204 = vector.load %arg12[%c0_204, %c0_205] : memref<896x28xf32, #tpu.memory_space<vmem>>, vector<896x28xf32>
    tpu.vector_store %arg12[%c0_204, %c0_205], %203 {strides = array<i32>} : memref<896x28xf32, #tpu.memory_space<vmem>>, vector<896x28xf32>,
    return
  }
  func.func @transform_0(%arg0: i32) -> (i32, i32) {
    %c0_i32 = arith.constant 0 : i32
    %c0_i32_0 = arith.constant 0 : i32
    return %arg0, %c0_i32 : i32, i32
  }
  func.func @transform_1(%arg0: i32) -> (i32, i32) {
    %c0_i32 = arith.constant 0 : i32
    %c0_i32_0 = arith.constant 0 : i32
    %c0_i32_1 = arith.constant 0 : i32
    return %c0_i32, %c0_i32_0 : i32, i32
  }
  func.func @transform_2(%arg0: i32) -> (i32, i32) {
    %c0_i32 = arith.constant 0 : i32
    %c0_i32_0 = arith.constant 0 : i32
    %c0_i32_1 = arith.constant 0 : i32
    return %c0_i32, %c0_i32_0 : i32, i32
  }
  func.func @transform_3(%arg0: i32) -> (i32, i32, i32) {
    %c0_i32 = arith.constant 0 : i32
    %c0_i32_0 = arith.constant 0 : i32
    %c0_i32_1 = arith.constant 0 : i32
    %c0_i32_2 = arith.constant 0 : i32
    return %c0_i32, %c0_i32_0, %c0_i32_1 : i32, i32, i32
  }
  func.func @transform_4(%arg0: i32) -> (i32, i32) {
    %c0_i32 = arith.constant 0 : i32
    %c0_i32_0 = arith.constant 0 : i32
    %c0_i32_1 = arith.constant 0 : i32
    return %c0_i32, %c0_i32_0 : i32, i32
  }
  func.func @transform_5(%arg0: i32) -> (i32, i32, i32) {
    %c0_i32 = arith.constant 0 : i32
    %c0_i32_0 = arith.constant 0 : i32
    %c0_i32_1 = arith.constant 0 : i32
    %c0_i32_2 = arith.constant 0 : i32
    return %c0_i32, %c0_i32_0, %c0_i32_1 : i32, i32, i32
  }
  func.func @transform_6(%arg0: i32) -> (i32, i32) {
    %c0_i32 = arith.constant 0 : i32
    %c0_i32_0 = arith.constant 0 : i32
    %c0_i32_1 = arith.constant 0 : i32
    return %c0_i32, %c0_i32_0 : i32, i32
  }
  func.func @transform_7(%arg0: i32) -> (i32, i32, i32) {
    %c0_i32 = arith.constant 0 : i32
    %c0_i32_0 = arith.constant 0 : i32
    %c0_i32_1 = arith.constant 0 : i32
    %c0_i32_2 = arith.constant 0 : i32
    return %c0_i32, %c0_i32_0, %c0_i32_1 : i32, i32, i32
  }
  func.func @transform_8(%arg0: i32) -> (i32, i32) {
    %c0_i32 = arith.constant 0 : i32
    %c0_i32_0 = arith.constant 0 : i32
    %c0_i32_1 = arith.constant 0 : i32
    return %c0_i32, %c0_i32_0 : i32, i32
  }
  func.func @transform_9(%arg0: i32) -> (i32, i32, i32) {
    %c0_i32 = arith.constant 0 : i32
    %c0_i32_0 = arith.constant 0 : i32
    %c0_i32_1 = arith.constant 0 : i32
    %c0_i32_2 = arith.constant 0 : i32
    return %c0_i32, %c0_i32_0, %c0_i32_1 : i32, i32, i32
  }
  func.func @transform_10(%arg0: i32) -> (i32, i32) {
    %c0_i32 = arith.constant 0 : i32
    %c0_i32_0 = arith.constant 0 : i32
    %c0_i32_1 = arith.constant 0 : i32
    return %c0_i32, %c0_i32_0 : i32, i32
  }
  func.func @transform_11(%arg0: i32) -> (i32, i32) {
    %c0_i32 = arith.constant 0 : i32
    %c0_i32_0 = arith.constant 0 : i32
    return %arg0, %c0_i32 : i32, i32
  }
}

</mosaic_0001>

<llo_original>
// kernel: decoder2_forward.1
$region0: #{decoder2_forward.1}
  #allocation0 [shape = 'u32[]', space=smem, size = 0x4, offset = 0x4, fixed_abs, tag = 'smem constant byte address 0x4 - core index']
  #allocation1 [shape = 'u32[144,128]{1,0:T(1,128)}', space=vmem, size = 0x12000, scoped, tag = 'internal scratch']
  #allocation2 [shape = 'bf16[288,288]{1,0:T(16,128)(2,1)}', space=vmem, size = 0x36000, scoped, tag = 'scratch operand']
  #allocation3 [shape = 'bf16[288,144]{1,0:T(16,128)(2,1)}', space=vmem, size = 0x24000, scoped, tag = 'scratch operand']
  #allocation4 [shape = 'bf16[544,136]{1,0:T(16,128)(2,1)}', space=vmem, size = 0x44000, scoped, tag = 'scratch operand']
  #allocation5 [shape = 'bf16[992,128]{1,0:T(16,128)(2,1)}', space=vmem, size = 0x3e000, scoped, tag = 'scratch operand']
  %s0 = inlined_call_operand.vmem [shape: f32[64,16], index: 0, kind: input, shape index: {}]
  %s1 = inlined_call_operand.vmem [shape: bf16[16,1920], index: 1, kind: input, shape index: {}]
  %s2 = inlined_call_operand.vmem [shape: f32[1,1920], index: 2, kind: input, shape index: {}]
  %s3 = inlined_call_operand.vmem [shape: bf16[3,288,144], index: 3, kind: input, shape index: {}]
  %s4 = inlined_call_operand.vmem [shape: f32[1,144], index: 4, kind: input, shape index: {}]
  %s5 = inlined_call_operand.vmem [shape: bf16[3,144,136], index: 5, kind: input, shape index: {}]
  %s6 = inlined_call_operand.vmem [shape: f32[1,136], index: 6, kind: input, shape index: {}]
  %s7 = inlined_call_operand.vmem [shape: bf16[4,136,128], index: 7, kind: input, shape index: {}]
  %s8 = inlined_call_operand.vmem [shape: f32[1,128], index: 8, kind: input, shape index: {}]
  %s9 = inlined_call_operand.vmem [shape: bf16[4,128,28], index: 9, kind: input, shape index: {}]
  %s10 = inlined_call_operand.vmem [shape: f32[1,28], index: 10, kind: input, shape index: {}]
  %s11 = inlined_call_operand.vmem [shape: f32[1792,28], index: 11, kind: output, shape index: {}]
  %s12 = sld [smem:[#allocation0]]
  $region77: #{decoder2_forward.1} parent=0
    _
  %s14 = ssub.s32 1, %s12
  %s15 = scalar_select 0, %s14, %s12
  loop: start=0, step=1, limit=4
  $region2: #{decoder2_forward.1} parent=0 // loop_pre_header
    _
  $region3: #{decoder2_forward.1} parent=0 // loop_header
    %s17 = sphi 0, %s21
    %p18 = scmp.ge.s32.totalorder %s17, 4
    %s27 = sphi 0, %s29
    %s30 = sphi 0, %s27
    %s31 = sphi 0, %s30
    %s47 = sphi 0, %s31
    %s51 = sphi 0, %s51
    %s53 = sphi 0, %s51
    %s54 = sphi 0, %s53
    %s68 = sphi 0, %s54
    %s72 = sphi 0, %s72
    %s74 = sphi 0, %s72
    %s75 = sphi 0, %s74
    %s89 = sphi 0, %s75
    %s93 = sphi 0, %s93
    %s95 = sphi 0, %s93
    %s96 = sphi 0, %s95
    %s110 = sphi 0, %s96
    %s114 = sphi 0, %s114
    %s116 = sphi 0, %s114
    %s117 = sphi 0, %s116
    %s131 = sphi 0, %s117
    %s135 = sphi 0, %s135
    %s137 = sphi 0, %s135
    %s138 = sphi 0, %s137
    %s152 = sphi 0, %s138
    %s156 = sphi 0, %s156
    %s158 = sphi 0, %s156
    %s159 = sphi 0, %s158
    %s173 = sphi 0, %s159
    %s177 = sphi 0, %s177
    %s179 = sphi 0, %s177
    %s180 = sphi 0, %s179
    %s194 = sphi 0, %s180
    %s198 = sphi 0, %s198
    %s200 = sphi 0, %s198
    %s201 = sphi 0, %s200
    %s215 = sphi 0, %s201
    %s219 = sphi 0, %s219
    %s221 = sphi 0, %s219
    %s222 = sphi 0, %s221
    %s236 = sphi 0, %s222
    %s240 = sphi 0, %s240
    %s242 = sphi 0, %s240
    %s243 = sphi 0, %s242
    %s257 = sphi 0, %s243
    %s263 = sphi 0, %s265
    %s266 = sphi 0, %s263
    %s267 = sphi 0, %s266
    %s283 = sphi 0, %s267
  $region4: #{decoder2_forward.1} parent=0 // loop_header_branch
    %20 = sbr.rel (%p18) target = $region8
  $region5: #{decoder2_forward.1} parent=0 // loop_body
    %s22 = ssub.s32 %s17, 1
    %s23 = ssub.s32 %s17, 2
    %s24 = sadd.s32 %s17, 1
    %s25 = ssub.s32 %s17, %s24
    %p26 = scmp.eq.s32.totalorder %s25, 0
    %s28 = sadd.s32 %s27, 1
    %s29 = scalar_select %p26, %s27, %s28
    %p32 = pneg %p26
    %p33 = scmp.eq.s32.totalorder %s17, 1
    %p34 = por %p32, %p33
    %p35 = scmp.ne.s32.totalorder %s27, %s30
    %p36 = scmp.eq.s32.totalorder %s17, 0
    %p37 = por %p35, %p36
    %p38 = scmp.ne.s32.totalorder %s27, %s30
    %p39 = scmp.eq.s32.totalorder %s22, 1
    %p40 = por %p38, %p39
    %p41 = scmp.ne.s32.totalorder %s30, %s31
    %p42 = scmp.eq.s32.totalorder %s22, 0
    %p43 = por %p41, %p42
    %p44 = scmp.ne.s32.totalorder %s30, %s31
    %p45 = scmp.eq.s32.totalorder %s23, 1
    %p46 = por %p44, %p45
    %p48 = scmp.ne.s32.totalorder %s31, %s47
    %p49 = scmp.eq.s32.totalorder %s23, 0
    %p50 = por %p48, %p49
    %s52 = sadd.s32 %s51, 1
    %p55 = scmp.eq.s32.totalorder %s17, 1
    %p56 = scmp.ne.s32.totalorder %s51, %s53
    %p57 = scmp.eq.s32.totalorder %s17, 0
    %p58 = por %p56, %p57
    %p59 = scmp.ne.s32.totalorder %s51, %s53
    %p60 = scmp.eq.s32.totalorder %s22, 1
    %p61 = por %p59, %p60
    %p62 = scmp.ne.s32.totalorder %s53, %s54
    %p63 = scmp.eq.s32.totalorder %s22, 0
    %p64 = por %p62, %p63
    %p65 = scmp.ne.s32.totalorder %s53, %s54
    %p66 = scmp.eq.s32.totalorder %s23, 1
    %p67 = por %p65, %p66
    %p69 = scmp.ne.s32.totalorder %s54, %s68
    %p70 = scmp.eq.s32.totalorder %s23, 0
    %p71 = por %p69, %p70
    %s73 = sadd.s32 %s72, 1
    %p76 = scmp.eq.s32.totalorder %s17, 1
    %p77 = scmp.ne.s32.totalorder %s72, %s74
    %p78 = scmp.eq.s32.totalorder %s17, 0
    %p79 = por %p77, %p78
    %p80 = scmp.ne.s32.totalorder %s72, %s74
    %p81 = scmp.eq.s32.totalorder %s22, 1
    %p82 = por %p80, %p81
    %p83 = scmp.ne.s32.totalorder %s74, %s75
    %p84 = scmp.eq.s32.totalorder %s22, 0
    %p85 = por %p83, %p84
    %p86 = scmp.ne.s32.totalorder %s74, %s75
    %p87 = scmp.eq.s32.totalorder %s23, 1
    %p88 = por %p86, %p87
    %p90 = scmp.ne.s32.totalorder %s75, %s89
    %p91 = scmp.eq.s32.totalorder %s23, 0
    %p92 = por %p90, %p91
    %s94 = sadd.s32 %s93, 1
    %p97 = scmp.eq.s32.totalorder %s17, 1
    %p98 = scmp.ne.s32.totalorder %s93, %s95
    %p99 = scmp.eq.s32.totalorder %s17, 0
    %p100 = por %p98, %p99
    %p101 = scmp.ne.s32.totalorder %s93, %s95
    %p102 = scmp.eq.s32.totalorder %s22, 1
    %p103 = por %p101, %p102
    %p104 = scmp.ne.s32.totalorder %s95, %s96
    %p105 = scmp.eq.s32.totalorder %s22, 0
    %p106 = por %p104, %p105
    %p107 = scmp.ne.s32.totalorder %s95, %s96
    %p108 = scmp.eq.s32.totalorder %s23, 1
    %p109 = por %p107, %p108
    %p111 = scmp.ne.s32.totalorder %s96, %s110
    %p112 = scmp.eq.s32.totalorder %s23, 0
    %p113 = por %p111, %p112
    %s115 = sadd.s32 %s114, 1
    %p118 = scmp.eq.s32.totalorder %s17, 1
    %p119 = scmp.ne.s32.totalorder %s114, %s116
    %p120 = scmp.eq.s32.totalorder %s17, 0
    %p121 = por %p119, %p120
    %p122 = scmp.ne.s32.totalorder %s114, %s116
    %p123 = scmp.eq.s32.totalorder %s22, 1
    %p124 = por %p122, %p123
    %p125 = scmp.ne.s32.totalorder %s116, %s117
    %p126 = scmp.eq.s32.totalorder %s22, 0
    %p127 = por %p125, %p126
    %p128 = scmp.ne.s32.totalorder %s116, %s117
    %p129 = scmp.eq.s32.totalorder %s23, 1
    %p130 = por %p128, %p129
    %p132 = scmp.ne.s32.totalorder %s117, %s131
    %p133 = scmp.eq.s32.totalorder %s23, 0
    %p134 = por %p132, %p133
    %s136 = sadd.s32 %s135, 1
    %p139 = scmp.eq.s32.totalorder %s17, 1
    %p140 = scmp.ne.s32.totalorder %s135, %s137
    %p141 = scmp.eq.s32.totalorder %s17, 0
    %p142 = por %p140, %p141
    %p143 = scmp.ne.s32.totalorder %s135, %s137
    %p144 = scmp.eq.s32.totalorder %s22, 1
    %p145 = por %p143, %p144
    %p146 = scmp.ne.s32.totalorder %s137, %s138
    %p147 = scmp.eq.s32.totalorder %s22, 0
    %p148 = por %p146, %p147
    %p149 = scmp.ne.s32.totalorder %s137, %s138
    %p150 = scmp.eq.s32.totalorder %s23, 1
    %p151 = por %p149, %p150
    %p153 = scmp.ne.s32.totalorder %s138, %s152
    %p154 = scmp.eq.s32.totalorder %s23, 0
    %p155 = por %p153, %p154
    %s157 = sadd.s32 %s156, 1
    %p160 = scmp.eq.s32.totalorder %s17, 1
    %p161 = scmp.ne.s32.totalorder %s156, %s158
    %p162 = scmp.eq.s32.totalorder %s17, 0
    %p163 = por %p161, %p162
    %p164 = scmp.ne.s32.totalorder %s156, %s158
    %p165 = scmp.eq.s32.totalorder %s22, 1
    %p166 = por %p164, %p165
    %p167 = scmp.ne.s32.totalorder %s158, %s159
    %p168 = scmp.eq.s32.totalorder %s22, 0
    %p169 = por %p167, %p168
    %p170 = scmp.ne.s32.totalorder %s158, %s159
    %p171 = scmp.eq.s32.totalorder %s23, 1
    %p172 = por %p170, %p171
    %p174 = scmp.ne.s32.totalorder %s159, %s173
    %p175 = scmp.eq.s32.totalorder %s23, 0
    %p176 = por %p174, %p175
    %s178 = sadd.s32 %s177, 1
    %p181 = scmp.eq.s32.totalorder %s17, 1
    %p182 = scmp.ne.s32.totalorder %s177, %s179
    %p183 = scmp.eq.s32.totalorder %s17, 0
    %p184 = por %p182, %p183
    %p185 = scmp.ne.s32.totalorder %s177, %s179
    %p186 = scmp.eq.s32.totalorder %s22, 1
    %p187 = por %p185, %p186
    %p188 = scmp.ne.s32.totalorder %s179, %s180
    %p189 = scmp.eq.s32.totalorder %s22, 0
    %p190 = por %p188, %p189
    %p191 = scmp.ne.s32.totalorder %s179, %s180
    %p192 = scmp.eq.s32.totalorder %s23, 1
    %p193 = por %p191, %p192
    %p195 = scmp.ne.s32.totalorder %s180, %s194
    %p196 = scmp.eq.s32.totalorder %s23, 0
    %p197 = por %p195, %p196
    %s199 = sadd.s32 %s198, 1
    %p202 = scmp.eq.s32.totalorder %s17, 1
    %p203 = scmp.ne.s32.totalorder %s198, %s200
    %p204 = scmp.eq.s32.totalorder %s17, 0
    %p205 = por %p203, %p204
    %p206 = scmp.ne.s32.totalorder %s198, %s200
    %p207 = scmp.eq.s32.totalorder %s22, 1
    %p208 = por %p206, %p207
    %p209 = scmp.ne.s32.totalorder %s200, %s201
    %p210 = scmp.eq.s32.totalorder %s22, 0
    %p211 = por %p209, %p210
    %p212 = scmp.ne.s32.totalorder %s200, %s201
    %p213 = scmp.eq.s32.totalorder %s23, 1
    %p214 = por %p212, %p213
    %p216 = scmp.ne.s32.totalorder %s201, %s215
    %p217 = scmp.eq.s32.totalorder %s23, 0
    %p218 = por %p216, %p217
    %s220 = sadd.s32 %s219, 1
    %p223 = scmp.eq.s32.totalorder %s17, 1
    %p224 = scmp.ne.s32.totalorder %s219, %s221
    %p225 = scmp.eq.s32.totalorder %s17, 0
    %p226 = por %p224, %p225
    %p227 = scmp.ne.s32.totalorder %s219, %s221
    %p228 = scmp.eq.s32.totalorder %s22, 1
    %p229 = por %p227, %p228
    %p230 = scmp.ne.s32.totalorder %s221, %s222
    %p231 = scmp.eq.s32.totalorder %s22, 0
    %p232 = por %p230, %p231
    %p233 = scmp.ne.s32.totalorder %s221, %s222
    %p234 = scmp.eq.s32.totalorder %s23, 1
    %p235 = por %p233, %p234
    %p237 = scmp.ne.s32.totalorder %s222, %s236
    %p238 = scmp.eq.s32.totalorder %s23, 0
    %p239 = por %p237, %p238
    %s241 = sadd.s32 %s240, 1
    %p244 = scmp.eq.s32.totalorder %s17, 1
    %p245 = scmp.ne.s32.totalorder %s240, %s242
    %p246 = scmp.eq.s32.totalorder %s17, 0
    %p247 = por %p245, %p246
    %p248 = scmp.ne.s32.totalorder %s240, %s242
    %p249 = scmp.eq.s32.totalorder %s22, 1
    %p250 = por %p248, %p249
    %p251 = scmp.ne.s32.totalorder %s242, %s243
    %p252 = scmp.eq.s32.totalorder %s22, 0
    %p253 = por %p251, %p252
    %p254 = scmp.ne.s32.totalorder %s242, %s243
    %p255 = scmp.eq.s32.totalorder %s23, 1
    %p256 = por %p254, %p255
    %p258 = scmp.ne.s32.totalorder %s243, %s257
    %p259 = scmp.eq.s32.totalorder %s23, 0
    %p260 = por %p258, %p259
    %s261 = ssub.s32 %s17, %s24
    %p262 = scmp.eq.s32.totalorder %s261, 0
    %s264 = sadd.s32 %s263, 1
    %s265 = scalar_select %p262, %s263, %s264
    %p268 = pneg %p262
    %p269 = scmp.eq.s32.totalorder %s17, 1
    %p270 = por %p268, %p269
    %p271 = scmp.ne.s32.totalorder %s263, %s266
    %p272 = scmp.eq.s32.totalorder %s17, 0
    %p273 = por %p271, %p272
    %p274 = scmp.ne.s32.totalorder %s263, %s266
    %p275 = scmp.eq.s32.totalorder %s22, 1
    %p276 = por %p274, %p275
    %p277 = scmp.ne.s32.totalorder %s266, %s267
    %p278 = scmp.eq.s32.totalorder %s22, 0
    %p279 = por %p277, %p278
    %p280 = scmp.ne.s32.totalorder %s266, %s267
    %p281 = scmp.eq.s32.totalorder %s23, 1
    %p282 = por %p280, %p281
    %p284 = scmp.ne.s32.totalorder %s267, %s283
    %p285 = scmp.eq.s32.totalorder %s23, 0
    %p286 = por %p284, %p285
    %p287 = scmp.le.s32.totalorder 1, %s17
    %p288 = scmp.lt.s32.totalorder %s17, 3
    %p289 = pnand %p287, %p288
    %p290 = pneg %p289
    // Predicated region
    $region9: #{decoder2_forward.1} parent=5 // pred_check
      _
    $region10: #{decoder2_forward.1} parent=5 // pred_check_branch
      %292 = sbr.rel (%p289) target = $region12
    $region11: #{decoder2_forward.1} parent=5 // pred_region
      %s293 = ssub.s32 %s17, 1
      // Predicated region
      $region13: #{decoder2_forward.1} parent=11 // pred_check
        %p294 = pneg %p64
      $region14: #{decoder2_forward.1} parent=11 // pred_check_branch
        %296 = sbr.rel (%p294) target = $region16
      $region15: #{decoder2_forward.1} parent=11 // pred_region
        _
      $region16: #{decoder2_forward.1} parent=11 // pred_fallthru
        _
      // Predicated region
      $region17: #{decoder2_forward.1} parent=11 // pred_check
        %p297 = pneg %p85
      $region18: #{decoder2_forward.1} parent=11 // pred_check_branch
        %299 = sbr.rel (%p297) target = $region20
      $region19: #{decoder2_forward.1} parent=11 // pred_region
        _
      $region20: #{decoder2_forward.1} parent=11 // pred_fallthru
        _
      // Predicated region
      $region21: #{decoder2_forward.1} parent=11 // pred_check
        %p300 = pneg %p106
      $region22: #{decoder2_forward.1} parent=11 // pred_check_branch
        %302 = sbr.rel (%p300) target = $region24
      $region23: #{decoder2_forward.1} parent=11 // pred_region
        _
      $region24: #{decoder2_forward.1} parent=11 // pred_fallthru
        _
      // Predicated region
      $region25: #{decoder2_forward.1} parent=11 // pred_check
        %p303 = pneg %p127
      $region26: #{decoder2_forward.1} parent=11 // pred_check_branch
        %305 = sbr.rel (%p303) target = $region28
      $region27: #{decoder2_forward.1} parent=11 // pred_region
        _
      $region28: #{decoder2_forward.1} parent=11 // pred_fallthru
        _
      // Predicated region
      $region29: #{decoder2_forward.1} parent=11 // pred_check
        %p306 = pneg %p148
      $region30: #{decoder2_forward.1} parent=11 // pred_check_branch
        %308 = sbr.rel (%p306) target = $region32
      $region31: #{decoder2_forward.1} parent=11 // pred_region
        _
      $region32: #{decoder2_forward.1} parent=11 // pred_fallthru
        _
      // Predicated region
      $region33: #{decoder2_forward.1} parent=11 // pred_check
        %p309 = pneg %p169
      $region34: #{decoder2_forward.1} parent=11 // pred_check_branch
        %311 = sbr.rel (%p309) target = $region36
      $region35: #{decoder2_forward.1} parent=11 // pred_region
        _
      $region36: #{decoder2_forward.1} parent=11 // pred_fallthru
        _
      // Predicated region
      $region37: #{decoder2_forward.1} parent=11 // pred_check
        %p312 = pneg %p190
      $region38: #{decoder2_forward.1} parent=11 // pred_check_branch
        %314 = sbr.rel (%p312) target = $region40
      $region39: #{decoder2_forward.1} parent=11 // pred_region
        _
      $region40: #{decoder2_forward.1} parent=11 // pred_fallthru
        _
      // Predicated region
      $region41: #{decoder2_forward.1} parent=11 // pred_check
        %p315 = pneg %p211
      $region42: #{decoder2_forward.1} parent=11 // pred_check_branch
        %317 = sbr.rel (%p315) target = $region44
      $region43: #{decoder2_forward.1} parent=11 // pred_region
        _
      $region44: #{decoder2_forward.1} parent=11 // pred_fallthru
        _
      // Predicated region
      $region45: #{decoder2_forward.1} parent=11 // pred_check
        %p318 = pneg %p232
      $region46: #{decoder2_forward.1} parent=11 // pred_check_branch
        %320 = sbr.rel (%p318) target = $region48
      $region47: #{decoder2_forward.1} parent=11 // pred_region
        _
      $region48: #{decoder2_forward.1} parent=11 // pred_fallthru
        _
      // Predicated region
      $region49: #{decoder2_forward.1} parent=11 // pred_check
        %p321 = pneg %p253
      $region50: #{decoder2_forward.1} parent=11 // pred_check_branch
        %323 = sbr.rel (%p321) target = $region52
      $region51: #{decoder2_forward.1} parent=11 // pred_region
        _
      $region52: #{decoder2_forward.1} parent=11 // pred_fallthru
        _
    $region12: #{decoder2_forward.1} parent=5 // pred_fallthru
      _
    %p324 = scmp.lt.s32.totalorder %s17, 2
    // Predicated region
    $region53: #{decoder2_forward.1} parent=5 // pred_check
      %p325 = pneg %p324
    $region54: #{decoder2_forward.1} parent=5 // pred_check_branch
      %327 = sbr.rel (%p325) target = $region56
    $region55: #{decoder2_forward.1} parent=5 // pred_region
      // Predicated region
      $region57: #{decoder2_forward.1} parent=55 // pred_check
        %p328 = pneg %p37
      $region58: #{decoder2_forward.1} parent=55 // pred_check_branch
        %330 = sbr.rel (%p328) target = $region60
      $region59: #{decoder2_forward.1} parent=55 // pred_region
        %s331 = smul.u32 4, %s17
        %p332 = scmp.lt.s32.totalorder %s331, 7
        %s333 = scalar_select %p332, %s331, 7
        %s334 = smul.addr %s333, 8
        %s335 = scalar_lea.vmem %s0, %s334
        %s336 = smul.u32 4, %s17
      $region60: #{decoder2_forward.1} parent=55 // pred_fallthru
        _
    $region56: #{decoder2_forward.1} parent=5 // pred_fallthru
      _
    %p337 = scmp.le.s32.totalorder 1, %s17
    %p338 = scmp.lt.s32.totalorder %s17, 3
    %p339 = pnand %p337, %p338
    %p340 = pneg %p339
    // Predicated region
    $region61: #{decoder2_forward.1} parent=5 // pred_check
      _
    $region62: #{decoder2_forward.1} parent=5 // pred_check_branch
      %342 = sbr.rel (%p339) target = $region64
    $region63: #{decoder2_forward.1} parent=5 // pred_region
      %s343 = ssub.s32 %s17, 1
      %s344 = smul.u32 4, %s22
      %p345 = scmp.lt.s32.totalorder %s344, 7
      %s346 = scalar_select %p345, %s344, 7
      %s347 = smul.addr %s346, 8
      %s348 = scalar_lea.vmem %s0, %s347
      %p349 = pneg %p43
      %p350 = pneg %p40
      %p351 = pneg %p64
      %p352 = pneg %p61
      %p353 = pneg %p85
      %p354 = pneg %p82
      %p355 = pneg %p106
      %p356 = pneg %p103
      %p357 = pneg %p127
      %p358 = pneg %p124
      %p359 = pneg %p148
      %p360 = pneg %p145
      %p361 = pneg %p169
      %p362 = pneg %p166
      %p363 = pneg %p190
      %p364 = pneg %p187
      %p365 = pneg %p211
      %p366 = pneg %p208
      %p367 = pneg %p232
      %p368 = pneg %p229
      %p369 = pneg %p253
      %p370 = pneg %p250
      %p371 = pneg %p279
      %p372 = pneg %p276
      %s373 = smul.u32 112, %s22
      %p374 = scmp.lt.s32.totalorder %s373, 223
      %s375 = scalar_select %p374, %s373, 223
      %s376 = smul.addr %s375, 8
      %s377 = scalar_lea.vmem %s11, %s376
      %s378 = smul.u32 4, %s22
      %p379 = scmp.lt.s32.totalorder %s378, 7
      %s380 = scalar_select %p379, %s378, 7
      %s381 = smul.addr %s380, 8
      %s382 = scalar_lea.vmem %s0, %s381
      %s383 = smul.u32 4, %s22
      %s384 = smul.u32 112, %s22
      %p385 = scmp.lt.s32.totalorder %s384, 223
      %s386 = scalar_select %p385, %s384, 223
      %s387 = smul.addr %s386, 8
      %s388 = scalar_lea.vmem %s11, %s387
      %s389 = smul.u32 112, %s22
      %391 = vst [vmem:[#allocation2] sm:$0xff] 0
      %392 = vst [vmem:[#allocation2 + $0x8] sm:$0xff] 0
      %vm393 = vcmask 261120
      %394 = vst.msk [vmem:[#allocation2 + $0x10] sm:$0xff] %vm393, 0
      %395 = vst [vmem:[#allocation2 + $0x18] sm:$0xff] 0
      %396 = vst [vmem:[#allocation2 + $0x20] sm:$0xff] 0
      %397 = vst.msk [vmem:[#allocation2 + $0x28] sm:$0xff] %vm393, 0
      %398 = vst [vmem:[#allocation2 + $0x30] sm:$0xff] 0
      %399 = vst [vmem:[#allocation2 + $0x38] sm:$0xff] 0
      %400 = vst.msk [vmem:[#allocation2 + $0x40] sm:$0xff] %vm393, 0
      %401 = vst [vmem:[#allocation2 + $0x48] sm:$0xff] 0
      %402 = vst [vmem:[#allocation2 + $0x50] sm:$0xff] 0
      %403 = vst.msk [vmem:[#allocation2 + $0x58] sm:$0xff] %vm393, 0
      %404 = vst [vmem:[#allocation2 + $0x150] sm:$0xff] 0
      %405 = vst [vmem:[#allocation2 + $0x158] sm:$0xff] 0
      %406 = vst.msk [vmem:[#allocation2 + $0x160] sm:$0xff] %vm393, 0
      %407 = vst [vmem:[#allocation2 + $0x168] sm:$0xff] 0
      %408 = vst [vmem:[#allocation2 + $0x170] sm:$0xff] 0
      %409 = vst.msk [vmem:[#allocation2 + $0x178] sm:$0xff] %vm393, 0
      %410 = vst [vmem:[#allocation2 + $0x180] sm:$0xff] 0
      %411 = vst [vmem:[#allocation2 + $0x188] sm:$0xff] 0
      %412 = vst.msk [vmem:[#allocation2 + $0x190] sm:$0xff] %vm393, 0
      %413 = vst [vmem:[#allocation2 + $0x198] sm:$0xff] 0
      %414 = vst [vmem:[#allocation2 + $0x1a0] sm:$0xff] 0
      %415 = vst.msk [vmem:[#allocation2 + $0x1a8] sm:$0xff] %vm393, 0
      %416 = vst [vmem:[#allocation3] sm:$0xff] 0
      %vm417 = vcmask 130048
      %418 = vst.msk [vmem:[#allocation3 + $0x8] sm:$0xff] %vm417, 0
      %419 = vst [vmem:[#allocation3 + $0x10] sm:$0xff] 0
      %420 = vst.msk [vmem:[#allocation3 + $0x18] sm:$0xff] %vm417, 0
      %421 = vst [vmem:[#allocation3 + $0x100] sm:$0xff] 0
      %422 = vst.msk [vmem:[#allocation3 + $0x108] sm:$0xff] %vm417, 0
      %423 = vst [vmem:[#allocation3 + $0x110] sm:$0xff] 0
      %424 = vst.msk [vmem:[#allocation3 + $0x118] sm:$0xff] %vm417, 0
      %425 = vst [vmem:[#allocation4] sm:$0xff] 0
      %vm426 = vcmask 64512
      %427 = vst.msk [vmem:[#allocation4 + $0x8] sm:$0xff] %vm426, 0
      %428 = vst [vmem:[#allocation4 + $0x10] sm:$0xff] 0
      %429 = vst.msk [vmem:[#allocation4 + $0x18] sm:$0xff] %vm426, 0
      %430 = vst [vmem:[#allocation4 + $0x20] sm:$0xff] 0
      %431 = vst.msk [vmem:[#allocation4 + $0x28] sm:$0xff] %vm426, 0
      %432 = vst [vmem:[#allocation4 + $0x30] sm:$0xff] 0
      %433 = vst.msk [vmem:[#allocation4 + $0x38] sm:$0xff] %vm426, 0
      %434 = vst [vmem:[#allocation4 + $0x60] sm:$0xff] 0
      %435 = vst.msk [vmem:[#allocation4 + $0x68] sm:$0xff] %vm426, 0
      %436 = vst [vmem:[#allocation4 + $0x70] sm:$0xff] 0
      %437 = vst.msk [vmem:[#allocation4 + $0x78] sm:$0xff] %vm426, 0
      %438 = vst [vmem:[#allocation4 + $0xa0] sm:$0xff] 0
      %439 = vst.msk [vmem:[#allocation4 + $0xa8] sm:$0xff] %vm426, 0
      %440 = vst [vmem:[#allocation4 + $0xb0] sm:$0xff] 0
      %441 = vst.msk [vmem:[#allocation4 + $0xb8] sm:$0xff] %vm426, 0
      %442 = vst [vmem:[#allocation4 + $0xe0] sm:$0xff] 0
      %443 = vst.msk [vmem:[#allocation4 + $0xe8] sm:$0xff] %vm426, 0
      %444 = vst [vmem:[#allocation4 + $0xf0] sm:$0xff] 0
      %445 = vst.msk [vmem:[#allocation4 + $0xf8] sm:$0xff] %vm426, 0
      %446 = vst [vmem:[#allocation4 + $0x120] sm:$0xff] 0
      %447 = vst.msk [vmem:[#allocation4 + $0x128] sm:$0xff] %vm426, 0
      %448 = vst [vmem:[#allocation4 + $0x130] sm:$0xff] 0
      %449 = vst.msk [vmem:[#allocation4 + $0x138] sm:$0xff] %vm426, 0
      %450 = vst [vmem:[#allocation4 + $0x160] sm:$0xff] 0
      %451 = vst.msk [vmem:[#allocation4 + $0x168] sm:$0xff] %vm426, 0
      %452 = vst [vmem:[#allocation4 + $0x170] sm:$0xff] 0
      %453 = vst.msk [vmem:[#allocation4 + $0x178] sm:$0xff] %vm426, 0
      %454 = vst [vmem:[#allocation4 + $0x1a0] sm:$0xff] 0
      %455 = vst.msk [vmem:[#allocation4 + $0x1a8] sm:$0xff] %vm426, 0
      %456 = vst [vmem:[#allocation4 + $0x1b0] sm:$0xff] 0
      %457 = vst.msk [vmem:[#allocation4 + $0x1b8] sm:$0xff] %vm426, 0
      %458 = vst [vmem:[#allocation4 + $0x1e0] sm:$0xff] 0
      %459 = vst.msk [vmem:[#allocation4 + $0x1e8] sm:$0xff] %vm426, 0
      %460 = vst [vmem:[#allocation4 + $0x1f0] sm:$0xff] 0
      %461 = vst.msk [vmem:[#allocation4 + $0x1f8] sm:$0xff] %vm426, 0
      %462 = vst [vmem:[#allocation4 + $0x200] sm:$0xff] 0
      %463 = vst.msk [vmem:[#allocation4 + $0x208] sm:$0xff] %vm426, 0
      %464 = vst [vmem:[#allocation4 + $0x210] sm:$0xff] 0
      %465 = vst.msk [vmem:[#allocation4 + $0x218] sm:$0xff] %vm426, 0
      %466 = vst [vmem:[#allocation5] sm:$0xff] 0
      %467 = vst [vmem:[#allocation5 + $0x8] sm:$0xff] 0
      %468 = vst [vmem:[#allocation5 + $0x10] sm:$0xff] 0
      %469 = vst [vmem:[#allocation5 + $0x18] sm:$0xff] 0
      %470 = vst [vmem:[#allocation5 + $0x30] sm:$0xff] 0
      %471 = vst [vmem:[#allocation5 + $0x38] sm:$0xff] 0
      %472 = vst [vmem:[#allocation5 + $0x50] sm:$0xff] 0
      %473 = vst [vmem:[#allocation5 + $0x58] sm:$0xff] 0
      %474 = vst [vmem:[#allocation5 + $0x70] sm:$0xff] 0
      %475 = vst [vmem:[#allocation5 + $0x78] sm:$0xff] 0
      %476 = vst [vmem:[#allocation5 + $0x90] sm:$0xff] 0
      %477 = vst [vmem:[#allocation5 + $0x98] sm:$0xff] 0
      %478 = vst [vmem:[#allocation5 + $0xb0] sm:$0xff] 0
      %479 = vst [vmem:[#allocation5 + $0xb8] sm:$0xff] 0
      %480 = vst [vmem:[#allocation5 + $0xd0] sm:$0xff] 0
      %481 = vst [vmem:[#allocation5 + $0xd8] sm:$0xff] 0
      %482 = vst [vmem:[#allocation5 + $0xf0] sm:$0xff] 0
      %483 = vst [vmem:[#allocation5 + $0xf8] sm:$0xff] 0
      %484 = vst [vmem:[#allocation5 + $0x110] sm:$0xff] 0
      %485 = vst [vmem:[#allocation5 + $0x118] sm:$0xff] 0
      %486 = vst [vmem:[#allocation5 + $0x130] sm:$0xff] 0
      %487 = vst [vmem:[#allocation5 + $0x138] sm:$0xff] 0
      %488 = vst [vmem:[#allocation5 + $0x150] sm:$0xff] 0
      %489 = vst [vmem:[#allocation5 + $0x158] sm:$0xff] 0
      %490 = vst [vmem:[#allocation5 + $0x170] sm:$0xff] 0
      %491 = vst [vmem:[#allocation5 + $0x178] sm:$0xff] 0
      %492 = vst [vmem:[#allocation5 + $0x190] sm:$0xff] 0
      %493 = vst [vmem:[#allocation5 + $0x198] sm:$0xff] 0
      %494 = vst [vmem:[#allocation5 + $0x1b0] sm:$0xff] 0
      %495 = vst [vmem:[#allocation5 + $0x1b8] sm:$0xff] 0
      %496 = vst [vmem:[#allocation5 + $0x1d0] sm:$0xff] 0
      %497 = vst [vmem:[#allocation5 + $0x1d8] sm:$0xff] 0
      %498 = vst [vmem:[#allocation5 + $0x1e0] sm:$0xff] 0
      %499 = vst [vmem:[#allocation5 + $0x1e8] sm:$0xff] 0
      %v500 = vld [vmem:[%s382] sm:$0xff]
      %v501 = vld [vmem:[%s382 + $0x8] sm:$0xff]
      %v502 = vld [vmem:[%s382 + $0x10] sm:$0xff]
      %v503 = vld [vmem:[%s382 + $0x18] sm:$0xff]
      %v504 = vpack.c.bf16 %v501, %v500
      %v505 = vpack.c.bf16 %v503, %v502
      %v506 = vld [vmem:[%s1] sm:$0xff]
      %v507 = vld [vmem:[%s1 + $0x8] sm:$0xff]
      %v508 = vld [vmem:[%s1 + $0x10] sm:$0xff]
      %v509 = vld [vmem:[%s1 + $0x18] sm:$0xff]
      %v510 = vld [vmem:[%s1 + $0x20] sm:$0xff]
      %v511 = vld [vmem:[%s1 + $0x28] sm:$0xff]
      %v512 = vld [vmem:[%s1 + $0x30] sm:$0xff]
      %v513 = vld [vmem:[%s1 + $0x38] sm:$0xf]
      %v514 = vld [vmem:[%s1 + $0x3c] sm:$0xff]
      %v515 = vld [vmem:[%s1 + $0x44] sm:$0xff]
      %v516 = vld [vmem:[%s1 + $0x4c] sm:$0xff]
      %v517 = vld [vmem:[%s1 + $0x54] sm:$0xff]
      %v518 = vld [vmem:[%s1 + $0x5c] sm:$0xff]
      %v519 = vld [vmem:[%s1 + $0x64] sm:$0xff]
      %v520 = vld [vmem:[%s1 + $0x6c] sm:$0xff]
      %v521 = vld [vmem:[%s1 + $0x74] sm:$0xf]
      %v522 = vld [vmem:[%s2] sm:$0xff]
      %v523 = vld [vmem:[%s2 + $0x8] sm:$0xff]
      %v526 = vlaneseq
      %v527 = vshrl.u32 %v526, 7
      %v528 = vsub.s32 0, %v527
      %v529 = vrot.slane %v522, %v528
      %v530 = vlaneseq
      %v531 = vshrl.u32 %v530, 7
      %v532 = vsub.s32 1, %v531
      %v533 = vrot.slane %v522, %v532
      %v534 = vlaneseq
      %v535 = vshrl.u32 %v534, 7
      %v536 = vsub.s32 2, %v535
      %v537 = vrot.slane %v522, %v536
      %v538 = vlaneseq
      %v539 = vshrl.u32 %v538, 7
      %v540 = vsub.s32 3, %v539
      %v541 = vrot.slane %v522, %v540
      %v542 = vlaneseq
      %v543 = vshrl.u32 %v542, 7
      %v544 = vsub.s32 4, %v543
      %v545 = vrot.slane %v522, %v544
      %v546 = vlaneseq
      %v547 = vshrl.u32 %v546, 7
      %v548 = vsub.s32 5, %v547
      %v549 = vrot.slane %v522, %v548
      %v550 = vlaneseq
      %v551 = vshrl.u32 %v550, 7
      %v552 = vsub.s32 6, %v551
      %v553 = vrot.slane %v522, %v552
      %v554 = vlaneseq
      %v555 = vshrl.u32 %v554, 7
      %v556 = vsub.s32 7, %v555
      %v557 = vrot.slane %v522, %v556
      %v558 = vlaneseq
      %v559 = vshrl.u32 %v558, 7
      %v560 = vsub.s32 0, %v559
      %v561 = vrot.slane %v523, %v560
      %v562 = vlaneseq
      %v563 = vshrl.u32 %v562, 7
      %v564 = vsub.s32 1, %v563
      %v565 = vrot.slane %v523, %v564
      %v566 = vlaneseq
      %v567 = vshrl.u32 %v566, 7
      %v568 = vsub.s32 2, %v567
      %v569 = vrot.slane %v523, %v568
      %v570 = vlaneseq
      %v571 = vshrl.u32 %v570, 7
      %v572 = vsub.s32 3, %v571
      %v573 = vrot.slane %v523, %v572
      %v574 = vlaneseq
      %v575 = vshrl.u32 %v574, 7
      %v576 = vsub.s32 4, %v575
      %v577 = vrot.slane %v523, %v576
      %v578 = vlaneseq
      %v579 = vshrl.u32 %v578, 7
      %v580 = vsub.s32 5, %v579
      %v581 = vrot.slane %v523, %v580
      %v582 = vlaneseq
      %v583 = vshrl.u32 %v582, 7
      %v584 = vsub.s32 6, %v583
      %v585 = vrot.slane %v523, %v584
      %v617 = vunpack.c.l.b16 %v506
      %v618 = vunpack.c.h.b16 %v506
      %v619 = vunpack.c.l.b16 %v507
      %v620 = vunpack.c.h.b16 %v507
      %v621 = vunpack.c.l.b16 %v508
      %v622 = vunpack.c.h.b16 %v508
      %v623 = vunpack.c.l.b16 %v509
      %v624 = vunpack.c.h.b16 %v509
      %v625 = vunpack.c.l.b16 %v510
      %v626 = vunpack.c.h.b16 %v510
      %v627 = vunpack.c.l.b16 %v511
      %v628 = vunpack.c.h.b16 %v511
      %v629 = vunpack.c.l.b16 %v512
      %v630 = vunpack.c.h.b16 %v512
      %v631 = vunpack.c.l.b16 %v513
      %v632 = vunpack.c.l.b16 %v514
      %v633 = vunpack.c.h.b16 %v514
      %v634 = vunpack.c.l.b16 %v515
      %v635 = vunpack.c.h.b16 %v515
      %v636 = vunpack.c.l.b16 %v516
      %v637 = vunpack.c.h.b16 %v516
      %v638 = vunpack.c.l.b16 %v517
      %v639 = vunpack.c.h.b16 %v517
      %v640 = vunpack.c.l.b16 %v518
      %v641 = vunpack.c.h.b16 %v518
      %v642 = vunpack.c.l.b16 %v519
      %v643 = vunpack.c.h.b16 %v519
      %v644 = vunpack.c.l.b16 %v520
      %v645 = vunpack.c.h.b16 %v520
      %v646 = vunpack.c.l.b16 %v521
      %v647 = vpack.c.b16 %v632, %v617
      %v648 = vpack.c.b16 %v633, %v618
      %v649 = vpack.c.b16 %v634, %v619
      %v650 = vpack.c.b16 %v635, %v620
      %v651 = vpack.c.b16 %v636, %v621
      %v652 = vpack.c.b16 %v637, %v622
      %v653 = vpack.c.b16 %v638, %v623
      %v654 = vpack.c.b16 %v639, %v624
      %v655 = vpack.c.b16 %v640, %v625
      %v656 = vpack.c.b16 %v641, %v626
      %v657 = vpack.c.b16 %v642, %v627
      %v658 = vpack.c.b16 %v643, %v628
      %v659 = vpack.c.b16 %v644, %v629
      %v660 = vpack.c.b16 %v645, %v630
      %v661 = vpack.c.b16 %v646, %v631
      %v678 = vsel %vm417, %v504, 0
      %v681 = vsel %vm417, %v505, 0
      %683 = vmatprep.subr.bf16.mxu0 %v648
      %684 = vmatpush1.bf16.msra.mxu0 %v647
      %685 = vmatprep.subr.bf16.mxu0 0
      %686 = vmatpush1.bf16.msra.mxu0 0
      %687 = vmatprep.subr.bf16.mxu0 0
      %688 = vmatpush1.bf16.msra.mxu0 0
      %689 = vmatprep.subr.bf16.mxu0 0
      %690 = vmatpush1.bf16.msra.mxu0 0
      %691 = vmatprep.subr.bf16.mxu0 0
      %692 = vmatpush1.bf16.msra.mxu0 0
      %693 = vmatprep.subr.bf16.mxu0 0
      %694 = vmatpush1.bf16.msra.mxu0 0
      %695 = vmatprep.subr.bf16.mxu0 0
      %696 = vmatpush1.bf16.msra.mxu0 0
      %697 = vmatprep.subr.bf16.mxu0 0
      %698 = vmatpush1.bf16.msra.mxu0 0
      %699 = vmatprep.subr.bf16.mxu0 0
      %700 = vmatpush1.bf16.msra.mxu0 0
      %701 = vmatprep.subr.bf16.mxu0 0
      %702 = vmatpush1.bf16.msra.mxu0 0
      %703 = vmatprep.subr.bf16.mxu0 0
      %704 = vmatpush1.bf16.msra.mxu0 0
      %705 = vmatprep.subr.bf16.mxu0 0
      %706 = vmatpush1.bf16.msra.mxu0 0
      %707 = vmatprep.subr.bf16.mxu0 0
      %708 = vmatpush1.bf16.msra.mxu0 0
      %709 = vmatprep.subr.bf16.mxu0 0
      %710 = vmatpush1.bf16.msra.mxu0 0
      %711 = vmatprep.subr.bf16.mxu0 0
      %712 = vmatpush1.bf16.msra.mxu0 0
      %713 = vmatprep.subr.bf16.mxu0 0
      %714 = vmatpush1.bf16.msra.mxu0 0
      %715 = vmatprep.mubr.bf16.mxu0 0
      %716 = vmatmul.mubr.bf16.gmra.mrb[0].mxu0 %v678
      %v717 = vpop.f32.mrb[0].mxu0
      %v718 = vadd.f32 %v529, %v717
      %v719 = vpop.f32.mrb[0].mxu0
      %v720 = vadd.f32 %v533, %v719
      %v721 = vpop.f32.mrb[0].mxu0
      %v722 = vadd.f32 %v529, %v721
      %v723 = vpop.f32.mrb[0].mxu0
      %v724 = vadd.f32 %v533, %v723
      %725 = vmatprep.mubr.bf16.mxu0 0
      %726 = vmatmul.mubr.bf16.gmra.mrb[0].mxu0 %v681
      %v727 = vpop.f32.mrb[0].mxu0
      %v728 = vadd.f32 %v529, %v727
      %v729 = vpop.f32.mrb[0].mxu0
      %v730 = vadd.f32 %v533, %v729
      %v731 = vpop.f32.mrb[0].mxu0
      %v732 = vadd.f32 %v529, %v731
      %v733 = vpop.f32.mrb[0].mxu0
      %v734 = vadd.f32 %v533, %v733
      %735 = vdwg.mxu0
      %736 = vmatprep.subr.bf16.mxu0 %v650
      %737 = vmatpush1.bf16.msra.mxu0 %v649
      %738 = vmatprep.subr.bf16.mxu0 0
      %739 = vmatpush1.bf16.msra.mxu0 0
      %740 = vmatprep.subr.bf16.mxu0 0
      %741 = vmatpush1.bf16.msra.mxu0 0
      %742 = vmatprep.subr.bf16.mxu0 0
      %743 = vmatpush1.bf16.msra.mxu0 0
      %744 = vmatprep.subr.bf16.mxu0 0
      %745 = vmatpush1.bf16.msra.mxu0 0
      %746 = vmatprep.subr.bf16.mxu0 0
      %747 = vmatpush1.bf16.msra.mxu0 0
      %748 = vmatprep.subr.bf16.mxu0 0
      %749 = vmatpush1.bf16.msra.mxu0 0
      %750 = vmatprep.subr.bf16.mxu0 0
      %751 = vmatpush1.bf16.msra.mxu0 0
      %752 = vmatprep.subr.bf16.mxu0 0
      %753 = vmatpush1.bf16.msra.mxu0 0
      %754 = vmatprep.subr.bf16.mxu0 0
      %755 = vmatpush1.bf16.msra.mxu0 0
      %756 = vmatprep.subr.bf16.mxu0 0
      %757 = vmatpush1.bf16.msra.mxu0 0
      %758 = vmatprep.subr.bf16.mxu0 0
      %759 = vmatpush1.bf16.msra.mxu0 0
      %760 = vmatprep.subr.bf16.mxu0 0
      %761 = vmatpush1.bf16.msra.mxu0 0
      %762 = vmatprep.subr.bf16.mxu0 0
      %763 = vmatpush1.bf16.msra.mxu0 0
      %764 = vmatprep.subr.bf16.mxu0 0
      %765 = vmatpush1.bf16.msra.mxu0 0
      %766 = vmatprep.subr.bf16.mxu0 0
      %767 = vmatpush1.bf16.msra.mxu0 0
      %768 = vmatprep.mubr.bf16.mxu0 0
      %769 = vmatmul.mubr.bf16.gmra.mrb[0].mxu0 %v678
      %v770 = vpop.f32.mrb[0].mxu0
      %v771 = vadd.f32 %v537, %v770
      %v772 = vpop.f32.mrb[0].mxu0
      %v773 = vadd.f32 %v541, %v772
      %v774 = vpop.f32.mrb[0].mxu0
      %v775 = vadd.f32 %v537, %v774
      %v776 = vpop.f32.mrb[0].mxu0
      %v777 = vadd.f32 %v541, %v776
      %778 = vmatprep.mubr.bf16.mxu0 0
      %779 = vmatmul.mubr.bf16.gmra.mrb[0].mxu0 %v681
      %v780 = vpop.f32.mrb[0].mxu0
      %v781 = vadd.f32 %v537, %v780
      %v782 = vpop.f32.mrb[0].mxu0
      %v783 = vadd.f32 %v541, %v782
      %v784 = vpop.f32.mrb[0].mxu0
      %v785 = vadd.f32 %v537, %v784
      %v786 = vpop.f32.mrb[0].mxu0
      %v787 = vadd.f32 %v541, %v786
      %788 = vdwg.mxu0
      %789 = vmatprep.subr.bf16.mxu0 %v652
      %790 = vmatpush1.bf16.msra.mxu0 %v651
      %791 = vmatprep.subr.bf16.mxu0 0
      %792 = vmatpush1.bf16.msra.mxu0 0
      %793 = vmatprep.subr.bf16.mxu0 0
      %794 = vmatpush1.bf16.msra.mxu0 0
      %795 = vmatprep.subr.bf16.mxu0 0
      %796 = vmatpush1.bf16.msra.mxu0 0
      %797 = vmatprep.subr.bf16.mxu0 0
      %798 = vmatpush1.bf16.msra.mxu0 0
      %799 = vmatprep.subr.bf16.mxu0 0
      %800 = vmatpush1.bf16.msra.mxu0 0
      %801 = vmatprep.subr.bf16.mxu0 0
      %802 = vmatpush1.bf16.msra.mxu0 0
      %803 = vmatprep.subr.bf16.mxu0 0
      %804 = vmatpush1.bf16.msra.mxu0 0
      %805 = vmatprep.subr.bf16.mxu0 0
      %806 = vmatpush1.bf16.msra.mxu0 0
      %807 = vmatprep.subr.bf16.mxu0 0
      %808 = vmatpush1.bf16.msra.mxu0 0
      %809 = vmatprep.subr.bf16.mxu0 0
      %810 = vmatpush1.bf16.msra.mxu0 0
      %811 = vmatprep.subr.bf16.mxu0 0
      %812 = vmatpush1.bf16.msra.mxu0 0
      %813 = vmatprep.subr.bf16.mxu0 0
      %814 = vmatpush1.bf16.msra.mxu0 0
      %815 = vmatprep.subr.bf16.mxu0 0
      %816 = vmatpush1.bf16.msra.mxu0 0
      %817 = vmatprep.subr.bf16.mxu0 0
      %818 = vmatpush1.bf16.msra.mxu0 0
      %819 = vmatprep.subr.bf16.mxu0 0
      %820 = vmatpush1.bf16.msra.mxu0 0
      %821 = vmatprep.mubr.bf16.mxu0 0
      %822 = vmatmul.mubr.bf16.gmra.mrb[0].mxu0 %v678
      %v823 = vpop.f32.mrb[0].mxu0
      %v824 = vadd.f32 %v545, %v823
      %v825 = vpop.f32.mrb[0].mxu0
      %v826 = vadd.f32 %v549, %v825
      %v827 = vpop.f32.mrb[0].mxu0
      %v828 = vadd.f32 %v545, %v827
      %v829 = vpop.f32.mrb[0].mxu0
      %v830 = vadd.f32 %v549, %v829
      %831 = vmatprep.mubr.bf16.mxu0 0
      %832 = vmatmul.mubr.bf16.gmra.mrb[0].mxu0 %v681
      %v833 = vpop.f32.mrb[0].mxu0
      %v834 = vadd.f32 %v545, %v833
      %v835 = vpop.f32.mrb[0].mxu0
      %v836 = vadd.f32 %v549, %v835
      %v837 = vpop.f32.mrb[0].mxu0
      %v838 = vadd.f32 %v545, %v837
      %v839 = vpop.f32.mrb[0].mxu0
      %v840 = vadd.f32 %v549, %v839
      %841 = vdwg.mxu0
      %842 = vmatprep.subr.bf16.mxu0 %v654
      %843 = vmatpush1.bf16.msra.mxu0 %v653
      %844 = vmatprep.subr.bf16.mxu0 0
      %845 = vmatpush1.bf16.msra.mxu0 0
      %846 = vmatprep.subr.bf16.mxu0 0
      %847 = vmatpush1.bf16.msra.mxu0 0
      %848 = vmatprep.subr.bf16.mxu0 0
      %849 = vmatpush1.bf16.msra.mxu0 0
      %850 = vmatprep.subr.bf16.mxu0 0
      %851 = vmatpush1.bf16.msra.mxu0 0
      %852 = vmatprep.subr.bf16.mxu0 0
      %853 = vmatpush1.bf16.msra.mxu0 0
      %854 = vmatprep.subr.bf16.mxu0 0
      %855 = vmatpush1.bf16.msra.mxu0 0
      %856 = vmatprep.subr.bf16.mxu0 0
      %857 = vmatpush1.bf16.msra.mxu0 0
      %858 = vmatprep.subr.bf16.mxu0 0
      %859 = vmatpush1.bf16.msra.mxu0 0
      %860 = vmatprep.subr.bf16.mxu0 0
      %861 = vmatpush1.bf16.msra.mxu0 0
      %862 = vmatprep.subr.bf16.mxu0 0
      %863 = vmatpush1.bf16.msra.mxu0 0
      %864 = vmatprep.subr.bf16.mxu0 0
      %865 = vmatpush1.bf16.msra.mxu0 0
      %866 = vmatprep.subr.bf16.mxu0 0
      %867 = vmatpush1.bf16.msra.mxu0 0
      %868 = vmatprep.subr.bf16.mxu0 0
      %869 = vmatpush1.bf16.msra.mxu0 0
      %870 = vmatprep.subr.bf16.mxu0 0
      %871 = vmatpush1.bf16.msra.mxu0 0
      %872 = vmatprep.subr.bf16.mxu0 0
      %873 = vmatpush1.bf16.msra.mxu0 0
      %874 = vmatprep.mubr.bf16.mxu0 0
      %875 = vmatmul.mubr.bf16.gmra.mrb[0].mxu0 %v678
      %v876 = vpop.f32.mrb[0].mxu0
      %v877 = vadd.f32 %v553, %v876
      %v878 = vpop.f32.mrb[0].mxu0
      %v879 = vadd.f32 %v557, %v878
      %v880 = vpop.f32.mrb[0].mxu0
      %v881 = vadd.f32 %v553, %v880
      %v882 = vpop.f32.mrb[0].mxu0
      %v883 = vadd.f32 %v557, %v882
      %884 = vmatprep.mubr.bf16.mxu0 0
      %885 = vmatmul.mubr.bf16.gmra.mrb[0].mxu0 %v681
      %v886 = vpop.f32.mrb[0].mxu0
      %v887 = vadd.f32 %v553, %v886
      %v888 = vpop.f32.mrb[0].mxu0
      %v889 = vadd.f32 %v557, %v888
      %v890 = vpop.f32.mrb[0].mxu0
      %v891 = vadd.f32 %v553, %v890
      %v892 = vpop.f32.mrb[0].mxu0
      %v893 = vadd.f32 %v557, %v892
      %894 = vdwg.mxu0
      %895 = vmatprep.subr.bf16.mxu0 %v656
      %896 = vmatpush1.bf16.msra.mxu0 %v655
      %897 = vmatprep.subr.bf16.mxu0 0
      %898 = vmatpush1.bf16.msra.mxu0 0
      %899 = vmatprep.subr.bf16.mxu0 0
      %900 = vmatpush1.bf16.msra.mxu0 0
      %901 = vmatprep.subr.bf16.mxu0 0
      %902 = vmatpush1.bf16.msra.mxu0 0
      %903 = vmatprep.subr.bf16.mxu0 0
      %904 = vmatpush1.bf16.msra.mxu0 0
      %905 = vmatprep.subr.bf16.mxu0 0
      %906 = vmatpush1.bf16.msra.mxu0 0
      %907 = vmatprep.subr.bf16.mxu0 0
      %908 = vmatpush1.bf16.msra.mxu0 0
      %909 = vmatprep.subr.bf16.mxu0 0
      %910 = vmatpush1.bf16.msra.mxu0 0
      %911 = vmatprep.subr.bf16.mxu0 0
      %912 = vmatpush1.bf16.msra.mxu0 0
      %913 = vmatprep.subr.bf16.mxu0 0
      %914 = vmatpush1.bf16.msra.mxu0 0
      %915 = vmatprep.subr.bf16.mxu0 0
      %916 = vmatpush1.bf16.msra.mxu0 0
      %917 = vmatprep.subr.bf16.mxu0 0
      %918 = vmatpush1.bf16.msra.mxu0 0
      %919 = vmatprep.subr.bf16.mxu0 0
      %920 = vmatpush1.bf16.msra.mxu0 0
      %921 = vmatprep.subr.bf16.mxu0 0
      %922 = vmatpush1.bf16.msra.mxu0 0
      %923 = vmatprep.subr.bf16.mxu0 0
      %924 = vmatpush1.bf16.msra.mxu0 0
      %925 = vmatprep.subr.bf16.mxu0 0
      %926 = vmatpush1.bf16.msra.mxu0 0
      %927 = vmatprep.mubr.bf16.mxu0 0
      %928 = vmatmul.mubr.bf16.gmra.mrb[0].mxu0 %v678
      %v929 = vpop.f32.mrb[0].mxu0
      %v930 = vadd.f32 %v561, %v929
      %v931 = vpop.f32.mrb[0].mxu0
      %v932 = vadd.f32 %v565, %v931
      %v933 = vpop.f32.mrb[0].mxu0
      %v934 = vadd.f32 %v561, %v933
      %v935 = vpop.f32.mrb[0].mxu0
      %v936 = vadd.f32 %v565, %v935
      %937 = vmatprep.mubr.bf16.mxu0 0
      %938 = vmatmul.mubr.bf16.gmra.mrb[0].mxu0 %v681
      %v939 = vpop.f32.mrb[0].mxu0
      %v940 = vadd.f32 %v561, %v939
      %v941 = vpop.f32.mrb[0].mxu0
      %v942 = vadd.f32 %v565, %v941
      %v943 = vpop.f32.mrb[0].mxu0
      %v944 = vadd.f32 %v561, %v943
      %v945 = vpop.f32.mrb[0].mxu0
      %v946 = vadd.f32 %v565, %v945
      %947 = vdwg.mxu0
      %948 = vmatprep.subr.bf16.mxu0 %v658
      %949 = vmatpush1.bf16.msra.mxu0 %v657
      %950 = vmatprep.subr.bf16.mxu0 0
      %951 = vmatpush1.bf16.msra.mxu0 0
      %952 = vmatprep.subr.bf16.mxu0 0
      %953 = vmatpush1.bf16.msra.mxu0 0
      %954 = vmatprep.subr.bf16.mxu0 0
      %955 = vmatpush1.bf16.msra.mxu0 0
      %956 = vmatprep.subr.bf16.mxu0 0
      %957 = vmatpush1.bf16.msra.mxu0 0
      %958 = vmatprep.subr.bf16.mxu0 0
      %959 = vmatpush1.bf16.msra.mxu0 0
      %960 = vmatprep.subr.bf16.mxu0 0
      %961 = vmatpush1.bf16.msra.mxu0 0
      %962 = vmatprep.subr.bf16.mxu0 0
      %963 = vmatpush1.bf16.msra.mxu0 0
      %964 = vmatprep.subr.bf16.mxu0 0
      %965 = vmatpush1.bf16.msra.mxu0 0
      %966 = vmatprep.subr.bf16.mxu0 0
      %967 = vmatpush1.bf16.msra.mxu0 0
      %968 = vmatprep.subr.bf16.mxu0 0
      %969 = vmatpush1.bf16.msra.mxu0 0
      %970 = vmatprep.subr.bf16.mxu0 0
      %971 = vmatpush1.bf16.msra.mxu0 0
      %972 = vmatprep.subr.bf16.mxu0 0
      %973 = vmatpush1.bf16.msra.mxu0 0
      %974 = vmatprep.subr.bf16.mxu0 0
      %975 = vmatpush1.bf16.msra.mxu0 0
      %976 = vmatprep.subr.bf16.mxu0 0
      %977 = vmatpush1.bf16.msra.mxu0 0
      %978 = vmatprep.subr.bf16.mxu0 0
      %979 = vmatpush1.bf16.msra.mxu0 0
      %980 = vmatprep.mubr.bf16.mxu0 0
      %981 = vmatmul.mubr.bf16.gmra.mrb[0].mxu0 %v678
      %v982 = vpop.f32.mrb[0].mxu0
      %v983 = vadd.f32 %v569, %v982
      %v984 = vpop.f32.mrb[0].mxu0
      %v985 = vadd.f32 %v573, %v984
      %v986 = vpop.f32.mrb[0].mxu0
      %v987 = vadd.f32 %v569, %v986
      %v988 = vpop.f32.mrb[0].mxu0
      %v989 = vadd.f32 %v573, %v988
      %990 = vmatprep.mubr.bf16.mxu0 0
      %991 = vmatmul.mubr.bf16.gmra.mrb[0].mxu0 %v681
      %v992 = vpop.f32.mrb[0].mxu0
      %v993 = vadd.f32 %v569, %v992
      %v994 = vpop.f32.mrb[0].mxu0
      %v995 = vadd.f32 %v573, %v994
      %v996 = vpop.f32.mrb[0].mxu0
      %v997 = vadd.f32 %v569, %v996
      %v998 = vpop.f32.mrb[0].mxu0
      %v999 = vadd.f32 %v573, %v998
      %1000 = vdwg.mxu0
      %1001 = vmatprep.subr.bf16.mxu0 %v660
      %1002 = vmatpush1.bf16.msra.mxu0 %v659
      %1003 = vmatprep.subr.bf16.mxu0 0
      %1004 = vmatpush1.bf16.msra.mxu0 0
      %1005 = vmatprep.subr.bf16.mxu0 0
      %1006 = vmatpush1.bf16.msra.mxu0 0
      %1007 = vmatprep.subr.bf16.mxu0 0
      %1008 = vmatpush1.bf16.msra.mxu0 0
      %1009 = vmatprep.subr.bf16.mxu0 0
      %1010 = vmatpush1.bf16.msra.mxu0 0
      %1011 = vmatprep.subr.bf16.mxu0 0
      %1012 = vmatpush1.bf16.msra.mxu0 0
      %1013 = vmatprep.subr.bf16.mxu0 0
      %1014 = vmatpush1.bf16.msra.mxu0 0
      %1015 = vmatprep.subr.bf16.mxu0 0
      %1016 = vmatpush1.bf16.msra.mxu0 0
      %1017 = vmatprep.subr.bf16.mxu0 0
      %1018 = vmatpush1.bf16.msra.mxu0 0
      %1019 = vmatprep.subr.bf16.mxu0 0
      %1020 = vmatpush1.bf16.msra.mxu0 0
      %1021 = vmatprep.subr.bf16.mxu0 0
      %1022 = vmatpush1.bf16.msra.mxu0 0
      %1023 = vmatprep.subr.bf16.mxu0 0
      %1024 = vmatpush1.bf16.msra.mxu0 0
      %1025 = vmatprep.subr.bf16.mxu0 0
      %1026 = vmatpush1.bf16.msra.mxu0 0
      %1027 = vmatprep.subr.bf16.mxu0 0
      %1028 = vmatpush1.bf16.msra.mxu0 0
      %1029 = vmatprep.subr.bf16.mxu0 0
      %1030 = vmatpush1.bf16.msra.mxu0 0
      %1031 = vmatprep.subr.bf16.mxu0 0
      %1032 = vmatpush1.bf16.msra.mxu0 0
      %1033 = vmatprep.mubr.bf16.mxu0 0
      %1034 = vmatmul.mubr.bf16.gmra.mrb[0].mxu0 %v678
      %v1035 = vpop.f32.mrb[0].mxu0
      %v1036 = vadd.f32 %v577, %v1035
      %v1037 = vpop.f32.mrb[0].mxu0
      %v1038 = vadd.f32 %v581, %v1037
      %v1039 = vpop.f32.mrb[0].mxu0
      %v1040 = vadd.f32 %v577, %v1039
      %v1041 = vpop.f32.mrb[0].mxu0
      %v1042 = vadd.f32 %v581, %v1041
      %1043 = vmatprep.mubr.bf16.mxu0 0
      %1044 = vmatmul.mubr.bf16.gmra.mrb[0].mxu0 %v681
      %v1045 = vpop.f32.mrb[0].mxu0
      %v1046 = vadd.f32 %v577, %v1045
      %v1047 = vpop.f32.mrb[0].mxu0
      %v1048 = vadd.f32 %v581, %v1047
      %v1049 = vpop.f32.mrb[0].mxu0
      %v1050 = vadd.f32 %v577, %v1049
      %v1051 = vpop.f32.mrb[0].mxu0
      %v1052 = vadd.f32 %v581, %v1051
      %1053 = vdwg.mxu0
      %1054 = vmatprep.subr.bf16.mxu0 0
      %1055 = vmatpush1.bf16.msra.mxu0 %v661
      %1056 = vmatprep.subr.bf16.mxu0 0
      %1057 = vmatpush1.bf16.msra.mxu0 0
      %1058 = vmatprep.subr.bf16.mxu0 0
      %1059 = vmatpush1.bf16.msra.mxu0 0
      %1060 = vmatprep.subr.bf16.mxu0 0
      %1061 = vmatpush1.bf16.msra.mxu0 0
      %1062 = vmatprep.subr.bf16.mxu0 0
      %1063 = vmatpush1.bf16.msra.mxu0 0
      %1064 = vmatprep.subr.bf16.mxu0 0
      %1065 = vmatpush1.bf16.msra.mxu0 0
      %1066 = vmatprep.subr.bf16.mxu0 0
      %1067 = vmatpush1.bf16.msra.mxu0 0
      %1068 = vmatprep.subr.bf16.mxu0 0
      %1069 = vmatpush1.bf16.msra.mxu0 0
      %1070 = vmatprep.subr.bf16.mxu0 0
      %1071 = vmatpush1.bf16.msra.mxu0 0
      %1072 = vmatprep.subr.bf16.mxu0 0
      %1073 = vmatpush1.bf16.msra.mxu0 0
      %1074 = vmatprep.subr.bf16.mxu0 0
      %1075 = vmatpush1.bf16.msra.mxu0 0
      %1076 = vmatprep.subr.bf16.mxu0 0
      %1077 = vmatpush1.bf16.msra.mxu0 0
      %1078 = vmatprep.subr.bf16.mxu0 0
      %1079 = vmatpush1.bf16.msra.mxu0 0
      %1080 = vmatprep.subr.bf16.mxu0 0
      %1081 = vmatpush1.bf16.msra.mxu0 0
      %1082 = vmatprep.subr.bf16.mxu0 0
      %1083 = vmatpush1.bf16.msra.mxu0 0
      %1084 = vmatprep.subr.bf16.mxu0 0
      %1085 = vmatpush1.bf16.msra.mxu0 0
      %1086 = vmatprep.mubr.bf16.mxu0 0
      %1087 = vmatmul.mubr.bf16.gmra.mrb[0].mxu0 %v678
      %v1088 = vpop.f32.mrb[0].mxu0
      %v1089 = vadd.f32 %v585, %v1088
      %v1090 = vpop.f32.mrb[0].mxu0
      %v1091 = vpop.f32.mrb[0].mxu0
      %v1092 = vadd.f32 %v585, %v1091
      %v1093 = vpop.f32.mrb[0].mxu0
      %1094 = vmatprep.mubr.bf16.mxu0 0
      %1095 = vmatmul.mubr.bf16.gmra.mrb[0].mxu0 %v681
      %v1096 = vpop.f32.mrb[0].mxu0
      %v1097 = vadd.f32 %v585, %v1096
      %v1098 = vpop.f32.mrb[0].mxu0
      %v1099 = vpop.f32.mrb[0].mxu0
      %v1100 = vadd.f32 %v585, %v1099
      %v1101 = vpop.f32.mrb[0].mxu0
      %1102 = vdwg.mxu0
      %v1103 = vmax.f32 %v718, 0.0
      %v1104 = vmax.f32 %v720, 0.0
      %v1105 = vmax.f32 %v771, 0.0
      %v1106 = vmax.f32 %v773, 0.0
      %v1107 = vmax.f32 %v824, 0.0
      %v1108 = vmax.f32 %v826, 0.0
      %v1109 = vmax.f32 %v877, 0.0
      %v1110 = vmax.f32 %v879, 0.0
      %v1111 = vmax.f32 %v930, 0.0
      %v1112 = vmax.f32 %v932, 0.0
      %v1113 = vmax.f32 %v983, 0.0
      %v1114 = vmax.f32 %v985, 0.0
      %v1115 = vmax.f32 %v1036, 0.0
      %v1116 = vmax.f32 %v1038, 0.0
      %v1117 = vmax.f32 %v1089, 0.0
      %v1118 = vmax.f32 %v722, 0.0
      %v1119 = vmax.f32 %v724, 0.0
      %v1120 = vmax.f32 %v775, 0.0
      %v1121 = vmax.f32 %v777, 0.0
      %v1122 = vmax.f32 %v828, 0.0
      %v1123 = vmax.f32 %v830, 0.0
      %v1124 = vmax.f32 %v881, 0.0
      %v1125 = vmax.f32 %v883, 0.0
      %v1126 = vmax.f32 %v934, 0.0
      %v1127 = vmax.f32 %v936, 0.0
      %v1128 = vmax.f32 %v987, 0.0
      %v1129 = vmax.f32 %v989, 0.0
      %v1130 = vmax.f32 %v1040, 0.0
      %v1131 = vmax.f32 %v1042, 0.0
      %v1132 = vmax.f32 %v1092, 0.0
      %v1133 = vmax.f32 %v728, 0.0
      %v1134 = vmax.f32 %v730, 0.0
      %v1135 = vmax.f32 %v781, 0.0
      %v1136 = vmax.f32 %v783, 0.0
      %v1137 = vmax.f32 %v834, 0.0
      %v1138 = vmax.f32 %v836, 0.0
      %v1139 = vmax.f32 %v887, 0.0
      %v1140 = vmax.f32 %v889, 0.0
      %v1141 = vmax.f32 %v940, 0.0
      %v1142 = vmax.f32 %v942, 0.0
      %v1143 = vmax.f32 %v993, 0.0
      %v1144 = vmax.f32 %v995, 0.0
      %v1145 = vmax.f32 %v1046, 0.0
      %v1146 = vmax.f32 %v1048, 0.0
      %v1147 = vmax.f32 %v1097, 0.0
      %v1148 = vmax.f32 %v732, 0.0
      %v1149 = vmax.f32 %v734, 0.0
      %v1150 = vmax.f32 %v785, 0.0
      %v1151 = vmax.f32 %v787, 0.0
      %v1152 = vmax.f32 %v838, 0.0
      %v1153 = vmax.f32 %v840, 0.0
      %v1154 = vmax.f32 %v891, 0.0
      %v1155 = vmax.f32 %v893, 0.0
      %v1156 = vmax.f32 %v944, 0.0
      %v1157 = vmax.f32 %v946, 0.0
      %v1158 = vmax.f32 %v997, 0.0
      %v1159 = vmax.f32 %v999, 0.0
      %v1160 = vmax.f32 %v1050, 0.0
      %v1161 = vmax.f32 %v1052, 0.0
      %v1162 = vmax.f32 %v1100, 0.0
      %v1163 = vpack.c.bf16 %v1118, %v1103
      %v1164 = vpack.c.bf16 %v1119, %v1104
      %v1165 = vpack.c.bf16 %v1120, %v1105
      %v1166 = vpack.c.bf16 %v1121, %v1106
      %v1167 = vpack.c.bf16 %v1122, %v1107
      %v1168 = vpack.c.bf16 %v1123, %v1108
      %v1169 = vpack.c.bf16 %v1124, %v1109
      %v1170 = vpack.c.bf16 %v1125, %v1110
      %v1171 = vpack.c.bf16 %v1126, %v1111
      %v1172 = vpack.c.bf16 %v1127, %v1112
      %v1173 = vpack.c.bf16 %v1128, %v1113
      %v1174 = vpack.c.bf16 %v1129, %v1114
      %v1175 = vpack.c.bf16 %v1130, %v1115
      %v1176 = vpack.c.bf16 %v1131, %v1116
      %v1177 = vpack.c.bf16 %v1132, %v1117
      %v1178 = vpack.c.bf16 %v1148, %v1133
      %v1179 = vpack.c.bf16 %v1149, %v1134
      %v1180 = vpack.c.bf16 %v1150, %v1135
      %v1181 = vpack.c.bf16 %v1151, %v1136
      %v1182 = vpack.c.bf16 %v1152, %v1137
      %v1183 = vpack.c.bf16 %v1153, %v1138
      %v1184 = vpack.c.bf16 %v1154, %v1139
      %v1185 = vpack.c.bf16 %v1155, %v1140
      %v1186 = vpack.c.bf16 %v1156, %v1141
      %v1187 = vpack.c.bf16 %v1157, %v1142
      %v1188 = vpack.c.bf16 %v1158, %v1143
      %v1189 = vpack.c.bf16 %v1159, %v1144
      %v1190 = vpack.c.bf16 %v1160, %v1145
      %v1191 = vpack.c.bf16 %v1161, %v1146
      %v1192 = vpack.c.bf16 %v1162, %v1147
      %1193 = vst [vmem:[#allocation2 + $0x60] sm:$0xff] %v1163
      %1194 = vst [vmem:[#allocation2 + $0x68] sm:$0xff] %v1164
      %1195 = vst.msk [vmem:[#allocation2 + $0x70] sm:$0xff] %vm393, %v1165
      %1196 = vst [vmem:[#allocation2 + $0x78] sm:$0xff] %v1178
      %1197 = vst [vmem:[#allocation2 + $0x80] sm:$0xff] %v1179
      %1198 = vst.msk [vmem:[#allocation2 + $0x88] sm:$0xff] %vm393, %v1180
      %1199 = vst [vmem:[#allocation2 + $0x90] sm:$0xff] %v1166
      %1200 = vst [vmem:[#allocation2 + $0x98] sm:$0xff] %v1167
      %1201 = vst.msk [vmem:[#allocation2 + $0xa0] sm:$0xff] %vm393, %v1168
      %1202 = vst [vmem:[#allocation2 + $0xa8] sm:$0xff] %v1181
      %1203 = vst [vmem:[#allocation2 + $0xb0] sm:$0xff] %v1182
      %1204 = vst.msk [vmem:[#allocation2 + $0xb8] sm:$0xff] %vm393, %v1183
      %1205 = vst [vmem:[#allocation2 + $0xc0] sm:$0xff] %v1169
      %1206 = vst [vmem:[#allocation2 + $0xc8] sm:$0xff] %v1170
      %1207 = vst.msk [vmem:[#allocation2 + $0xd0] sm:$0xff] %vm393, %v1171
      %1208 = vst [vmem:[#allocation2 + $0xd8] sm:$0xff] %v1184
      %1209 = vst [vmem:[#allocation2 + $0xe0] sm:$0xff] %v1185
      %1210 = vst.msk [vmem:[#allocation2 + $0xe8] sm:$0xff] %vm393, %v1186
      %1211 = vst [vmem:[#allocation2 + $0xf0] sm:$0xff] %v1172
      %1212 = vst [vmem:[#allocation2 + $0xf8] sm:$0xff] %v1173
      %1213 = vst.msk [vmem:[#allocation2 + $0x100] sm:$0xff] %vm393, %v1174
      %1214 = vst [vmem:[#allocation2 + $0x108] sm:$0xff] %v1187
      %1215 = vst [vmem:[#allocation2 + $0x110] sm:$0xff] %v1188
      %1216 = vst.msk [vmem:[#allocation2 + $0x118] sm:$0xff] %vm393, %v1189
      %1217 = vst [vmem:[#allocation2 + $0x120] sm:$0xff] %v1175
      %1218 = vst [vmem:[#allocation2 + $0x128] sm:$0xff] %v1176
      %1219 = vst.msk [vmem:[#allocation2 + $0x130] sm:$0xff] %vm393, %v1177
      %1220 = vst [vmem:[#allocation2 + $0x138] sm:$0xff] %v1190
      %1221 = vst [vmem:[#allocation2 + $0x140] sm:$0xff] %v1191
      %1222 = vst.msk [vmem:[#allocation2 + $0x148] sm:$0xff] %vm393, %v1192
      %v1223 = vld [vmem:[#allocation2] sm:$0xff]
      %v1224 = vld [vmem:[#allocation2 + $0x8] sm:$0xff]
      %v1225 = vld [vmem:[#allocation2 + $0x10] sm:$0xff]
      %v1226 = vld [vmem:[#allocation2 + $0x18] sm:$0xff]
      %v1227 = vld [vmem:[#allocation2 + $0x20] sm:$0xff]
      %v1228 = vld [vmem:[#allocation2 + $0x28] sm:$0xff]
      %v1229 = vld [vmem:[#allocation2 + $0x30] sm:$0xff]
      %v1230 = vld [vmem:[#allocation2 + $0x38] sm:$0xff]
      %v1231 = vld [vmem:[#allocation2 + $0x40] sm:$0xff]
      %v1232 = vld [vmem:[#allocation2 + $0x48] sm:$0xff]
      %v1233 = vld [vmem:[#allocation2 + $0x50] sm:$0xff]
      %v1234 = vld [vmem:[#allocation2 + $0x58] sm:$0xff]
      %v1235 = vld [vmem:[#allocation2 + $0x60] sm:$0xff]
      %v1236 = vld [vmem:[#allocation2 + $0x68] sm:$0xff]
      %v1237 = vld [vmem:[#allocation2 + $0x70] sm:$0xff]
      %v1238 = vld [vmem:[#allocation2 + $0x78] sm:$0xff]
      %v1239 = vld [vmem:[#allocation2 + $0x80] sm:$0xff]
      %v1240 = vld [vmem:[#allocation2 + $0x88] sm:$0xff]
      %v1241 = vld [vmem:[#allocation2 + $0x90] sm:$0xff]
      %v1242 = vld [vmem:[#allocation2 + $0x98] sm:$0xff]
      %v1243 = vld [vmem:[#allocation2 + $0xa0] sm:$0xff]
      %v1244 = vld [vmem:[#allocation2 + $0xa8] sm:$0xff]
      %v1245 = vld [vmem:[#allocation2 + $0xb0] sm:$0xff]
      %v1246 = vld [vmem:[#allocation2 + $0xb8] sm:$0xff]
      %v1247 = vld [vmem:[#allocation2 + $0xc0] sm:$0xff]
      %v1248 = vld [vmem:[#allocation2 + $0xc8] sm:$0xff]
      %v1249 = vld [vmem:[#allocation2 + $0xd0] sm:$0xff]
      %v1250 = vld [vmem:[#allocation2 + $0xd8] sm:$0xff]
      %v1251 = vld [vmem:[#allocation2 + $0xe0] sm:$0xff]
      %v1252 = vld [vmem:[#allocation2 + $0xe8] sm:$0xff]
      %v1253 = vld [vmem:[#allocation2 + $0xf0] sm:$0xff]
      %v1254 = vld [vmem:[#allocation2 + $0xf8] sm:$0xff]
      %v1255 = vld [vmem:[#allocation2 + $0x100] sm:$0xff]
      %v1256 = vld [vmem:[#allocation2 + $0x108] sm:$0xff]
      %v1257 = vld [vmem:[#allocation2 + $0x110] sm:$0xff]
      %v1258 = vld [vmem:[#allocation2 + $0x118] sm:$0xff]
      %v1259 = vld [vmem:[#allocation2 + $0x120] sm:$0xff]
      %v1260 = vld [vmem:[#allocation2 + $0x128] sm:$0xff]
      %v1261 = vld [vmem:[#allocation2 + $0x130] sm:$0xff]
      %v1262 = vld [vmem:[#allocation2 + $0x138] sm:$0xff]
      %v1263 = vld [vmem:[#allocation2 + $0x140] sm:$0xff]
      %v1264 = vld [vmem:[#allocation2 + $0x148] sm:$0xff]
      %v1265 = vld [vmem:[%s3] sm:$0xff]
      %v1266 = vld [vmem:[%s3 + $0x8] sm:$0xff]
      %v1267 = vld [vmem:[%s3 + $0x10] sm:$0xff]
      %v1268 = vld [vmem:[%s3 + $0x18] sm:$0xff]
      %v1269 = vld [vmem:[%s3 + $0x20] sm:$0xff]
      %v1270 = vld [vmem:[%s3 + $0x28] sm:$0xff]
      %v1271 = vld [vmem:[%s3 + $0x30] sm:$0xff]
      %v1272 = vld [vmem:[%s3 + $0x38] sm:$0xff]
      %v1273 = vld [vmem:[%s3 + $0x40] sm:$0xff]
      %v1274 = vld [vmem:[%s3 + $0x48] sm:$0xff]
      %v1275 = vld [vmem:[%s3 + $0x50] sm:$0xff]
      %v1276 = vld [vmem:[%s3 + $0x58] sm:$0xff]
      %v1277 = vld [vmem:[%s3 + $0x60] sm:$0xff]
      %v1278 = vld [vmem:[%s3 + $0x68] sm:$0xff]
      %v1279 = vld [vmem:[%s3 + $0x70] sm:$0xff]
      %v1280 = vld [vmem:[%s3 + $0x78] sm:$0xff]
      %v1281 = vld [vmem:[%s3 + $0x80] sm:$0xff]
      %v1282 = vld [vmem:[%s3 + $0x88] sm:$0xff]
      %v1283 = vld [vmem:[%s3 + $0x90] sm:$0xff]
      %v1284 = vld [vmem:[%s3 + $0x98] sm:$0xff]
      %v1285 = vld [vmem:[%s3 + $0xa0] sm:$0xff]
      %v1286 = vld [vmem:[%s3 + $0xa8] sm:$0xff]
      %v1287 = vld [vmem:[%s3 + $0xb0] sm:$0xff]
      %v1288 = vld [vmem:[%s3 + $0xb8] sm:$0xff]
      %v1289 = vld [vmem:[%s3 + $0xc0] sm:$0xff]
      %v1290 = vld [vmem:[%s3 + $0xc8] sm:$0xff]
      %v1291 = vld [vmem:[%s3 + $0xd0] sm:$0xff]
      %v1292 = vld [vmem:[%s3 + $0xd8] sm:$0xff]
      %v1293 = vld [vmem:[%s3 + $0xe0] sm:$0xff]
      %v1294 = vld [vmem:[%s3 + $0xe8] sm:$0xff]
      %v1295 = vld [vmem:[%s3 + $0xf0] sm:$0xff]
      %v1296 = vld [vmem:[%s3 + $0xf8] sm:$0xff]
      %v1297 = vld [vmem:[%s3 + $0x100] sm:$0xff]
      %v1298 = vld [vmem:[%s3 + $0x108] sm:$0xff]
      %v1299 = vld [vmem:[%s3 + $0x110] sm:$0xff]
      %v1300 = vld [vmem:[%s3 + $0x118] sm:$0xff]
      %v1301 = vld [vmem:[#allocation2 + $0x150] sm:$0xff]
      %v1302 = vld [vmem:[#allocation2 + $0x158] sm:$0xff]
      %v1303 = vld [vmem:[#allocation2 + $0x160] sm:$0xff]
      %v1304 = vld [vmem:[#allocation2 + $0x168] sm:$0xff]
      %v1305 = vld [vmem:[#allocation2 + $0x170] sm:$0xff]
      %v1306 = vld [vmem:[#allocation2 + $0x178] sm:$0xff]
      %s1307 = scalar_lea.vmem %s3, 288
      %v1308 = vld [vmem:[%s1307] sm:$0xff]
      %v1309 = vld [vmem:[%s1307 + $0x8] sm:$0xff]
      %v1310 = vld [vmem:[%s1307 + $0x10] sm:$0xff]
      %v1311 = vld [vmem:[%s1307 + $0x18] sm:$0xff]
      %v1312 = vld [vmem:[%s1307 + $0x20] sm:$0xff]
      %v1313 = vld [vmem:[%s1307 + $0x28] sm:$0xff]
      %v1314 = vld [vmem:[%s1307 + $0x30] sm:$0xff]
      %v1315 = vld [vmem:[%s1307 + $0x38] sm:$0xff]
      %v1316 = vld [vmem:[%s1307 + $0x40] sm:$0xff]
      %v1317 = vld [vmem:[%s1307 + $0x48] sm:$0xff]
      %v1318 = vld [vmem:[%s1307 + $0x50] sm:$0xff]
      %v1319 = vld [vmem:[%s1307 + $0x58] sm:$0xff]
      %v1320 = vld [vmem:[%s1307 + $0x60] sm:$0xff]
      %v1321 = vld [vmem:[%s1307 + $0x68] sm:$0xff]
      %v1322 = vld [vmem:[%s1307 + $0x70] sm:$0xff]
      %v1323 = vld [vmem:[%s1307 + $0x78] sm:$0xff]
      %v1324 = vld [vmem:[%s1307 + $0x80] sm:$0xff]
      %v1325 = vld [vmem:[%s1307 + $0x88] sm:$0xff]
      %v1326 = vld [vmem:[%s1307 + $0x90] sm:$0xff]
      %v1327 = vld [vmem:[%s1307 + $0x98] sm:$0xff]
      %v1328 = vld [vmem:[%s1307 + $0xa0] sm:$0xff]
      %v1329 = vld [vmem:[%s1307 + $0xa8] sm:$0xff]
      %v1330 = vld [vmem:[%s1307 + $0xb0] sm:$0xff]
      %v1331 = vld [vmem:[%s1307 + $0xb8] sm:$0xff]
      %v1332 = vld [vmem:[%s1307 + $0xc0] sm:$0xff]
      %v1333 = vld [vmem:[%s1307 + $0xc8] sm:$0xff]
      %v1334 = vld [vmem:[%s1307 + $0xd0] sm:$0xff]
      %v1335 = vld [vmem:[%s1307 + $0xd8] sm:$0xff]
      %v1336 = vld [vmem:[%s1307 + $0xe0] sm:$0xff]
      %v1337 = vld [vmem:[%s1307 + $0xe8] sm:$0xff]
      %v1338 = vld [vmem:[%s1307 + $0xf0] sm:$0xff]
      %v1339 = vld [vmem:[%s1307 + $0xf8] sm:$0xff]
      %v1340 = vld [vmem:[%s1307 + $0x100] sm:$0xff]
      %v1341 = vld [vmem:[%s1307 + $0x108] sm:$0xff]
      %v1342 = vld [vmem:[%s1307 + $0x110] sm:$0xff]
      %v1343 = vld [vmem:[%s1307 + $0x118] sm:$0xff]
      %v1380 = vunpack.c.l.b16 %v1308
      %v1381 = vunpack.c.h.b16 %v1308
      %v1382 = vunpack.c.l.b16 %v1309
      %v1383 = vunpack.c.h.b16 %v1309
      %v1384 = vunpack.c.l.b16 %v1310
      %v1385 = vunpack.c.h.b16 %v1310
      %v1386 = vunpack.c.l.b16 %v1311
      %v1387 = vunpack.c.h.b16 %v1311
      %v1388 = vunpack.c.l.b16 %v1312
      %v1389 = vunpack.c.h.b16 %v1312
      %v1390 = vunpack.c.l.b16 %v1313
      %v1391 = vunpack.c.h.b16 %v1313
      %v1392 = vunpack.c.l.b16 %v1314
      %v1393 = vunpack.c.h.b16 %v1314
      %v1394 = vunpack.c.l.b16 %v1315
      %v1395 = vunpack.c.h.b16 %v1315
      %v1396 = vunpack.c.l.b16 %v1316
      %v1397 = vunpack.c.h.b16 %v1316
      %v1398 = vunpack.c.l.b16 %v1317
      %v1399 = vunpack.c.h.b16 %v1317
      %v1400 = vunpack.c.l.b16 %v1318
      %v1401 = vunpack.c.h.b16 %v1318
      %v1402 = vunpack.c.l.b16 %v1319
      %v1403 = vunpack.c.h.b16 %v1319
      %v1404 = vunpack.c.l.b16 %v1320
      %v1405 = vunpack.c.h.b16 %v1320
      %v1406 = vunpack.c.l.b16 %v1321
      %v1407 = vunpack.c.h.b16 %v1321
      %v1408 = vunpack.c.l.b16 %v1322
      %v1409 = vunpack.c.h.b16 %v1322
      %v1410 = vunpack.c.l.b16 %v1323
      %v1411 = vunpack.c.h.b16 %v1323
      %v1412 = vunpack.c.l.b16 %v1324
      %v1413 = vunpack.c.h.b16 %v1324
      %v1414 = vunpack.c.l.b16 %v1325
      %v1415 = vunpack.c.h.b16 %v1325
      %v1416 = vunpack.c.l.b16 %v1326
      %v1417 = vunpack.c.h.b16 %v1326
      %v1418 = vunpack.c.l.b16 %v1327
      %v1419 = vunpack.c.h.b16 %v1327
      %v1420 = vunpack.c.l.b16 %v1328
      %v1421 = vunpack.c.h.b16 %v1328
      %v1422 = vunpack.c.l.b16 %v1329
      %v1423 = vunpack.c.h.b16 %v1329
      %v1424 = vunpack.c.l.b16 %v1330
      %v1425 = vunpack.c.h.b16 %v1330
      %v1426 = vunpack.c.l.b16 %v1331
      %v1427 = vunpack.c.h.b16 %v1331
      %v1428 = vunpack.c.l.b16 %v1332
      %v1429 = vunpack.c.h.b16 %v1332
      %v1430 = vunpack.c.l.b16 %v1333
      %v1431 = vunpack.c.h.b16 %v1333
      %v1432 = vunpack.c.l.b16 %v1334
      %v1433 = vunpack.c.h.b16 %v1334
      %v1434 = vunpack.c.l.b16 %v1335
      %v1435 = vunpack.c.h.b16 %v1335
      %v1436 = vunpack.c.l.b16 %v1336
      %v1437 = vunpack.c.h.b16 %v1336
      %v1438 = vunpack.c.l.b16 %v1337
      %v1439 = vunpack.c.h.b16 %v1337
      %v1440 = vunpack.c.l.b16 %v1338
      %v1441 = vunpack.c.h.b16 %v1338
      %v1442 = vunpack.c.l.b16 %v1339
      %v1443 = vunpack.c.h.b16 %v1339
      %v1444 = vunpack.c.l.b16 %v1340
      %v1445 = vunpack.c.h.b16 %v1340
      %v1446 = vunpack.c.l.b16 %v1341
      %v1447 = vunpack.c.h.b16 %v1341
      %v1448 = vunpack.c.l.b16 %v1342
      %v1449 = vunpack.c.h.b16 %v1342
      %v1450 = vunpack.c.l.b16 %v1343
      %v1451 = vunpack.c.h.b16 %v1343
      %v1452 = vpack.c.b16 %v1382, %v1380
      %v1453 = vpack.c.b16 %v1383, %v1381
      %v1454 = vpack.c.b16 %v1386, %v1384
      %v1455 = vpack.c.b16 %v1387, %v1385
      %v1456 = vpack.c.b16 %v1390, %v1388
      %v1457 = vpack.c.b16 %v1391, %v1389
      %v1458 = vpack.c.b16 %v1394, %v1392
      %v1459 = vpack.c.b16 %v1395, %v1393
      %v1460 = vpack.c.b16 %v1398, %v1396
      %v1461 = vpack.c.b16 %v1399, %v1397
      %v1462 = vpack.c.b16 %v1402, %v1400
      %v1463 = vpack.c.b16 %v1403, %v1401
      %v1464 = vpack.c.b16 %v1406, %v1404
      %v1465 = vpack.c.b16 %v1407, %v1405
      %v1466 = vpack.c.b16 %v1410, %v1408
      %v1467 = vpack.c.b16 %v1411, %v1409
      %v1468 = vpack.c.b16 %v1414, %v1412
      %v1469 = vpack.c.b16 %v1415, %v1413
      %v1470 = vpack.c.b16 %v1418, %v1416
      %v1471 = vpack.c.b16 %v1419, %v1417
      %v1472 = vpack.c.b16 %v1422, %v1420
      %v1473 = vpack.c.b16 %v1423, %v1421
      %v1474 = vpack.c.b16 %v1426, %v1424
      %v1475 = vpack.c.b16 %v1427, %v1425
      %v1476 = vpack.c.b16 %v1430, %v1428
      %v1477 = vpack.c.b16 %v1431, %v1429
      %v1478 = vpack.c.b16 %v1434, %v1432
      %v1479 = vpack.c.b16 %v1435, %v1433
      %v1480 = vpack.c.b16 %v1438, %v1436
      %v1481 = vpack.c.b16 %v1439, %v1437
      %v1482 = vpack.c.b16 %v1442, %v1440
      %v1483 = vpack.c.b16 %v1443, %v1441
      %v1484 = vpack.c.b16 %v1446, %v1444
      %v1485 = vpack.c.b16 %v1447, %v1445
      %v1486 = vpack.c.b16 %v1450, %v1448
      %v1487 = vpack.c.b16 %v1451, %v1449
      %v1525 = vsel %vm393, %v1231, 0
      %v1528 = vsel %vm393, %v1234, 0
      %v1531 = vsel %vm393, %v1237, 0
      %v1534 = vsel %vm393, %v1240, 0
      %v1537 = vsel %vm393, %v1243, 0
      %v1540 = vsel %vm393, %v1246, 0
      %v1543 = vsel %vm393, %v1249, 0
      %v1546 = vsel %vm393, %v1252, 0
      %v1549 = vsel %vm393, %v1255, 0
      %v1552 = vsel %vm393, %v1258, 0
      %v1555 = vsel %vm393, %v1261, 0
      %v1558 = vsel %vm393, %v1264, 0
      %v1561 = vsel %vm393, %v1303, 0
      %v1564 = vsel %vm393, %v1306, 0
      %1566 = vmatprep.subr.bf16.mxu0 %v1453
      %1567 = vmatpush1.bf16.msra.mxu0 %v1452
      %1568 = vmatprep.subr.bf16.mxu0 %v1455
      %1569 = vmatpush1.bf16.msra.mxu0 %v1454
      %1570 = vmatprep.subr.bf16.mxu0 %v1457
      %1571 = vmatpush1.bf16.msra.mxu0 %v1456
      %1572 = vmatprep.subr.bf16.mxu0 %v1459
      %1573 = vmatpush1.bf16.msra.mxu0 %v1458
      %1574 = vmatprep.subr.bf16.mxu0 %v1461
      %1575 = vmatpush1.bf16.msra.mxu0 %v1460
      %1576 = vmatprep.subr.bf16.mxu0 %v1463
      %1577 = vmatpush1.bf16.msra.mxu0 %v1462
      %1578 = vmatprep.subr.bf16.mxu0 %v1465
      %1579 = vmatpush1.bf16.msra.mxu0 %v1464
      %1580 = vmatprep.subr.bf16.mxu0 %v1467
      %1581 = vmatpush1.bf16.msra.mxu0 %v1466
      %1582 = vmatprep.subr.bf16.mxu0 %v1469
      %1583 = vmatpush1.bf16.msra.mxu0 %v1468
      %1584 = vmatprep.subr.bf16.mxu0 %v1471
      %1585 = vmatpush1.bf16.msra.mxu0 %v1470
      %1586 = vmatprep.subr.bf16.mxu0 %v1473
      %1587 = vmatpush1.bf16.msra.mxu0 %v1472
      %1588 = vmatprep.subr.bf16.mxu0 %v1475
      %1589 = vmatpush1.bf16.msra.mxu0 %v1474
      %1590 = vmatprep.subr.bf16.mxu0 %v1477
      %1591 = vmatpush1.bf16.msra.mxu0 %v1476
      %1592 = vmatprep.subr.bf16.mxu0 %v1479
      %1593 = vmatpush1.bf16.msra.mxu0 %v1478
      %1594 = vmatprep.subr.bf16.mxu0 %v1481
      %1595 = vmatpush1.bf16.msra.mxu0 %v1480
      %1596 = vmatprep.subr.bf16.mxu0 %v1483
      %1597 = vmatpush1.bf16.msra.mxu0 %v1482
      %1598 = vmatprep.mubr.bf16.mxu0 %v1230
      %1599 = vmatmul.mubr.bf16.gmra.mrb[0].mxu0 %v1229
      %v1600 = vpop.f32.mrb[0].mxu0
      %v1601 = vadd.f32 0.0, %v1600
      %v1602 = vpop.f32.mrb[0].mxu0
      %v1603 = vadd.f32 0.0, %v1602
      %v1604 = vpop.f32.mrb[0].mxu0
      %v1605 = vadd.f32 0.0, %v1604
      %v1606 = vpop.f32.mrb[0].mxu0
      %v1607 = vadd.f32 0.0, %v1606
      %1608 = vmatprep.mubr.bf16.mxu0 %v1233
      %1609 = vmatmul.mubr.bf16.gmra.mrb[0].mxu0 %v1232
      %v1610 = vpop.f32.mrb[0].mxu0
      %v1611 = vadd.f32 0.0, %v1610
      %v1612 = vpop.f32.mrb[0].mxu0
      %v1613 = vadd.f32 0.0, %v1612
      %v1614 = vpop.f32.mrb[0].mxu0
      %v1615 = vadd.f32 0.0, %v1614
      %v1616 = vpop.f32.mrb[0].mxu0
      %v1617 = vadd.f32 0.0, %v1616
      %1618 = vmatprep.mubr.bf16.mxu0 %v1236
      %1619 = vmatmul.mubr.bf16.gmra.mrb[0].mxu0 %v1235
      %v1620 = vpop.f32.mrb[0].mxu0
      %v1621 = vadd.f32 0.0, %v1620
      %v1622 = vpop.f32.mrb[0].mxu0
      %v1623 = vadd.f32 0.0, %v1622
      %v1624 = vpop.f32.mrb[0].mxu0
      %v1625 = vadd.f32 0.0, %v1624
      %v1626 = vpop.f32.mrb[0].mxu0
      %v1627 = vadd.f32 0.0, %v1626
      %1628 = vmatprep.mubr.bf16.mxu0 %v1239
      %1629 = vmatmul.mubr.bf16.gmra.mrb[0].mxu0 %v1238
      %v1630 = vpop.f32.mrb[0].mxu0
      %v1631 = vadd.f32 0.0, %v1630
      %v1632 = vpop.f32.mrb[0].mxu0
      %v1633 = vadd.f32 0.0, %v1632
      %v1634 = vpop.f32.mrb[0].mxu0
      %v1635 = vadd.f32 0.0, %v1634
      %v1636 = vpop.f32.mrb[0].mxu0
      %v1637 = vadd.f32 0.0, %v1636
      %1638 = vmatprep.mubr.bf16.mxu0 %v1242
      %1639 = vmatmul.mubr.bf16.gmra.mrb[0].mxu0 %v1241
      %v1640 = vpop.f32.mrb[0].mxu0
      %v1641 = vadd.f32 0.0, %v1640
      %v1642 = vpop.f32.mrb[0].mxu0
      %v1643 = vadd.f32 0.0, %v1642
      %v1644 = vpop.f32.mrb[0].mxu0
      %v1645 = vadd.f32 0.0, %v1644
      %v1646 = vpop.f32.mrb[0].mxu0
      %v1647 = vadd.f32 0.0, %v1646
      %1648 = vmatprep.mubr.bf16.mxu0 %v1245
      %1649 = vmatmul.mubr.bf16.gmra.mrb[0].mxu0 %v1244
      %v1650 = vpop.f32.mrb[0].mxu0
      %v1651 = vadd.f32 0.0, %v1650
      %v1652 = vpop.f32.mrb[0].mxu0
      %v1653 = vadd.f32 0.0, %v1652
      %v1654 = vpop.f32.mrb[0].mxu0
      %v1655 = vadd.f32 0.0, %v1654
      %v1656 = vpop.f32.mrb[0].mxu0
      %v1657 = vadd.f32 0.0, %v1656
      %1658 = vmatprep.mubr.bf16.mxu0 %v1248
      %1659 = vmatmul.mubr.bf16.gmra.mrb[0].mxu0 %v1247
      %v1660 = vpop.f32.mrb[0].mxu0
      %v1661 = vadd.f32 0.0, %v1660
      %v1662 = vpop.f32.mrb[0].mxu0
      %v1663 = vadd.f32 0.0, %v1662
      %v1664 = vpop.f32.mrb[0].mxu0
      %v1665 = vadd.f32 0.0, %v1664
      %v1666 = vpop.f32.mrb[0].mxu0
      %v1667 = vadd.f32 0.0, %v1666
      %1668 = vmatprep.mubr.bf16.mxu0 %v1251
      %1669 = vmatmul.mubr.bf16.gmra.mrb[0].mxu0 %v1250
      %v1670 = vpop.f32.mrb[0].mxu0
      %v1671 = vadd.f32 0.0, %v1670
      %v1672 = vpop.f32.mrb[0].mxu0
      %v1673 = vadd.f32 0.0, %v1672
      %v1674 = vpop.f32.mrb[0].mxu0
      %v1675 = vadd.f32 0.0, %v1674
      %v1676 = vpop.f32.mrb[0].mxu0
      %v1677 = vadd.f32 0.0, %v1676
      %1678 = vmatprep.mubr.bf16.mxu0 %v1254
      %1679 = vmatmul.mubr.bf16.gmra.mrb[0].mxu0 %v1253
      %v1680 = vpop.f32.mrb[0].mxu0
      %v1681 = vadd.f32 0.0, %v1680
      %v1682 = vpop.f32.mrb[0].mxu0
      %v1683 = vadd.f32 0.0, %v1682
      %v1684 = vpop.f32.mrb[0].mxu0
      %v1685 = vadd.f32 0.0, %v1684
      %v1686 = vpop.f32.mrb[0].mxu0
      %v1687 = vadd.f32 0.0, %v1686
      %1688 = vmatprep.mubr.bf16.mxu0 %v1257
      %1689 = vmatmul.mubr.bf16.gmra.mrb[0].mxu0 %v1256
      %v1690 = vpop.f32.mrb[0].mxu0
      %v1691 = vadd.f32 0.0, %v1690
      %v1692 = vpop.f32.mrb[0].mxu0
      %v1693 = vadd.f32 0.0, %v1692
      %v1694 = vpop.f32.mrb[0].mxu0
      %v1695 = vadd.f32 0.0, %v1694
      %v1696 = vpop.f32.mrb[0].mxu0
      %v1697 = vadd.f32 0.0, %v1696
      %1698 = vmatprep.mubr.bf16.mxu0 %v1260
      %1699 = vmatmul.mubr.bf16.gmra.mrb[0].mxu0 %v1259
      %v1700 = vpop.f32.mrb[0].mxu0
      %v1701 = vadd.f32 0.0, %v1700
      %v1702 = vpop.f32.mrb[0].mxu0
      %v1703 = vadd.f32 0.0, %v1702
      %v1704 = vpop.f32.mrb[0].mxu0
      %v1705 = vadd.f32 0.0, %v1704
      %v1706 = vpop.f32.mrb[0].mxu0
      %v1707 = vadd.f32 0.0, %v1706
      %1708 = vmatprep.mubr.bf16.mxu0 %v1263
      %1709 = vmatmul.mubr.bf16.gmra.mrb[0].mxu0 %v1262
      %v1710 = vpop.f32.mrb[0].mxu0
      %v1711 = vadd.f32 0.0, %v1710
      %v1712 = vpop.f32.mrb[0].mxu0
      %v1713 = vadd.f32 0.0, %v1712
      %v1714 = vpop.f32.mrb[0].mxu0
      %v1715 = vadd.f32 0.0, %v1714
      %v1716 = vpop.f32.mrb[0].mxu0
      %v1717 = vadd.f32 0.0, %v1716
      %1718 = vmatprep.mubr.bf16.mxu0 %v1302
      %1719 = vmatmul.mubr.bf16.gmra.mrb[0].mxu0 %v1301
      %v1720 = vpop.f32.mrb[0].mxu0
      %v1721 = vadd.f32 0.0, %v1720
      %v1722 = vpop.f32.mrb[0].mxu0
      %v1723 = vadd.f32 0.0, %v1722
      %v1724 = vpop.f32.mrb[0].mxu0
      %v1725 = vadd.f32 0.0, %v1724
      %v1726 = vpop.f32.mrb[0].mxu0
      %v1727 = vadd.f32 0.0, %v1726
      %1728 = vmatprep.mubr.bf16.mxu0 %v1305
      %1729 = vmatmul.mubr.bf16.gmra.mrb[0].mxu0 %v1304
      %v1730 = vpop.f32.mrb[0].mxu0
      %v1731 = vadd.f32 0.0, %v1730
      %v1732 = vpop.f32.mrb[0].mxu0
      %v1733 = vadd.f32 0.0, %v1732
      %v1734 = vpop.f32.mrb[0].mxu0
      %v1735 = vadd.f32 0.0, %v1734
      %v1736 = vpop.f32.mrb[0].mxu0
      %v1737 = vadd.f32 0.0, %v1736
      %1738 = vdwg.mxu0
      %1739 = vmatprep.subr.bf16.mxu0 %v1485
      %1740 = vmatpush1.bf16.msra.mxu0 %v1484
      %1741 = vmatprep.subr.bf16.mxu0 %v1487
      %1742 = vmatpush1.bf16.msra.mxu0 %v1486
      %1743 = vmatprep.subr.bf16.mxu0 0
      %1744 = vmatpush1.bf16.msra.mxu0 0
      %1745 = vmatprep.subr.bf16.mxu0 0
      %1746 = vmatpush1.bf16.msra.mxu0 0
      %1747 = vmatprep.subr.bf16.mxu0 0
      %1748 = vmatpush1.bf16.msra.mxu0 0
      %1749 = vmatprep.subr.bf16.mxu0 0
      %1750 = vmatpush1.bf16.msra.mxu0 0
      %1751 = vmatprep.subr.bf16.mxu0 0
      %1752 = vmatpush1.bf16.msra.mxu0 0
      %1753 = vmatprep.subr.bf16.mxu0 0
      %1754 = vmatpush1.bf16.msra.mxu0 0
      %1755 = vmatprep.subr.bf16.mxu0 0
      %1756 = vmatpush1.bf16.msra.mxu0 0
      %1757 = vmatprep.subr.bf16.mxu0 0
      %1758 = vmatpush1.bf16.msra.mxu0 0
      %1759 = vmatprep.subr.bf16.mxu0 0
      %1760 = vmatpush1.bf16.msra.mxu0 0
      %1761 = vmatprep.subr.bf16.mxu0 0
      %1762 = vmatpush1.bf16.msra.mxu0 0
      %1763 = vmatprep.subr.bf16.mxu0 0
      %1764 = vmatpush1.bf16.msra.mxu0 0
      %1765 = vmatprep.subr.bf16.mxu0 0
      %1766 = vmatpush1.bf16.msra.mxu0 0
      %1767 = vmatprep.subr.bf16.mxu0 0
      %1768 = vmatpush1.bf16.msra.mxu0 0
      %1769 = vmatprep.subr.bf16.mxu0 0
      %1770 = vmatpush1.bf16.msra.mxu0 0
      %1771 = vmatprep.mubr.bf16.mxu0 0
      %1772 = vmatmul.mubr.bf16.gmra.mrb[0].mxu0 %v1525
      %v1773 = vpop.f32.mrb[0].mxu0
      %v1774 = vadd.f32 %v1601, %v1773
      %v1775 = vpop.f32.mrb[0].mxu0
      %v1776 = vadd.f32 %v1603, %v1775
      %v1777 = vpop.f32.mrb[0].mxu0
      %v1778 = vadd.f32 %v1605, %v1777
      %v1779 = vpop.f32.mrb[0].mxu0
      %v1780 = vadd.f32 %v1607, %v1779
      %1781 = vmatprep.mubr.bf16.mxu0 0
      %1782 = vmatmul.mubr.bf16.gmra.mrb[0].mxu0 %v1528
      %v1783 = vpop.f32.mrb[0].mxu0
      %v1784 = vadd.f32 %v1611, %v1783
      %v1785 = vpop.f32.mrb[0].mxu0
      %v1786 = vadd.f32 %v1613, %v1785
      %v1787 = vpop.f32.mrb[0].mxu0
      %v1788 = vadd.f32 %v1615, %v1787
      %v1789 = vpop.f32.mrb[0].mxu0
      %v1790 = vadd.f32 %v1617, %v1789
      %1791 = vmatprep.mubr.bf16.mxu0 0
      %1792 = vmatmul.mubr.bf16.gmra.mrb[0].mxu0 %v1531
      %v1793 = vpop.f32.mrb[0].mxu0
      %v1794 = vadd.f32 %v1621, %v1793
      %v1795 = vpop.f32.mrb[0].mxu0
      %v1796 = vadd.f32 %v1623, %v1795
      %v1797 = vpop.f32.mrb[0].mxu0
      %v1798 = vadd.f32 %v1625, %v1797
      %v1799 = vpop.f32.mrb[0].mxu0
      %v1800 = vadd.f32 %v1627, %v1799
      %1801 = vmatprep.mubr.bf16.mxu0 0
      %1802 = vmatmul.mubr.bf16.gmra.mrb[0].mxu0 %v1534
      %v1803 = vpop.f32.mrb[0].mxu0
      %v1804 = vadd.f32 %v1631, %v1803
      %v1805 = vpop.f32.mrb[0].mxu0
      %v1806 = vadd.f32 %v1633, %v1805
      %v1807 = vpop.f32.mrb[0].mxu0
      %v1808 = vadd.f32 %v1635, %v1807
      %v1809 = vpop.f32.mrb[0].mxu0
      %v1810 = vadd.f32 %v1637, %v1809
      %1811 = vmatprep.mubr.bf16.mxu0 0
      %1812 = vmatmul.mubr.bf16.gmra.mrb[0].mxu0 %v1537
      %v1813 = vpop.f32.mrb[0].mxu0
      %v1814 = vadd.f32 %v1641, %v1813
      %v1815 = vpop.f32.mrb[0].mxu0
      %v1816 = vadd.f32 %v1643, %v1815
      %v1817 = vpop.f32.mrb[0].mxu0
      %v1818 = vadd.f32 %v1645, %v1817
      %v1819 = vpop.f32.mrb[0].mxu0
      %v1820 = vadd.f32 %v1647, %v1819
      %1821 = vmatprep.mubr.bf16.mxu0 0
      %1822 = vmatmul.mubr.bf16.gmra.mrb[0].mxu0 %v1540
      %v1823 = vpop.f32.mrb[0].mxu0
      %v1824 = vadd.f32 %v1651, %v1823
      %v1825 = vpop.f32.mrb[0].mxu0
      %v1826 = vadd.f32 %v1653, %v1825
      %v1827 = vpop.f32.mrb[0].mxu0
      %v1828 = vadd.f32 %v1655, %v1827
      %v1829 = vpop.f32.mrb[0].mxu0
      %v1830 = vadd.f32 %v1657, %v1829
      %1831 = vmatprep.mubr.bf16.mxu0 0
      %1832 = vmatmul.mubr.bf16.gmra.mrb[0].mxu0 %v1543
      %v1833 = vpop.f32.mrb[0].mxu0
      %v1834 = vadd.f32 %v1661, %v1833
      %v1835 = vpop.f32.mrb[0].mxu0
      %v1836 = vadd.f32 %v1663, %v1835
      %v1837 = vpop.f32.mrb[0].mxu0
      %v1838 = vadd.f32 %v1665, %v1837
      %v1839 = vpop.f32.mrb[0].mxu0
      %v1840 = vadd.f32 %v1667, %v1839
      %1841 = vmatprep.mubr.bf16.mxu0 0
      %1842 = vmatmul.mubr.bf16.gmra.mrb[0].mxu0 %v1546
      %v1843 = vpop.f32.mrb[0].mxu0
      %v1844 = vadd.f32 %v1671, %v1843
      %v1845 = vpop.f32.mrb[0].mxu0
      %v1846 = vadd.f32 %v1673, %v1845
      %v1847 = vpop.f32.mrb[0].mxu0
      %v1848 = vadd.f32 %v1675, %v1847
      %v1849 = vpop.f32.mrb[0].mxu0
      %v1850 = vadd.f32 %v1677, %v1849
      %1851 = vmatprep.mubr.bf16.mxu0 0
      %1852 = vmatmul.mubr.bf16.gmra.mrb[0].mxu0 %v1549
      %v1853 = vpop.f32.mrb[0].mxu0
      %v1854 = vadd.f32 %v1681, %v1853
      %v1855 = vpop.f32.mrb[0].mxu0
      %v1856 = vadd.f32 %v1683, %v1855
      %v1857 = vpop.f32.mrb[0].mxu0
      %v1858 = vadd.f32 %v1685, %v1857
      %v1859 = vpop.f32.mrb[0].mxu0
      %v1860 = vadd.f32 %v1687, %v1859
      %1861 = vmatprep.mubr.bf16.mxu0 0
      %1862 = vmatmul.mubr.bf16.gmra.mrb[0].mxu0 %v1552
      %v1863 = vpop.f32.mrb[0].mxu0
      %v1864 = vadd.f32 %v1691, %v1863
      %v1865 = vpop.f32.mrb[0].mxu0
      %v1866 = vadd.f32 %v1693, %v1865
      %v1867 = vpop.f32.mrb[0].mxu0
      %v1868 = vadd.f32 %v1695, %v1867
      %v1869 = vpop.f32.mrb[0].mxu0
      %v1870 = vadd.f32 %v1697, %v1869
      %1871 = vmatprep.mubr.bf16.mxu0 0
      %1872 = vmatmul.mubr.bf16.gmra.mrb[0].mxu0 %v1555
      %v1873 = vpop.f32.mrb[0].mxu0
      %v1874 = vadd.f32 %v1701, %v1873
      %v1875 = vpop.f32.mrb[0].mxu0
      %v1876 = vadd.f32 %v1703, %v1875
      %v1877 = vpop.f32.mrb[0].mxu0
      %v1878 = vadd.f32 %v1705, %v1877
      %v1879 = vpop.f32.mrb[0].mxu0
      %v1880 = vadd.f32 %v1707, %v1879
      %1881 = vmatprep.mubr.bf16.mxu0 0
      %1882 = vmatmul.mubr.bf16.gmra.mrb[0].mxu0 %v1558
      %v1883 = vpop.f32.mrb[0].mxu0
      %v1884 = vadd.f32 %v1711, %v1883
      %v1885 = vpop.f32.mrb[0].mxu0
      %v1886 = vadd.f32 %v1713, %v1885
      %v1887 = vpop.f32.mrb[0].mxu0
      %v1888 = vadd.f32 %v1715, %v1887
      %v1889 = vpop.f32.mrb[0].mxu0
      %v1890 = vadd.f32 %v1717, %v1889
      %1891 = vmatprep.mubr.bf16.mxu0 0
      %1892 = vmatmul.mubr.bf16.gmra.mrb[0].mxu0 %v1561
      %v1893 = vpop.f32.mrb[0].mxu0
      %v1894 = vadd.f32 %v1721, %v1893
      %v1895 = vpop.f32.mrb[0].mxu0
      %v1896 = vadd.f32 %v1723, %v1895
      %v1897 = vpop.f32.mrb[0].mxu0
      %v1898 = vadd.f32 %v1725, %v1897
      %v1899 = vpop.f32.mrb[0].mxu0
      %v1900 = vadd.f32 %v1727, %v1899
      %1901 = vmatprep.mubr.bf16.mxu0 0
      %1902 = vmatmul.mubr.bf16.gmra.mrb[0].mxu0 %v1564
      %v1903 = vpop.f32.mrb[0].mxu0
      %v1904 = vadd.f32 %v1731, %v1903
      %v1905 = vpop.f32.mrb[0].mxu0
      %v1906 = vadd.f32 %v1733, %v1905
      %v1907 = vpop.f32.mrb[0].mxu0
      %v1908 = vadd.f32 %v1735, %v1907
      %v1909 = vpop.f32.mrb[0].mxu0
      %v1910 = vadd.f32 %v1737, %v1909
      %1911 = vdwg.mxu0
      %v1948 = vunpack.c.l.b16 %v1265
      %v1949 = vunpack.c.h.b16 %v1265
      %v1950 = vunpack.c.l.b16 %v1266
      %v1951 = vunpack.c.h.b16 %v1266
      %v1952 = vunpack.c.l.b16 %v1267
      %v1953 = vunpack.c.h.b16 %v1267
      %v1954 = vunpack.c.l.b16 %v1268
      %v1955 = vunpack.c.h.b16 %v1268
      %v1956 = vunpack.c.l.b16 %v1269
      %v1957 = vunpack.c.h.b16 %v1269
      %v1958 = vunpack.c.l.b16 %v1270
      %v1959 = vunpack.c.h.b16 %v1270
      %v1960 = vunpack.c.l.b16 %v1271
      %v1961 = vunpack.c.h.b16 %v1271
      %v1962 = vunpack.c.l.b16 %v1272
      %v1963 = vunpack.c.h.b16 %v1272
      %v1964 = vunpack.c.l.b16 %v1273
      %v1965 = vunpack.c.h.b16 %v1273
      %v1966 = vunpack.c.l.b16 %v1274
      %v1967 = vunpack.c.h.b16 %v1274
      %v1968 = vunpack.c.l.b16 %v1275
      %v1969 = vunpack.c.h.b16 %v1275
      %v1970 = vunpack.c.l.b16 %v1276
      %v1971 = vunpack.c.h.b16 %v1276
      %v1972 = vunpack.c.l.b16 %v1277
      %v1973 = vunpack.c.h.b16 %v1277
      %v1974 = vunpack.c.l.b16 %v1278
      %v1975 = vunpack.c.h.b16 %v1278
      %v1976 = vunpack.c.l.b16 %v1279
      %v1977 = vunpack.c.h.b16 %v1279
      %v1978 = vunpack.c.l.b16 %v1280
      %v1979 = vunpack.c.h.b16 %v1280
      %v1980 = vunpack.c.l.b16 %v1281
      %v1981 = vunpack.c.h.b16 %v1281
      %v1982 = vunpack.c.l.b16 %v1282
      %v1983 = vunpack.c.h.b16 %v1282
      %v1984 = vunpack.c.l.b16 %v1283
      %v1985 = vunpack.c.h.b16 %v1283
      %v1986 = vunpack.c.l.b16 %v1284
      %v1987 = vunpack.c.h.b16 %v1284
      %v1988 = vunpack.c.l.b16 %v1285
      %v1989 = vunpack.c.h.b16 %v1285
      %v1990 = vunpack.c.l.b16 %v1286
      %v1991 = vunpack.c.h.b16 %v1286
      %v1992 = vunpack.c.l.b16 %v1287
      %v1993 = vunpack.c.h.b16 %v1287
      %v1994 = vunpack.c.l.b16 %v1288
      %v1995 = vunpack.c.h.b16 %v1288
      %v1996 = vunpack.c.l.b16 %v1289
      %v1997 = vunpack.c.h.b16 %v1289
      %v1998 = vunpack.c.l.b16 %v1290
      %v1999 = vunpack.c.h.b16 %v1290
      %v2000 = vunpack.c.l.b16 %v1291
      %v2001 = vunpack.c.h.b16 %v1291
      %v2002 = vunpack.c.l.b16 %v1292
      %v2003 = vunpack.c.h.b16 %v1292
      %v2004 = vunpack.c.l.b16 %v1293
      %v2005 = vunpack.c.h.b16 %v1293
      %v2006 = vunpack.c.l.b16 %v1294
      %v2007 = vunpack.c.h.b16 %v1294
      %v2008 = vunpack.c.l.b16 %v1295
      %v2009 = vunpack.c.h.b16 %v1295
      %v2010 = vunpack.c.l.b16 %v1296
      %v2011 = vunpack.c.h.b16 %v1296
      %v2012 = vunpack.c.l.b16 %v1297
      %v2013 = vunpack.c.h.b16 %v1297
      %v2014 = vunpack.c.l.b16 %v1298
      %v2015 = vunpack.c.h.b16 %v1298
      %v2016 = vunpack.c.l.b16 %v1299
      %v2017 = vunpack.c.h.b16 %v1299
      %v2018 = vunpack.c.l.b16 %v1300
      %v2019 = vunpack.c.h.b16 %v1300
      %v2020 = vpack.c.b16 %v1950, %v1948
      %v2021 = vpack.c.b16 %v1951, %v1949
      %v2022 = vpack.c.b16 %v1954, %v1952
      %v2023 = vpack.c.b16 %v1955, %v1953
      %v2024 = vpack.c.b16 %v1958, %v1956
      %v2025 = vpack.c.b16 %v1959, %v1957
      %v2026 = vpack.c.b16 %v1962, %v1960
      %v2027 = vpack.c.b16 %v1963, %v1961
      %v2028 = vpack.c.b16 %v1966, %v1964
      %v2029 = vpack.c.b16 %v1967, %v1965
      %v2030 = vpack.c.b16 %v1970, %v1968
      %v2031 = vpack.c.b16 %v1971, %v1969
      %v2032 = vpack.c.b16 %v1974, %v1972
      %v2033 = vpack.c.b16 %v1975, %v1973
      %v2034 = vpack.c.b16 %v1978, %v1976
      %v2035 = vpack.c.b16 %v1979, %v1977
      %v2036 = vpack.c.b16 %v1982, %v1980
      %v2037 = vpack.c.b16 %v1983, %v1981
      %v2038 = vpack.c.b16 %v1986, %v1984
      %v2039 = vpack.c.b16 %v1987, %v1985
      %v2040 = vpack.c.b16 %v1990, %v1988
      %v2041 = vpack.c.b16 %v1991, %v1989
      %v2042 = vpack.c.b16 %v1994, %v1992
      %v2043 = vpack.c.b16 %v1995, %v1993
      %v2044 = vpack.c.b16 %v1998, %v1996
      %v2045 = vpack.c.b16 %v1999, %v1997
      %v2046 = vpack.c.b16 %v2002, %v2000
      %v2047 = vpack.c.b16 %v2003, %v2001
      %v2048 = vpack.c.b16 %v2006, %v2004
      %v2049 = vpack.c.b16 %v2007, %v2005
      %v2050 = vpack.c.b16 %v2010, %v2008
      %v2051 = vpack.c.b16 %v2011, %v2009
      %v2052 = vpack.c.b16 %v2014, %v2012
      %v2053 = vpack.c.b16 %v2015, %v2013
      %v2054 = vpack.c.b16 %v2018, %v2016
      %v2055 = vpack.c.b16 %v2019, %v2017
      %v2093 = vsel %vm393, %v1225, 0
      %v2096 = vsel %vm393, %v1228, 0
      %2098 = vmatprep.subr.bf16.mxu0 %v2021
      %2099 = vmatpush1.bf16.msra.mxu0 %v2020
      %2100 = vmatprep.subr.bf16.mxu0 %v2023
      %2101 = vmatpush1.bf16.msra.mxu0 %v2022
      %2102 = vmatprep.subr.bf16.mxu0 %v2025
      %2103 = vmatpush1.bf16.msra.mxu0 %v2024
      %2104 = vmatprep.subr.bf16.mxu0 %v2027
      %2105 = vmatpush1.bf16.msra.mxu0 %v2026
      %2106 = vmatprep.subr.bf16.mxu0 %v2029
      %2107 = vmatpush1.bf16.msra.mxu0 %v2028
      %2108 = vmatprep.subr.bf16.mxu0 %v2031
      %2109 = vmatpush1.bf16.msra.mxu0 %v2030
      %2110 = vmatprep.subr.bf16.mxu0 %v2033
      %2111 = vmatpush1.bf16.msra.mxu0 %v2032
      %2112 = vmatprep.subr.bf16.mxu0 %v2035
      %2113 = vmatpush1.bf16.msra.mxu0 %v2034
      %2114 = vmatprep.subr.bf16.mxu0 %v2037
      %2115 = vmatpush1.bf16.msra.mxu0 %v2036
      %2116 = vmatprep.subr.bf16.mxu0 %v2039
      %2117 = vmatpush1.bf16.msra.mxu0 %v2038
      %2118 = vmatprep.subr.bf16.mxu0 %v2041
      %2119 = vmatpush1.bf16.msra.mxu0 %v2040
      %2120 = vmatprep.subr.bf16.mxu0 %v2043
      %2121 = vmatpush1.bf16.msra.mxu0 %v2042
      %2122 = vmatprep.subr.bf16.mxu0 %v2045
      %2123 = vmatpush1.bf16.msra.mxu0 %v2044
      %2124 = vmatprep.subr.bf16.mxu0 %v2047
      %2125 = vmatpush1.bf16.msra.mxu0 %v2046
      %2126 = vmatprep.subr.bf16.mxu0 %v2049
      %2127 = vmatpush1.bf16.msra.mxu0 %v2048
      %2128 = vmatprep.subr.bf16.mxu0 %v2051
      %2129 = vmatpush1.bf16.msra.mxu0 %v2050
      %2130 = vmatprep.mubr.bf16.mxu0 %v1224
      %2131 = vmatmul.mubr.bf16.gmra.mrb[0].mxu0 %v1223
      %v2132 = vpop.f32.mrb[0].mxu0
      %v2133 = vadd.f32 %v1774, %v2132
      %v2134 = vpop.f32.mrb[0].mxu0
      %v2135 = vadd.f32 %v1776, %v2134
      %v2136 = vpop.f32.mrb[0].mxu0
      %v2137 = vadd.f32 %v1778, %v2136
      %v2138 = vpop.f32.mrb[0].mxu0
      %v2139 = vadd.f32 %v1780, %v2138
      %2140 = vmatprep.mubr.bf16.mxu0 %v1227
      %2141 = vmatmul.mubr.bf16.gmra.mrb[0].mxu0 %v1226
      %v2142 = vpop.f32.mrb[0].mxu0
      %v2143 = vadd.f32 %v1784, %v2142
      %v2144 = vpop.f32.mrb[0].mxu0
      %v2145 = vadd.f32 %v1786, %v2144
      %v2146 = vpop.f32.mrb[0].mxu0
      %v2147 = vadd.f32 %v1788, %v2146
      %v2148 = vpop.f32.mrb[0].mxu0
      %v2149 = vadd.f32 %v1790, %v2148
      %2150 = vmatprep.mubr.bf16.mxu0 %v1230
      %2151 = vmatmul.mubr.bf16.gmra.mrb[0].mxu0 %v1229
      %v2152 = vpop.f32.mrb[0].mxu0
      %v2153 = vadd.f32 %v1794, %v2152
      %v2154 = vpop.f32.mrb[0].mxu0
      %v2155 = vadd.f32 %v1796, %v2154
      %v2156 = vpop.f32.mrb[0].mxu0
      %v2157 = vadd.f32 %v1798, %v2156
      %v2158 = vpop.f32.mrb[0].mxu0
      %v2159 = vadd.f32 %v1800, %v2158
      %2160 = vmatprep.mubr.bf16.mxu0 %v1233
      %2161 = vmatmul.mubr.bf16.gmra.mrb[0].mxu0 %v1232
      %v2162 = vpop.f32.mrb[0].mxu0
      %v2163 = vadd.f32 %v1804, %v2162
      %v2164 = vpop.f32.mrb[0].mxu0
      %v2165 = vadd.f32 %v1806, %v2164
      %v2166 = vpop.f32.mrb[0].mxu0
      %v2167 = vadd.f32 %v1808, %v2166
      %v2168 = vpop.f32.mrb[0].mxu0
      %v2169 = vadd.f32 %v1810, %v2168
      %2170 = vmatprep.mubr.bf16.mxu0 %v1236
      %2171 = vmatmul.mubr.bf16.gmra.mrb[0].mxu0 %v1235
      %v2172 = vpop.f32.mrb[0].mxu0
      %v2173 = vadd.f32 %v1814, %v2172
      %v2174 = vpop.f32.mrb[0].mxu0
      %v2175 = vadd.f32 %v1816, %v2174
      %v2176 = vpop.f32.mrb[0].mxu0
      %v2177 = vadd.f32 %v1818, %v2176
      %v2178 = vpop.f32.mrb[0].mxu0
      %v2179 = vadd.f32 %v1820, %v2178
      %2180 = vmatprep.mubr.bf16.mxu0 %v1239
      %2181 = vmatmul.mubr.bf16.gmra.mrb[0].mxu0 %v1238
      %v2182 = vpop.f32.mrb[0].mxu0
      %v2183 = vadd.f32 %v1824, %v2182
      %v2184 = vpop.f32.mrb[0].mxu0
      %v2185 = vadd.f32 %v1826, %v2184
      %v2186 = vpop.f32.mrb[0].mxu0
      %v2187 = vadd.f32 %v1828, %v2186
      %v2188 = vpop.f32.mrb[0].mxu0
      %v2189 = vadd.f32 %v1830, %v2188
      %2190 = vmatprep.mubr.bf16.mxu0 %v1242
      %2191 = vmatmul.mubr.bf16.gmra.mrb[0].mxu0 %v1241
      %v2192 = vpop.f32.mrb[0].mxu0
      %v2193 = vadd.f32 %v1834, %v2192
      %v2194 = vpop.f32.mrb[0].mxu0
      %v2195 = vadd.f32 %v1836, %v2194
      %v2196 = vpop.f32.mrb[0].mxu0
      %v2197 = vadd.f32 %v1838, %v2196
      %v2198 = vpop.f32.mrb[0].mxu0
      %v2199 = vadd.f32 %v1840, %v2198
      %2200 = vmatprep.mubr.bf16.mxu0 %v1245
      %2201 = vmatmul.mubr.bf16.gmra.mrb[0].mxu0 %v1244
      %v2202 = vpop.f32.mrb[0].mxu0
      %v2203 = vadd.f32 %v1844, %v2202
      %v2204 = vpop.f32.mrb[0].mxu0
      %v2205 = vadd.f32 %v1846, %v2204
      %v2206 = vpop.f32.mrb[0].mxu0
      %v2207 = vadd.f32 %v1848, %v2206
      %v2208 = vpop.f32.mrb[0].mxu0
      %v2209 = vadd.f32 %v1850, %v2208
      %2210 = vmatprep.mubr.bf16.mxu0 %v1248
      %2211 = vmatmul.mubr.bf16.gmra.mrb[0].mxu0 %v1247
      %v2212 = vpop.f32.mrb[0].mxu0
      %v2213 = vadd.f32 %v1854, %v2212
      %v2214 = vpop.f32.mrb[0].mxu0
      %v2215 = vadd.f32 %v1856, %v2214
      %v2216 = vpop.f32.mrb[0].mxu0
      %v2217 = vadd.f32 %v1858, %v2216
      %v2218 = vpop.f32.mrb[0].mxu0
      %v2219 = vadd.f32 %v1860, %v2218
      %2220 = vmatprep.mubr.bf16.mxu0 %v1251
      %2221 = vmatmul.mubr.bf16.gmra.mrb[0].mxu0 %v1250
      %v2222 = vpop.f32.mrb[0].mxu0
      %v2223 = vadd.f32 %v1864, %v2222
      %v2224 = vpop.f32.mrb[0].mxu0
      %v2225 = vadd.f32 %v1866, %v2224
      %v2226 = vpop.f32.mrb[0].mxu0
      %v2227 = vadd.f32 %v1868, %v2226
      %v2228 = vpop.f32.mrb[0].mxu0
      %v2229 = vadd.f32 %v1870, %v2228
      %2230 = vmatprep.mubr.bf16.mxu0 %v1254
      %2231 = vmatmul.mubr.bf16.gmra.mrb[0].mxu0 %v1253
      %v2232 = vpop.f32.mrb[0].mxu0
      %v2233 = vadd.f32 %v1874, %v2232
      %v2234 = vpop.f32.mrb[0].mxu0
      %v2235 = vadd.f32 %v1876, %v2234
      %v2236 = vpop.f32.mrb[0].mxu0
      %v2237 = vadd.f32 %v1878, %v2236
      %v2238 = vpop.f32.mrb[0].mxu0
      %v2239 = vadd.f32 %v1880, %v2238
      %2240 = vmatprep.mubr.bf16.mxu0 %v1257
      %2241 = vmatmul.mubr.bf16.gmra.mrb[0].mxu0 %v1256
      %v2242 = vpop.f32.mrb[0].mxu0
      %v2243 = vadd.f32 %v1884, %v2242
      %v2244 = vpop.f32.mrb[0].mxu0
      %v2245 = vadd.f32 %v1886, %v2244
      %v2246 = vpop.f32.mrb[0].mxu0
      %v2247 = vadd.f32 %v1888, %v2246
      %v2248 = vpop.f32.mrb[0].mxu0
      %v2249 = vadd.f32 %v1890, %v2248
      %2250 = vmatprep.mubr.bf16.mxu0 %v1260
      %2251 = vmatmul.mubr.bf16.gmra.mrb[0].mxu0 %v1259
      %v2252 = vpop.f32.mrb[0].mxu0
      %v2253 = vadd.f32 %v1894, %v2252
      %v2254 = vpop.f32.mrb[0].mxu0
      %v2255 = vadd.f32 %v1896, %v2254
      %v2256 = vpop.f32.mrb[0].mxu0
      %v2257 = vadd.f32 %v1898, %v2256
      %v2258 = vpop.f32.mrb[0].mxu0
      %v2259 = vadd.f32 %v1900, %v2258
      %2260 = vmatprep.mubr.bf16.mxu0 %v1263
      %2261 = vmatmul.mubr.bf16.gmra.mrb[0].mxu0 %v1262
      %v2262 = vpop.f32.mrb[0].mxu0
      %v2263 = vadd.f32 %v1904, %v2262
      %v2264 = vpop.f32.mrb[0].mxu0
      %v2265 = vadd.f32 %v1906, %v2264
      %v2266 = vpop.f32.mrb[0].mxu0
      %v2267 = vadd.f32 %v1908, %v2266
      %v2268 = vpop.f32.mrb[0].mxu0
      %v2269 = vadd.f32 %v1910, %v2268
      %2270 = vdwg.mxu0
      %2271 = vmatprep.subr.bf16.mxu0 %v2053
      %2272 = vmatpush1.bf16.msra.mxu0 %v2052
      %2273 = vmatprep.subr.bf16.mxu0 %v2055
      %2274 = vmatpush1.bf16.msra.mxu0 %v2054
      %2275 = vmatprep.subr.bf16.mxu0 0
      %2276 = vmatpush1.bf16.msra.mxu0 0
      %2277 = vmatprep.subr.bf16.mxu0 0
      %2278 = vmatpush1.bf16.msra.mxu0 0
      %2279 = vmatprep.subr.bf16.mxu0 0
      %2280 = vmatpush1.bf16.msra.mxu0 0
      %2281 = vmatprep.subr.bf16.mxu0 0
      %2282 = vmatpush1.bf16.msra.mxu0 0
      %2283 = vmatprep.subr.bf16.mxu0 0
      %2284 = vmatpush1.bf16.msra.mxu0 0
      %2285 = vmatprep.subr.bf16.mxu0 0
      %2286 = vmatpush1.bf16.msra.mxu0 0
      %2287 = vmatprep.subr.bf16.mxu0 0
      %2288 = vmatpush1.bf16.msra.mxu0 0
      %2289 = vmatprep.subr.bf16.mxu0 0
      %2290 = vmatpush1.bf16.msra.mxu0 0
      %2291 = vmatprep.subr.bf16.mxu0 0
      %2292 = vmatpush1.bf16.msra.mxu0 0
      %2293 = vmatprep.subr.bf16.mxu0 0
      %2294 = vmatpush1.bf16.msra.mxu0 0
      %2295 = vmatprep.subr.bf16.mxu0 0
      %2296 = vmatpush1.bf16.msra.mxu0 0
      %2297 = vmatprep.subr.bf16.mxu0 0
      %2298 = vmatpush1.bf16.msra.mxu0 0
      %2299 = vmatprep.subr.bf16.mxu0 0
      %2300 = vmatpush1.bf16.msra.mxu0 0
      %2301 = vmatprep.subr.bf16.mxu0 0
      %2302 = vmatpush1.bf16.msra.mxu0 0
      %2303 = vmatprep.mubr.bf16.mxu0 0
      %2304 = vmatmul.mubr.bf16.gmra.mrb[0].mxu0 %v2093
      %v2305 = vpop.f32.mrb[0].mxu0
      %v2306 = vadd.f32 %v2133, %v2305
      %v2307 = vpop.f32.mrb[0].mxu0
      %v2308 = vadd.f32 %v2135, %v2307
      %v2309 = vpop.f32.mrb[0].mxu0
      %v2310 = vadd.f32 %v2137, %v2309
      %v2311 = vpop.f32.mrb[0].mxu0
      %v2312 = vadd.f32 %v2139, %v2311
      %2313 = vmatprep.mubr.bf16.mxu0 0
      %2314 = vmatmul.mubr.bf16.gmra.mrb[0].mxu0 %v2096
      %v2315 = vpop.f32.mrb[0].mxu0
      %v2316 = vadd.f32 %v2143, %v2315
      %v2317 = vpop.f32.mrb[0].mxu0
      %v2318 = vadd.f32 %v2145, %v2317
      %v2319 = vpop.f32.mrb[0].mxu0
      %v2320 = vadd.f32 %v2147, %v2319
      %v2321 = vpop.f32.mrb[0].mxu0
      %v2322 = vadd.f32 %v2149, %v2321
      %2323 = vmatprep.mubr.bf16.mxu0 0
      %2324 = vmatmul.mubr.bf16.gmra.mrb[0].mxu0 %v1525
      %v2325 = vpop.f32.mrb[0].mxu0
      %v2326 = vadd.f32 %v2153, %v2325
      %v2327 = vpop.f32.mrb[0].mxu0
      %v2328 = vadd.f32 %v2155, %v2327
      %v2329 = vpop.f32.mrb[0].mxu0
      %v2330 = vadd.f32 %v2157, %v2329
      %v2331 = vpop.f32.mrb[0].mxu0
      %v2332 = vadd.f32 %v2159, %v2331
      %2333 = vmatprep.mubr.bf16.mxu0 0
      %2334 = vmatmul.mubr.bf16.gmra.mrb[0].mxu0 %v1528
      %v2335 = vpop.f32.mrb[0].mxu0
      %v2336 = vadd.f32 %v2163, %v2335
      %v2337 = vpop.f32.mrb[0].mxu0
      %v2338 = vadd.f32 %v2165, %v2337
      %v2339 = vpop.f32.mrb[0].mxu0
      %v2340 = vadd.f32 %v2167, %v2339
      %v2341 = vpop.f32.mrb[0].mxu0
      %v2342 = vadd.f32 %v2169, %v2341
      %2343 = vmatprep.mubr.bf16.mxu0 0
      %2344 = vmatmul.mubr.bf16.gmra.mrb[0].mxu0 %v1531
      %v2345 = vpop.f32.mrb[0].mxu0
      %v2346 = vadd.f32 %v2173, %v2345
      %v2347 = vpop.f32.mrb[0].mxu0
      %v2348 = vadd.f32 %v2175, %v2347
      %v2349 = vpop.f32.mrb[0].mxu0
      %v2350 = vadd.f32 %v2177, %v2349
      %v2351 = vpop.f32.mrb[0].mxu0
      %v2352 = vadd.f32 %v2179, %v2351
      %2353 = vmatprep.mubr.bf16.mxu0 0
      %2354 = vmatmul.mubr.bf16.gmra.mrb[0].mxu0 %v1534
      %v2355 = vpop.f32.mrb[0].mxu0
      %v2356 = vadd.f32 %v2183, %v2355
      %v2357 = vpop.f32.mrb[0].mxu0
      %v2358 = vadd.f32 %v2185, %v2357
      %v2359 = vpop.f32.mrb[0].mxu0
      %v2360 = vadd.f32 %v2187, %v2359
      %v2361 = vpop.f32.mrb[0].mxu0
      %v2362 = vadd.f32 %v2189, %v2361
      %2363 = vmatprep.mubr.bf16.mxu0 0
      %2364 = vmatmul.mubr.bf16.gmra.mrb[0].mxu0 %v1537
      %v2365 = vpop.f32.mrb[0].mxu0
      %v2366 = vadd.f32 %v2193, %v2365
      %v2367 = vpop.f32.mrb[0].mxu0
      %v2368 = vadd.f32 %v2195, %v2367
      %v2369 = vpop.f32.mrb[0].mxu0
      %v2370 = vadd.f32 %v2197, %v2369
      %v2371 = vpop.f32.mrb[0].mxu0
      %v2372 = vadd.f32 %v2199, %v2371
      %2373 = vmatprep.mubr.bf16.mxu0 0
      %2374 = vmatmul.mubr.bf16.gmra.mrb[0].mxu0 %v1540
      %v2375 = vpop.f32.mrb[0].mxu0
      %v2376 = vadd.f32 %v2203, %v2375
      %v2377 = vpop.f32.mrb[0].mxu0
      %v2378 = vadd.f32 %v2205, %v2377
      %v2379 = vpop.f32.mrb[0].mxu0
      %v2380 = vadd.f32 %v2207, %v2379
      %v2381 = vpop.f32.mrb[0].mxu0
      %v2382 = vadd.f32 %v2209, %v2381
      %2383 = vmatprep.mubr.bf16.mxu0 0
      %2384 = vmatmul.mubr.bf16.gmra.mrb[0].mxu0 %v1543
      %v2385 = vpop.f32.mrb[0].mxu0
      %v2386 = vadd.f32 %v2213, %v2385
      %v2387 = vpop.f32.mrb[0].mxu0
      %v2388 = vadd.f32 %v2215, %v2387
      %v2389 = vpop.f32.mrb[0].mxu0
      %v2390 = vadd.f32 %v2217, %v2389
      %v2391 = vpop.f32.mrb[0].mxu0
      %v2392 = vadd.f32 %v2219, %v2391
      %2393 = vmatprep.mubr.bf16.mxu0 0
      %2394 = vmatmul.mubr.bf16.gmra.mrb[0].mxu0 %v1546
      %v2395 = vpop.f32.mrb[0].mxu0
      %v2396 = vadd.f32 %v2223, %v2395
      %v2397 = vpop.f32.mrb[0].mxu0
      %v2398 = vadd.f32 %v2225, %v2397
      %v2399 = vpop.f32.mrb[0].mxu0
      %v2400 = vadd.f32 %v2227, %v2399
      %v2401 = vpop.f32.mrb[0].mxu0
      %v2402 = vadd.f32 %v2229, %v2401
      %2403 = vmatprep.mubr.bf16.mxu0 0
      %2404 = vmatmul.mubr.bf16.gmra.mrb[0].mxu0 %v1549
      %v2405 = vpop.f32.mrb[0].mxu0
      %v2406 = vadd.f32 %v2233, %v2405
      %v2407 = vpop.f32.mrb[0].mxu0
      %v2408 = vadd.f32 %v2235, %v2407
      %v2409 = vpop.f32.mrb[0].mxu0
      %v2410 = vadd.f32 %v2237, %v2409
      %v2411 = vpop.f32.mrb[0].mxu0
      %v2412 = vadd.f32 %v2239, %v2411
      %2413 = vmatprep.mubr.bf16.mxu0 0
      %2414 = vmatmul.mubr.bf16.gmra.mrb[0].mxu0 %v1552
      %v2415 = vpop.f32.mrb[0].mxu0
      %v2416 = vadd.f32 %v2243, %v2415
      %v2417 = vpop.f32.mrb[0].mxu0
      %v2418 = vadd.f32 %v2245, %v2417
      %v2419 = vpop.f32.mrb[0].mxu0
      %v2420 = vadd.f32 %v2247, %v2419
      %v2421 = vpop.f32.mrb[0].mxu0
      %v2422 = vadd.f32 %v2249, %v2421
      %2423 = vmatprep.mubr.bf16.mxu0 0
      %2424 = vmatmul.mubr.bf16.gmra.mrb[0].mxu0 %v1555
      %v2425 = vpop.f32.mrb[0].mxu0
      %v2426 = vadd.f32 %v2253, %v2425
      %v2427 = vpop.f32.mrb[0].mxu0
      %v2428 = vadd.f32 %v2255, %v2427
      %v2429 = vpop.f32.mrb[0].mxu0
      %v2430 = vadd.f32 %v2257, %v2429
      %v2431 = vpop.f32.mrb[0].mxu0
      %v2432 = vadd.f32 %v2259, %v2431
      %2433 = vmatprep.mubr.bf16.mxu0 0
      %2434 = vmatmul.mubr.bf16.gmra.mrb[0].mxu0 %v1558
      %v2435 = vpop.f32.mrb[0].mxu0
      %v2436 = vadd.f32 %v2263, %v2435
      %v2437 = vpop.f32.mrb[0].mxu0
      %v2438 = vadd.f32 %v2265, %v2437
      %v2439 = vpop.f32.mrb[0].mxu0
      %v2440 = vadd.f32 %v2267, %v2439
      %v2441 = vpop.f32.mrb[0].mxu0
      %v2442 = vadd.f32 %v2269, %v2441
      %2443 = vdwg.mxu0
      %v2444 = vld [vmem:[#allocation2 + $0x60] sm:$0xff]
      %v2445 = vld [vmem:[#allocation2 + $0x68] sm:$0xff]
      %v2446 = vld [vmem:[#allocation2 + $0x70] sm:$0xff]
      %v2447 = vld [vmem:[#allocation2 + $0x78] sm:$0xff]
      %v2448 = vld [vmem:[#allocation2 + $0x80] sm:$0xff]
      %v2449 = vld [vmem:[#allocation2 + $0x88] sm:$0xff]
      %v2450 = vld [vmem:[#allocation2 + $0x90] sm:$0xff]
      %v2451 = vld [vmem:[#allocation2 + $0x98] sm:$0xff]
      %v2452 = vld [vmem:[#allocation2 + $0xa0] sm:$0xff]
      %v2453 = vld [vmem:[#allocation2 + $0xa8] sm:$0xff]
      %v2454 = vld [vmem:[#allocation2 + $0xb0] sm:$0xff]
      %v2455 = vld [vmem:[#allocation2 + $0xb8] sm:$0xff]
      %v2456 = vld [vmem:[#allocation2 + $0xc0] sm:$0xff]
      %v2457 = vld [vmem:[#allocation2 + $0xc8] sm:$0xff]
      %v2458 = vld [vmem:[#allocation2 + $0xd0] sm:$0xff]
      %v2459 = vld [vmem:[#allocation2 + $0xd8] sm:$0xff]
      %v2460 = vld [vmem:[#allocation2 + $0xe0] sm:$0xff]
      %v2461 = vld [vmem:[#allocation2 + $0xe8] sm:$0xff]
      %v2462 = vld [vmem:[#allocation2 + $0xf0] sm:$0xff]
      %v2463 = vld [vmem:[#allocation2 + $0xf8] sm:$0xff]
      %v2464 = vld [vmem:[#allocation2 + $0x100] sm:$0xff]
      %v2465 = vld [vmem:[#allocation2 + $0x108] sm:$0xff]
      %v2466 = vld [vmem:[#allocation2 + $0x110] sm:$0xff]
      %v2467 = vld [vmem:[#allocation2 + $0x118] sm:$0xff]
      %v2468 = vld [vmem:[#allocation2 + $0x120] sm:$0xff]
      %v2469 = vld [vmem:[#allocation2 + $0x128] sm:$0xff]
      %v2470 = vld [vmem:[#allocation2 + $0x130] sm:$0xff]
      %v2471 = vld [vmem:[#allocation2 + $0x138] sm:$0xff]
      %v2472 = vld [vmem:[#allocation2 + $0x140] sm:$0xff]
      %v2473 = vld [vmem:[#allocation2 + $0x148] sm:$0xff]
      %v2474 = vld [vmem:[#allocation2 + $0x150] sm:$0xff]
      %v2475 = vld [vmem:[#allocation2 + $0x158] sm:$0xff]
      %v2476 = vld [vmem:[#allocation2 + $0x160] sm:$0xff]
      %v2477 = vld [vmem:[#allocation2 + $0x168] sm:$0xff]
      %v2478 = vld [vmem:[#allocation2 + $0x170] sm:$0xff]
      %v2479 = vld [vmem:[#allocation2 + $0x178] sm:$0xff]
      %v2480 = vld [vmem:[#allocation2 + $0x180] sm:$0xff]
      %v2481 = vld [vmem:[#allocation2 + $0x188] sm:$0xff]
      %v2482 = vld [vmem:[#allocation2 + $0x190] sm:$0xff]
      %v2483 = vld [vmem:[#allocation2 + $0x198] sm:$0xff]
      %v2484 = vld [vmem:[#allocation2 + $0x1a0] sm:$0xff]
      %v2485 = vld [vmem:[#allocation2 + $0x1a8] sm:$0xff]
      %s2486 = scalar_lea.vmem %s3, 576
      %v2487 = vld [vmem:[%s2486] sm:$0xff]
      %v2488 = vld [vmem:[%s2486 + $0x8] sm:$0xff]
      %v2489 = vld [vmem:[%s2486 + $0x10] sm:$0xff]
      %v2490 = vld [vmem:[%s2486 + $0x18] sm:$0xff]
      %v2491 = vld [vmem:[%s2486 + $0x20] sm:$0xff]
      %v2492 = vld [vmem:[%s2486 + $0x28] sm:$0xff]
      %v2493 = vld [vmem:[%s2486 + $0x30] sm:$0xff]
      %v2494 = vld [vmem:[%s2486 + $0x38] sm:$0xff]
      %v2495 = vld [vmem:[%s2486 + $0x40] sm:$0xff]
      %v2496 = vld [vmem:[%s2486 + $0x48] sm:$0xff]
      %v2497 = vld [vmem:[%s2486 + $0x50] sm:$0xff]
      %v2498 = vld [vmem:[%s2486 + $0x58] sm:$0xff]
      %v2499 = vld [vmem:[%s2486 + $0x60] sm:$0xff]
      %v2500 = vld [vmem:[%s2486 + $0x68] sm:$0xff]
      %v2501 = vld [vmem:[%s2486 + $0x70] sm:$0xff]
      %v2502 = vld [vmem:[%s2486 + $0x78] sm:$0xff]
      %v2503 = vld [vmem:[%s2486 + $0x80] sm:$0xff]
      %v2504 = vld [vmem:[%s2486 + $0x88] sm:$0xff]
      %v2505 = vld [vmem:[%s2486 + $0x90] sm:$0xff]
      %v2506 = vld [vmem:[%s2486 + $0x98] sm:$0xff]
      %v2507 = vld [vmem:[%s2486 + $0xa0] sm:$0xff]
      %v2508 = vld [vmem:[%s2486 + $0xa8] sm:$0xff]
      %v2509 = vld [vmem:[%s2486 + $0xb0] sm:$0xff]
      %v2510 = vld [vmem:[%s2486 + $0xb8] sm:$0xff]
      %v2511 = vld [vmem:[%s2486 + $0xc0] sm:$0xff]
      %v2512 = vld [vmem:[%s2486 + $0xc8] sm:$0xff]
      %v2513 = vld [vmem:[%s2486 + $0xd0] sm:$0xff]
      %v2514 = vld [vmem:[%s2486 + $0xd8] sm:$0xff]
      %v2515 = vld [vmem:[%s2486 + $0xe0] sm:$0xff]
      %v2516 = vld [vmem:[%s2486 + $0xe8] sm:$0xff]
      %v2517 = vld [vmem:[%s2486 + $0xf0] sm:$0xff]
      %v2518 = vld [vmem:[%s2486 + $0xf8] sm:$0xff]
      %v2519 = vld [vmem:[%s2486 + $0x100] sm:$0xff]
      %v2520 = vld [vmem:[%s2486 + $0x108] sm:$0xff]
      %v2521 = vld [vmem:[%s2486 + $0x110] sm:$0xff]
      %v2522 = vld [vmem:[%s2486 + $0x118] sm:$0xff]
      %v2559 = vunpack.c.l.b16 %v2487
      %v2560 = vunpack.c.h.b16 %v2487
      %v2561 = vunpack.c.l.b16 %v2488
      %v2562 = vunpack.c.h.b16 %v2488
      %v2563 = vunpack.c.l.b16 %v2489
      %v2564 = vunpack.c.h.b16 %v2489
      %v2565 = vunpack.c.l.b16 %v2490
      %v2566 = vunpack.c.h.b16 %v2490
      %v2567 = vunpack.c.l.b16 %v2491
      %v2568 = vunpack.c.h.b16 %v2491
      %v2569 = vunpack.c.l.b16 %v2492
      %v2570 = vunpack.c.h.b16 %v2492
      %v2571 = vunpack.c.l.b16 %v2493
      %v2572 = vunpack.c.h.b16 %v2493
      %v2573 = vunpack.c.l.b16 %v2494
      %v2574 = vunpack.c.h.b16 %v2494
      %v2575 = vunpack.c.l.b16 %v2495
      %v2576 = vunpack.c.h.b16 %v2495
      %v2577 = vunpack.c.l.b16 %v2496
      %v2578 = vunpack.c.h.b16 %v2496
      %v2579 = vunpack.c.l.b16 %v2497
      %v2580 = vunpack.c.h.b16 %v2497
      %v2581 = vunpack.c.l.b16 %v2498
      %v2582 = vunpack.c.h.b16 %v2498
      %v2583 = vunpack.c.l.b16 %v2499
      %v2584 = vunpack.c.h.b16 %v2499
      %v2585 = vunpack.c.l.b16 %v2500
      %v2586 = vunpack.c.h.b16 %v2500
      %v2587 = vunpack.c.l.b16 %v2501
      %v2588 = vunpack.c.h.b16 %v2501
      %v2589 = vunpack.c.l.b16 %v2502
      %v2590 = vunpack.c.h.b16 %v2502
      %v2591 = vunpack.c.l.b16 %v2503
      %v2592 = vunpack.c.h.b16 %v2503
      %v2593 = vunpack.c.l.b16 %v2504
      %v2594 = vunpack.c.h.b16 %v2504
      %v2595 = vunpack.c.l.b16 %v2505
      %v2596 = vunpack.c.h.b16 %v2505
      %v2597 = vunpack.c.l.b16 %v2506
      %v2598 = vunpack.c.h.b16 %v2506
      %v2599 = vunpack.c.l.b16 %v2507
      %v2600 = vunpack.c.h.b16 %v2507
      %v2601 = vunpack.c.l.b16 %v2508
      %v2602 = vunpack.c.h.b16 %v2508
      %v2603 = vunpack.c.l.b16 %v2509
      %v2604 = vunpack.c.h.b16 %v2509
      %v2605 = vunpack.c.l.b16 %v2510
      %v2606 = vunpack.c.h.b16 %v2510
      %v2607 = vunpack.c.l.b16 %v2511
      %v2608 = vunpack.c.h.b16 %v2511
      %v2609 = vunpack.c.l.b16 %v2512
      %v2610 = vunpack.c.h.b16 %v2512
      %v2611 = vunpack.c.l.b16 %v2513
      %v2612 = vunpack.c.h.b16 %v2513
      %v2613 = vunpack.c.l.b16 %v2514
      %v2614 = vunpack.c.h.b16 %v2514
      %v2615 = vunpack.c.l.b16 %v2515
      %v2616 = vunpack.c.h.b16 %v2515
      %v2617 = vunpack.c.l.b16 %v2516
      %v2618 = vunpack.c.h.b16 %v2516
      %v2619 = vunpack.c.l.b16 %v2517
      %v2620 = vunpack.c.h.b16 %v2517
      %v2621 = vunpack.c.l.b16 %v2518
      %v2622 = vunpack.c.h.b16 %v2518
      %v2623 = vunpack.c.l.b16 %v2519
      %v2624 = vunpack.c.h.b16 %v2519
      %v2625 = vunpack.c.l.b16 %v2520
      %v2626 = vunpack.c.h.b16 %v2520
      %v2627 = vunpack.c.l.b16 %v2521
      %v2628 = vunpack.c.h.b16 %v2521
      %v2629 = vunpack.c.l.b16 %v2522
      %v2630 = vunpack.c.h.b16 %v2522
      %v2631 = vpack.c.b16 %v2561, %v2559
      %v2632 = vpack.c.b16 %v2562, %v2560
      %v2633 = vpack.c.b16 %v2565, %v2563
      %v2634 = vpack.c.b16 %v2566, %v2564
      %v2635 = vpack.c.b16 %v2569, %v2567
      %v2636 = vpack.c.b16 %v2570, %v2568
      %v2637 = vpack.c.b16 %v2573, %v2571
      %v2638 = vpack.c.b16 %v2574, %v2572
      %v2639 = vpack.c.b16 %v2577, %v2575
      %v2640 = vpack.c.b16 %v2578, %v2576
      %v2641 = vpack.c.b16 %v2581, %v2579
      %v2642 = vpack.c.b16 %v2582, %v2580
      %v2643 = vpack.c.b16 %v2585, %v2583
      %v2644 = vpack.c.b16 %v2586, %v2584
      %v2645 = vpack.c.b16 %v2589, %v2587
      %v2646 = vpack.c.b16 %v2590, %v2588
      %v2647 = vpack.c.b16 %v2593, %v2591
      %v2648 = vpack.c.b16 %v2594, %v2592
      %v2649 = vpack.c.b16 %v2597, %v2595
      %v2650 = vpack.c.b16 %v2598, %v2596
      %v2651 = vpack.c.b16 %v2601, %v2599
      %v2652 = vpack.c.b16 %v2602, %v2600
      %v2653 = vpack.c.b16 %v2605, %v2603
      %v2654 = vpack.c.b16 %v2606, %v2604
      %v2655 = vpack.c.b16 %v2609, %v2607
      %v2656 = vpack.c.b16 %v2610, %v2608
      %v2657 = vpack.c.b16 %v2613, %v2611
      %v2658 = vpack.c.b16 %v2614, %v2612
      %v2659 = vpack.c.b16 %v2617, %v2615
      %v2660 = vpack.c.b16 %v2618, %v2616
      %v2661 = vpack.c.b16 %v2621, %v2619
      %v2662 = vpack.c.b16 %v2622, %v2620
      %v2663 = vpack.c.b16 %v2625, %v2623
      %v2664 = vpack.c.b16 %v2626, %v2624
      %v2665 = vpack.c.b16 %v2629, %v2627
      %v2666 = vpack.c.b16 %v2630, %v2628
      %v2704 = vsel %vm393, %v2446, 0
      %v2707 = vsel %vm393, %v2449, 0
      %v2710 = vsel %vm393, %v2452, 0
      %v2713 = vsel %vm393, %v2455, 0
      %v2716 = vsel %vm393, %v2458, 0
      %v2719 = vsel %vm393, %v2461, 0
      %v2722 = vsel %vm393, %v2464, 0
      %v2725 = vsel %vm393, %v2467, 0
      %v2728 = vsel %vm393, %v2470, 0
      %v2731 = vsel %vm393, %v2473, 0
      %v2734 = vsel %vm393, %v2476, 0
      %v2737 = vsel %vm393, %v2479, 0
      %v2740 = vsel %vm393, %v2482, 0
      %v2743 = vsel %vm393, %v2485, 0
      %2745 = vmatprep.subr.bf16.mxu0 %v2632
      %2746 = vmatpush1.bf16.msra.mxu0 %v2631
      %2747 = vmatprep.subr.bf16.mxu0 %v2634
      %2748 = vmatpush1.bf16.msra.mxu0 %v2633
      %2749 = vmatprep.subr.bf16.mxu0 %v2636
      %2750 = vmatpush1.bf16.msra.mxu0 %v2635
      %2751 = vmatprep.subr.bf16.mxu0 %v2638
      %2752 = vmatpush1.bf16.msra.mxu0 %v2637
      %2753 = vmatprep.subr.bf16.mxu0 %v2640
      %2754 = vmatpush1.bf16.msra.mxu0 %v2639
      %2755 = vmatprep.subr.bf16.mxu0 %v2642
      %2756 = vmatpush1.bf16.msra.mxu0 %v2641
      %2757 = vmatprep.subr.bf16.mxu0 %v2644
      %2758 = vmatpush1.bf16.msra.mxu0 %v2643
      %2759 = vmatprep.subr.bf16.mxu0 %v2646
      %2760 = vmatpush1.bf16.msra.mxu0 %v2645
      %2761 = vmatprep.subr.bf16.mxu0 %v2648
      %2762 = vmatpush1.bf16.msra.mxu0 %v2647
      %2763 = vmatprep.subr.bf16.mxu0 %v2650
      %2764 = vmatpush1.bf16.msra.mxu0 %v2649
      %2765 = vmatprep.subr.bf16.mxu0 %v2652
      %2766 = vmatpush1.bf16.msra.mxu0 %v2651
      %2767 = vmatprep.subr.bf16.mxu0 %v2654
      %2768 = vmatpush1.bf16.msra.mxu0 %v2653
      %2769 = vmatprep.subr.bf16.mxu0 %v2656
      %2770 = vmatpush1.bf16.msra.mxu0 %v2655
      %2771 = vmatprep.subr.bf16.mxu0 %v2658
      %2772 = vmatpush1.bf16.msra.mxu0 %v2657
      %2773 = vmatprep.subr.bf16.mxu0 %v2660
      %2774 = vmatpush1.bf16.msra.mxu0 %v2659
      %2775 = vmatprep.subr.bf16.mxu0 %v2662
      %2776 = vmatpush1.bf16.msra.mxu0 %v2661
      %2777 = vmatprep.mubr.bf16.mxu0 %v2445
      %2778 = vmatmul.mubr.bf16.gmra.mrb[0].mxu0 %v2444
      %v2779 = vpop.f32.mrb[0].mxu0
      %v2780 = vadd.f32 0.0, %v2779
      %v2781 = vpop.f32.mrb[0].mxu0
      %v2782 = vadd.f32 0.0, %v2781
      %v2783 = vpop.f32.mrb[0].mxu0
      %v2784 = vadd.f32 0.0, %v2783
      %v2785 = vpop.f32.mrb[0].mxu0
      %v2786 = vadd.f32 0.0, %v2785
      %2787 = vmatprep.mubr.bf16.mxu0 %v2448
      %2788 = vmatmul.mubr.bf16.gmra.mrb[0].mxu0 %v2447
      %v2789 = vpop.f32.mrb[0].mxu0
      %v2790 = vadd.f32 0.0, %v2789
      %v2791 = vpop.f32.mrb[0].mxu0
      %v2792 = vadd.f32 0.0, %v2791
      %v2793 = vpop.f32.mrb[0].mxu0
      %v2794 = vadd.f32 0.0, %v2793
      %v2795 = vpop.f32.mrb[0].mxu0
      %v2796 = vadd.f32 0.0, %v2795
      %2797 = vmatprep.mubr.bf16.mxu0 %v2451
      %2798 = vmatmul.mubr.bf16.gmra.mrb[0].mxu0 %v2450
      %v2799 = vpop.f32.mrb[0].mxu0
      %v2800 = vadd.f32 0.0, %v2799
      %v2801 = vpop.f32.mrb[0].mxu0
      %v2802 = vadd.f32 0.0, %v2801
      %v2803 = vpop.f32.mrb[0].mxu0
      %v2804 = vadd.f32 0.0, %v2803
      %v2805 = vpop.f32.mrb[0].mxu0
      %v2806 = vadd.f32 0.0, %v2805
      %2807 = vmatprep.mubr.bf16.mxu0 %v2454
      %2808 = vmatmul.mubr.bf16.gmra.mrb[0].mxu0 %v2453
      %v2809 = vpop.f32.mrb[0].mxu0
      %v2810 = vadd.f32 0.0, %v2809
      %v2811 = vpop.f32.mrb[0].mxu0
      %v2812 = vadd.f32 0.0, %v2811
      %v2813 = vpop.f32.mrb[0].mxu0
      %v2814 = vadd.f32 0.0, %v2813
      %v2815 = vpop.f32.mrb[0].mxu0
      %v2816 = vadd.f32 0.0, %v2815
      %2817 = vmatprep.mubr.bf16.mxu0 %v2457
      %2818 = vmatmul.mubr.bf16.gmra.mrb[0].mxu0 %v2456
      %v2819 = vpop.f32.mrb[0].mxu0
      %v2820 = vadd.f32 0.0, %v2819
      %v2821 = vpop.f32.mrb[0].mxu0
      %v2822 = vadd.f32 0.0, %v2821
      %v2823 = vpop.f32.mrb[0].mxu0
      %v2824 = vadd.f32 0.0, %v2823
      %v2825 = vpop.f32.mrb[0].mxu0
      %v2826 = vadd.f32 0.0, %v2825
      %2827 = vmatprep.mubr.bf16.mxu0 %v2460
      %2828 = vmatmul.mubr.bf16.gmra.mrb[0].mxu0 %v2459
      %v2829 = vpop.f32.mrb[0].mxu0
      %v2830 = vadd.f32 0.0, %v2829
      %v2831 = vpop.f32.mrb[0].mxu0
      %v2832 = vadd.f32 0.0, %v2831
      %v2833 = vpop.f32.mrb[0].mxu0
      %v2834 = vadd.f32 0.0, %v2833
      %v2835 = vpop.f32.mrb[0].mxu0
      %v2836 = vadd.f32 0.0, %v2835
      %2837 = vmatprep.mubr.bf16.mxu0 %v2463
      %2838 = vmatmul.mubr.bf16.gmra.mrb[0].mxu0 %v2462
      %v2839 = vpop.f32.mrb[0].mxu0
      %v2840 = vadd.f32 0.0, %v2839
      %v2841 = vpop.f32.mrb[0].mxu0
      %v2842 = vadd.f32 0.0, %v2841
      %v2843 = vpop.f32.mrb[0].mxu0
      %v2844 = vadd.f32 0.0, %v2843
      %v2845 = vpop.f32.mrb[0].mxu0
      %v2846 = vadd.f32 0.0, %v2845
      %2847 = vmatprep.mubr.bf16.mxu0 %v2466
      %2848 = vmatmul.mubr.bf16.gmra.mrb[0].mxu0 %v2465
      %v2849 = vpop.f32.mrb[0].mxu0
      %v2850 = vadd.f32 0.0, %v2849
      %v2851 = vpop.f32.mrb[0].mxu0
      %v2852 = vadd.f32 0.0, %v2851
      %v2853 = vpop.f32.mrb[0].mxu0
      %v2854 = vadd.f32 0.0, %v2853
      %v2855 = vpop.f32.mrb[0].mxu0
      %v2856 = vadd.f32 0.0, %v2855
      %2857 = vmatprep.mubr.bf16.mxu0 %v2469
      %2858 = vmatmul.mubr.bf16.gmra.mrb[0].mxu0 %v2468
      %v2859 = vpop.f32.mrb[0].mxu0
      %v2860 = vadd.f32 0.0, %v2859
      %v2861 = vpop.f32.mrb[0].mxu0
      %v2862 = vadd.f32 0.0, %v2861
      %v2863 = vpop.f32.mrb[0].mxu0
      %v2864 = vadd.f32 0.0, %v2863
      %v2865 = vpop.f32.mrb[0].mxu0
      %v2866 = vadd.f32 0.0, %v2865
      %2867 = vmatprep.mubr.bf16.mxu0 %v2472
      %2868 = vmatmul.mubr.bf16.gmra.mrb[0].mxu0 %v2471
      %v2869 = vpop.f32.mrb[0].mxu0
      %v2870 = vadd.f32 0.0, %v2869
      %v2871 = vpop.f32.mrb[0].mxu0
      %v2872 = vadd.f32 0.0, %v2871
      %v2873 = vpop.f32.mrb[0].mxu0
      %v2874 = vadd.f32 0.0, %v2873
      %v2875 = vpop.f32.mrb[0].mxu0
      %v2876 = vadd.f32 0.0, %v2875
      %2877 = vmatprep.mubr.bf16.mxu0 %v2475
      %2878 = vmatmul.mubr.bf16.gmra.mrb[0].mxu0 %v2474
      %v2879 = vpop.f32.mrb[0].mxu0
      %v2880 = vadd.f32 0.0, %v2879
      %v2881 = vpop.f32.mrb[0].mxu0
      %v2882 = vadd.f32 0.0, %v2881
      %v2883 = vpop.f32.mrb[0].mxu0
      %v2884 = vadd.f32 0.0, %v2883
      %v2885 = vpop.f32.mrb[0].mxu0
      %v2886 = vadd.f32 0.0, %v2885
      %2887 = vmatprep.mubr.bf16.mxu0 %v2478
      %2888 = vmatmul.mubr.bf16.gmra.mrb[0].mxu0 %v2477
      %v2889 = vpop.f32.mrb[0].mxu0
      %v2890 = vadd.f32 0.0, %v2889
      %v2891 = vpop.f32.mrb[0].mxu0
      %v2892 = vadd.f32 0.0, %v2891
      %v2893 = vpop.f32.mrb[0].mxu0
      %v2894 = vadd.f32 0.0, %v2893
      %v2895 = vpop.f32.mrb[0].mxu0
      %v2896 = vadd.f32 0.0, %v2895
      %2897 = vmatprep.mubr.bf16.mxu0 %v2481
      %2898 = vmatmul.mubr.bf16.gmra.mrb[0].mxu0 %v2480
      %v2899 = vpop.f32.mrb[0].mxu0
      %v2900 = vadd.f32 0.0, %v2899
      %v2901 = vpop.f32.mrb[0].mxu0
      %v2902 = vadd.f32 0.0, %v2901
      %v2903 = vpop.f32.mrb[0].mxu0
      %v2904 = vadd.f32 0.0, %v2903
      %v2905 = vpop.f32.mrb[0].mxu0
      %v2906 = vadd.f32 0.0, %v2905
      %2907 = vmatprep.mubr.bf16.mxu0 %v2484
      %2908 = vmatmul.mubr.bf16.gmra.mrb[0].mxu0 %v2483
      %v2909 = vpop.f32.mrb[0].mxu0
      %v2910 = vadd.f32 0.0, %v2909
      %v2911 = vpop.f32.mrb[0].mxu0
      %v2912 = vadd.f32 0.0, %v2911
      %v2913 = vpop.f32.mrb[0].mxu0
      %v2914 = vadd.f32 0.0, %v2913
      %v2915 = vpop.f32.mrb[0].mxu0
      %v2916 = vadd.f32 0.0, %v2915
      %2917 = vdwg.mxu0
      %2918 = vmatprep.subr.bf16.mxu0 %v2664
      %2919 = vmatpush1.bf16.msra.mxu0 %v2663
      %2920 = vmatprep.subr.bf16.mxu0 %v2666
      %2921 = vmatpush1.bf16.msra.mxu0 %v2665
      %2922 = vmatprep.subr.bf16.mxu0 0
      %2923 = vmatpush1.bf16.msra.mxu0 0
      %2924 = vmatprep.subr.bf16.mxu0 0
      %2925 = vmatpush1.bf16.msra.mxu0 0
      %2926 = vmatprep.subr.bf16.mxu0 0
      %2927 = vmatpush1.bf16.msra.mxu0 0
      %2928 = vmatprep.subr.bf16.mxu0 0
      %2929 = vmatpush1.bf16.msra.mxu0 0
      %2930 = vmatprep.subr.bf16.mxu0 0
      %2931 = vmatpush1.bf16.msra.mxu0 0
      %2932 = vmatprep.subr.bf16.mxu0 0
      %2933 = vmatpush1.bf16.msra.mxu0 0
      %2934 = vmatprep.subr.bf16.mxu0 0
      %2935 = vmatpush1.bf16.msra.mxu0 0
      %2936 = vmatprep.subr.bf16.mxu0 0
      %2937 = vmatpush1.bf16.msra.mxu0 0
      %2938 = vmatprep.subr.bf16.mxu0 0
      %2939 = vmatpush1.bf16.msra.mxu0 0
      %2940 = vmatprep.subr.bf16.mxu0 0
      %2941 = vmatpush1.bf16.msra.mxu0 0
      %2942 = vmatprep.subr.bf16.mxu0 0
      %2943 = vmatpush1.bf16.msra.mxu0 0
      %2944 = vmatprep.subr.bf16.mxu0 0
      %2945 = vmatpush1.bf16.msra.mxu0 0
      %2946 = vmatprep.subr.bf16.mxu0 0
      %2947 = vmatpush1.bf16.msra.mxu0 0
      %2948 = vmatprep.subr.bf16.mxu0 0
      %2949 = vmatpush1.bf16.msra.mxu0 0
      %2950 = vmatprep.mubr.bf16.mxu0 0
      %2951 = vmatmul.mubr.bf16.gmra.mrb[0].mxu0 %v2704
      %v2952 = vpop.f32.mrb[0].mxu0
      %v2953 = vadd.f32 %v2780, %v2952
      %v2954 = vpop.f32.mrb[0].mxu0
      %v2955 = vadd.f32 %v2782, %v2954
      %v2956 = vpop.f32.mrb[0].mxu0
      %v2957 = vadd.f32 %v2784, %v2956
      %v2958 = vpop.f32.mrb[0].mxu0
      %v2959 = vadd.f32 %v2786, %v2958
      %2960 = vmatprep.mubr.bf16.mxu0 0
      %2961 = vmatmul.mubr.bf16.gmra.mrb[0].mxu0 %v2707
      %v2962 = vpop.f32.mrb[0].mxu0
      %v2963 = vadd.f32 %v2790, %v2962
      %v2964 = vpop.f32.mrb[0].mxu0
      %v2965 = vadd.f32 %v2792, %v2964
      %v2966 = vpop.f32.mrb[0].mxu0
      %v2967 = vadd.f32 %v2794, %v2966
      %v2968 = vpop.f32.mrb[0].mxu0
      %v2969 = vadd.f32 %v2796, %v2968
      %2970 = vmatprep.mubr.bf16.mxu0 0
      %2971 = vmatmul.mubr.bf16.gmra.mrb[0].mxu0 %v2710
      %v2972 = vpop.f32.mrb[0].mxu0
      %v2973 = vadd.f32 %v2800, %v2972
      %v2974 = vpop.f32.mrb[0].mxu0
      %v2975 = vadd.f32 %v2802, %v2974
      %v2976 = vpop.f32.mrb[0].mxu0
      %v2977 = vadd.f32 %v2804, %v2976
      %v2978 = vpop.f32.mrb[0].mxu0
      %v2979 = vadd.f32 %v2806, %v2978
      %2980 = vmatprep.mubr.bf16.mxu0 0
      %2981 = vmatmul.mubr.bf16.gmra.mrb[0].mxu0 %v2713
      %v2982 = vpop.f32.mrb[0].mxu0
      %v2983 = vadd.f32 %v2810, %v2982
      %v2984 = vpop.f32.mrb[0].mxu0
      %v2985 = vadd.f32 %v2812, %v2984
      %v2986 = vpop.f32.mrb[0].mxu0
      %v2987 = vadd.f32 %v2814, %v2986
      %v2988 = vpop.f32.mrb[0].mxu0
      %v2989 = vadd.f32 %v2816, %v2988
      %2990 = vmatprep.mubr.bf16.mxu0 0
      %2991 = vmatmul.mubr.bf16.gmra.mrb[0].mxu0 %v2716
      %v2992 = vpop.f32.mrb[0].mxu0
      %v2993 = vadd.f32 %v2820, %v2992
      %v2994 = vpop.f32.mrb[0].mxu0
      %v2995 = vadd.f32 %v2822, %v2994
      %v2996 = vpop.f32.mrb[0].mxu0
      %v2997 = vadd.f32 %v2824, %v2996
      %v2998 = vpop.f32.mrb[0].mxu0
      %v2999 = vadd.f32 %v2826, %v2998
      %3000 = vmatprep.mubr.bf16.mxu0 0
      %3001 = vmatmul.mubr.bf16.gmra.mrb[0].mxu0 %v2719
      %v3002 = vpop.f32.mrb[0].mxu0
      %v3003 = vadd.f32 %v2830, %v3002
      %v3004 = vpop.f32.mrb[0].mxu0
      %v3005 = vadd.f32 %v2832, %v3004
      %v3006 = vpop.f32.mrb[0].mxu0
      %v3007 = vadd.f32 %v2834, %v3006
      %v3008 = vpop.f32.mrb[0].mxu0
      %v3009 = vadd.f32 %v2836, %v3008
      %3010 = vmatprep.mubr.bf16.mxu0 0
      %3011 = vmatmul.mubr.bf16.gmra.mrb[0].mxu0 %v2722
      %v3012 = vpop.f32.mrb[0].mxu0
      %v3013 = vadd.f32 %v2840, %v3012
      %v3014 = vpop.f32.mrb[0].mxu0
      %v3015 = vadd.f32 %v2842, %v3014
      %v3016 = vpop.f32.mrb[0].mxu0
      %v3017 = vadd.f32 %v2844, %v3016
      %v3018 = vpop.f32.mrb[0].mxu0
      %v3019 = vadd.f32 %v2846, %v3018
      %3020 = vmatprep.mubr.bf16.mxu0 0
      %3021 = vmatmul.mubr.bf16.gmra.mrb[0].mxu0 %v2725
      %v3022 = vpop.f32.mrb[0].mxu0
      %v3023 = vadd.f32 %v2850, %v3022
      %v3024 = vpop.f32.mrb[0].mxu0
      %v3025 = vadd.f32 %v2852, %v3024
      %v3026 = vpop.f32.mrb[0].mxu0
      %v3027 = vadd.f32 %v2854, %v3026
      %v3028 = vpop.f32.mrb[0].mxu0
      %v3029 = vadd.f32 %v2856, %v3028
      %3030 = vmatprep.mubr.bf16.mxu0 0
      %3031 = vmatmul.mubr.bf16.gmra.mrb[0].mxu0 %v2728
      %v3032 = vpop.f32.mrb[0].mxu0
      %v3033 = vadd.f32 %v2860, %v3032
      %v3034 = vpop.f32.mrb[0].mxu0
      %v3035 = vadd.f32 %v2862, %v3034
      %v3036 = vpop.f32.mrb[0].mxu0
      %v3037 = vadd.f32 %v2864, %v3036
      %v3038 = vpop.f32.mrb[0].mxu0
      %v3039 = vadd.f32 %v2866, %v3038
      %3040 = vmatprep.mubr.bf16.mxu0 0
      %3041 = vmatmul.mubr.bf16.gmra.mrb[0].mxu0 %v2731
      %v3042 = vpop.f32.mrb[0].mxu0
      %v3043 = vadd.f32 %v2870, %v3042
      %v3044 = vpop.f32.mrb[0].mxu0
      %v3045 = vadd.f32 %v2872, %v3044
      %v3046 = vpop.f32.mrb[0].mxu0
      %v3047 = vadd.f32 %v2874, %v3046
      %v3048 = vpop.f32.mrb[0].mxu0
      %v3049 = vadd.f32 %v2876, %v3048
      %3050 = vmatprep.mubr.bf16.mxu0 0
      %3051 = vmatmul.mubr.bf16.gmra.mrb[0].mxu0 %v2734
      %v3052 = vpop.f32.mrb[0].mxu0
      %v3053 = vadd.f32 %v2880, %v3052
      %v3054 = vpop.f32.mrb[0].mxu0
      %v3055 = vadd.f32 %v2882, %v3054
      %v3056 = vpop.f32.mrb[0].mxu0
      %v3057 = vadd.f32 %v2884, %v3056
      %v3058 = vpop.f32.mrb[0].mxu0
      %v3059 = vadd.f32 %v2886, %v3058
      %3060 = vmatprep.mubr.bf16.mxu0 0
      %3061 = vmatmul.mubr.bf16.gmra.mrb[0].mxu0 %v2737
      %v3062 = vpop.f32.mrb[0].mxu0
      %v3063 = vadd.f32 %v2890, %v3062
      %v3064 = vpop.f32.mrb[0].mxu0
      %v3065 = vadd.f32 %v2892, %v3064
      %v3066 = vpop.f32.mrb[0].mxu0
      %v3067 = vadd.f32 %v2894, %v3066
      %v3068 = vpop.f32.mrb[0].mxu0
      %v3069 = vadd.f32 %v2896, %v3068
      %3070 = vmatprep.mubr.bf16.mxu0 0
      %3071 = vmatmul.mubr.bf16.gmra.mrb[0].mxu0 %v2740
      %v3072 = vpop.f32.mrb[0].mxu0
      %v3073 = vadd.f32 %v2900, %v3072
      %v3074 = vpop.f32.mrb[0].mxu0
      %v3075 = vadd.f32 %v2902, %v3074
      %v3076 = vpop.f32.mrb[0].mxu0
      %v3077 = vadd.f32 %v2904, %v3076
      %v3078 = vpop.f32.mrb[0].mxu0
      %v3079 = vadd.f32 %v2906, %v3078
      %3080 = vmatprep.mubr.bf16.mxu0 0
      %3081 = vmatmul.mubr.bf16.gmra.mrb[0].mxu0 %v2743
      %v3082 = vpop.f32.mrb[0].mxu0
      %v3083 = vadd.f32 %v2910, %v3082
      %v3084 = vpop.f32.mrb[0].mxu0
      %v3085 = vadd.f32 %v2912, %v3084
      %v3086 = vpop.f32.mrb[0].mxu0
      %v3087 = vadd.f32 %v2914, %v3086
      %v3088 = vpop.f32.mrb[0].mxu0
      %v3089 = vadd.f32 %v2916, %v3088
      %3090 = vdwg.mxu0
      %v3091 = vadd.f32 %v2306, %v2953
      %v3092 = vadd.f32 %v2308, %v2955
      %v3093 = vadd.f32 %v2310, %v2957
      %v3094 = vadd.f32 %v2312, %v2959
      %v3095 = vadd.f32 %v2316, %v2963
      %v3096 = vadd.f32 %v2318, %v2965
      %v3097 = vadd.f32 %v2320, %v2967
      %v3098 = vadd.f32 %v2322, %v2969
      %v3099 = vadd.f32 %v2326, %v2973
      %v3100 = vadd.f32 %v2328, %v2975
      %v3101 = vadd.f32 %v2330, %v2977
      %v3102 = vadd.f32 %v2332, %v2979
      %v3103 = vadd.f32 %v2336, %v2983
      %v3104 = vadd.f32 %v2338, %v2985
      %v3105 = vadd.f32 %v2340, %v2987
      %v3106 = vadd.f32 %v2342, %v2989
      %v3107 = vadd.f32 %v2346, %v2993
      %v3108 = vadd.f32 %v2348, %v2995
      %v3109 = vadd.f32 %v2350, %v2997
      %v3110 = vadd.f32 %v2352, %v2999
      %v3111 = vadd.f32 %v2356, %v3003
      %v3112 = vadd.f32 %v2358, %v3005
      %v3113 = vadd.f32 %v2360, %v3007
      %v3114 = vadd.f32 %v2362, %v3009
      %v3115 = vadd.f32 %v2366, %v3013
      %v3116 = vadd.f32 %v2368, %v3015
      %v3117 = vadd.f32 %v2370, %v3017
      %v3118 = vadd.f32 %v2372, %v3019
      %v3119 = vadd.f32 %v2376, %v3023
      %v3120 = vadd.f32 %v2378, %v3025
      %v3121 = vadd.f32 %v2380, %v3027
      %v3122 = vadd.f32 %v2382, %v3029
      %v3123 = vadd.f32 %v2386, %v3033
      %v3124 = vadd.f32 %v2388, %v3035
      %v3125 = vadd.f32 %v2390, %v3037
      %v3126 = vadd.f32 %v2392, %v3039
      %v3127 = vadd.f32 %v2396, %v3043
      %v3128 = vadd.f32 %v2398, %v3045
      %v3129 = vadd.f32 %v2400, %v3047
      %v3130 = vadd.f32 %v2402, %v3049
      %v3131 = vadd.f32 %v2406, %v3053
      %v3132 = vadd.f32 %v2408, %v3055
      %v3133 = vadd.f32 %v2410, %v3057
      %v3134 = vadd.f32 %v2412, %v3059
      %v3135 = vadd.f32 %v2416, %v3063
      %v3136 = vadd.f32 %v2418, %v3065
      %v3137 = vadd.f32 %v2420, %v3067
      %v3138 = vadd.f32 %v2422, %v3069
      %v3139 = vadd.f32 %v2426, %v3073
      %v3140 = vadd.f32 %v2428, %v3075
      %v3141 = vadd.f32 %v2430, %v3077
      %v3142 = vadd.f32 %v2432, %v3079
      %v3143 = vadd.f32 %v2436, %v3083
      %v3144 = vadd.f32 %v2438, %v3085
      %v3145 = vadd.f32 %v2440, %v3087
      %v3146 = vadd.f32 %v2442, %v3089
      %v3147 = vld [vmem:[%s4] sm:$0x3]
      %v3149 = vlaneseq
      %v3150 = vshrl.u32 %v3149, 7
      %v3151 = vsub.s32 0, %v3150
      %v3152 = vrot.slane %v3147, %v3151
      %v3153 = vlaneseq
      %v3154 = vshrl.u32 %v3153, 7
      %v3155 = vsub.s32 1, %v3154
      %v3156 = vrot.slane %v3147, %v3155
      %v3159 = vadd.f32 %v3091, %v3152
      %v3160 = vadd.f32 %v3092, %v3156
      %v3161 = vadd.f32 %v3093, %v3152
      %v3162 = vadd.f32 %v3094, %v3156
      %v3163 = vadd.f32 %v3095, %v3152
      %v3164 = vadd.f32 %v3096, %v3156
      %v3165 = vadd.f32 %v3097, %v3152
      %v3166 = vadd.f32 %v3098, %v3156
      %v3167 = vadd.f32 %v3099, %v3152
      %v3168 = vadd.f32 %v3100, %v3156
      %v3169 = vadd.f32 %v3101, %v3152
      %v3170 = vadd.f32 %v3102, %v3156
      %v3171 = vadd.f32 %v3103, %v3152
      %v3172 = vadd.f32 %v3104, %v3156
      %v3173 = vadd.f32 %v3105, %v3152
      %v3174 = vadd.f32 %v3106, %v3156
      %v3175 = vadd.f32 %v3107, %v3152
      %v3176 = vadd.f32 %v3108, %v3156
      %v3177 = vadd.f32 %v3109, %v3152
      %v3178 = vadd.f32 %v3110, %v3156
      %v3179 = vadd.f32 %v3111, %v3152
      %v3180 = vadd.f32 %v3112, %v3156
      %v3181 = vadd.f32 %v3113, %v3152
      %v3182 = vadd.f32 %v3114, %v3156
      %v3183 = vadd.f32 %v3115, %v3152
      %v3184 = vadd.f32 %v3116, %v3156
      %v3185 = vadd.f32 %v3117, %v3152
      %v3186 = vadd.f32 %v3118, %v3156
      %v3187 = vadd.f32 %v3119, %v3152
      %v3188 = vadd.f32 %v3120, %v3156
      %v3189 = vadd.f32 %v3121, %v3152
      %v3190 = vadd.f32 %v3122, %v3156
      %v3191 = vadd.f32 %v3123, %v3152
      %v3192 = vadd.f32 %v3124, %v3156
      %v3193 = vadd.f32 %v3125, %v3152
      %v3194 = vadd.f32 %v3126, %v3156
      %v3195 = vadd.f32 %v3127, %v3152
      %v3196 = vadd.f32 %v3128, %v3156
      %v3197 = vadd.f32 %v3129, %v3152
      %v3198 = vadd.f32 %v3130, %v3156
      %v3199 = vadd.f32 %v3131, %v3152
      %v3200 = vadd.f32 %v3132, %v3156
      %v3201 = vadd.f32 %v3133, %v3152
      %v3202 = vadd.f32 %v3134, %v3156
      %v3203 = vadd.f32 %v3135, %v3152
      %v3204 = vadd.f32 %v3136, %v3156
      %v3205 = vadd.f32 %v3137, %v3152
      %v3206 = vadd.f32 %v3138, %v3156
      %v3207 = vadd.f32 %v3139, %v3152
      %v3208 = vadd.f32 %v3140, %v3156
      %v3209 = vadd.f32 %v3141, %v3152
      %v3210 = vadd.f32 %v3142, %v3156
      %v3211 = vadd.f32 %v3143, %v3152
      %v3212 = vadd.f32 %v3144, %v3156
      %v3213 = vadd.f32 %v3145, %v3152
      %v3214 = vadd.f32 %v3146, %v3156
      %v3215 = vmax.f32 %v3159, 0.0
      %v3216 = vmax.f32 %v3160, 0.0
      %v3217 = vmax.f32 %v3161, 0.0
      %v3218 = vmax.f32 %v3162, 0.0
      %v3219 = vmax.f32 %v3163, 0.0
      %v3220 = vmax.f32 %v3164, 0.0
      %v3221 = vmax.f32 %v3165, 0.0
      %v3222 = vmax.f32 %v3166, 0.0
      %v3223 = vmax.f32 %v3167, 0.0
      %v3224 = vmax.f32 %v3168, 0.0
      %v3225 = vmax.f32 %v3169, 0.0
      %v3226 = vmax.f32 %v3170, 0.0
      %v3227 = vmax.f32 %v3171, 0.0
      %v3228 = vmax.f32 %v3172, 0.0
      %v3229 = vmax.f32 %v3173, 0.0
      %v3230 = vmax.f32 %v3174, 0.0
      %v3231 = vmax.f32 %v3175, 0.0
      %v3232 = vmax.f32 %v3176, 0.0
      %v3233 = vmax.f32 %v3177, 0.0
      %v3234 = vmax.f32 %v3178, 0.0
      %v3235 = vmax.f32 %v3179, 0.0
      %v3236 = vmax.f32 %v3180, 0.0
      %v3237 = vmax.f32 %v3181, 0.0
      %v3238 = vmax.f32 %v3182, 0.0
      %v3239 = vmax.f32 %v3183, 0.0
      %v3240 = vmax.f32 %v3184, 0.0
      %v3241 = vmax.f32 %v3185, 0.0
      %v3242 = vmax.f32 %v3186, 0.0
      %v3243 = vmax.f32 %v3187, 0.0
      %v3244 = vmax.f32 %v3188, 0.0
      %v3245 = vmax.f32 %v3189, 0.0
      %v3246 = vmax.f32 %v3190, 0.0
      %v3247 = vmax.f32 %v3191, 0.0
      %v3248 = vmax.f32 %v3192, 0.0
      %v3249 = vmax.f32 %v3193, 0.0
      %v3250 = vmax.f32 %v3194, 0.0
      %v3251 = vmax.f32 %v3195, 0.0
      %v3252 = vmax.f32 %v3196, 0.0
      %v3253 = vmax.f32 %v3197, 0.0
      %v3254 = vmax.f32 %v3198, 0.0
      %v3255 = vmax.f32 %v3199, 0.0
      %v3256 = vmax.f32 %v3200, 0.0
      %v3257 = vmax.f32 %v3201, 0.0
      %v3258 = vmax.f32 %v3202, 0.0
      %v3259 = vmax.f32 %v3203, 0.0
      %v3260 = vmax.f32 %v3204, 0.0
      %v3261 = vmax.f32 %v3205, 0.0
      %v3262 = vmax.f32 %v3206, 0.0
      %v3263 = vmax.f32 %v3207, 0.0
      %v3264 = vmax.f32 %v3208, 0.0
      %v3265 = vmax.f32 %v3209, 0.0
      %v3266 = vmax.f32 %v3210, 0.0
      %v3267 = vmax.f32 %v3211, 0.0
      %v3268 = vmax.f32 %v3212, 0.0
      %v3269 = vmax.f32 %v3213, 0.0
      %v3270 = vmax.f32 %v3214, 0.0
      %v3271 = vpack.c.bf16 %v3217, %v3215
      %v3272 = vpack.c.bf16 %v3218, %v3216
      %v3273 = vpack.c.bf16 %v3221, %v3219
      %v3274 = vpack.c.bf16 %v3222, %v3220
      %v3275 = vpack.c.bf16 %v3225, %v3223
      %v3276 = vpack.c.bf16 %v3226, %v3224
      %v3277 = vpack.c.bf16 %v3229, %v3227
      %v3278 = vpack.c.bf16 %v3230, %v3228
      %v3279 = vpack.c.bf16 %v3233, %v3231
      %v3280 = vpack.c.bf16 %v3234, %v3232
      %v3281 = vpack.c.bf16 %v3237, %v3235
      %v3282 = vpack.c.bf16 %v3238, %v3236
      %v3283 = vpack.c.bf16 %v3241, %v3239
      %v3284 = vpack.c.bf16 %v3242, %v3240
      %v3285 = vpack.c.bf16 %v3245, %v3243
      %v3286 = vpack.c.bf16 %v3246, %v3244
      %v3287 = vpack.c.bf16 %v3249, %v3247
      %v3288 = vpack.c.bf16 %v3250, %v3248
      %v3289 = vpack.c.bf16 %v3253, %v3251
      %v3290 = vpack.c.bf16 %v3254, %v3252
      %v3291 = vpack.c.bf16 %v3257, %v3255
      %v3292 = vpack.c.bf16 %v3258, %v3256
      %v3293 = vpack.c.bf16 %v3261, %v3259
      %v3294 = vpack.c.bf16 %v3262, %v3260
      %v3295 = vpack.c.bf16 %v3265, %v3263
      %v3296 = vpack.c.bf16 %v3266, %v3264
      %v3297 = vpack.c.bf16 %v3269, %v3267
      %v3298 = vpack.c.bf16 %v3270, %v3268
      %3299 = vst [vmem:[#allocation3 + $0x20] sm:$0xff] %v3271
      %3300 = vst.msk [vmem:[#allocation3 + $0x28] sm:$0xff] %vm417, %v3272
      %3301 = vst [vmem:[#allocation3 + $0x30] sm:$0xff] %v3273
      %3302 = vst.msk [vmem:[#allocation3 + $0x38] sm:$0xff] %vm417, %v3274
      %3303 = vst [vmem:[#allocation3 + $0x40] sm:$0xff] %v3275
      %3304 = vst.msk [vmem:[#allocation3 + $0x48] sm:$0xff] %vm417, %v3276
      %3305 = vst [vmem:[#allocation3 + $0x50] sm:$0xff] %v3277
      %3306 = vst.msk [vmem:[#allocation3 + $0x58] sm:$0xff] %vm417, %v3278
      %3307 = vst [vmem:[#allocation3 + $0x60] sm:$0xff] %v3279
      %3308 = vst.msk [vmem:[#allocation3 + $0x68] sm:$0xff] %vm417, %v3280
      %3309 = vst [vmem:[#allocation3 + $0x70] sm:$0xff] %v3281
      %3310 = vst.msk [vmem:[#allocation3 + $0x78] sm:$0xff] %vm417, %v3282
      %3311 = vst [vmem:[#allocation3 + $0x80] sm:$0xff] %v3283
      %3312 = vst.msk [vmem:[#allocation3 + $0x88] sm:$0xff] %vm417, %v3284
      %3313 = vst [vmem:[#allocation3 + $0x90] sm:$0xff] %v3285
      %3314 = vst.msk [vmem:[#allocation3 + $0x98] sm:$0xff] %vm417, %v3286
      %3315 = vst [vmem:[#allocation3 + $0xa0] sm:$0xff] %v3287
      %3316 = vst.msk [vmem:[#allocation3 + $0xa8] sm:$0xff] %vm417, %v3288
      %3317 = vst [vmem:[#allocation3 + $0xb0] sm:$0xff] %v3289
      %3318 = vst.msk [vmem:[#allocation3 + $0xb8] sm:$0xff] %vm417, %v3290
      %3319 = vst [vmem:[#allocation3 + $0xc0] sm:$0xff] %v3291
      %3320 = vst.msk [vmem:[#allocation3 + $0xc8] sm:$0xff] %vm417, %v3292
      %3321 = vst [vmem:[#allocation3 + $0xd0] sm:$0xff] %v3293
      %3322 = vst.msk [vmem:[#allocation3 + $0xd8] sm:$0xff] %vm417, %v3294
      %3323 = vst [vmem:[#allocation3 + $0xe0] sm:$0xff] %v3295
      %3324 = vst.msk [vmem:[#allocation3 + $0xe8] sm:$0xff] %vm417, %v3296
      %3325 = vst [vmem:[#allocation3 + $0xf0] sm:$0xff] %v3297
      %3326 = vst.msk [vmem:[#allocation3 + $0xf8] sm:$0xff] %vm417, %v3298
      %v3327 = vld [vmem:[#allocation3] sm:$0xff]
      %v3328 = vld [vmem:[#allocation3 + $0x8] sm:$0xff]
      %v3329 = vld [vmem:[#allocation3 + $0x10] sm:$0xff]
      %v3330 = vld [vmem:[#allocation3 + $0x18] sm:$0xff]
      %v3331 = vld [vmem:[#allocation3 + $0x20] sm:$0xff]
      %v3332 = vld [vmem:[#allocation3 + $0x28] sm:$0xff]
      %v3333 = vld [vmem:[#allocation3 + $0x30] sm:$0xff]
      %v3334 = vld [vmem:[#allocation3 + $0x38] sm:$0xff]
      %v3335 = vld [vmem:[#allocation3 + $0x40] sm:$0xff]
      %v3336 = vld [vmem:[#allocation3 + $0x48] sm:$0xff]
      %v3337 = vld [vmem:[#allocation3 + $0x50] sm:$0xff]
      %v3338 = vld [vmem:[#allocation3 + $0x58] sm:$0xff]
      %v3339 = vld [vmem:[#allocation3 + $0x60] sm:$0xff]
      %v3340 = vld [vmem:[#allocation3 + $0x68] sm:$0xff]
      %v3341 = vld [vmem:[#allocation3 + $0x70] sm:$0xff]
      %v3342 = vld [vmem:[#allocation3 + $0x78] sm:$0xff]
      %v3343 = vld [vmem:[#allocation3 + $0x80] sm:$0xff]
      %v3344 = vld [vmem:[#allocation3 + $0x88] sm:$0xff]
      %v3345 = vld [vmem:[#allocation3 + $0x90] sm:$0xff]
      %v3346 = vld [vmem:[#allocation3 + $0x98] sm:$0xff]
      %v3347 = vld [vmem:[#allocation3 + $0xa0] sm:$0xff]
      %v3348 = vld [vmem:[#allocation3 + $0xa8] sm:$0xff]
      %v3349 = vld [vmem:[#allocation3 + $0xb0] sm:$0xff]
      %v3350 = vld [vmem:[#allocation3 + $0xb8] sm:$0xff]
      %v3351 = vld [vmem:[#allocation3 + $0xc0] sm:$0xff]
      %v3352 = vld [vmem:[#allocation3 + $0xc8] sm:$0xff]
      %v3353 = vld [vmem:[#allocation3 + $0xd0] sm:$0xff]
      %v3354 = vld [vmem:[#allocation3 + $0xd8] sm:$0xff]
      %v3355 = vld [vmem:[%s5] sm:$0xff]
      %v3356 = vld [vmem:[%s5 + $0x8] sm:$0xff]
      %v3357 = vld [vmem:[%s5 + $0x10] sm:$0xff]
      %v3358 = vld [vmem:[%s5 + $0x18] sm:$0xff]
      %v3359 = vld [vmem:[%s5 + $0x20] sm:$0xff]
      %v3360 = vld [vmem:[%s5 + $0x28] sm:$0xff]
      %v3361 = vld [vmem:[%s5 + $0x30] sm:$0xff]
      %v3362 = vld [vmem:[%s5 + $0x38] sm:$0xff]
      %v3363 = vld [vmem:[%s5 + $0x40] sm:$0xff]
      %v3364 = vld [vmem:[%s5 + $0x48] sm:$0xff]
      %v3365 = vld [vmem:[%s5 + $0x50] sm:$0xff]
      %v3366 = vld [vmem:[%s5 + $0x58] sm:$0xff]
      %v3367 = vld [vmem:[%s5 + $0x60] sm:$0xff]
      %v3368 = vld [vmem:[%s5 + $0x68] sm:$0xff]
      %v3369 = vld [vmem:[%s5 + $0x70] sm:$0xff]
      %v3370 = vld [vmem:[%s5 + $0x78] sm:$0xff]
      %v3371 = vld [vmem:[%s5 + $0x80] sm:$0xff]
      %v3372 = vld [vmem:[%s5 + $0x88] sm:$0xff]
      %v3373 = vld [vmem:[#allocation3 + $0xe0] sm:$0xff]
      %v3374 = vld [vmem:[#allocation3 + $0xe8] sm:$0xff]
      %v3375 = vld [vmem:[#allocation3 + $0xf0] sm:$0xff]
      %v3376 = vld [vmem:[#allocation3 + $0xf8] sm:$0xff]
      %s3377 = scalar_lea.vmem %s5, 144
      %v3378 = vld [vmem:[%s3377] sm:$0xff]
      %v3379 = vld [vmem:[%s3377 + $0x8] sm:$0xff]
      %v3380 = vld [vmem:[%s3377 + $0x10] sm:$0xff]
      %v3381 = vld [vmem:[%s3377 + $0x18] sm:$0xff]
      %v3382 = vld [vmem:[%s3377 + $0x20] sm:$0xff]
      %v3383 = vld [vmem:[%s3377 + $0x28] sm:$0xff]
      %v3384 = vld [vmem:[%s3377 + $0x30] sm:$0xff]
      %v3385 = vld [vmem:[%s3377 + $0x38] sm:$0xff]
      %v3386 = vld [vmem:[%s3377 + $0x40] sm:$0xff]
      %v3387 = vld [vmem:[%s3377 + $0x48] sm:$0xff]
      %v3388 = vld [vmem:[%s3377 + $0x50] sm:$0xff]
      %v3389 = vld [vmem:[%s3377 + $0x58] sm:$0xff]
      %v3390 = vld [vmem:[%s3377 + $0x60] sm:$0xff]
      %v3391 = vld [vmem:[%s3377 + $0x68] sm:$0xff]
      %v3392 = vld [vmem:[%s3377 + $0x70] sm:$0xff]
      %v3393 = vld [vmem:[%s3377 + $0x78] sm:$0xff]
      %v3394 = vld [vmem:[%s3377 + $0x80] sm:$0xff]
      %v3395 = vld [vmem:[%s3377 + $0x88] sm:$0xff]
      %v3414 = vunpack.c.l.b16 %v3378
      %v3415 = vunpack.c.h.b16 %v3378
      %v3416 = vunpack.c.l.b16 %v3379
      %v3417 = vunpack.c.h.b16 %v3379
      %v3418 = vunpack.c.l.b16 %v3380
      %v3419 = vunpack.c.h.b16 %v3380
      %v3420 = vunpack.c.l.b16 %v3381
      %v3421 = vunpack.c.h.b16 %v3381
      %v3422 = vunpack.c.l.b16 %v3382
      %v3423 = vunpack.c.h.b16 %v3382
      %v3424 = vunpack.c.l.b16 %v3383
      %v3425 = vunpack.c.h.b16 %v3383
      %v3426 = vunpack.c.l.b16 %v3384
      %v3427 = vunpack.c.h.b16 %v3384
      %v3428 = vunpack.c.l.b16 %v3385
      %v3429 = vunpack.c.h.b16 %v3385
      %v3430 = vunpack.c.l.b16 %v3386
      %v3431 = vunpack.c.h.b16 %v3386
      %v3432 = vunpack.c.l.b16 %v3387
      %v3433 = vunpack.c.h.b16 %v3387
      %v3434 = vunpack.c.l.b16 %v3388
      %v3435 = vunpack.c.h.b16 %v3388
      %v3436 = vunpack.c.l.b16 %v3389
      %v3437 = vunpack.c.h.b16 %v3389
      %v3438 = vunpack.c.l.b16 %v3390
      %v3439 = vunpack.c.h.b16 %v3390
      %v3440 = vunpack.c.l.b16 %v3391
      %v3441 = vunpack.c.h.b16 %v3391
      %v3442 = vunpack.c.l.b16 %v3392
      %v3443 = vunpack.c.h.b16 %v3392
      %v3444 = vunpack.c.l.b16 %v3393
      %v3445 = vunpack.c.h.b16 %v3393
      %v3446 = vunpack.c.l.b16 %v3394
      %v3447 = vunpack.c.h.b16 %v3394
      %v3448 = vunpack.c.l.b16 %v3395
      %v3449 = vunpack.c.h.b16 %v3395
      %v3450 = vpack.c.b16 %v3416, %v3414
      %v3451 = vpack.c.b16 %v3417, %v3415
      %v3452 = vpack.c.b16 %v3420, %v3418
      %v3453 = vpack.c.b16 %v3421, %v3419
      %v3454 = vpack.c.b16 %v3424, %v3422
      %v3455 = vpack.c.b16 %v3425, %v3423
      %v3456 = vpack.c.b16 %v3428, %v3426
      %v3457 = vpack.c.b16 %v3429, %v3427
      %v3458 = vpack.c.b16 %v3432, %v3430
      %v3459 = vpack.c.b16 %v3433, %v3431
      %v3460 = vpack.c.b16 %v3436, %v3434
      %v3461 = vpack.c.b16 %v3437, %v3435
      %v3462 = vpack.c.b16 %v3440, %v3438
      %v3463 = vpack.c.b16 %v3441, %v3439
      %v3464 = vpack.c.b16 %v3444, %v3442
      %v3465 = vpack.c.b16 %v3445, %v3443
      %v3466 = vpack.c.b16 %v3448, %v3446
      %v3467 = vpack.c.b16 %v3449, %v3447
      %v3487 = vsel %vm417, %v3332, 0
      %v3490 = vsel %vm417, %v3334, 0
      %v3493 = vsel %vm417, %v3336, 0
      %v3496 = vsel %vm417, %v3338, 0
      %v3499 = vsel %vm417, %v3340, 0
      %v3502 = vsel %vm417, %v3342, 0
      %v3505 = vsel %vm417, %v3344, 0
      %v3508 = vsel %vm417, %v3346, 0
      %v3511 = vsel %vm417, %v3348, 0
      %v3514 = vsel %vm417, %v3350, 0
      %v3517 = vsel %vm417, %v3352, 0
      %v3520 = vsel %vm417, %v3354, 0
      %v3523 = vsel %vm417, %v3374, 0
      %v3526 = vsel %vm417, %v3376, 0
      %3528 = vmatprep.subr.bf16.mxu0 %v3451
      %3529 = vmatpush1.bf16.msra.mxu0 %v3450
      %3530 = vmatprep.subr.bf16.mxu0 %v3453
      %3531 = vmatpush1.bf16.msra.mxu0 %v3452
      %3532 = vmatprep.subr.bf16.mxu0 %v3455
      %3533 = vmatpush1.bf16.msra.mxu0 %v3454
      %3534 = vmatprep.subr.bf16.mxu0 %v3457
      %3535 = vmatpush1.bf16.msra.mxu0 %v3456
      %3536 = vmatprep.subr.bf16.mxu0 %v3459
      %3537 = vmatpush1.bf16.msra.mxu0 %v3458
      %3538 = vmatprep.subr.bf16.mxu0 %v3461
      %3539 = vmatpush1.bf16.msra.mxu0 %v3460
      %3540 = vmatprep.subr.bf16.mxu0 %v3463
      %3541 = vmatpush1.bf16.msra.mxu0 %v3462
      %3542 = vmatprep.subr.bf16.mxu0 %v3465
      %3543 = vmatpush1.bf16.msra.mxu0 %v3464
      %3544 = vmatprep.subr.bf16.mxu0 %v3467
      %3545 = vmatpush1.bf16.msra.mxu0 %v3466
      %3546 = vmatprep.subr.bf16.mxu0 0
      %3547 = vmatpush1.bf16.msra.mxu0 0
      %3548 = vmatprep.subr.bf16.mxu0 0
      %3549 = vmatpush1.bf16.msra.mxu0 0
      %3550 = vmatprep.subr.bf16.mxu0 0
      %3551 = vmatpush1.bf16.msra.mxu0 0
      %3552 = vmatprep.subr.bf16.mxu0 0
      %3553 = vmatpush1.bf16.msra.mxu0 0
      %3554 = vmatprep.subr.bf16.mxu0 0
      %3555 = vmatpush1.bf16.msra.mxu0 0
      %3556 = vmatprep.subr.bf16.mxu0 0
      %3557 = vmatpush1.bf16.msra.mxu0 0
      %3558 = vmatprep.subr.bf16.mxu0 0
      %3559 = vmatpush1.bf16.msra.mxu0 0
      %3560 = vmatprep.mubr.bf16.mxu0 %v3487
      %3561 = vmatmul.mubr.bf16.gmra.mrb[0].mxu0 %v3331
      %v3562 = vpop.f32.mrb[0].mxu0
      %v3563 = vadd.f32 0.0, %v3562
      %v3564 = vpop.f32.mrb[0].mxu0
      %v3565 = vadd.f32 0.0, %v3564
      %v3566 = vpop.f32.mrb[0].mxu0
      %v3567 = vadd.f32 0.0, %v3566
      %v3568 = vpop.f32.mrb[0].mxu0
      %v3569 = vadd.f32 0.0, %v3568
      %3570 = vmatprep.mubr.bf16.mxu0 %v3490
      %3571 = vmatmul.mubr.bf16.gmra.mrb[0].mxu0 %v3333
      %v3572 = vpop.f32.mrb[0].mxu0
      %v3573 = vadd.f32 0.0, %v3572
      %v3574 = vpop.f32.mrb[0].mxu0
      %v3575 = vadd.f32 0.0, %v3574
      %v3576 = vpop.f32.mrb[0].mxu0
      %v3577 = vadd.f32 0.0, %v3576
      %v3578 = vpop.f32.mrb[0].mxu0
      %v3579 = vadd.f32 0.0, %v3578
      %3580 = vmatprep.mubr.bf16.mxu0 %v3493
      %3581 = vmatmul.mubr.bf16.gmra.mrb[0].mxu0 %v3335
      %v3582 = vpop.f32.mrb[0].mxu0
      %v3583 = vadd.f32 0.0, %v3582
      %v3584 = vpop.f32.mrb[0].mxu0
      %v3585 = vadd.f32 0.0, %v3584
      %v3586 = vpop.f32.mrb[0].mxu0
      %v3587 = vadd.f32 0.0, %v3586
      %v3588 = vpop.f32.mrb[0].mxu0
      %v3589 = vadd.f32 0.0, %v3588
      %3590 = vmatprep.mubr.bf16.mxu0 %v3496
      %3591 = vmatmul.mubr.bf16.gmra.mrb[0].mxu0 %v3337
      %v3592 = vpop.f32.mrb[0].mxu0
      %v3593 = vadd.f32 0.0, %v3592
      %v3594 = vpop.f32.mrb[0].mxu0
      %v3595 = vadd.f32 0.0, %v3594
      %v3596 = vpop.f32.mrb[0].mxu0
      %v3597 = vadd.f32 0.0, %v3596
      %v3598 = vpop.f32.mrb[0].mxu0
      %v3599 = vadd.f32 0.0, %v3598
      %3600 = vmatprep.mubr.bf16.mxu0 %v3499
      %3601 = vmatmul.mubr.bf16.gmra.mrb[0].mxu0 %v3339
      %v3602 = vpop.f32.mrb[0].mxu0
      %v3603 = vadd.f32 0.0, %v3602
      %v3604 = vpop.f32.mrb[0].mxu0
      %v3605 = vadd.f32 0.0, %v3604
      %v3606 = vpop.f32.mrb[0].mxu0
      %v3607 = vadd.f32 0.0, %v3606
      %v3608 = vpop.f32.mrb[0].mxu0
      %v3609 = vadd.f32 0.0, %v3608
      %3610 = vmatprep.mubr.bf16.mxu0 %v3502
      %3611 = vmatmul.mubr.bf16.gmra.mrb[0].mxu0 %v3341
      %v3612 = vpop.f32.mrb[0].mxu0
      %v3613 = vadd.f32 0.0, %v3612
      %v3614 = vpop.f32.mrb[0].mxu0
      %v3615 = vadd.f32 0.0, %v3614
      %v3616 = vpop.f32.mrb[0].mxu0
      %v3617 = vadd.f32 0.0, %v3616
      %v3618 = vpop.f32.mrb[0].mxu0
      %v3619 = vadd.f32 0.0, %v3618
      %3620 = vmatprep.mubr.bf16.mxu0 %v3505
      %3621 = vmatmul.mubr.bf16.gmra.mrb[0].mxu0 %v3343
      %v3622 = vpop.f32.mrb[0].mxu0
      %v3623 = vadd.f32 0.0, %v3622
      %v3624 = vpop.f32.mrb[0].mxu0
      %v3625 = vadd.f32 0.0, %v3624
      %v3626 = vpop.f32.mrb[0].mxu0
      %v3627 = vadd.f32 0.0, %v3626
      %v3628 = vpop.f32.mrb[0].mxu0
      %v3629 = vadd.f32 0.0, %v3628
      %3630 = vmatprep.mubr.bf16.mxu0 %v3508
      %3631 = vmatmul.mubr.bf16.gmra.mrb[0].mxu0 %v3345
      %v3632 = vpop.f32.mrb[0].mxu0
      %v3633 = vadd.f32 0.0, %v3632
      %v3634 = vpop.f32.mrb[0].mxu0
      %v3635 = vadd.f32 0.0, %v3634
      %v3636 = vpop.f32.mrb[0].mxu0
      %v3637 = vadd.f32 0.0, %v3636
      %v3638 = vpop.f32.mrb[0].mxu0
      %v3639 = vadd.f32 0.0, %v3638
      %3640 = vmatprep.mubr.bf16.mxu0 %v3511
      %3641 = vmatmul.mubr.bf16.gmra.mrb[0].mxu0 %v3347
      %v3642 = vpop.f32.mrb[0].mxu0
      %v3643 = vadd.f32 0.0, %v3642
      %v3644 = vpop.f32.mrb[0].mxu0
      %v3645 = vadd.f32 0.0, %v3644
      %v3646 = vpop.f32.mrb[0].mxu0
      %v3647 = vadd.f32 0.0, %v3646
      %v3648 = vpop.f32.mrb[0].mxu0
      %v3649 = vadd.f32 0.0, %v3648
      %3650 = vmatprep.mubr.bf16.mxu0 %v3514
      %3651 = vmatmul.mubr.bf16.gmra.mrb[0].mxu0 %v3349
      %v3652 = vpop.f32.mrb[0].mxu0
      %v3653 = vadd.f32 0.0, %v3652
      %v3654 = vpop.f32.mrb[0].mxu0
      %v3655 = vadd.f32 0.0, %v3654
      %v3656 = vpop.f32.mrb[0].mxu0
      %v3657 = vadd.f32 0.0, %v3656
      %v3658 = vpop.f32.mrb[0].mxu0
      %v3659 = vadd.f32 0.0, %v3658
      %3660 = vmatprep.mubr.bf16.mxu0 %v3517
      %3661 = vmatmul.mubr.bf16.gmra.mrb[0].mxu0 %v3351
      %v3662 = vpop.f32.mrb[0].mxu0
      %v3663 = vadd.f32 0.0, %v3662
      %v3664 = vpop.f32.mrb[0].mxu0
      %v3665 = vadd.f32 0.0, %v3664
      %v3666 = vpop.f32.mrb[0].mxu0
      %v3667 = vadd.f32 0.0, %v3666
      %v3668 = vpop.f32.mrb[0].mxu0
      %v3669 = vadd.f32 0.0, %v3668
      %3670 = vmatprep.mubr.bf16.mxu0 %v3520
      %3671 = vmatmul.mubr.bf16.gmra.mrb[0].mxu0 %v3353
      %v3672 = vpop.f32.mrb[0].mxu0
      %v3673 = vadd.f32 0.0, %v3672
      %v3674 = vpop.f32.mrb[0].mxu0
      %v3675 = vadd.f32 0.0, %v3674
      %v3676 = vpop.f32.mrb[0].mxu0
      %v3677 = vadd.f32 0.0, %v3676
      %v3678 = vpop.f32.mrb[0].mxu0
      %v3679 = vadd.f32 0.0, %v3678
      %3680 = vmatprep.mubr.bf16.mxu0 %v3523
      %3681 = vmatmul.mubr.bf16.gmra.mrb[0].mxu0 %v3373
      %v3682 = vpop.f32.mrb[0].mxu0
      %v3683 = vadd.f32 0.0, %v3682
      %v3684 = vpop.f32.mrb[0].mxu0
      %v3685 = vadd.f32 0.0, %v3684
      %v3686 = vpop.f32.mrb[0].mxu0
      %v3687 = vadd.f32 0.0, %v3686
      %v3688 = vpop.f32.mrb[0].mxu0
      %v3689 = vadd.f32 0.0, %v3688
      %3690 = vmatprep.mubr.bf16.mxu0 %v3526
      %3691 = vmatmul.mubr.bf16.gmra.mrb[0].mxu0 %v3375
      %v3692 = vpop.f32.mrb[0].mxu0
      %v3693 = vadd.f32 0.0, %v3692
      %v3694 = vpop.f32.mrb[0].mxu0
      %v3695 = vadd.f32 0.0, %v3694
      %v3696 = vpop.f32.mrb[0].mxu0
      %v3697 = vadd.f32 0.0, %v3696
      %v3698 = vpop.f32.mrb[0].mxu0
      %v3699 = vadd.f32 0.0, %v3698
      %3700 = vdwg.mxu0
      %v3719 = vunpack.c.l.b16 %v3355
      %v3720 = vunpack.c.h.b16 %v3355
      %v3721 = vunpack.c.l.b16 %v3356
      %v3722 = vunpack.c.h.b16 %v3356
      %v3723 = vunpack.c.l.b16 %v3357
      %v3724 = vunpack.c.h.b16 %v3357
      %v3725 = vunpack.c.l.b16 %v3358
      %v3726 = vunpack.c.h.b16 %v3358
      %v3727 = vunpack.c.l.b16 %v3359
      %v3728 = vunpack.c.h.b16 %v3359
      %v3729 = vunpack.c.l.b16 %v3360
      %v3730 = vunpack.c.h.b16 %v3360
      %v3731 = vunpack.c.l.b16 %v3361
      %v3732 = vunpack.c.h.b16 %v3361
      %v3733 = vunpack.c.l.b16 %v3362
      %v3734 = vunpack.c.h.b16 %v3362
      %v3735 = vunpack.c.l.b16 %v3363
      %v3736 = vunpack.c.h.b16 %v3363
      %v3737 = vunpack.c.l.b16 %v3364
      %v3738 = vunpack.c.h.b16 %v3364
      %v3739 = vunpack.c.l.b16 %v3365
      %v3740 = vunpack.c.h.b16 %v3365
      %v3741 = vunpack.c.l.b16 %v3366
      %v3742 = vunpack.c.h.b16 %v3366
      %v3743 = vunpack.c.l.b16 %v3367
      %v3744 = vunpack.c.h.b16 %v3367
      %v3745 = vunpack.c.l.b16 %v3368
      %v3746 = vunpack.c.h.b16 %v3368
      %v3747 = vunpack.c.l.b16 %v3369
      %v3748 = vunpack.c.h.b16 %v3369
      %v3749 = vunpack.c.l.b16 %v3370
      %v3750 = vunpack.c.h.b16 %v3370
      %v3751 = vunpack.c.l.b16 %v3371
      %v3752 = vunpack.c.h.b16 %v3371
      %v3753 = vunpack.c.l.b16 %v3372
      %v3754 = vunpack.c.h.b16 %v3372
      %v3755 = vpack.c.b16 %v3721, %v3719
      %v3756 = vpack.c.b16 %v3722, %v3720
      %v3757 = vpack.c.b16 %v3725, %v3723
      %v3758 = vpack.c.b16 %v3726, %v3724
      %v3759 = vpack.c.b16 %v3729, %v3727
      %v3760 = vpack.c.b16 %v3730, %v3728
      %v3761 = vpack.c.b16 %v3733, %v3731
      %v3762 = vpack.c.b16 %v3734, %v3732
      %v3763 = vpack.c.b16 %v3737, %v3735
      %v3764 = vpack.c.b16 %v3738, %v3736
      %v3765 = vpack.c.b16 %v3741, %v3739
      %v3766 = vpack.c.b16 %v3742, %v3740
      %v3767 = vpack.c.b16 %v3745, %v3743
      %v3768 = vpack.c.b16 %v3746, %v3744
      %v3769 = vpack.c.b16 %v3749, %v3747
      %v3770 = vpack.c.b16 %v3750, %v3748
      %v3771 = vpack.c.b16 %v3753, %v3751
      %v3772 = vpack.c.b16 %v3754, %v3752
      %v3792 = vsel %vm417, %v3328, 0
      %v3795 = vsel %vm417, %v3330, 0
      %3797 = vmatprep.subr.bf16.mxu0 %v3756
      %3798 = vmatpush1.bf16.msra.mxu0 %v3755
      %3799 = vmatprep.subr.bf16.mxu0 %v3758
      %3800 = vmatpush1.bf16.msra.mxu0 %v3757
      %3801 = vmatprep.subr.bf16.mxu0 %v3760
      %3802 = vmatpush1.bf16.msra.mxu0 %v3759
      %3803 = vmatprep.subr.bf16.mxu0 %v3762
      %3804 = vmatpush1.bf16.msra.mxu0 %v3761
      %3805 = vmatprep.subr.bf16.mxu0 %v3764
      %3806 = vmatpush1.bf16.msra.mxu0 %v3763
      %3807 = vmatprep.subr.bf16.mxu0 %v3766
      %3808 = vmatpush1.bf16.msra.mxu0 %v3765
      %3809 = vmatprep.subr.bf16.mxu0 %v3768
      %3810 = vmatpush1.bf16.msra.mxu0 %v3767
      %3811 = vmatprep.subr.bf16.mxu0 %v3770
      %3812 = vmatpush1.bf16.msra.mxu0 %v3769
      %3813 = vmatprep.subr.bf16.mxu0 %v3772
      %3814 = vmatpush1.bf16.msra.mxu0 %v3771
      %3815 = vmatprep.subr.bf16.mxu0 0
      %3816 = vmatpush1.bf16.msra.mxu0 0
      %3817 = vmatprep.subr.bf16.mxu0 0
      %3818 = vmatpush1.bf16.msra.mxu0 0
      %3819 = vmatprep.subr.bf16.mxu0 0
      %3820 = vmatpush1.bf16.msra.mxu0 0
      %3821 = vmatprep.subr.bf16.mxu0 0
      %3822 = vmatpush1.bf16.msra.mxu0 0
      %3823 = vmatprep.subr.bf16.mxu0 0
      %3824 = vmatpush1.bf16.msra.mxu0 0
      %3825 = vmatprep.subr.bf16.mxu0 0
      %3826 = vmatpush1.bf16.msra.mxu0 0
      %3827 = vmatprep.subr.bf16.mxu0 0
      %3828 = vmatpush1.bf16.msra.mxu0 0
      %3829 = vmatprep.mubr.bf16.mxu0 %v3792
      %3830 = vmatmul.mubr.bf16.gmra.mrb[0].mxu0 %v3327
      %v3831 = vpop.f32.mrb[0].mxu0
      %v3832 = vadd.f32 %v3563, %v3831
      %v3833 = vpop.f32.mrb[0].mxu0
      %v3834 = vadd.f32 %v3565, %v3833
      %v3835 = vpop.f32.mrb[0].mxu0
      %v3836 = vadd.f32 %v3567, %v3835
      %v3837 = vpop.f32.mrb[0].mxu0
      %v3838 = vadd.f32 %v3569, %v3837
      %3839 = vmatprep.mubr.bf16.mxu0 %v3795
      %3840 = vmatmul.mubr.bf16.gmra.mrb[0].mxu0 %v3329
      %v3841 = vpop.f32.mrb[0].mxu0
      %v3842 = vadd.f32 %v3573, %v3841
      %v3843 = vpop.f32.mrb[0].mxu0
      %v3844 = vadd.f32 %v3575, %v3843
      %v3845 = vpop.f32.mrb[0].mxu0
      %v3846 = vadd.f32 %v3577, %v3845
      %v3847 = vpop.f32.mrb[0].mxu0
      %v3848 = vadd.f32 %v3579, %v3847
      %3849 = vmatprep.mubr.bf16.mxu0 %v3487
      %3850 = vmatmul.mubr.bf16.gmra.mrb[0].mxu0 %v3331
      %v3851 = vpop.f32.mrb[0].mxu0
      %v3852 = vadd.f32 %v3583, %v3851
      %v3853 = vpop.f32.mrb[0].mxu0
      %v3854 = vadd.f32 %v3585, %v3853
      %v3855 = vpop.f32.mrb[0].mxu0
      %v3856 = vadd.f32 %v3587, %v3855
      %v3857 = vpop.f32.mrb[0].mxu0
      %v3858 = vadd.f32 %v3589, %v3857
      %3859 = vmatprep.mubr.bf16.mxu0 %v3490
      %3860 = vmatmul.mubr.bf16.gmra.mrb[0].mxu0 %v3333
      %v3861 = vpop.f32.mrb[0].mxu0
      %v3862 = vadd.f32 %v3593, %v3861
      %v3863 = vpop.f32.mrb[0].mxu0
      %v3864 = vadd.f32 %v3595, %v3863
      %v3865 = vpop.f32.mrb[0].mxu0
      %v3866 = vadd.f32 %v3597, %v3865
      %v3867 = vpop.f32.mrb[0].mxu0
      %v3868 = vadd.f32 %v3599, %v3867
      %3869 = vmatprep.mubr.bf16.mxu0 %v3493
      %3870 = vmatmul.mubr.bf16.gmra.mrb[0].mxu0 %v3335
      %v3871 = vpop.f32.mrb[0].mxu0
      %v3872 = vadd.f32 %v3603, %v3871
      %v3873 = vpop.f32.mrb[0].mxu0
      %v3874 = vadd.f32 %v3605, %v3873
      %v3875 = vpop.f32.mrb[0].mxu0
      %v3876 = vadd.f32 %v3607, %v3875
      %v3877 = vpop.f32.mrb[0].mxu0
      %v3878 = vadd.f32 %v3609, %v3877
      %3879 = vmatprep.mubr.bf16.mxu0 %v3496
      %3880 = vmatmul.mubr.bf16.gmra.mrb[0].mxu0 %v3337
      %v3881 = vpop.f32.mrb[0].mxu0
      %v3882 = vadd.f32 %v3613, %v3881
      %v3883 = vpop.f32.mrb[0].mxu0
      %v3884 = vadd.f32 %v3615, %v3883
      %v3885 = vpop.f32.mrb[0].mxu0
      %v3886 = vadd.f32 %v3617, %v3885
      %v3887 = vpop.f32.mrb[0].mxu0
      %v3888 = vadd.f32 %v3619, %v3887
      %3889 = vmatprep.mubr.bf16.mxu0 %v3499
      %3890 = vmatmul.mubr.bf16.gmra.mrb[0].mxu0 %v3339
      %v3891 = vpop.f32.mrb[0].mxu0
      %v3892 = vadd.f32 %v3623, %v3891
      %v3893 = vpop.f32.mrb[0].mxu0
      %v3894 = vadd.f32 %v3625, %v3893
      %v3895 = vpop.f32.mrb[0].mxu0
      %v3896 = vadd.f32 %v3627, %v3895
      %v3897 = vpop.f32.mrb[0].mxu0
      %v3898 = vadd.f32 %v3629, %v3897
      %3899 = vmatprep.mubr.bf16.mxu0 %v3502
      %3900 = vmatmul.mubr.bf16.gmra.mrb[0].mxu0 %v3341
      %v3901 = vpop.f32.mrb[0].mxu0
      %v3902 = vadd.f32 %v3633, %v3901
      %v3903 = vpop.f32.mrb[0].mxu0
      %v3904 = vadd.f32 %v3635, %v3903
      %v3905 = vpop.f32.mrb[0].mxu0
      %v3906 = vadd.f32 %v3637, %v3905
      %v3907 = vpop.f32.mrb[0].mxu0
      %v3908 = vadd.f32 %v3639, %v3907
      %3909 = vmatprep.mubr.bf16.mxu0 %v3505
      %3910 = vmatmul.mubr.bf16.gmra.mrb[0].mxu0 %v3343
      %v3911 = vpop.f32.mrb[0].mxu0
      %v3912 = vadd.f32 %v3643, %v3911
      %v3913 = vpop.f32.mrb[0].mxu0
      %v3914 = vadd.f32 %v3645, %v3913
      %v3915 = vpop.f32.mrb[0].mxu0
      %v3916 = vadd.f32 %v3647, %v3915
      %v3917 = vpop.f32.mrb[0].mxu0
      %v3918 = vadd.f32 %v3649, %v3917
      %3919 = vmatprep.mubr.bf16.mxu0 %v3508
      %3920 = vmatmul.mubr.bf16.gmra.mrb[0].mxu0 %v3345
      %v3921 = vpop.f32.mrb[0].mxu0
      %v3922 = vadd.f32 %v3653, %v3921
      %v3923 = vpop.f32.mrb[0].mxu0
      %v3924 = vadd.f32 %v3655, %v3923
      %v3925 = vpop.f32.mrb[0].mxu0
      %v3926 = vadd.f32 %v3657, %v3925
      %v3927 = vpop.f32.mrb[0].mxu0
      %v3928 = vadd.f32 %v3659, %v3927
      %3929 = vmatprep.mubr.bf16.mxu0 %v3511
      %3930 = vmatmul.mubr.bf16.gmra.mrb[0].mxu0 %v3347
      %v3931 = vpop.f32.mrb[0].mxu0
      %v3932 = vadd.f32 %v3663, %v3931
      %v3933 = vpop.f32.mrb[0].mxu0
      %v3934 = vadd.f32 %v3665, %v3933
      %v3935 = vpop.f32.mrb[0].mxu0
      %v3936 = vadd.f32 %v3667, %v3935
      %v3937 = vpop.f32.mrb[0].mxu0
      %v3938 = vadd.f32 %v3669, %v3937
      %3939 = vmatprep.mubr.bf16.mxu0 %v3514
      %3940 = vmatmul.mubr.bf16.gmra.mrb[0].mxu0 %v3349
      %v3941 = vpop.f32.mrb[0].mxu0
      %v3942 = vadd.f32 %v3673, %v3941
      %v3943 = vpop.f32.mrb[0].mxu0
      %v3944 = vadd.f32 %v3675, %v3943
      %v3945 = vpop.f32.mrb[0].mxu0
      %v3946 = vadd.f32 %v3677, %v3945
      %v3947 = vpop.f32.mrb[0].mxu0
      %v3948 = vadd.f32 %v3679, %v3947
      %3949 = vmatprep.mubr.bf16.mxu0 %v3517
      %3950 = vmatmul.mubr.bf16.gmra.mrb[0].mxu0 %v3351
      %v3951 = vpop.f32.mrb[0].mxu0
      %v3952 = vadd.f32 %v3683, %v3951
      %v3953 = vpop.f32.mrb[0].mxu0
      %v3954 = vadd.f32 %v3685, %v3953
      %v3955 = vpop.f32.mrb[0].mxu0
      %v3956 = vadd.f32 %v3687, %v3955
      %v3957 = vpop.f32.mrb[0].mxu0
      %v3958 = vadd.f32 %v3689, %v3957
      %3959 = vmatprep.mubr.bf16.mxu0 %v3520
      %3960 = vmatmul.mubr.bf16.gmra.mrb[0].mxu0 %v3353
      %v3961 = vpop.f32.mrb[0].mxu0
      %v3962 = vadd.f32 %v3693, %v3961
      %v3963 = vpop.f32.mrb[0].mxu0
      %v3964 = vadd.f32 %v3695, %v3963
      %v3965 = vpop.f32.mrb[0].mxu0
      %v3966 = vadd.f32 %v3697, %v3965
      %v3967 = vpop.f32.mrb[0].mxu0
      %v3968 = vadd.f32 %v3699, %v3967
      %3969 = vdwg.mxu0
      %v3970 = vld [vmem:[#allocation3 + $0x40] sm:$0xff]
      %v3971 = vld [vmem:[#allocation3 + $0x48] sm:$0xff]
      %v3972 = vld [vmem:[#allocation3 + $0x50] sm:$0xff]
      %v3973 = vld [vmem:[#allocation3 + $0x58] sm:$0xff]
      %v3974 = vld [vmem:[#allocation3 + $0x60] sm:$0xff]
      %v3975 = vld [vmem:[#allocation3 + $0x68] sm:$0xff]
      %v3976 = vld [vmem:[#allocation3 + $0x70] sm:$0xff]
      %v3977 = vld [vmem:[#allocation3 + $0x78] sm:$0xff]
      %v3978 = vld [vmem:[#allocation3 + $0x80] sm:$0xff]
      %v3979 = vld [vmem:[#allocation3 + $0x88] sm:$0xff]
      %v3980 = vld [vmem:[#allocation3 + $0x90] sm:$0xff]
      %v3981 = vld [vmem:[#allocation3 + $0x98] sm:$0xff]
      %v3982 = vld [vmem:[#allocation3 + $0xa0] sm:$0xff]
      %v3983 = vld [vmem:[#allocation3 + $0xa8] sm:$0xff]
      %v3984 = vld [vmem:[#allocation3 + $0xb0] sm:$0xff]
      %v3985 = vld [vmem:[#allocation3 + $0xb8] sm:$0xff]
      %v3986 = vld [vmem:[#allocation3 + $0xc0] sm:$0xff]
      %v3987 = vld [vmem:[#allocation3 + $0xc8] sm:$0xff]
      %v3988 = vld [vmem:[#allocation3 + $0xd0] sm:$0xff]
      %v3989 = vld [vmem:[#allocation3 + $0xd8] sm:$0xff]
      %v3990 = vld [vmem:[#allocation3 + $0xe0] sm:$0xff]
      %v3991 = vld [vmem:[#allocation3 + $0xe8] sm:$0xff]
      %v3992 = vld [vmem:[#allocation3 + $0xf0] sm:$0xff]
      %v3993 = vld [vmem:[#allocation3 + $0xf8] sm:$0xff]
      %v3994 = vld [vmem:[#allocation3 + $0x100] sm:$0xff]
      %v3995 = vld [vmem:[#allocation3 + $0x108] sm:$0xff]
      %v3996 = vld [vmem:[#allocation3 + $0x110] sm:$0xff]
      %v3997 = vld [vmem:[#allocation3 + $0x118] sm:$0xff]
      %s3998 = scalar_lea.vmem %s5, 288
      %v3999 = vld [vmem:[%s3998] sm:$0xff]
      %v4000 = vld [vmem:[%s3998 + $0x8] sm:$0xff]
      %v4001 = vld [vmem:[%s3998 + $0x10] sm:$0xff]
      %v4002 = vld [vmem:[%s3998 + $0x18] sm:$0xff]
      %v4003 = vld [vmem:[%s3998 + $0x20] sm:$0xff]
      %v4004 = vld [vmem:[%s3998 + $0x28] sm:$0xff]
      %v4005 = vld [vmem:[%s3998 + $0x30] sm:$0xff]
      %v4006 = vld [vmem:[%s3998 + $0x38] sm:$0xff]
      %v4007 = vld [vmem:[%s3998 + $0x40] sm:$0xff]
      %v4008 = vld [vmem:[%s3998 + $0x48] sm:$0xff]
      %v4009 = vld [vmem:[%s3998 + $0x50] sm:$0xff]
      %v4010 = vld [vmem:[%s3998 + $0x58] sm:$0xff]
      %v4011 = vld [vmem:[%s3998 + $0x60] sm:$0xff]
      %v4012 = vld [vmem:[%s3998 + $0x68] sm:$0xff]
      %v4013 = vld [vmem:[%s3998 + $0x70] sm:$0xff]
      %v4014 = vld [vmem:[%s3998 + $0x78] sm:$0xff]
      %v4015 = vld [vmem:[%s3998 + $0x80] sm:$0xff]
      %v4016 = vld [vmem:[%s3998 + $0x88] sm:$0xff]
      %v4035 = vunpack.c.l.b16 %v3999
      %v4036 = vunpack.c.h.b16 %v3999
      %v4037 = vunpack.c.l.b16 %v4000
      %v4038 = vunpack.c.h.b16 %v4000
      %v4039 = vunpack.c.l.b16 %v4001
      %v4040 = vunpack.c.h.b16 %v4001
      %v4041 = vunpack.c.l.b16 %v4002
      %v4042 = vunpack.c.h.b16 %v4002
      %v4043 = vunpack.c.l.b16 %v4003
      %v4044 = vunpack.c.h.b16 %v4003
      %v4045 = vunpack.c.l.b16 %v4004
      %v4046 = vunpack.c.h.b16 %v4004
      %v4047 = vunpack.c.l.b16 %v4005
      %v4048 = vunpack.c.h.b16 %v4005
      %v4049 = vunpack.c.l.b16 %v4006
      %v4050 = vunpack.c.h.b16 %v4006
      %v4051 = vunpack.c.l.b16 %v4007
      %v4052 = vunpack.c.h.b16 %v4007
      %v4053 = vunpack.c.l.b16 %v4008
      %v4054 = vunpack.c.h.b16 %v4008
      %v4055 = vunpack.c.l.b16 %v4009
      %v4056 = vunpack.c.h.b16 %v4009
      %v4057 = vunpack.c.l.b16 %v4010
      %v4058 = vunpack.c.h.b16 %v4010
      %v4059 = vunpack.c.l.b16 %v4011
      %v4060 = vunpack.c.h.b16 %v4011
      %v4061 = vunpack.c.l.b16 %v4012
      %v4062 = vunpack.c.h.b16 %v4012
      %v4063 = vunpack.c.l.b16 %v4013
      %v4064 = vunpack.c.h.b16 %v4013
      %v4065 = vunpack.c.l.b16 %v4014
      %v4066 = vunpack.c.h.b16 %v4014
      %v4067 = vunpack.c.l.b16 %v4015
      %v4068 = vunpack.c.h.b16 %v4015
      %v4069 = vunpack.c.l.b16 %v4016
      %v4070 = vunpack.c.h.b16 %v4016
      %v4071 = vpack.c.b16 %v4037, %v4035
      %v4072 = vpack.c.b16 %v4038, %v4036
      %v4073 = vpack.c.b16 %v4041, %v4039
      %v4074 = vpack.c.b16 %v4042, %v4040
      %v4075 = vpack.c.b16 %v4045, %v4043
      %v4076 = vpack.c.b16 %v4046, %v4044
      %v4077 = vpack.c.b16 %v4049, %v4047
      %v4078 = vpack.c.b16 %v4050, %v4048
      %v4079 = vpack.c.b16 %v4053, %v4051
      %v4080 = vpack.c.b16 %v4054, %v4052
      %v4081 = vpack.c.b16 %v4057, %v4055
      %v4082 = vpack.c.b16 %v4058, %v4056
      %v4083 = vpack.c.b16 %v4061, %v4059
      %v4084 = vpack.c.b16 %v4062, %v4060
      %v4085 = vpack.c.b16 %v4065, %v4063
      %v4086 = vpack.c.b16 %v4066, %v4064
      %v4087 = vpack.c.b16 %v4069, %v4067
      %v4088 = vpack.c.b16 %v4070, %v4068
      %v4108 = vsel %vm417, %v3971, 0
      %v4111 = vsel %vm417, %v3973, 0
      %v4114 = vsel %vm417, %v3975, 0
      %v4117 = vsel %vm417, %v3977, 0
      %v4120 = vsel %vm417, %v3979, 0
      %v4123 = vsel %vm417, %v3981, 0
      %v4126 = vsel %vm417, %v3983, 0
      %v4129 = vsel %vm417, %v3985, 0
      %v4132 = vsel %vm417, %v3987, 0
      %v4135 = vsel %vm417, %v3989, 0
      %v4138 = vsel %vm417, %v3991, 0
      %v4141 = vsel %vm417, %v3993, 0
      %v4144 = vsel %vm417, %v3995, 0
      %v4147 = vsel %vm417, %v3997, 0
      %4149 = vmatprep.subr.bf16.mxu0 %v4072
      %4150 = vmatpush1.bf16.msra.mxu0 %v4071
      %4151 = vmatprep.subr.bf16.mxu0 %v4074
      %4152 = vmatpush1.bf16.msra.mxu0 %v4073
      %4153 = vmatprep.subr.bf16.mxu0 %v4076
      %4154 = vmatpush1.bf16.msra.mxu0 %v4075
      %4155 = vmatprep.subr.bf16.mxu0 %v4078
      %4156 = vmatpush1.bf16.msra.mxu0 %v4077
      %4157 = vmatprep.subr.bf16.mxu0 %v4080
      %4158 = vmatpush1.bf16.msra.mxu0 %v4079
      %4159 = vmatprep.subr.bf16.mxu0 %v4082
      %4160 = vmatpush1.bf16.msra.mxu0 %v4081
      %4161 = vmatprep.subr.bf16.mxu0 %v4084
      %4162 = vmatpush1.bf16.msra.mxu0 %v4083
      %4163 = vmatprep.subr.bf16.mxu0 %v4086
      %4164 = vmatpush1.bf16.msra.mxu0 %v4085
      %4165 = vmatprep.subr.bf16.mxu0 %v4088
      %4166 = vmatpush1.bf16.msra.mxu0 %v4087
      %4167 = vmatprep.subr.bf16.mxu0 0
      %4168 = vmatpush1.bf16.msra.mxu0 0
      %4169 = vmatprep.subr.bf16.mxu0 0
      %4170 = vmatpush1.bf16.msra.mxu0 0
      %4171 = vmatprep.subr.bf16.mxu0 0
      %4172 = vmatpush1.bf16.msra.mxu0 0
      %4173 = vmatprep.subr.bf16.mxu0 0
      %4174 = vmatpush1.bf16.msra.mxu0 0
      %4175 = vmatprep.subr.bf16.mxu0 0
      %4176 = vmatpush1.bf16.msra.mxu0 0
      %4177 = vmatprep.subr.bf16.mxu0 0
      %4178 = vmatpush1.bf16.msra.mxu0 0
      %4179 = vmatprep.subr.bf16.mxu0 0
      %4180 = vmatpush1.bf16.msra.mxu0 0
      %4181 = vmatprep.mubr.bf16.mxu0 %v4108
      %4182 = vmatmul.mubr.bf16.gmra.mrb[0].mxu0 %v3970
      %v4183 = vpop.f32.mrb[0].mxu0
      %v4184 = vadd.f32 0.0, %v4183
      %v4185 = vpop.f32.mrb[0].mxu0
      %v4186 = vadd.f32 0.0, %v4185
      %v4187 = vpop.f32.mrb[0].mxu0
      %v4188 = vadd.f32 0.0, %v4187
      %v4189 = vpop.f32.mrb[0].mxu0
      %v4190 = vadd.f32 0.0, %v4189
      %4191 = vmatprep.mubr.bf16.mxu0 %v4111
      %4192 = vmatmul.mubr.bf16.gmra.mrb[0].mxu0 %v3972
      %v4193 = vpop.f32.mrb[0].mxu0
      %v4194 = vadd.f32 0.0, %v4193
      %v4195 = vpop.f32.mrb[0].mxu0
      %v4196 = vadd.f32 0.0, %v4195
      %v4197 = vpop.f32.mrb[0].mxu0
      %v4198 = vadd.f32 0.0, %v4197
      %v4199 = vpop.f32.mrb[0].mxu0
      %v4200 = vadd.f32 0.0, %v4199
      %4201 = vmatprep.mubr.bf16.mxu0 %v4114
      %4202 = vmatmul.mubr.bf16.gmra.mrb[0].mxu0 %v3974
      %v4203 = vpop.f32.mrb[0].mxu0
      %v4204 = vadd.f32 0.0, %v4203
      %v4205 = vpop.f32.mrb[0].mxu0
      %v4206 = vadd.f32 0.0, %v4205
      %v4207 = vpop.f32.mrb[0].mxu0
      %v4208 = vadd.f32 0.0, %v4207
      %v4209 = vpop.f32.mrb[0].mxu0
      %v4210 = vadd.f32 0.0, %v4209
      %4211 = vmatprep.mubr.bf16.mxu0 %v4117
      %4212 = vmatmul.mubr.bf16.gmra.mrb[0].mxu0 %v3976
      %v4213 = vpop.f32.mrb[0].mxu0
      %v4214 = vadd.f32 0.0, %v4213
      %v4215 = vpop.f32.mrb[0].mxu0
      %v4216 = vadd.f32 0.0, %v4215
      %v4217 = vpop.f32.mrb[0].mxu0
      %v4218 = vadd.f32 0.0, %v4217
      %v4219 = vpop.f32.mrb[0].mxu0
      %v4220 = vadd.f32 0.0, %v4219
      %4221 = vmatprep.mubr.bf16.mxu0 %v4120
      %4222 = vmatmul.mubr.bf16.gmra.mrb[0].mxu0 %v3978
      %v4223 = vpop.f32.mrb[0].mxu0
      %v4224 = vadd.f32 0.0, %v4223
      %v4225 = vpop.f32.mrb[0].mxu0
      %v4226 = vadd.f32 0.0, %v4225
      %v4227 = vpop.f32.mrb[0].mxu0
      %v4228 = vadd.f32 0.0, %v4227
      %v4229 = vpop.f32.mrb[0].mxu0
      %v4230 = vadd.f32 0.0, %v4229
      %4231 = vmatprep.mubr.bf16.mxu0 %v4123
      %4232 = vmatmul.mubr.bf16.gmra.mrb[0].mxu0 %v3980
      %v4233 = vpop.f32.mrb[0].mxu0
      %v4234 = vadd.f32 0.0, %v4233
      %v4235 = vpop.f32.mrb[0].mxu0
      %v4236 = vadd.f32 0.0, %v4235
      %v4237 = vpop.f32.mrb[0].mxu0
      %v4238 = vadd.f32 0.0, %v4237
      %v4239 = vpop.f32.mrb[0].mxu0
      %v4240 = vadd.f32 0.0, %v4239
      %4241 = vmatprep.mubr.bf16.mxu0 %v4126
      %4242 = vmatmul.mubr.bf16.gmra.mrb[0].mxu0 %v3982
      %v4243 = vpop.f32.mrb[0].mxu0
      %v4244 = vadd.f32 0.0, %v4243
      %v4245 = vpop.f32.mrb[0].mxu0
      %v4246 = vadd.f32 0.0, %v4245
      %v4247 = vpop.f32.mrb[0].mxu0
      %v4248 = vadd.f32 0.0, %v4247
      %v4249 = vpop.f32.mrb[0].mxu0
      %v4250 = vadd.f32 0.0, %v4249
      %4251 = vmatprep.mubr.bf16.mxu0 %v4129
      %4252 = vmatmul.mubr.bf16.gmra.mrb[0].mxu0 %v3984
      %v4253 = vpop.f32.mrb[0].mxu0
      %v4254 = vadd.f32 0.0, %v4253
      %v4255 = vpop.f32.mrb[0].mxu0
      %v4256 = vadd.f32 0.0, %v4255
      %v4257 = vpop.f32.mrb[0].mxu0
      %v4258 = vadd.f32 0.0, %v4257
      %v4259 = vpop.f32.mrb[0].mxu0
      %v4260 = vadd.f32 0.0, %v4259
      %4261 = vmatprep.mubr.bf16.mxu0 %v4132
      %4262 = vmatmul.mubr.bf16.gmra.mrb[0].mxu0 %v3986
      %v4263 = vpop.f32.mrb[0].mxu0
      %v4264 = vadd.f32 0.0, %v4263
      %v4265 = vpop.f32.mrb[0].mxu0
      %v4266 = vadd.f32 0.0, %v4265
      %v4267 = vpop.f32.mrb[0].mxu0
      %v4268 = vadd.f32 0.0, %v4267
      %v4269 = vpop.f32.mrb[0].mxu0
      %v4270 = vadd.f32 0.0, %v4269
      %4271 = vmatprep.mubr.bf16.mxu0 %v4135
      %4272 = vmatmul.mubr.bf16.gmra.mrb[0].mxu0 %v3988
      %v4273 = vpop.f32.mrb[0].mxu0
      %v4274 = vadd.f32 0.0, %v4273
      %v4275 = vpop.f32.mrb[0].mxu0
      %v4276 = vadd.f32 0.0, %v4275
      %v4277 = vpop.f32.mrb[0].mxu0
      %v4278 = vadd.f32 0.0, %v4277
      %v4279 = vpop.f32.mrb[0].mxu0
      %v4280 = vadd.f32 0.0, %v4279
      %4281 = vmatprep.mubr.bf16.mxu0 %v4138
      %4282 = vmatmul.mubr.bf16.gmra.mrb[0].mxu0 %v3990
      %v4283 = vpop.f32.mrb[0].mxu0
      %v4284 = vadd.f32 0.0, %v4283
      %v4285 = vpop.f32.mrb[0].mxu0
      %v4286 = vadd.f32 0.0, %v4285
      %v4287 = vpop.f32.mrb[0].mxu0
      %v4288 = vadd.f32 0.0, %v4287
      %v4289 = vpop.f32.mrb[0].mxu0
      %v4290 = vadd.f32 0.0, %v4289
      %4291 = vmatprep.mubr.bf16.mxu0 %v4141
      %4292 = vmatmul.mubr.bf16.gmra.mrb[0].mxu0 %v3992
      %v4293 = vpop.f32.mrb[0].mxu0
      %v4294 = vadd.f32 0.0, %v4293
      %v4295 = vpop.f32.mrb[0].mxu0
      %v4296 = vadd.f32 0.0, %v4295
      %v4297 = vpop.f32.mrb[0].mxu0
      %v4298 = vadd.f32 0.0, %v4297
      %v4299 = vpop.f32.mrb[0].mxu0
      %v4300 = vadd.f32 0.0, %v4299
      %4301 = vmatprep.mubr.bf16.mxu0 %v4144
      %4302 = vmatmul.mubr.bf16.gmra.mrb[0].mxu0 %v3994
      %v4303 = vpop.f32.mrb[0].mxu0
      %v4304 = vadd.f32 0.0, %v4303
      %v4305 = vpop.f32.mrb[0].mxu0
      %v4306 = vadd.f32 0.0, %v4305
      %v4307 = vpop.f32.mrb[0].mxu0
      %v4308 = vadd.f32 0.0, %v4307
      %v4309 = vpop.f32.mrb[0].mxu0
      %v4310 = vadd.f32 0.0, %v4309
      %4311 = vmatprep.mubr.bf16.mxu0 %v4147
      %4312 = vmatmul.mubr.bf16.gmra.mrb[0].mxu0 %v3996
      %v4313 = vpop.f32.mrb[0].mxu0
      %v4314 = vadd.f32 0.0, %v4313
      %v4315 = vpop.f32.mrb[0].mxu0
      %v4316 = vadd.f32 0.0, %v4315
      %v4317 = vpop.f32.mrb[0].mxu0
      %v4318 = vadd.f32 0.0, %v4317
      %v4319 = vpop.f32.mrb[0].mxu0
      %v4320 = vadd.f32 0.0, %v4319
      %4321 = vdwg.mxu0
      %v4322 = vadd.f32 %v3832, %v4184
      %v4323 = vadd.f32 %v3834, %v4186
      %v4324 = vadd.f32 %v3836, %v4188
      %v4325 = vadd.f32 %v3838, %v4190
      %v4326 = vadd.f32 %v3842, %v4194
      %v4327 = vadd.f32 %v3844, %v4196
      %v4328 = vadd.f32 %v3846, %v4198
      %v4329 = vadd.f32 %v3848, %v4200
      %v4330 = vadd.f32 %v3852, %v4204
      %v4331 = vadd.f32 %v3854, %v4206
      %v4332 = vadd.f32 %v3856, %v4208
      %v4333 = vadd.f32 %v3858, %v4210
      %v4334 = vadd.f32 %v3862, %v4214
      %v4335 = vadd.f32 %v3864, %v4216
      %v4336 = vadd.f32 %v3866, %v4218
      %v4337 = vadd.f32 %v3868, %v4220
      %v4338 = vadd.f32 %v3872, %v4224
      %v4339 = vadd.f32 %v3874, %v4226
      %v4340 = vadd.f32 %v3876, %v4228
      %v4341 = vadd.f32 %v3878, %v4230
      %v4342 = vadd.f32 %v3882, %v4234
      %v4343 = vadd.f32 %v3884, %v4236
      %v4344 = vadd.f32 %v3886, %v4238
      %v4345 = vadd.f32 %v3888, %v4240
      %v4346 = vadd.f32 %v3892, %v4244
      %v4347 = vadd.f32 %v3894, %v4246
      %v4348 = vadd.f32 %v3896, %v4248
      %v4349 = vadd.f32 %v3898, %v4250
      %v4350 = vadd.f32 %v3902, %v4254
      %v4351 = vadd.f32 %v3904, %v4256
      %v4352 = vadd.f32 %v3906, %v4258
      %v4353 = vadd.f32 %v3908, %v4260
      %v4354 = vadd.f32 %v3912, %v4264
      %v4355 = vadd.f32 %v3914, %v4266
      %v4356 = vadd.f32 %v3916, %v4268
      %v4357 = vadd.f32 %v3918, %v4270
      %v4358 = vadd.f32 %v3922, %v4274
      %v4359 = vadd.f32 %v3924, %v4276
      %v4360 = vadd.f32 %v3926, %v4278
      %v4361 = vadd.f32 %v3928, %v4280
      %v4362 = vadd.f32 %v3932, %v4284
      %v4363 = vadd.f32 %v3934, %v4286
      %v4364 = vadd.f32 %v3936, %v4288
      %v4365 = vadd.f32 %v3938, %v4290
      %v4366 = vadd.f32 %v3942, %v4294
      %v4367 = vadd.f32 %v3944, %v4296
      %v4368 = vadd.f32 %v3946, %v4298
      %v4369 = vadd.f32 %v3948, %v4300
      %v4370 = vadd.f32 %v3952, %v4304
      %v4371 = vadd.f32 %v3954, %v4306
      %v4372 = vadd.f32 %v3956, %v4308
      %v4373 = vadd.f32 %v3958, %v4310
      %v4374 = vadd.f32 %v3962, %v4314
      %v4375 = vadd.f32 %v3964, %v4316
      %v4376 = vadd.f32 %v3966, %v4318
      %v4377 = vadd.f32 %v3968, %v4320
      %v4378 = vld [vmem:[%s6] sm:$0x3]
      %v4380 = vlaneseq
      %v4381 = vshrl.u32 %v4380, 7
      %v4382 = vsub.s32 0, %v4381
      %v4383 = vrot.slane %v4378, %v4382
      %v4384 = vlaneseq
      %v4385 = vshrl.u32 %v4384, 7
      %v4386 = vsub.s32 1, %v4385
      %v4387 = vrot.slane %v4378, %v4386
      %v4390 = vadd.f32 %v4322, %v4383
      %v4391 = vadd.f32 %v4323, %v4387
      %v4392 = vadd.f32 %v4324, %v4383
      %v4393 = vadd.f32 %v4325, %v4387
      %v4394 = vadd.f32 %v4326, %v4383
      %v4395 = vadd.f32 %v4327, %v4387
      %v4396 = vadd.f32 %v4328, %v4383
      %v4397 = vadd.f32 %v4329, %v4387
      %v4398 = vadd.f32 %v4330, %v4383
      %v4399 = vadd.f32 %v4331, %v4387
      %v4400 = vadd.f32 %v4332, %v4383
      %v4401 = vadd.f32 %v4333, %v4387
      %v4402 = vadd.f32 %v4334, %v4383
      %v4403 = vadd.f32 %v4335, %v4387
      %v4404 = vadd.f32 %v4336, %v4383
      %v4405 = vadd.f32 %v4337, %v4387
      %v4406 = vadd.f32 %v4338, %v4383
      %v4407 = vadd.f32 %v4339, %v4387
      %v4408 = vadd.f32 %v4340, %v4383
      %v4409 = vadd.f32 %v4341, %v4387
      %v4410 = vadd.f32 %v4342, %v4383
      %v4411 = vadd.f32 %v4343, %v4387
      %v4412 = vadd.f32 %v4344, %v4383
      %v4413 = vadd.f32 %v4345, %v4387
      %v4414 = vadd.f32 %v4346, %v4383
      %v4415 = vadd.f32 %v4347, %v4387
      %v4416 = vadd.f32 %v4348, %v4383
      %v4417 = vadd.f32 %v4349, %v4387
      %v4418 = vadd.f32 %v4350, %v4383
      %v4419 = vadd.f32 %v4351, %v4387
      %v4420 = vadd.f32 %v4352, %v4383
      %v4421 = vadd.f32 %v4353, %v4387
      %v4422 = vadd.f32 %v4354, %v4383
      %v4423 = vadd.f32 %v4355, %v4387
      %v4424 = vadd.f32 %v4356, %v4383
      %v4425 = vadd.f32 %v4357, %v4387
      %v4426 = vadd.f32 %v4358, %v4383
      %v4427 = vadd.f32 %v4359, %v4387
      %v4428 = vadd.f32 %v4360, %v4383
      %v4429 = vadd.f32 %v4361, %v4387
      %v4430 = vadd.f32 %v4362, %v4383
      %v4431 = vadd.f32 %v4363, %v4387
      %v4432 = vadd.f32 %v4364, %v4383
      %v4433 = vadd.f32 %v4365, %v4387
      %v4434 = vadd.f32 %v4366, %v4383
      %v4435 = vadd.f32 %v4367, %v4387
      %v4436 = vadd.f32 %v4368, %v4383
      %v4437 = vadd.f32 %v4369, %v4387
      %v4438 = vadd.f32 %v4370, %v4383
      %v4439 = vadd.f32 %v4371, %v4387
      %v4440 = vadd.f32 %v4372, %v4383
      %v4441 = vadd.f32 %v4373, %v4387
      %v4442 = vadd.f32 %v4374, %v4383
      %v4443 = vadd.f32 %v4375, %v4387
      %v4444 = vadd.f32 %v4376, %v4383
      %v4445 = vadd.f32 %v4377, %v4387
      %v4446 = vmax.f32 %v4390, 0.0
      %v4447 = vmax.f32 %v4391, 0.0
      %v4448 = vmax.f32 %v4392, 0.0
      %v4449 = vmax.f32 %v4393, 0.0
      %v4450 = vmax.f32 %v4394, 0.0
      %v4451 = vmax.f32 %v4395, 0.0
      %v4452 = vmax.f32 %v4396, 0.0
      %v4453 = vmax.f32 %v4397, 0.0
      %v4454 = vmax.f32 %v4398, 0.0
      %v4455 = vmax.f32 %v4399, 0.0
      %v4456 = vmax.f32 %v4400, 0.0
      %v4457 = vmax.f32 %v4401, 0.0
      %v4458 = vmax.f32 %v4402, 0.0
      %v4459 = vmax.f32 %v4403, 0.0
      %v4460 = vmax.f32 %v4404, 0.0
      %v4461 = vmax.f32 %v4405, 0.0
      %v4462 = vmax.f32 %v4406, 0.0
      %v4463 = vmax.f32 %v4407, 0.0
      %v4464 = vmax.f32 %v4408, 0.0
      %v4465 = vmax.f32 %v4409, 0.0
      %v4466 = vmax.f32 %v4410, 0.0
      %v4467 = vmax.f32 %v4411, 0.0
      %v4468 = vmax.f32 %v4412, 0.0
      %v4469 = vmax.f32 %v4413, 0.0
      %v4470 = vmax.f32 %v4414, 0.0
      %v4471 = vmax.f32 %v4415, 0.0
      %v4472 = vmax.f32 %v4416, 0.0
      %v4473 = vmax.f32 %v4417, 0.0
      %v4474 = vmax.f32 %v4418, 0.0
      %v4475 = vmax.f32 %v4419, 0.0
      %v4476 = vmax.f32 %v4420, 0.0
      %v4477 = vmax.f32 %v4421, 0.0
      %v4478 = vmax.f32 %v4422, 0.0
      %v4479 = vmax.f32 %v4423, 0.0
      %v4480 = vmax.f32 %v4424, 0.0
      %v4481 = vmax.f32 %v4425, 0.0
      %v4482 = vmax.f32 %v4426, 0.0
      %v4483 = vmax.f32 %v4427, 0.0
      %v4484 = vmax.f32 %v4428, 0.0
      %v4485 = vmax.f32 %v4429, 0.0
      %v4486 = vmax.f32 %v4430, 0.0
      %v4487 = vmax.f32 %v4431, 0.0
      %v4488 = vmax.f32 %v4432, 0.0
      %v4489 = vmax.f32 %v4433, 0.0
      %v4490 = vmax.f32 %v4434, 0.0
      %v4491 = vmax.f32 %v4435, 0.0
      %v4492 = vmax.f32 %v4436, 0.0
      %v4493 = vmax.f32 %v4437, 0.0
      %v4494 = vmax.f32 %v4438, 0.0
      %v4495 = vmax.f32 %v4439, 0.0
      %v4496 = vmax.f32 %v4440, 0.0
      %v4497 = vmax.f32 %v4441, 0.0
      %v4498 = vmax.f32 %v4442, 0.0
      %v4499 = vmax.f32 %v4443, 0.0
      %v4500 = vmax.f32 %v4444, 0.0
      %v4501 = vmax.f32 %v4445, 0.0
      %v4502 = vpack.c.bf16 %v4448, %v4446
      %v4503 = vpack.c.bf16 %v4449, %v4447
      %v4504 = vpack.c.bf16 %v4452, %v4450
      %v4505 = vpack.c.bf16 %v4453, %v4451
      %v4506 = vpack.c.bf16 %v4456, %v4454
      %v4507 = vpack.c.bf16 %v4457, %v4455
      %v4508 = vpack.c.bf16 %v4460, %v4458
      %v4509 = vpack.c.bf16 %v4461, %v4459
      %v4510 = vpack.c.bf16 %v4464, %v4462
      %v4511 = vpack.c.bf16 %v4465, %v4463
      %v4512 = vpack.c.bf16 %v4468, %v4466
      %v4513 = vpack.c.bf16 %v4469, %v4467
      %v4514 = vpack.c.bf16 %v4472, %v4470
      %v4515 = vpack.c.bf16 %v4473, %v4471
      %v4516 = vpack.c.bf16 %v4476, %v4474
      %v4517 = vpack.c.bf16 %v4477, %v4475
      %v4518 = vpack.c.bf16 %v4480, %v4478
      %v4519 = vpack.c.bf16 %v4481, %v4479
      %v4520 = vpack.c.bf16 %v4484, %v4482
      %v4521 = vpack.c.bf16 %v4485, %v4483
      %v4522 = vpack.c.bf16 %v4488, %v4486
      %v4523 = vpack.c.bf16 %v4489, %v4487
      %v4524 = vpack.c.bf16 %v4492, %v4490
      %v4525 = vpack.c.bf16 %v4493, %v4491
      %v4526 = vpack.c.bf16 %v4496, %v4494
      %v4527 = vpack.c.bf16 %v4497, %v4495
      %v4528 = vpack.c.bf16 %v4500, %v4498
      %v4529 = vpack.c.bf16 %v4501, %v4499
      %4530 = vst [vmem:[#allocation4 + $0x40] sm:$0xff] %v4502
      %4531 = vst.msk [vmem:[#allocation4 + $0x48] sm:$0xff] %vm426, %v4503
      %4532 = vst [vmem:[#allocation4 + $0x50] sm:$0xff] %v4504
      %4533 = vst.msk [vmem:[#allocation4 + $0x58] sm:$0xff] %vm426, %v4505
      %4534 = vst [vmem:[#allocation4 + $0x80] sm:$0xff] %v4506
      %4535 = vst.msk [vmem:[#allocation4 + $0x88] sm:$0xff] %vm426, %v4507
      %4536 = vst [vmem:[#allocation4 + $0x90] sm:$0xff] %v4508
      %4537 = vst.msk [vmem:[#allocation4 + $0x98] sm:$0xff] %vm426, %v4509
      %4538 = vst [vmem:[#allocation4 + $0xc0] sm:$0xff] %v4510
      %4539 = vst.msk [vmem:[#allocation4 + $0xc8] sm:$0xff] %vm426, %v4511
      %4540 = vst [vmem:[#allocation4 + $0xd0] sm:$0xff] %v4512
      %4541 = vst.msk [vmem:[#allocation4 + $0xd8] sm:$0xff] %vm426, %v4513
      %4542 = vst [vmem:[#allocation4 + $0x100] sm:$0xff] %v4514
      %4543 = vst.msk [vmem:[#allocation4 + $0x108] sm:$0xff] %vm426, %v4515
      %4544 = vst [vmem:[#allocation4 + $0x110] sm:$0xff] %v4516
      %4545 = vst.msk [vmem:[#allocation4 + $0x118] sm:$0xff] %vm426, %v4517
      %4546 = vst [vmem:[#allocation4 + $0x140] sm:$0xff] %v4518
      %4547 = vst.msk [vmem:[#allocation4 + $0x148] sm:$0xff] %vm426, %v4519
      %4548 = vst [vmem:[#allocation4 + $0x150] sm:$0xff] %v4520
      %4549 = vst.msk [vmem:[#allocation4 + $0x158] sm:$0xff] %vm426, %v4521
      %4550 = vst [vmem:[#allocation4 + $0x180] sm:$0xff] %v4522
      %4551 = vst.msk [vmem:[#allocation4 + $0x188] sm:$0xff] %vm426, %v4523
      %4552 = vst [vmem:[#allocation4 + $0x190] sm:$0xff] %v4524
      %4553 = vst.msk [vmem:[#allocation4 + $0x198] sm:$0xff] %vm426, %v4525
      %4554 = vst [vmem:[#allocation4 + $0x1c0] sm:$0xff] %v4526
      %4555 = vst.msk [vmem:[#allocation4 + $0x1c8] sm:$0xff] %vm426, %v4527
      %4556 = vst [vmem:[#allocation4 + $0x1d0] sm:$0xff] %v4528
      %4557 = vst.msk [vmem:[#allocation4 + $0x1d8] sm:$0xff] %vm426, %v4529
      %v4558 = vld [vmem:[#allocation4] sm:$0xff]
      %v4559 = vld [vmem:[#allocation4 + $0x8] sm:$0xff]
      %v4560 = vld [vmem:[#allocation4 + $0x10] sm:$0xff]
      %v4561 = vld [vmem:[#allocation4 + $0x18] sm:$0xff]
      %v4562 = vld [vmem:[#allocation4 + $0x20] sm:$0xff]
      %v4563 = vld [vmem:[#allocation4 + $0x28] sm:$0xff]
      %v4564 = vld [vmem:[#allocation4 + $0x30] sm:$0xff]
      %v4565 = vld [vmem:[#allocation4 + $0x38] sm:$0xff]
      %v4566 = vld [vmem:[#allocation4 + $0x40] sm:$0xff]
      %v4567 = vld [vmem:[#allocation4 + $0x48] sm:$0xff]
      %v4568 = vld [vmem:[#allocation4 + $0x50] sm:$0xff]
      %v4569 = vld [vmem:[#allocation4 + $0x58] sm:$0xff]
      %v4570 = vld [vmem:[#allocation4 + $0x60] sm:$0xff]
      %v4571 = vld [vmem:[#allocation4 + $0x68] sm:$0xff]
      %v4572 = vld [vmem:[#allocation4 + $0x70] sm:$0xff]
      %v4573 = vld [vmem:[#allocation4 + $0x78] sm:$0xff]
      %v4574 = vld [vmem:[#allocation4 + $0x80] sm:$0xff]
      %v4575 = vld [vmem:[#allocation4 + $0x88] sm:$0xff]
      %v4576 = vld [vmem:[#allocation4 + $0x90] sm:$0xff]
      %v4577 = vld [vmem:[#allocation4 + $0x98] sm:$0xff]
      %v4578 = vld [vmem:[#allocation4 + $0xa0] sm:$0xff]
      %v4579 = vld [vmem:[#allocation4 + $0xa8] sm:$0xff]
      %v4580 = vld [vmem:[#allocation4 + $0xb0] sm:$0xff]
      %v4581 = vld [vmem:[#allocation4 + $0xb8] sm:$0xff]
      %v4582 = vld [vmem:[#allocation4 + $0xc0] sm:$0xff]
      %v4583 = vld [vmem:[#allocation4 + $0xc8] sm:$0xff]
      %v4584 = vld [vmem:[#allocation4 + $0xd0] sm:$0xff]
      %v4585 = vld [vmem:[#allocation4 + $0xd8] sm:$0xff]
      %v4586 = vld [vmem:[#allocation4 + $0xe0] sm:$0xff]
      %v4587 = vld [vmem:[#allocation4 + $0xe8] sm:$0xff]
      %v4588 = vld [vmem:[#allocation4 + $0xf0] sm:$0xff]
      %v4589 = vld [vmem:[#allocation4 + $0xf8] sm:$0xff]
      %v4590 = vld [vmem:[#allocation4 + $0x100] sm:$0xff]
      %v4591 = vld [vmem:[#allocation4 + $0x108] sm:$0xff]
      %v4592 = vld [vmem:[#allocation4 + $0x110] sm:$0xff]
      %v4593 = vld [vmem:[#allocation4 + $0x118] sm:$0xff]
      %v4594 = vld [vmem:[#allocation4 + $0x120] sm:$0xff]
      %v4595 = vld [vmem:[#allocation4 + $0x128] sm:$0xff]
      %v4596 = vld [vmem:[#allocation4 + $0x130] sm:$0xff]
      %v4597 = vld [vmem:[#allocation4 + $0x138] sm:$0xff]
      %v4598 = vld [vmem:[#allocation4 + $0x140] sm:$0xff]
      %v4599 = vld [vmem:[#allocation4 + $0x148] sm:$0xff]
      %v4600 = vld [vmem:[#allocation4 + $0x150] sm:$0xff]
      %v4601 = vld [vmem:[#allocation4 + $0x158] sm:$0xff]
      %v4602 = vld [vmem:[#allocation4 + $0x160] sm:$0xff]
      %v4603 = vld [vmem:[#allocation4 + $0x168] sm:$0xff]
      %v4604 = vld [vmem:[#allocation4 + $0x170] sm:$0xff]
      %v4605 = vld [vmem:[#allocation4 + $0x178] sm:$0xff]
      %v4606 = vld [vmem:[#allocation4 + $0x180] sm:$0xff]
      %v4607 = vld [vmem:[#allocation4 + $0x188] sm:$0xff]
      %v4608 = vld [vmem:[#allocation4 + $0x190] sm:$0xff]
      %v4609 = vld [vmem:[#allocation4 + $0x198] sm:$0xff]
      %v4610 = vld [vmem:[#allocation4 + $0x1a0] sm:$0xff]
      %v4611 = vld [vmem:[#allocation4 + $0x1a8] sm:$0xff]
      %v4612 = vld [vmem:[#allocation4 + $0x1b0] sm:$0xff]
      %v4613 = vld [vmem:[#allocation4 + $0x1b8] sm:$0xff]
      %v4614 = vld [vmem:[%s7] sm:$0xf]
      %v4615 = vld [vmem:[%s7 + $0x4] sm:$0xf]
      %v4616 = vld [vmem:[%s7 + $0x8] sm:$0xf]
      %v4617 = vld [vmem:[%s7 + $0xc] sm:$0xf]
      %v4618 = vld [vmem:[%s7 + $0x10] sm:$0xf]
      %v4619 = vld [vmem:[%s7 + $0x14] sm:$0xf]
      %v4620 = vld [vmem:[%s7 + $0x18] sm:$0xf]
      %v4621 = vld [vmem:[%s7 + $0x1c] sm:$0xf]
      %v4622 = vld [vmem:[%s7 + $0x20] sm:$0xf]
      %v4623 = vld [vmem:[%s7 + $0x24] sm:$0xf]
      %v4624 = vld [vmem:[%s7 + $0x28] sm:$0xf]
      %v4625 = vld [vmem:[%s7 + $0x2c] sm:$0xf]
      %v4626 = vld [vmem:[%s7 + $0x30] sm:$0xf]
      %v4627 = vld [vmem:[%s7 + $0x34] sm:$0xf]
      %v4628 = vld [vmem:[%s7 + $0x38] sm:$0xf]
      %v4629 = vld [vmem:[%s7 + $0x3c] sm:$0xf]
      %v4630 = vld [vmem:[%s7 + $0x40] sm:$0xf]
      %v4631 = vld [vmem:[#allocation4 + $0x1c0] sm:$0xff]
      %v4632 = vld [vmem:[#allocation4 + $0x1c8] sm:$0xff]
      %v4633 = vld [vmem:[#allocation4 + $0x1d0] sm:$0xff]
      %v4634 = vld [vmem:[#allocation4 + $0x1d8] sm:$0xff]
      %s4635 = scalar_lea.vmem %s7, 68
      %v4636 = vld [vmem:[%s4635] sm:$0xf]
      %v4637 = vld [vmem:[%s4635 + $0x4] sm:$0xf]
      %v4638 = vld [vmem:[%s4635 + $0x8] sm:$0xf]
      %v4639 = vld [vmem:[%s4635 + $0xc] sm:$0xf]
      %v4640 = vld [vmem:[%s4635 + $0x10] sm:$0xf]
      %v4641 = vld [vmem:[%s4635 + $0x14] sm:$0xf]
      %v4642 = vld [vmem:[%s4635 + $0x18] sm:$0xf]
      %v4643 = vld [vmem:[%s4635 + $0x1c] sm:$0xf]
      %v4644 = vld [vmem:[%s4635 + $0x20] sm:$0xf]
      %v4645 = vld [vmem:[%s4635 + $0x24] sm:$0xf]
      %v4646 = vld [vmem:[%s4635 + $0x28] sm:$0xf]
      %v4647 = vld [vmem:[%s4635 + $0x2c] sm:$0xf]
      %v4648 = vld [vmem:[%s4635 + $0x30] sm:$0xf]
      %v4649 = vld [vmem:[%s4635 + $0x34] sm:$0xf]
      %v4650 = vld [vmem:[%s4635 + $0x38] sm:$0xf]
      %v4651 = vld [vmem:[%s4635 + $0x3c] sm:$0xf]
      %v4652 = vld [vmem:[%s4635 + $0x40] sm:$0xf]
      %v4670 = vunpack.c.l.b16 %v4636
      %v4671 = vunpack.c.l.b16 %v4637
      %v4672 = vunpack.c.l.b16 %v4638
      %v4673 = vunpack.c.l.b16 %v4639
      %v4674 = vunpack.c.l.b16 %v4640
      %v4675 = vunpack.c.l.b16 %v4641
      %v4676 = vunpack.c.l.b16 %v4642
      %v4677 = vunpack.c.l.b16 %v4643
      %v4678 = vunpack.c.l.b16 %v4644
      %v4679 = vunpack.c.l.b16 %v4645
      %v4680 = vunpack.c.l.b16 %v4646
      %v4681 = vunpack.c.l.b16 %v4647
      %v4682 = vunpack.c.l.b16 %v4648
      %v4683 = vunpack.c.l.b16 %v4649
      %v4684 = vunpack.c.l.b16 %v4650
      %v4685 = vunpack.c.l.b16 %v4651
      %v4686 = vunpack.c.l.b16 %v4652
      %v4687 = vpack.c.b16 %v4671, %v4670
      %v4688 = vpack.c.b16 %v4673, %v4672
      %v4689 = vpack.c.b16 %v4675, %v4674
      %v4690 = vpack.c.b16 %v4677, %v4676
      %v4691 = vpack.c.b16 %v4679, %v4678
      %v4692 = vpack.c.b16 %v4681, %v4680
      %v4693 = vpack.c.b16 %v4683, %v4682
      %v4694 = vpack.c.b16 %v4685, %v4684
      %v4695 = vpack.c.b16 %v4686, %v4686
      %v4705 = vsel %vm426, %v4563, 0
      %v4708 = vsel %vm426, %v4565, 0
      %v4711 = vsel %vm426, %v4567, 0
      %v4714 = vsel %vm426, %v4569, 0
      %v4717 = vsel %vm426, %v4571, 0
      %v4720 = vsel %vm426, %v4573, 0
      %v4723 = vsel %vm426, %v4575, 0
      %v4726 = vsel %vm426, %v4577, 0
      %v4729 = vsel %vm426, %v4579, 0
      %v4732 = vsel %vm426, %v4581, 0
      %v4735 = vsel %vm426, %v4583, 0
      %v4738 = vsel %vm426, %v4585, 0
      %v4741 = vsel %vm426, %v4587, 0
      %v4744 = vsel %vm426, %v4589, 0
      %v4747 = vsel %vm426, %v4591, 0
      %v4750 = vsel %vm426, %v4593, 0
      %v4753 = vsel %vm426, %v4595, 0
      %v4756 = vsel %vm426, %v4597, 0
      %v4759 = vsel %vm426, %v4599, 0
      %v4762 = vsel %vm426, %v4601, 0
      %v4765 = vsel %vm426, %v4603, 0
      %v4768 = vsel %vm426, %v4605, 0
      %v4771 = vsel %vm426, %v4607, 0
      %v4774 = vsel %vm426, %v4609, 0
      %v4777 = vsel %vm426, %v4611, 0
      %v4780 = vsel %vm426, %v4613, 0
      %v4783 = vsel %vm426, %v4632, 0
      %v4786 = vsel %vm426, %v4634, 0
      %vm4788 = vcmask 1043456
      %v4790 = vsel %vm4788, %v4695, 0
      %4792 = vmatprep.subr.bf16.mxu0 0
      %4793 = vmatpush1.bf16.msra.mxu0 %v4687
      %4794 = vmatprep.subr.bf16.mxu0 0
      %4795 = vmatpush1.bf16.msra.mxu0 %v4688
      %4796 = vmatprep.subr.bf16.mxu0 0
      %4797 = vmatpush1.bf16.msra.mxu0 %v4689
      %4798 = vmatprep.subr.bf16.mxu0 0
      %4799 = vmatpush1.bf16.msra.mxu0 %v4690
      %4800 = vmatprep.subr.bf16.mxu0 0
      %4801 = vmatpush1.bf16.msra.mxu0 %v4691
      %4802 = vmatprep.subr.bf16.mxu0 0
      %4803 = vmatpush1.bf16.msra.mxu0 %v4692
      %4804 = vmatprep.subr.bf16.mxu0 0
      %4805 = vmatpush1.bf16.msra.mxu0 %v4693
      %4806 = vmatprep.subr.bf16.mxu0 0
      %4807 = vmatpush1.bf16.msra.mxu0 %v4694
      %4808 = vmatprep.subr.bf16.mxu0 0
      %4809 = vmatpush1.bf16.msra.mxu0 %v4790
      %4810 = vmatprep.subr.bf16.mxu0 0
      %4811 = vmatpush1.bf16.msra.mxu0 0
      %4812 = vmatprep.subr.bf16.mxu0 0
      %4813 = vmatpush1.bf16.msra.mxu0 0
      %4814 = vmatprep.subr.bf16.mxu0 0
      %4815 = vmatpush1.bf16.msra.mxu0 0
      %4816 = vmatprep.subr.bf16.mxu0 0
      %4817 = vmatpush1.bf16.msra.mxu0 0
      %4818 = vmatprep.subr.bf16.mxu0 0
      %4819 = vmatpush1.bf16.msra.mxu0 0
      %4820 = vmatprep.subr.bf16.mxu0 0
      %4821 = vmatpush1.bf16.msra.mxu0 0
      %4822 = vmatprep.subr.bf16.mxu0 0
      %4823 = vmatpush1.bf16.msra.mxu0 0
      %4824 = vmatprep.mubr.bf16.mxu0 %v4705
      %4825 = vmatmul.mubr.bf16.gmra.mrb[0].mxu0 %v4562
      %v4826 = vpop.f32.mrb[0].mxu0
      %v4827 = vadd.f32 0.0, %v4826
      %v4828 = vpop.f32.mrb[0].mxu0
      %v4829 = vpop.f32.mrb[0].mxu0
      %v4830 = vadd.f32 0.0, %v4829
      %v4831 = vpop.f32.mrb[0].mxu0
      %4832 = vmatprep.mubr.bf16.mxu0 %v4708
      %4833 = vmatmul.mubr.bf16.gmra.mrb[0].mxu0 %v4564
      %v4834 = vpop.f32.mrb[0].mxu0
      %v4835 = vadd.f32 0.0, %v4834
      %v4836 = vpop.f32.mrb[0].mxu0
      %v4837 = vpop.f32.mrb[0].mxu0
      %v4838 = vadd.f32 0.0, %v4837
      %v4839 = vpop.f32.mrb[0].mxu0
      %4840 = vmatprep.mubr.bf16.mxu0 %v4711
      %4841 = vmatmul.mubr.bf16.gmra.mrb[0].mxu0 %v4566
      %v4842 = vpop.f32.mrb[0].mxu0
      %v4843 = vadd.f32 0.0, %v4842
      %v4844 = vpop.f32.mrb[0].mxu0
      %v4845 = vpop.f32.mrb[0].mxu0
      %v4846 = vadd.f32 0.0, %v4845
      %v4847 = vpop.f32.mrb[0].mxu0
      %4848 = vmatprep.mubr.bf16.mxu0 %v4714
      %4849 = vmatmul.mubr.bf16.gmra.mrb[0].mxu0 %v4568
      %v4850 = vpop.f32.mrb[0].mxu0
      %v4851 = vadd.f32 0.0, %v4850
      %v4852 = vpop.f32.mrb[0].mxu0
      %v4853 = vpop.f32.mrb[0].mxu0
      %v4854 = vadd.f32 0.0, %v4853
      %v4855 = vpop.f32.mrb[0].mxu0
      %4856 = vmatprep.mubr.bf16.mxu0 %v4717
      %4857 = vmatmul.mubr.bf16.gmra.mrb[0].mxu0 %v4570
      %v4858 = vpop.f32.mrb[0].mxu0
      %v4859 = vadd.f32 0.0, %v4858
      %v4860 = vpop.f32.mrb[0].mxu0
      %v4861 = vpop.f32.mrb[0].mxu0
      %v4862 = vadd.f32 0.0, %v4861
      %v4863 = vpop.f32.mrb[0].mxu0
      %4864 = vmatprep.mubr.bf16.mxu0 %v4720
      %4865 = vmatmul.mubr.bf16.gmra.mrb[0].mxu0 %v4572
      %v4866 = vpop.f32.mrb[0].mxu0
      %v4867 = vadd.f32 0.0, %v4866
      %v4868 = vpop.f32.mrb[0].mxu0
      %v4869 = vpop.f32.mrb[0].mxu0
      %v4870 = vadd.f32 0.0, %v4869
      %v4871 = vpop.f32.mrb[0].mxu0
      %4872 = vmatprep.mubr.bf16.mxu0 %v4723
      %4873 = vmatmul.mubr.bf16.gmra.mrb[0].mxu0 %v4574
      %v4874 = vpop.f32.mrb[0].mxu0
      %v4875 = vadd.f32 0.0, %v4874
      %v4876 = vpop.f32.mrb[0].mxu0
      %v4877 = vpop.f32.mrb[0].mxu0
      %v4878 = vadd.f32 0.0, %v4877
      %v4879 = vpop.f32.mrb[0].mxu0
      %4880 = vmatprep.mubr.bf16.mxu0 %v4726
      %4881 = vmatmul.mubr.bf16.gmra.mrb[0].mxu0 %v4576
      %v4882 = vpop.f32.mrb[0].mxu0
      %v4883 = vadd.f32 0.0, %v4882
      %v4884 = vpop.f32.mrb[0].mxu0
      %v4885 = vpop.f32.mrb[0].mxu0
      %v4886 = vadd.f32 0.0, %v4885
      %v4887 = vpop.f32.mrb[0].mxu0
      %4888 = vmatprep.mubr.bf16.mxu0 %v4729
      %4889 = vmatmul.mubr.bf16.gmra.mrb[0].mxu0 %v4578
      %v4890 = vpop.f32.mrb[0].mxu0
      %v4891 = vadd.f32 0.0, %v4890
      %v4892 = vpop.f32.mrb[0].mxu0
      %v4893 = vpop.f32.mrb[0].mxu0
      %v4894 = vadd.f32 0.0, %v4893
      %v4895 = vpop.f32.mrb[0].mxu0
      %4896 = vmatprep.mubr.bf16.mxu0 %v4732
      %4897 = vmatmul.mubr.bf16.gmra.mrb[0].mxu0 %v4580
      %v4898 = vpop.f32.mrb[0].mxu0
      %v4899 = vadd.f32 0.0, %v4898
      %v4900 = vpop.f32.mrb[0].mxu0
      %v4901 = vpop.f32.mrb[0].mxu0
      %v4902 = vadd.f32 0.0, %v4901
      %v4903 = vpop.f32.mrb[0].mxu0
      %4904 = vmatprep.mubr.bf16.mxu0 %v4735
      %4905 = vmatmul.mubr.bf16.gmra.mrb[0].mxu0 %v4582
      %v4906 = vpop.f32.mrb[0].mxu0
      %v4907 = vadd.f32 0.0, %v4906
      %v4908 = vpop.f32.mrb[0].mxu0
      %v4909 = vpop.f32.mrb[0].mxu0
      %v4910 = vadd.f32 0.0, %v4909
      %v4911 = vpop.f32.mrb[0].mxu0
      %4912 = vmatprep.mubr.bf16.mxu0 %v4738
      %4913 = vmatmul.mubr.bf16.gmra.mrb[0].mxu0 %v4584
      %v4914 = vpop.f32.mrb[0].mxu0
      %v4915 = vadd.f32 0.0, %v4914
      %v4916 = vpop.f32.mrb[0].mxu0
      %v4917 = vpop.f32.mrb[0].mxu0
      %v4918 = vadd.f32 0.0, %v4917
      %v4919 = vpop.f32.mrb[0].mxu0
      %4920 = vmatprep.mubr.bf16.mxu0 %v4741
      %4921 = vmatmul.mubr.bf16.gmra.mrb[0].mxu0 %v4586
      %v4922 = vpop.f32.mrb[0].mxu0
      %v4923 = vadd.f32 0.0, %v4922
      %v4924 = vpop.f32.mrb[0].mxu0
      %v4925 = vpop.f32.mrb[0].mxu0
      %v4926 = vadd.f32 0.0, %v4925
      %v4927 = vpop.f32.mrb[0].mxu0
      %4928 = vmatprep.mubr.bf16.mxu0 %v4744
      %4929 = vmatmul.mubr.bf16.gmra.mrb[0].mxu0 %v4588
      %v4930 = vpop.f32.mrb[0].mxu0
      %v4931 = vadd.f32 0.0, %v4930
      %v4932 = vpop.f32.mrb[0].mxu0
      %v4933 = vpop.f32.mrb[0].mxu0
      %v4934 = vadd.f32 0.0, %v4933
      %v4935 = vpop.f32.mrb[0].mxu0
      %4936 = vmatprep.mubr.bf16.mxu0 %v4747
      %4937 = vmatmul.mubr.bf16.gmra.mrb[0].mxu0 %v4590
      %v4938 = vpop.f32.mrb[0].mxu0
      %v4939 = vadd.f32 0.0, %v4938
      %v4940 = vpop.f32.mrb[0].mxu0
      %v4941 = vpop.f32.mrb[0].mxu0
      %v4942 = vadd.f32 0.0, %v4941
      %v4943 = vpop.f32.mrb[0].mxu0
      %4944 = vmatprep.mubr.bf16.mxu0 %v4750
      %4945 = vmatmul.mubr.bf16.gmra.mrb[0].mxu0 %v4592
      %v4946 = vpop.f32.mrb[0].mxu0
      %v4947 = vadd.f32 0.0, %v4946
      %v4948 = vpop.f32.mrb[0].mxu0
      %v4949 = vpop.f32.mrb[0].mxu0
      %v4950 = vadd.f32 0.0, %v4949
      %v4951 = vpop.f32.mrb[0].mxu0
      %4952 = vmatprep.mubr.bf16.mxu0 %v4753
      %4953 = vmatmul.mubr.bf16.gmra.mrb[0].mxu0 %v4594
      %v4954 = vpop.f32.mrb[0].mxu0
      %v4955 = vadd.f32 0.0, %v4954
      %v4956 = vpop.f32.mrb[0].mxu0
      %v4957 = vpop.f32.mrb[0].mxu0
      %v4958 = vadd.f32 0.0, %v4957
      %v4959 = vpop.f32.mrb[0].mxu0
      %4960 = vmatprep.mubr.bf16.mxu0 %v4756
      %4961 = vmatmul.mubr.bf16.gmra.mrb[0].mxu0 %v4596
      %v4962 = vpop.f32.mrb[0].mxu0
      %v4963 = vadd.f32 0.0, %v4962
      %v4964 = vpop.f32.mrb[0].mxu0
      %v4965 = vpop.f32.mrb[0].mxu0
      %v4966 = vadd.f32 0.0, %v4965
      %v4967 = vpop.f32.mrb[0].mxu0
      %4968 = vmatprep.mubr.bf16.mxu0 %v4759
      %4969 = vmatmul.mubr.bf16.gmra.mrb[0].mxu0 %v4598
      %v4970 = vpop.f32.mrb[0].mxu0
      %v4971 = vadd.f32 0.0, %v4970
      %v4972 = vpop.f32.mrb[0].mxu0
      %v4973 = vpop.f32.mrb[0].mxu0
      %v4974 = vadd.f32 0.0, %v4973
      %v4975 = vpop.f32.mrb[0].mxu0
      %4976 = vmatprep.mubr.bf16.mxu0 %v4762
      %4977 = vmatmul.mubr.bf16.gmra.mrb[0].mxu0 %v4600
      %v4978 = vpop.f32.mrb[0].mxu0
      %v4979 = vadd.f32 0.0, %v4978
      %v4980 = vpop.f32.mrb[0].mxu0
      %v4981 = vpop.f32.mrb[0].mxu0
      %v4982 = vadd.f32 0.0, %v4981
      %v4983 = vpop.f32.mrb[0].mxu0
      %4984 = vmatprep.mubr.bf16.mxu0 %v4765
      %4985 = vmatmul.mubr.bf16.gmra.mrb[0].mxu0 %v4602
      %v4986 = vpop.f32.mrb[0].mxu0
      %v4987 = vadd.f32 0.0, %v4986
      %v4988 = vpop.f32.mrb[0].mxu0
      %v4989 = vpop.f32.mrb[0].mxu0
      %v4990 = vadd.f32 0.0, %v4989
      %v4991 = vpop.f32.mrb[0].mxu0
      %4992 = vmatprep.mubr.bf16.mxu0 %v4768
      %4993 = vmatmul.mubr.bf16.gmra.mrb[0].mxu0 %v4604
      %v4994 = vpop.f32.mrb[0].mxu0
      %v4995 = vadd.f32 0.0, %v4994
      %v4996 = vpop.f32.mrb[0].mxu0
      %v4997 = vpop.f32.mrb[0].mxu0
      %v4998 = vadd.f32 0.0, %v4997
      %v4999 = vpop.f32.mrb[0].mxu0
      %5000 = vmatprep.mubr.bf16.mxu0 %v4771
      %5001 = vmatmul.mubr.bf16.gmra.mrb[0].mxu0 %v4606
      %v5002 = vpop.f32.mrb[0].mxu0
      %v5003 = vadd.f32 0.0, %v5002
      %v5004 = vpop.f32.mrb[0].mxu0
      %v5005 = vpop.f32.mrb[0].mxu0
      %v5006 = vadd.f32 0.0, %v5005
      %v5007 = vpop.f32.mrb[0].mxu0
      %5008 = vmatprep.mubr.bf16.mxu0 %v4774
      %5009 = vmatmul.mubr.bf16.gmra.mrb[0].mxu0 %v4608
      %v5010 = vpop.f32.mrb[0].mxu0
      %v5011 = vadd.f32 0.0, %v5010
      %v5012 = vpop.f32.mrb[0].mxu0
      %v5013 = vpop.f32.mrb[0].mxu0
      %v5014 = vadd.f32 0.0, %v5013
      %v5015 = vpop.f32.mrb[0].mxu0
      %5016 = vmatprep.mubr.bf16.mxu0 %v4777
      %5017 = vmatmul.mubr.bf16.gmra.mrb[0].mxu0 %v4610
      %v5018 = vpop.f32.mrb[0].mxu0
      %v5019 = vadd.f32 0.0, %v5018
      %v5020 = vpop.f32.mrb[0].mxu0
      %v5021 = vpop.f32.mrb[0].mxu0
      %v5022 = vadd.f32 0.0, %v5021
      %v5023 = vpop.f32.mrb[0].mxu0
      %5024 = vmatprep.mubr.bf16.mxu0 %v4780
      %5025 = vmatmul.mubr.bf16.gmra.mrb[0].mxu0 %v4612
      %v5026 = vpop.f32.mrb[0].mxu0
      %v5027 = vadd.f32 0.0, %v5026
      %v5028 = vpop.f32.mrb[0].mxu0
      %v5029 = vpop.f32.mrb[0].mxu0
      %v5030 = vadd.f32 0.0, %v5029
      %v5031 = vpop.f32.mrb[0].mxu0
      %5032 = vmatprep.mubr.bf16.mxu0 %v4783
      %5033 = vmatmul.mubr.bf16.gmra.mrb[0].mxu0 %v4631
      %v5034 = vpop.f32.mrb[0].mxu0
      %v5035 = vadd.f32 0.0, %v5034
      %v5036 = vpop.f32.mrb[0].mxu0
      %v5037 = vpop.f32.mrb[0].mxu0
      %v5038 = vadd.f32 0.0, %v5037
      %v5039 = vpop.f32.mrb[0].mxu0
      %5040 = vmatprep.mubr.bf16.mxu0 %v4786
      %5041 = vmatmul.mubr.bf16.gmra.mrb[0].mxu0 %v4633
      %v5042 = vpop.f32.mrb[0].mxu0
      %v5043 = vadd.f32 0.0, %v5042
      %v5044 = vpop.f32.mrb[0].mxu0
      %v5045 = vpop.f32.mrb[0].mxu0
      %v5046 = vadd.f32 0.0, %v5045
      %v5047 = vpop.f32.mrb[0].mxu0
      %5048 = vdwg.mxu0
      %v5066 = vunpack.c.l.b16 %v4614
      %v5067 = vunpack.c.l.b16 %v4615
      %v5068 = vunpack.c.l.b16 %v4616
      %v5069 = vunpack.c.l.b16 %v4617
      %v5070 = vunpack.c.l.b16 %v4618
      %v5071 = vunpack.c.l.b16 %v4619
      %v5072 = vunpack.c.l.b16 %v4620
      %v5073 = vunpack.c.l.b16 %v4621
      %v5074 = vunpack.c.l.b16 %v4622
      %v5075 = vunpack.c.l.b16 %v4623
      %v5076 = vunpack.c.l.b16 %v4624
      %v5077 = vunpack.c.l.b16 %v4625
      %v5078 = vunpack.c.l.b16 %v4626
      %v5079 = vunpack.c.l.b16 %v4627
      %v5080 = vunpack.c.l.b16 %v4628
      %v5081 = vunpack.c.l.b16 %v4629
      %v5082 = vunpack.c.l.b16 %v4630
      %v5083 = vpack.c.b16 %v5067, %v5066
      %v5084 = vpack.c.b16 %v5069, %v5068
      %v5085 = vpack.c.b16 %v5071, %v5070
      %v5086 = vpack.c.b16 %v5073, %v5072
      %v5087 = vpack.c.b16 %v5075, %v5074
      %v5088 = vpack.c.b16 %v5077, %v5076
      %v5089 = vpack.c.b16 %v5079, %v5078
      %v5090 = vpack.c.b16 %v5081, %v5080
      %v5091 = vpack.c.b16 %v5082, %v5082
      %v5101 = vsel %vm426, %v4559, 0
      %v5104 = vsel %vm426, %v4561, 0
      %v5107 = vsel %vm4788, %v5091, 0
      %5109 = vmatprep.subr.bf16.mxu0 0
      %5110 = vmatpush1.bf16.msra.mxu0 %v5083
      %5111 = vmatprep.subr.bf16.mxu0 0
      %5112 = vmatpush1.bf16.msra.mxu0 %v5084
      %5113 = vmatprep.subr.bf16.mxu0 0
      %5114 = vmatpush1.bf16.msra.mxu0 %v5085
      %5115 = vmatprep.subr.bf16.mxu0 0
      %5116 = vmatpush1.bf16.msra.mxu0 %v5086
      %5117 = vmatprep.subr.bf16.mxu0 0
      %5118 = vmatpush1.bf16.msra.mxu0 %v5087
      %5119 = vmatprep.subr.bf16.mxu0 0
      %5120 = vmatpush1.bf16.msra.mxu0 %v5088
      %5121 = vmatprep.subr.bf16.mxu0 0
      %5122 = vmatpush1.bf16.msra.mxu0 %v5089
      %5123 = vmatprep.subr.bf16.mxu0 0
      %5124 = vmatpush1.bf16.msra.mxu0 %v5090
      %5125 = vmatprep.subr.bf16.mxu0 0
      %5126 = vmatpush1.bf16.msra.mxu0 %v5107
      %5127 = vmatprep.subr.bf16.mxu0 0
      %5128 = vmatpush1.bf16.msra.mxu0 0
      %5129 = vmatprep.subr.bf16.mxu0 0
      %5130 = vmatpush1.bf16.msra.mxu0 0
      %5131 = vmatprep.subr.bf16.mxu0 0
      %5132 = vmatpush1.bf16.msra.mxu0 0
      %5133 = vmatprep.subr.bf16.mxu0 0
      %5134 = vmatpush1.bf16.msra.mxu0 0
      %5135 = vmatprep.subr.bf16.mxu0 0
      %5136 = vmatpush1.bf16.msra.mxu0 0
      %5137 = vmatprep.subr.bf16.mxu0 0
      %5138 = vmatpush1.bf16.msra.mxu0 0
      %5139 = vmatprep.subr.bf16.mxu0 0
      %5140 = vmatpush1.bf16.msra.mxu0 0
      %5141 = vmatprep.mubr.bf16.mxu0 %v5101
      %5142 = vmatmul.mubr.bf16.gmra.mrb[0].mxu0 %v4558
      %v5143 = vpop.f32.mrb[0].mxu0
      %v5144 = vadd.f32 %v4827, %v5143
      %v5145 = vpop.f32.mrb[0].mxu0
      %v5146 = vpop.f32.mrb[0].mxu0
      %v5147 = vadd.f32 %v4830, %v5146
      %v5148 = vpop.f32.mrb[0].mxu0
      %5149 = vmatprep.mubr.bf16.mxu0 %v5104
      %5150 = vmatmul.mubr.bf16.gmra.mrb[0].mxu0 %v4560
      %v5151 = vpop.f32.mrb[0].mxu0
      %v5152 = vadd.f32 %v4835, %v5151
      %v5153 = vpop.f32.mrb[0].mxu0
      %v5154 = vpop.f32.mrb[0].mxu0
      %v5155 = vadd.f32 %v4838, %v5154
      %v5156 = vpop.f32.mrb[0].mxu0
      %5157 = vmatprep.mubr.bf16.mxu0 %v4705
      %5158 = vmatmul.mubr.bf16.gmra.mrb[0].mxu0 %v4562
      %v5159 = vpop.f32.mrb[0].mxu0
      %v5160 = vadd.f32 %v4843, %v5159
      %v5161 = vpop.f32.mrb[0].mxu0
      %v5162 = vpop.f32.mrb[0].mxu0
      %v5163 = vadd.f32 %v4846, %v5162
      %v5164 = vpop.f32.mrb[0].mxu0
      %5165 = vmatprep.mubr.bf16.mxu0 %v4708
      %5166 = vmatmul.mubr.bf16.gmra.mrb[0].mxu0 %v4564
      %v5167 = vpop.f32.mrb[0].mxu0
      %v5168 = vadd.f32 %v4851, %v5167
      %v5169 = vpop.f32.mrb[0].mxu0
      %v5170 = vpop.f32.mrb[0].mxu0
      %v5171 = vadd.f32 %v4854, %v5170
      %v5172 = vpop.f32.mrb[0].mxu0
      %5173 = vmatprep.mubr.bf16.mxu0 %v4711
      %5174 = vmatmul.mubr.bf16.gmra.mrb[0].mxu0 %v4566
      %v5175 = vpop.f32.mrb[0].mxu0
      %v5176 = vadd.f32 %v4859, %v5175
      %v5177 = vpop.f32.mrb[0].mxu0
      %v5178 = vpop.f32.mrb[0].mxu0
      %v5179 = vadd.f32 %v4862, %v5178
      %v5180 = vpop.f32.mrb[0].mxu0
      %5181 = vmatprep.mubr.bf16.mxu0 %v4714
      %5182 = vmatmul.mubr.bf16.gmra.mrb[0].mxu0 %v4568
      %v5183 = vpop.f32.mrb[0].mxu0
      %v5184 = vadd.f32 %v4867, %v5183
      %v5185 = vpop.f32.mrb[0].mxu0
      %v5186 = vpop.f32.mrb[0].mxu0
      %v5187 = vadd.f32 %v4870, %v5186
      %v5188 = vpop.f32.mrb[0].mxu0
      %5189 = vmatprep.mubr.bf16.mxu0 %v4717
      %5190 = vmatmul.mubr.bf16.gmra.mrb[0].mxu0 %v4570
      %v5191 = vpop.f32.mrb[0].mxu0
      %v5192 = vadd.f32 %v4875, %v5191
      %v5193 = vpop.f32.mrb[0].mxu0
      %v5194 = vpop.f32.mrb[0].mxu0
      %v5195 = vadd.f32 %v4878, %v5194
      %v5196 = vpop.f32.mrb[0].mxu0
      %5197 = vmatprep.mubr.bf16.mxu0 %v4720
      %5198 = vmatmul.mubr.bf16.gmra.mrb[0].mxu0 %v4572
      %v5199 = vpop.f32.mrb[0].mxu0
      %v5200 = vadd.f32 %v4883, %v5199
      %v5201 = vpop.f32.mrb[0].mxu0
      %v5202 = vpop.f32.mrb[0].mxu0
      %v5203 = vadd.f32 %v4886, %v5202
      %v5204 = vpop.f32.mrb[0].mxu0
      %5205 = vmatprep.mubr.bf16.mxu0 %v4723
      %5206 = vmatmul.mubr.bf16.gmra.mrb[0].mxu0 %v4574
      %v5207 = vpop.f32.mrb[0].mxu0
      %v5208 = vadd.f32 %v4891, %v5207
      %v5209 = vpop.f32.mrb[0].mxu0
      %v5210 = vpop.f32.mrb[0].mxu0
      %v5211 = vadd.f32 %v4894, %v5210
      %v5212 = vpop.f32.mrb[0].mxu0
      %5213 = vmatprep.mubr.bf16.mxu0 %v4726
      %5214 = vmatmul.mubr.bf16.gmra.mrb[0].mxu0 %v4576
      %v5215 = vpop.f32.mrb[0].mxu0
      %v5216 = vadd.f32 %v4899, %v5215
      %v5217 = vpop.f32.mrb[0].mxu0
      %v5218 = vpop.f32.mrb[0].mxu0
      %v5219 = vadd.f32 %v4902, %v5218
      %v5220 = vpop.f32.mrb[0].mxu0
      %5221 = vmatprep.mubr.bf16.mxu0 %v4729
      %5222 = vmatmul.mubr.bf16.gmra.mrb[0].mxu0 %v4578
      %v5223 = vpop.f32.mrb[0].mxu0
      %v5224 = vadd.f32 %v4907, %v5223
      %v5225 = vpop.f32.mrb[0].mxu0
      %v5226 = vpop.f32.mrb[0].mxu0
      %v5227 = vadd.f32 %v4910, %v5226
      %v5228 = vpop.f32.mrb[0].mxu0
      %5229 = vmatprep.mubr.bf16.mxu0 %v4732
      %5230 = vmatmul.mubr.bf16.gmra.mrb[0].mxu0 %v4580
      %v5231 = vpop.f32.mrb[0].mxu0
      %v5232 = vadd.f32 %v4915, %v5231
      %v5233 = vpop.f32.mrb[0].mxu0
      %v5234 = vpop.f32.mrb[0].mxu0
      %v5235 = vadd.f32 %v4918, %v5234
      %v5236 = vpop.f32.mrb[0].mxu0
      %5237 = vmatprep.mubr.bf16.mxu0 %v4735
      %5238 = vmatmul.mubr.bf16.gmra.mrb[0].mxu0 %v4582
      %v5239 = vpop.f32.mrb[0].mxu0
      %v5240 = vadd.f32 %v4923, %v5239
      %v5241 = vpop.f32.mrb[0].mxu0
      %v5242 = vpop.f32.mrb[0].mxu0
      %v5243 = vadd.f32 %v4926, %v5242
      %v5244 = vpop.f32.mrb[0].mxu0
      %5245 = vmatprep.mubr.bf16.mxu0 %v4738
      %5246 = vmatmul.mubr.bf16.gmra.mrb[0].mxu0 %v4584
      %v5247 = vpop.f32.mrb[0].mxu0
      %v5248 = vadd.f32 %v4931, %v5247
      %v5249 = vpop.f32.mrb[0].mxu0
      %v5250 = vpop.f32.mrb[0].mxu0
      %v5251 = vadd.f32 %v4934, %v5250
      %v5252 = vpop.f32.mrb[0].mxu0
      %5253 = vmatprep.mubr.bf16.mxu0 %v4741
      %5254 = vmatmul.mubr.bf16.gmra.mrb[0].mxu0 %v4586
      %v5255 = vpop.f32.mrb[0].mxu0
      %v5256 = vadd.f32 %v4939, %v5255
      %v5257 = vpop.f32.mrb[0].mxu0
      %v5258 = vpop.f32.mrb[0].mxu0
      %v5259 = vadd.f32 %v4942, %v5258
      %v5260 = vpop.f32.mrb[0].mxu0
      %5261 = vmatprep.mubr.bf16.mxu0 %v4744
      %5262 = vmatmul.mubr.bf16.gmra.mrb[0].mxu0 %v4588
      %v5263 = vpop.f32.mrb[0].mxu0
      %v5264 = vadd.f32 %v4947, %v5263
      %v5265 = vpop.f32.mrb[0].mxu0
      %v5266 = vpop.f32.mrb[0].mxu0
      %v5267 = vadd.f32 %v4950, %v5266
      %v5268 = vpop.f32.mrb[0].mxu0
      %5269 = vmatprep.mubr.bf16.mxu0 %v4747
      %5270 = vmatmul.mubr.bf16.gmra.mrb[0].mxu0 %v4590
      %v5271 = vpop.f32.mrb[0].mxu0
      %v5272 = vadd.f32 %v4955, %v5271
      %v5273 = vpop.f32.mrb[0].mxu0
      %v5274 = vpop.f32.mrb[0].mxu0
      %v5275 = vadd.f32 %v4958, %v5274
      %v5276 = vpop.f32.mrb[0].mxu0
      %5277 = vmatprep.mubr.bf16.mxu0 %v4750
      %5278 = vmatmul.mubr.bf16.gmra.mrb[0].mxu0 %v4592
      %v5279 = vpop.f32.mrb[0].mxu0
      %v5280 = vadd.f32 %v4963, %v5279
      %v5281 = vpop.f32.mrb[0].mxu0
      %v5282 = vpop.f32.mrb[0].mxu0
      %v5283 = vadd.f32 %v4966, %v5282
      %v5284 = vpop.f32.mrb[0].mxu0
      %5285 = vmatprep.mubr.bf16.mxu0 %v4753
      %5286 = vmatmul.mubr.bf16.gmra.mrb[0].mxu0 %v4594
      %v5287 = vpop.f32.mrb[0].mxu0
      %v5288 = vadd.f32 %v4971, %v5287
      %v5289 = vpop.f32.mrb[0].mxu0
      %v5290 = vpop.f32.mrb[0].mxu0
      %v5291 = vadd.f32 %v4974, %v5290
      %v5292 = vpop.f32.mrb[0].mxu0
      %5293 = vmatprep.mubr.bf16.mxu0 %v4756
      %5294 = vmatmul.mubr.bf16.gmra.mrb[0].mxu0 %v4596
      %v5295 = vpop.f32.mrb[0].mxu0
      %v5296 = vadd.f32 %v4979, %v5295
      %v5297 = vpop.f32.mrb[0].mxu0
      %v5298 = vpop.f32.mrb[0].mxu0
      %v5299 = vadd.f32 %v4982, %v5298
      %v5300 = vpop.f32.mrb[0].mxu0
      %5301 = vmatprep.mubr.bf16.mxu0 %v4759
      %5302 = vmatmul.mubr.bf16.gmra.mrb[0].mxu0 %v4598
      %v5303 = vpop.f32.mrb[0].mxu0
      %v5304 = vadd.f32 %v4987, %v5303
      %v5305 = vpop.f32.mrb[0].mxu0
      %v5306 = vpop.f32.mrb[0].mxu0
      %v5307 = vadd.f32 %v4990, %v5306
      %v5308 = vpop.f32.mrb[0].mxu0
      %5309 = vmatprep.mubr.bf16.mxu0 %v4762
      %5310 = vmatmul.mubr.bf16.gmra.mrb[0].mxu0 %v4600
      %v5311 = vpop.f32.mrb[0].mxu0
      %v5312 = vadd.f32 %v4995, %v5311
      %v5313 = vpop.f32.mrb[0].mxu0
      %v5314 = vpop.f32.mrb[0].mxu0
      %v5315 = vadd.f32 %v4998, %v5314
      %v5316 = vpop.f32.mrb[0].mxu0
      %5317 = vmatprep.mubr.bf16.mxu0 %v4765
      %5318 = vmatmul.mubr.bf16.gmra.mrb[0].mxu0 %v4602
      %v5319 = vpop.f32.mrb[0].mxu0
      %v5320 = vadd.f32 %v5003, %v5319
      %v5321 = vpop.f32.mrb[0].mxu0
      %v5322 = vpop.f32.mrb[0].mxu0
      %v5323 = vadd.f32 %v5006, %v5322
      %v5324 = vpop.f32.mrb[0].mxu0
      %5325 = vmatprep.mubr.bf16.mxu0 %v4768
      %5326 = vmatmul.mubr.bf16.gmra.mrb[0].mxu0 %v4604
      %v5327 = vpop.f32.mrb[0].mxu0
      %v5328 = vadd.f32 %v5011, %v5327
      %v5329 = vpop.f32.mrb[0].mxu0
      %v5330 = vpop.f32.mrb[0].mxu0
      %v5331 = vadd.f32 %v5014, %v5330
      %v5332 = vpop.f32.mrb[0].mxu0
      %5333 = vmatprep.mubr.bf16.mxu0 %v4771
      %5334 = vmatmul.mubr.bf16.gmra.mrb[0].mxu0 %v4606
      %v5335 = vpop.f32.mrb[0].mxu0
      %v5336 = vadd.f32 %v5019, %v5335
      %v5337 = vpop.f32.mrb[0].mxu0
      %v5338 = vpop.f32.mrb[0].mxu0
      %v5339 = vadd.f32 %v5022, %v5338
      %v5340 = vpop.f32.mrb[0].mxu0
      %5341 = vmatprep.mubr.bf16.mxu0 %v4774
      %5342 = vmatmul.mubr.bf16.gmra.mrb[0].mxu0 %v4608
      %v5343 = vpop.f32.mrb[0].mxu0
      %v5344 = vadd.f32 %v5027, %v5343
      %v5345 = vpop.f32.mrb[0].mxu0
      %v5346 = vpop.f32.mrb[0].mxu0
      %v5347 = vadd.f32 %v5030, %v5346
      %v5348 = vpop.f32.mrb[0].mxu0
      %5349 = vmatprep.mubr.bf16.mxu0 %v4777
      %5350 = vmatmul.mubr.bf16.gmra.mrb[0].mxu0 %v4610
      %v5351 = vpop.f32.mrb[0].mxu0
      %v5352 = vadd.f32 %v5035, %v5351
      %v5353 = vpop.f32.mrb[0].mxu0
      %v5354 = vpop.f32.mrb[0].mxu0
      %v5355 = vadd.f32 %v5038, %v5354
      %v5356 = vpop.f32.mrb[0].mxu0
      %5357 = vmatprep.mubr.bf16.mxu0 %v4780
      %5358 = vmatmul.mubr.bf16.gmra.mrb[0].mxu0 %v4612
      %v5359 = vpop.f32.mrb[0].mxu0
      %v5360 = vadd.f32 %v5043, %v5359
      %v5361 = vpop.f32.mrb[0].mxu0
      %v5362 = vpop.f32.mrb[0].mxu0
      %v5363 = vadd.f32 %v5046, %v5362
      %v5364 = vpop.f32.mrb[0].mxu0
      %5365 = vdwg.mxu0
      %v5366 = vld [vmem:[#allocation4 + $0x40] sm:$0xff]
      %v5367 = vld [vmem:[#allocation4 + $0x48] sm:$0xff]
      %v5368 = vld [vmem:[#allocation4 + $0x50] sm:$0xff]
      %v5369 = vld [vmem:[#allocation4 + $0x58] sm:$0xff]
      %v5370 = vld [vmem:[#allocation4 + $0x60] sm:$0xff]
      %v5371 = vld [vmem:[#allocation4 + $0x68] sm:$0xff]
      %v5372 = vld [vmem:[#allocation4 + $0x70] sm:$0xff]
      %v5373 = vld [vmem:[#allocation4 + $0x78] sm:$0xff]
      %v5374 = vld [vmem:[#allocation4 + $0x80] sm:$0xff]
      %v5375 = vld [vmem:[#allocation4 + $0x88] sm:$0xff]
      %v5376 = vld [vmem:[#allocation4 + $0x90] sm:$0xff]
      %v5377 = vld [vmem:[#allocation4 + $0x98] sm:$0xff]
      %v5378 = vld [vmem:[#allocation4 + $0xa0] sm:$0xff]
      %v5379 = vld [vmem:[#allocation4 + $0xa8] sm:$0xff]
      %v5380 = vld [vmem:[#allocation4 + $0xb0] sm:$0xff]
      %v5381 = vld [vmem:[#allocation4 + $0xb8] sm:$0xff]
      %v5382 = vld [vmem:[#allocation4 + $0xc0] sm:$0xff]
      %v5383 = vld [vmem:[#allocation4 + $0xc8] sm:$0xff]
      %v5384 = vld [vmem:[#allocation4 + $0xd0] sm:$0xff]
      %v5385 = vld [vmem:[#allocation4 + $0xd8] sm:$0xff]
      %v5386 = vld [vmem:[#allocation4 + $0xe0] sm:$0xff]
      %v5387 = vld [vmem:[#allocation4 + $0xe8] sm:$0xff]
      %v5388 = vld [vmem:[#allocation4 + $0xf0] sm:$0xff]
      %v5389 = vld [vmem:[#allocation4 + $0xf8] sm:$0xff]
      %v5390 = vld [vmem:[#allocation4 + $0x100] sm:$0xff]
      %v5391 = vld [vmem:[#allocation4 + $0x108] sm:$0xff]
      %v5392 = vld [vmem:[#allocation4 + $0x110] sm:$0xff]
      %v5393 = vld [vmem:[#allocation4 + $0x118] sm:$0xff]
      %v5394 = vld [vmem:[#allocation4 + $0x120] sm:$0xff]
      %v5395 = vld [vmem:[#allocation4 + $0x128] sm:$0xff]
      %v5396 = vld [vmem:[#allocation4 + $0x130] sm:$0xff]
      %v5397 = vld [vmem:[#allocation4 + $0x138] sm:$0xff]
      %v5398 = vld [vmem:[#allocation4 + $0x140] sm:$0xff]
      %v5399 = vld [vmem:[#allocation4 + $0x148] sm:$0xff]
      %v5400 = vld [vmem:[#allocation4 + $0x150] sm:$0xff]
      %v5401 = vld [vmem:[#allocation4 + $0x158] sm:$0xff]
      %v5402 = vld [vmem:[#allocation4 + $0x160] sm:$0xff]
      %v5403 = vld [vmem:[#allocation4 + $0x168] sm:$0xff]
      %v5404 = vld [vmem:[#allocation4 + $0x170] sm:$0xff]
      %v5405 = vld [vmem:[#allocation4 + $0x178] sm:$0xff]
      %v5406 = vld [vmem:[#allocation4 + $0x180] sm:$0xff]
      %v5407 = vld [vmem:[#allocation4 + $0x188] sm:$0xff]
      %v5408 = vld [vmem:[#allocation4 + $0x190] sm:$0xff]
      %v5409 = vld [vmem:[#allocation4 + $0x198] sm:$0xff]
      %v5410 = vld [vmem:[#allocation4 + $0x1a0] sm:$0xff]
      %v5411 = vld [vmem:[#allocation4 + $0x1a8] sm:$0xff]
      %v5412 = vld [vmem:[#allocation4 + $0x1b0] sm:$0xff]
      %v5413 = vld [vmem:[#allocation4 + $0x1b8] sm:$0xff]
      %v5414 = vld [vmem:[#allocation4 + $0x1c0] sm:$0xff]
      %v5415 = vld [vmem:[#allocation4 + $0x1c8] sm:$0xff]
      %v5416 = vld [vmem:[#allocation4 + $0x1d0] sm:$0xff]
      %v5417 = vld [vmem:[#allocation4 + $0x1d8] sm:$0xff]
      %v5418 = vld [vmem:[#allocation4 + $0x1e0] sm:$0xff]
      %v5419 = vld [vmem:[#allocation4 + $0x1e8] sm:$0xff]
      %v5420 = vld [vmem:[#allocation4 + $0x1f0] sm:$0xff]
      %v5421 = vld [vmem:[#allocation4 + $0x1f8] sm:$0xff]
      %s5422 = scalar_lea.vmem %s7, 136
      %v5423 = vld [vmem:[%s5422] sm:$0xf]
      %v5424 = vld [vmem:[%s5422 + $0x4] sm:$0xf]
      %v5425 = vld [vmem:[%s5422 + $0x8] sm:$0xf]
      %v5426 = vld [vmem:[%s5422 + $0xc] sm:$0xf]
      %v5427 = vld [vmem:[%s5422 + $0x10] sm:$0xf]
      %v5428 = vld [vmem:[%s5422 + $0x14] sm:$0xf]
      %v5429 = vld [vmem:[%s5422 + $0x18] sm:$0xf]
      %v5430 = vld [vmem:[%s5422 + $0x1c] sm:$0xf]
      %v5431 = vld [vmem:[%s5422 + $0x20] sm:$0xf]
      %v5432 = vld [vmem:[%s5422 + $0x24] sm:$0xf]
      %v5433 = vld [vmem:[%s5422 + $0x28] sm:$0xf]
      %v5434 = vld [vmem:[%s5422 + $0x2c] sm:$0xf]
      %v5435 = vld [vmem:[%s5422 + $0x30] sm:$0xf]
      %v5436 = vld [vmem:[%s5422 + $0x34] sm:$0xf]
      %v5437 = vld [vmem:[%s5422 + $0x38] sm:$0xf]
      %v5438 = vld [vmem:[%s5422 + $0x3c] sm:$0xf]
      %v5439 = vld [vmem:[%s5422 + $0x40] sm:$0xf]
      %v5457 = vunpack.c.l.b16 %v5423
      %v5458 = vunpack.c.l.b16 %v5424
      %v5459 = vunpack.c.l.b16 %v5425
      %v5460 = vunpack.c.l.b16 %v5426
      %v5461 = vunpack.c.l.b16 %v5427
      %v5462 = vunpack.c.l.b16 %v5428
      %v5463 = vunpack.c.l.b16 %v5429
      %v5464 = vunpack.c.l.b16 %v5430
      %v5465 = vunpack.c.l.b16 %v5431
      %v5466 = vunpack.c.l.b16 %v5432
      %v5467 = vunpack.c.l.b16 %v5433
      %v5468 = vunpack.c.l.b16 %v5434
      %v5469 = vunpack.c.l.b16 %v5435
      %v5470 = vunpack.c.l.b16 %v5436
      %v5471 = vunpack.c.l.b16 %v5437
      %v5472 = vunpack.c.l.b16 %v5438
      %v5473 = vunpack.c.l.b16 %v5439
      %v5474 = vpack.c.b16 %v5458, %v5457
      %v5475 = vpack.c.b16 %v5460, %v5459
      %v5476 = vpack.c.b16 %v5462, %v5461
      %v5477 = vpack.c.b16 %v5464, %v5463
      %v5478 = vpack.c.b16 %v5466, %v5465
      %v5479 = vpack.c.b16 %v5468, %v5467
      %v5480 = vpack.c.b16 %v5470, %v5469
      %v5481 = vpack.c.b16 %v5472, %v5471
      %v5482 = vpack.c.b16 %v5473, %v5473
      %v5492 = vsel %vm426, %v5367, 0
      %v5495 = vsel %vm426, %v5369, 0
      %v5498 = vsel %vm426, %v5371, 0
      %v5501 = vsel %vm426, %v5373, 0
      %v5504 = vsel %vm426, %v5375, 0
      %v5507 = vsel %vm426, %v5377, 0
      %v5510 = vsel %vm426, %v5379, 0
      %v5513 = vsel %vm426, %v5381, 0
      %v5516 = vsel %vm426, %v5383, 0
      %v5519 = vsel %vm426, %v5385, 0
      %v5522 = vsel %vm426, %v5387, 0
      %v5525 = vsel %vm426, %v5389, 0
      %v5528 = vsel %vm426, %v5391, 0
      %v5531 = vsel %vm426, %v5393, 0
      %v5534 = vsel %vm426, %v5395, 0
      %v5537 = vsel %vm426, %v5397, 0
      %v5540 = vsel %vm426, %v5399, 0
      %v5543 = vsel %vm426, %v5401, 0
      %v5546 = vsel %vm426, %v5403, 0
      %v5549 = vsel %vm426, %v5405, 0
      %v5552 = vsel %vm426, %v5407, 0
      %v5555 = vsel %vm426, %v5409, 0
      %v5558 = vsel %vm426, %v5411, 0
      %v5561 = vsel %vm426, %v5413, 0
      %v5564 = vsel %vm426, %v5415, 0
      %v5567 = vsel %vm426, %v5417, 0
      %v5570 = vsel %vm426, %v5419, 0
      %v5573 = vsel %vm426, %v5421, 0
      %v5576 = vsel %vm4788, %v5482, 0
      %5578 = vmatprep.subr.bf16.mxu0 0
      %5579 = vmatpush1.bf16.msra.mxu0 %v5474
      %5580 = vmatprep.subr.bf16.mxu0 0
      %5581 = vmatpush1.bf16.msra.mxu0 %v5475
      %5582 = vmatprep.subr.bf16.mxu0 0
      %5583 = vmatpush1.bf16.msra.mxu0 %v5476
      %5584 = vmatprep.subr.bf16.mxu0 0
      %5585 = vmatpush1.bf16.msra.mxu0 %v5477
      %5586 = vmatprep.subr.bf16.mxu0 0
      %5587 = vmatpush1.bf16.msra.mxu0 %v5478
      %5588 = vmatprep.subr.bf16.mxu0 0
      %5589 = vmatpush1.bf16.msra.mxu0 %v5479
      %5590 = vmatprep.subr.bf16.mxu0 0
      %5591 = vmatpush1.bf16.msra.mxu0 %v5480
      %5592 = vmatprep.subr.bf16.mxu0 0
      %5593 = vmatpush1.bf16.msra.mxu0 %v5481
      %5594 = vmatprep.subr.bf16.mxu0 0
      %5595 = vmatpush1.bf16.msra.mxu0 %v5576
      %5596 = vmatprep.subr.bf16.mxu0 0
      %5597 = vmatpush1.bf16.msra.mxu0 0
      %5598 = vmatprep.subr.bf16.mxu0 0
      %5599 = vmatpush1.bf16.msra.mxu0 0
      %5600 = vmatprep.subr.bf16.mxu0 0
      %5601 = vmatpush1.bf16.msra.mxu0 0
      %5602 = vmatprep.subr.bf16.mxu0 0
      %5603 = vmatpush1.bf16.msra.mxu0 0
      %5604 = vmatprep.subr.bf16.mxu0 0
      %5605 = vmatpush1.bf16.msra.mxu0 0
      %5606 = vmatprep.subr.bf16.mxu0 0
      %5607 = vmatpush1.bf16.msra.mxu0 0
      %5608 = vmatprep.subr.bf16.mxu0 0
      %5609 = vmatpush1.bf16.msra.mxu0 0
      %5610 = vmatprep.mubr.bf16.mxu0 %v5492
      %5611 = vmatmul.mubr.bf16.gmra.mrb[0].mxu0 %v5366
      %v5612 = vpop.f32.mrb[0].mxu0
      %v5613 = vadd.f32 0.0, %v5612
      %v5614 = vpop.f32.mrb[0].mxu0
      %v5615 = vpop.f32.mrb[0].mxu0
      %v5616 = vadd.f32 0.0, %v5615
      %v5617 = vpop.f32.mrb[0].mxu0
      %5618 = vmatprep.mubr.bf16.mxu0 %v5495
      %5619 = vmatmul.mubr.bf16.gmra.mrb[0].mxu0 %v5368
      %v5620 = vpop.f32.mrb[0].mxu0
      %v5621 = vadd.f32 0.0, %v5620
      %v5622 = vpop.f32.mrb[0].mxu0
      %v5623 = vpop.f32.mrb[0].mxu0
      %v5624 = vadd.f32 0.0, %v5623
      %v5625 = vpop.f32.mrb[0].mxu0
      %5626 = vmatprep.mubr.bf16.mxu0 %v5498
      %5627 = vmatmul.mubr.bf16.gmra.mrb[0].mxu0 %v5370
      %v5628 = vpop.f32.mrb[0].mxu0
      %v5629 = vadd.f32 0.0, %v5628
      %v5630 = vpop.f32.mrb[0].mxu0
      %v5631 = vpop.f32.mrb[0].mxu0
      %v5632 = vadd.f32 0.0, %v5631
      %v5633 = vpop.f32.mrb[0].mxu0
      %5634 = vmatprep.mubr.bf16.mxu0 %v5501
      %5635 = vmatmul.mubr.bf16.gmra.mrb[0].mxu0 %v5372
      %v5636 = vpop.f32.mrb[0].mxu0
      %v5637 = vadd.f32 0.0, %v5636
      %v5638 = vpop.f32.mrb[0].mxu0
      %v5639 = vpop.f32.mrb[0].mxu0
      %v5640 = vadd.f32 0.0, %v5639
      %v5641 = vpop.f32.mrb[0].mxu0
      %5642 = vmatprep.mubr.bf16.mxu0 %v5504
      %5643 = vmatmul.mubr.bf16.gmra.mrb[0].mxu0 %v5374
      %v5644 = vpop.f32.mrb[0].mxu0
      %v5645 = vadd.f32 0.0, %v5644
      %v5646 = vpop.f32.mrb[0].mxu0
      %v5647 = vpop.f32.mrb[0].mxu0
      %v5648 = vadd.f32 0.0, %v5647
      %v5649 = vpop.f32.mrb[0].mxu0
      %5650 = vmatprep.mubr.bf16.mxu0 %v5507
      %5651 = vmatmul.mubr.bf16.gmra.mrb[0].mxu0 %v5376
      %v5652 = vpop.f32.mrb[0].mxu0
      %v5653 = vadd.f32 0.0, %v5652
      %v5654 = vpop.f32.mrb[0].mxu0
      %v5655 = vpop.f32.mrb[0].mxu0
      %v5656 = vadd.f32 0.0, %v5655
      %v5657 = vpop.f32.mrb[0].mxu0
      %5658 = vmatprep.mubr.bf16.mxu0 %v5510
      %5659 = vmatmul.mubr.bf16.gmra.mrb[0].mxu0 %v5378
      %v5660 = vpop.f32.mrb[0].mxu0
      %v5661 = vadd.f32 0.0, %v5660
      %v5662 = vpop.f32.mrb[0].mxu0
      %v5663 = vpop.f32.mrb[0].mxu0
      %v5664 = vadd.f32 0.0, %v5663
      %v5665 = vpop.f32.mrb[0].mxu0
      %5666 = vmatprep.mubr.bf16.mxu0 %v5513
      %5667 = vmatmul.mubr.bf16.gmra.mrb[0].mxu0 %v5380
      %v5668 = vpop.f32.mrb[0].mxu0
      %v5669 = vadd.f32 0.0, %v5668
      %v5670 = vpop.f32.mrb[0].mxu0
      %v5671 = vpop.f32.mrb[0].mxu0
      %v5672 = vadd.f32 0.0, %v5671
      %v5673 = vpop.f32.mrb[0].mxu0
      %5674 = vmatprep.mubr.bf16.mxu0 %v5516
      %5675 = vmatmul.mubr.bf16.gmra.mrb[0].mxu0 %v5382
      %v5676 = vpop.f32.mrb[0].mxu0
      %v5677 = vadd.f32 0.0, %v5676
      %v5678 = vpop.f32.mrb[0].mxu0
      %v5679 = vpop.f32.mrb[0].mxu0
      %v5680 = vadd.f32 0.0, %v5679
      %v5681 = vpop.f32.mrb[0].mxu0
      %5682 = vmatprep.mubr.bf16.mxu0 %v5519
      %5683 = vmatmul.mubr.bf16.gmra.mrb[0].mxu0 %v5384
      %v5684 = vpop.f32.mrb[0].mxu0
      %v5685 = vadd.f32 0.0, %v5684
      %v5686 = vpop.f32.mrb[0].mxu0
      %v5687 = vpop.f32.mrb[0].mxu0
      %v5688 = vadd.f32 0.0, %v5687
      %v5689 = vpop.f32.mrb[0].mxu0
      %5690 = vmatprep.mubr.bf16.mxu0 %v5522
      %5691 = vmatmul.mubr.bf16.gmra.mrb[0].mxu0 %v5386
      %v5692 = vpop.f32.mrb[0].mxu0
      %v5693 = vadd.f32 0.0, %v5692
      %v5694 = vpop.f32.mrb[0].mxu0
      %v5695 = vpop.f32.mrb[0].mxu0
      %v5696 = vadd.f32 0.0, %v5695
      %v5697 = vpop.f32.mrb[0].mxu0
      %5698 = vmatprep.mubr.bf16.mxu0 %v5525
      %5699 = vmatmul.mubr.bf16.gmra.mrb[0].mxu0 %v5388
      %v5700 = vpop.f32.mrb[0].mxu0
      %v5701 = vadd.f32 0.0, %v5700
      %v5702 = vpop.f32.mrb[0].mxu0
      %v5703 = vpop.f32.mrb[0].mxu0
      %v5704 = vadd.f32 0.0, %v5703
      %v5705 = vpop.f32.mrb[0].mxu0
      %5706 = vmatprep.mubr.bf16.mxu0 %v5528
      %5707 = vmatmul.mubr.bf16.gmra.mrb[0].mxu0 %v5390
      %v5708 = vpop.f32.mrb[0].mxu0
      %v5709 = vadd.f32 0.0, %v5708
      %v5710 = vpop.f32.mrb[0].mxu0
      %v5711 = vpop.f32.mrb[0].mxu0
      %v5712 = vadd.f32 0.0, %v5711
      %v5713 = vpop.f32.mrb[0].mxu0
      %5714 = vmatprep.mubr.bf16.mxu0 %v5531
      %5715 = vmatmul.mubr.bf16.gmra.mrb[0].mxu0 %v5392
      %v5716 = vpop.f32.mrb[0].mxu0
      %v5717 = vadd.f32 0.0, %v5716
      %v5718 = vpop.f32.mrb[0].mxu0
      %v5719 = vpop.f32.mrb[0].mxu0
      %v5720 = vadd.f32 0.0, %v5719
      %v5721 = vpop.f32.mrb[0].mxu0
      %5722 = vmatprep.mubr.bf16.mxu0 %v5534
      %5723 = vmatmul.mubr.bf16.gmra.mrb[0].mxu0 %v5394
      %v5724 = vpop.f32.mrb[0].mxu0
      %v5725 = vadd.f32 0.0, %v5724
      %v5726 = vpop.f32.mrb[0].mxu0
      %v5727 = vpop.f32.mrb[0].mxu0
      %v5728 = vadd.f32 0.0, %v5727
      %v5729 = vpop.f32.mrb[0].mxu0
      %5730 = vmatprep.mubr.bf16.mxu0 %v5537
      %5731 = vmatmul.mubr.bf16.gmra.mrb[0].mxu0 %v5396
      %v5732 = vpop.f32.mrb[0].mxu0
      %v5733 = vadd.f32 0.0, %v5732
      %v5734 = vpop.f32.mrb[0].mxu0
      %v5735 = vpop.f32.mrb[0].mxu0
      %v5736 = vadd.f32 0.0, %v5735
      %v5737 = vpop.f32.mrb[0].mxu0
      %5738 = vmatprep.mubr.bf16.mxu0 %v5540
      %5739 = vmatmul.mubr.bf16.gmra.mrb[0].mxu0 %v5398
      %v5740 = vpop.f32.mrb[0].mxu0
      %v5741 = vadd.f32 0.0, %v5740
      %v5742 = vpop.f32.mrb[0].mxu0
      %v5743 = vpop.f32.mrb[0].mxu0
      %v5744 = vadd.f32 0.0, %v5743
      %v5745 = vpop.f32.mrb[0].mxu0
      %5746 = vmatprep.mubr.bf16.mxu0 %v5543
      %5747 = vmatmul.mubr.bf16.gmra.mrb[0].mxu0 %v5400
      %v5748 = vpop.f32.mrb[0].mxu0
      %v5749 = vadd.f32 0.0, %v5748
      %v5750 = vpop.f32.mrb[0].mxu0
      %v5751 = vpop.f32.mrb[0].mxu0
      %v5752 = vadd.f32 0.0, %v5751
      %v5753 = vpop.f32.mrb[0].mxu0
      %5754 = vmatprep.mubr.bf16.mxu0 %v5546
      %5755 = vmatmul.mubr.bf16.gmra.mrb[0].mxu0 %v5402
      %v5756 = vpop.f32.mrb[0].mxu0
      %v5757 = vadd.f32 0.0, %v5756
      %v5758 = vpop.f32.mrb[0].mxu0
      %v5759 = vpop.f32.mrb[0].mxu0
      %v5760 = vadd.f32 0.0, %v5759
      %v5761 = vpop.f32.mrb[0].mxu0
      %5762 = vmatprep.mubr.bf16.mxu0 %v5549
      %5763 = vmatmul.mubr.bf16.gmra.mrb[0].mxu0 %v5404
      %v5764 = vpop.f32.mrb[0].mxu0
      %v5765 = vadd.f32 0.0, %v5764
      %v5766 = vpop.f32.mrb[0].mxu0
      %v5767 = vpop.f32.mrb[0].mxu0
      %v5768 = vadd.f32 0.0, %v5767
      %v5769 = vpop.f32.mrb[0].mxu0
      %5770 = vmatprep.mubr.bf16.mxu0 %v5552
      %5771 = vmatmul.mubr.bf16.gmra.mrb[0].mxu0 %v5406
      %v5772 = vpop.f32.mrb[0].mxu0
      %v5773 = vadd.f32 0.0, %v5772
      %v5774 = vpop.f32.mrb[0].mxu0
      %v5775 = vpop.f32.mrb[0].mxu0
      %v5776 = vadd.f32 0.0, %v5775
      %v5777 = vpop.f32.mrb[0].mxu0
      %5778 = vmatprep.mubr.bf16.mxu0 %v5555
      %5779 = vmatmul.mubr.bf16.gmra.mrb[0].mxu0 %v5408
      %v5780 = vpop.f32.mrb[0].mxu0
      %v5781 = vadd.f32 0.0, %v5780
      %v5782 = vpop.f32.mrb[0].mxu0
      %v5783 = vpop.f32.mrb[0].mxu0
      %v5784 = vadd.f32 0.0, %v5783
      %v5785 = vpop.f32.mrb[0].mxu0
      %5786 = vmatprep.mubr.bf16.mxu0 %v5558
      %5787 = vmatmul.mubr.bf16.gmra.mrb[0].mxu0 %v5410
      %v5788 = vpop.f32.mrb[0].mxu0
      %v5789 = vadd.f32 0.0, %v5788
      %v5790 = vpop.f32.mrb[0].mxu0
      %v5791 = vpop.f32.mrb[0].mxu0
      %v5792 = vadd.f32 0.0, %v5791
      %v5793 = vpop.f32.mrb[0].mxu0
      %5794 = vmatprep.mubr.bf16.mxu0 %v5561
      %5795 = vmatmul.mubr.bf16.gmra.mrb[0].mxu0 %v5412
      %v5796 = vpop.f32.mrb[0].mxu0
      %v5797 = vadd.f32 0.0, %v5796
      %v5798 = vpop.f32.mrb[0].mxu0
      %v5799 = vpop.f32.mrb[0].mxu0
      %v5800 = vadd.f32 0.0, %v5799
      %v5801 = vpop.f32.mrb[0].mxu0
      %5802 = vmatprep.mubr.bf16.mxu0 %v5564
      %5803 = vmatmul.mubr.bf16.gmra.mrb[0].mxu0 %v5414
      %v5804 = vpop.f32.mrb[0].mxu0
      %v5805 = vadd.f32 0.0, %v5804
      %v5806 = vpop.f32.mrb[0].mxu0
      %v5807 = vpop.f32.mrb[0].mxu0
      %v5808 = vadd.f32 0.0, %v5807
      %v5809 = vpop.f32.mrb[0].mxu0
      %5810 = vmatprep.mubr.bf16.mxu0 %v5567
      %5811 = vmatmul.mubr.bf16.gmra.mrb[0].mxu0 %v5416
      %v5812 = vpop.f32.mrb[0].mxu0
      %v5813 = vadd.f32 0.0, %v5812
      %v5814 = vpop.f32.mrb[0].mxu0
      %v5815 = vpop.f32.mrb[0].mxu0
      %v5816 = vadd.f32 0.0, %v5815
      %v5817 = vpop.f32.mrb[0].mxu0
      %5818 = vmatprep.mubr.bf16.mxu0 %v5570
      %5819 = vmatmul.mubr.bf16.gmra.mrb[0].mxu0 %v5418
      %v5820 = vpop.f32.mrb[0].mxu0
      %v5821 = vadd.f32 0.0, %v5820
      %v5822 = vpop.f32.mrb[0].mxu0
      %v5823 = vpop.f32.mrb[0].mxu0
      %v5824 = vadd.f32 0.0, %v5823
      %v5825 = vpop.f32.mrb[0].mxu0
      %5826 = vmatprep.mubr.bf16.mxu0 %v5573
      %5827 = vmatmul.mubr.bf16.gmra.mrb[0].mxu0 %v5420
      %v5828 = vpop.f32.mrb[0].mxu0
      %v5829 = vadd.f32 0.0, %v5828
      %v5830 = vpop.f32.mrb[0].mxu0
      %v5831 = vpop.f32.mrb[0].mxu0
      %v5832 = vadd.f32 0.0, %v5831
      %v5833 = vpop.f32.mrb[0].mxu0
      %5834 = vdwg.mxu0
      %v5835 = vadd.f32 %v5144, %v5613
      %v5836 = vadd.f32 %v5147, %v5616
      %v5837 = vadd.f32 %v5152, %v5621
      %v5838 = vadd.f32 %v5155, %v5624
      %v5839 = vadd.f32 %v5160, %v5629
      %v5840 = vadd.f32 %v5163, %v5632
      %v5841 = vadd.f32 %v5168, %v5637
      %v5842 = vadd.f32 %v5171, %v5640
      %v5843 = vadd.f32 %v5176, %v5645
      %v5844 = vadd.f32 %v5179, %v5648
      %v5845 = vadd.f32 %v5184, %v5653
      %v5846 = vadd.f32 %v5187, %v5656
      %v5847 = vadd.f32 %v5192, %v5661
      %v5848 = vadd.f32 %v5195, %v5664
      %v5849 = vadd.f32 %v5200, %v5669
      %v5850 = vadd.f32 %v5203, %v5672
      %v5851 = vadd.f32 %v5208, %v5677
      %v5852 = vadd.f32 %v5211, %v5680
      %v5853 = vadd.f32 %v5216, %v5685
      %v5854 = vadd.f32 %v5219, %v5688
      %v5855 = vadd.f32 %v5224, %v5693
      %v5856 = vadd.f32 %v5227, %v5696
      %v5857 = vadd.f32 %v5232, %v5701
      %v5858 = vadd.f32 %v5235, %v5704
      %v5859 = vadd.f32 %v5240, %v5709
      %v5860 = vadd.f32 %v5243, %v5712
      %v5861 = vadd.f32 %v5248, %v5717
      %v5862 = vadd.f32 %v5251, %v5720
      %v5863 = vadd.f32 %v5256, %v5725
      %v5864 = vadd.f32 %v5259, %v5728
      %v5865 = vadd.f32 %v5264, %v5733
      %v5866 = vadd.f32 %v5267, %v5736
      %v5867 = vadd.f32 %v5272, %v5741
      %v5868 = vadd.f32 %v5275, %v5744
      %v5869 = vadd.f32 %v5280, %v5749
      %v5870 = vadd.f32 %v5283, %v5752
      %v5871 = vadd.f32 %v5288, %v5757
      %v5872 = vadd.f32 %v5291, %v5760
      %v5873 = vadd.f32 %v5296, %v5765
      %v5874 = vadd.f32 %v5299, %v5768
      %v5875 = vadd.f32 %v5304, %v5773
      %v5876 = vadd.f32 %v5307, %v5776
      %v5877 = vadd.f32 %v5312, %v5781
      %v5878 = vadd.f32 %v5315, %v5784
      %v5879 = vadd.f32 %v5320, %v5789
      %v5880 = vadd.f32 %v5323, %v5792
      %v5881 = vadd.f32 %v5328, %v5797
      %v5882 = vadd.f32 %v5331, %v5800
      %v5883 = vadd.f32 %v5336, %v5805
      %v5884 = vadd.f32 %v5339, %v5808
      %v5885 = vadd.f32 %v5344, %v5813
      %v5886 = vadd.f32 %v5347, %v5816
      %v5887 = vadd.f32 %v5352, %v5821
      %v5888 = vadd.f32 %v5355, %v5824
      %v5889 = vadd.f32 %v5360, %v5829
      %v5890 = vadd.f32 %v5363, %v5832
      %v5891 = vld [vmem:[#allocation4 + $0x60] sm:$0xff]
      %v5892 = vld [vmem:[#allocation4 + $0x68] sm:$0xff]
      %v5893 = vld [vmem:[#allocation4 + $0x70] sm:$0xff]
      %v5894 = vld [vmem:[#allocation4 + $0x78] sm:$0xff]
      %v5895 = vld [vmem:[#allocation4 + $0x80] sm:$0xff]
      %v5896 = vld [vmem:[#allocation4 + $0x88] sm:$0xff]
      %v5897 = vld [vmem:[#allocation4 + $0x90] sm:$0xff]
      %v5898 = vld [vmem:[#allocation4 + $0x98] sm:$0xff]
      %v5899 = vld [vmem:[#allocation4 + $0xa0] sm:$0xff]
      %v5900 = vld [vmem:[#allocation4 + $0xa8] sm:$0xff]
      %v5901 = vld [vmem:[#allocation4 + $0xb0] sm:$0xff]
      %v5902 = vld [vmem:[#allocation4 + $0xb8] sm:$0xff]
      %v5903 = vld [vmem:[#allocation4 + $0xc0] sm:$0xff]
      %v5904 = vld [vmem:[#allocation4 + $0xc8] sm:$0xff]
      %v5905 = vld [vmem:[#allocation4 + $0xd0] sm:$0xff]
      %v5906 = vld [vmem:[#allocation4 + $0xd8] sm:$0xff]
      %v5907 = vld [vmem:[#allocation4 + $0xe0] sm:$0xff]
      %v5908 = vld [vmem:[#allocation4 + $0xe8] sm:$0xff]
      %v5909 = vld [vmem:[#allocation4 + $0xf0] sm:$0xff]
      %v5910 = vld [vmem:[#allocation4 + $0xf8] sm:$0xff]
      %v5911 = vld [vmem:[#allocation4 + $0x100] sm:$0xff]
      %v5912 = vld [vmem:[#allocation4 + $0x108] sm:$0xff]
      %v5913 = vld [vmem:[#allocation4 + $0x110] sm:$0xff]
      %v5914 = vld [vmem:[#allocation4 + $0x118] sm:$0xff]
      %v5915 = vld [vmem:[#allocation4 + $0x120] sm:$0xff]
      %v5916 = vld [vmem:[#allocation4 + $0x128] sm:$0xff]
      %v5917 = vld [vmem:[#allocation4 + $0x130] sm:$0xff]
      %v5918 = vld [vmem:[#allocation4 + $0x138] sm:$0xff]
      %v5919 = vld [vmem:[#allocation4 + $0x140] sm:$0xff]
      %v5920 = vld [vmem:[#allocation4 + $0x148] sm:$0xff]
      %v5921 = vld [vmem:[#allocation4 + $0x150] sm:$0xff]
      %v5922 = vld [vmem:[#allocation4 + $0x158] sm:$0xff]
      %v5923 = vld [vmem:[#allocation4 + $0x160] sm:$0xff]
      %v5924 = vld [vmem:[#allocation4 + $0x168] sm:$0xff]
      %v5925 = vld [vmem:[#allocation4 + $0x170] sm:$0xff]
      %v5926 = vld [vmem:[#allocation4 + $0x178] sm:$0xff]
      %v5927 = vld [vmem:[#allocation4 + $0x180] sm:$0xff]
      %v5928 = vld [vmem:[#allocation4 + $0x188] sm:$0xff]
      %v5929 = vld [vmem:[#allocation4 + $0x190] sm:$0xff]
      %v5930 = vld [vmem:[#allocation4 + $0x198] sm:$0xff]
      %v5931 = vld [vmem:[#allocation4 + $0x1a0] sm:$0xff]
      %v5932 = vld [vmem:[#allocation4 + $0x1a8] sm:$0xff]
      %v5933 = vld [vmem:[#allocation4 + $0x1b0] sm:$0xff]
      %v5934 = vld [vmem:[#allocation4 + $0x1b8] sm:$0xff]
      %v5935 = vld [vmem:[#allocation4 + $0x1c0] sm:$0xff]
      %v5936 = vld [vmem:[#allocation4 + $0x1c8] sm:$0xff]
      %v5937 = vld [vmem:[#allocation4 + $0x1d0] sm:$0xff]
      %v5938 = vld [vmem:[#allocation4 + $0x1d8] sm:$0xff]
      %v5939 = vld [vmem:[#allocation4 + $0x1e0] sm:$0xff]
      %v5940 = vld [vmem:[#allocation4 + $0x1e8] sm:$0xff]
      %v5941 = vld [vmem:[#allocation4 + $0x1f0] sm:$0xff]
      %v5942 = vld [vmem:[#allocation4 + $0x1f8] sm:$0xff]
      %v5943 = vld [vmem:[#allocation4 + $0x200] sm:$0xff]
      %v5944 = vld [vmem:[#allocation4 + $0x208] sm:$0xff]
      %v5945 = vld [vmem:[#allocation4 + $0x210] sm:$0xff]
      %v5946 = vld [vmem:[#allocation4 + $0x218] sm:$0xff]
      %s5947 = scalar_lea.vmem %s7, 204
      %v5948 = vld [vmem:[%s5947] sm:$0xf]
      %v5949 = vld [vmem:[%s5947 + $0x4] sm:$0xf]
      %v5950 = vld [vmem:[%s5947 + $0x8] sm:$0xf]
      %v5951 = vld [vmem:[%s5947 + $0xc] sm:$0xf]
      %v5952 = vld [vmem:[%s5947 + $0x10] sm:$0xf]
      %v5953 = vld [vmem:[%s5947 + $0x14] sm:$0xf]
      %v5954 = vld [vmem:[%s5947 + $0x18] sm:$0xf]
      %v5955 = vld [vmem:[%s5947 + $0x1c] sm:$0xf]
      %v5956 = vld [vmem:[%s5947 + $0x20] sm:$0xf]
      %v5957 = vld [vmem:[%s5947 + $0x24] sm:$0xf]
      %v5958 = vld [vmem:[%s5947 + $0x28] sm:$0xf]
      %v5959 = vld [vmem:[%s5947 + $0x2c] sm:$0xf]
      %v5960 = vld [vmem:[%s5947 + $0x30] sm:$0xf]
      %v5961 = vld [vmem:[%s5947 + $0x34] sm:$0xf]
      %v5962 = vld [vmem:[%s5947 + $0x38] sm:$0xf]
      %v5963 = vld [vmem:[%s5947 + $0x3c] sm:$0xf]
      %v5964 = vld [vmem:[%s5947 + $0x40] sm:$0xf]
      %v5982 = vunpack.c.l.b16 %v5948
      %v5983 = vunpack.c.l.b16 %v5949
      %v5984 = vunpack.c.l.b16 %v5950
      %v5985 = vunpack.c.l.b16 %v5951
      %v5986 = vunpack.c.l.b16 %v5952
      %v5987 = vunpack.c.l.b16 %v5953
      %v5988 = vunpack.c.l.b16 %v5954
      %v5989 = vunpack.c.l.b16 %v5955
      %v5990 = vunpack.c.l.b16 %v5956
      %v5991 = vunpack.c.l.b16 %v5957
      %v5992 = vunpack.c.l.b16 %v5958
      %v5993 = vunpack.c.l.b16 %v5959
      %v5994 = vunpack.c.l.b16 %v5960
      %v5995 = vunpack.c.l.b16 %v5961
      %v5996 = vunpack.c.l.b16 %v5962
      %v5997 = vunpack.c.l.b16 %v5963
      %v5998 = vunpack.c.l.b16 %v5964
      %v5999 = vpack.c.b16 %v5983, %v5982
      %v6000 = vpack.c.b16 %v5985, %v5984
      %v6001 = vpack.c.b16 %v5987, %v5986
      %v6002 = vpack.c.b16 %v5989, %v5988
      %v6003 = vpack.c.b16 %v5991, %v5990
      %v6004 = vpack.c.b16 %v5993, %v5992
      %v6005 = vpack.c.b16 %v5995, %v5994
      %v6006 = vpack.c.b16 %v5997, %v5996
      %v6007 = vpack.c.b16 %v5998, %v5998
      %v6017 = vsel %vm426, %v5892, 0
      %v6020 = vsel %vm426, %v5894, 0
      %v6023 = vsel %vm426, %v5896, 0
      %v6026 = vsel %vm426, %v5898, 0
      %v6029 = vsel %vm426, %v5900, 0
      %v6032 = vsel %vm426, %v5902, 0
      %v6035 = vsel %vm426, %v5904, 0
      %v6038 = vsel %vm426, %v5906, 0
      %v6041 = vsel %vm426, %v5908, 0
      %v6044 = vsel %vm426, %v5910, 0
      %v6047 = vsel %vm426, %v5912, 0
      %v6050 = vsel %vm426, %v5914, 0
      %v6053 = vsel %vm426, %v5916, 0
      %v6056 = vsel %vm426, %v5918, 0
      %v6059 = vsel %vm426, %v5920, 0
      %v6062 = vsel %vm426, %v5922, 0
      %v6065 = vsel %vm426, %v5924, 0
      %v6068 = vsel %vm426, %v5926, 0
      %v6071 = vsel %vm426, %v5928, 0
      %v6074 = vsel %vm426, %v5930, 0
      %v6077 = vsel %vm426, %v5932, 0
      %v6080 = vsel %vm426, %v5934, 0
      %v6083 = vsel %vm426, %v5936, 0
      %v6086 = vsel %vm426, %v5938, 0
      %v6089 = vsel %vm426, %v5940, 0
      %v6092 = vsel %vm426, %v5942, 0
      %v6095 = vsel %vm426, %v5944, 0
      %v6098 = vsel %vm426, %v5946, 0
      %v6101 = vsel %vm4788, %v6007, 0
      %6103 = vmatprep.subr.bf16.mxu0 0
      %6104 = vmatpush1.bf16.msra.mxu0 %v5999
      %6105 = vmatprep.subr.bf16.mxu0 0
      %6106 = vmatpush1.bf16.msra.mxu0 %v6000
      %6107 = vmatprep.subr.bf16.mxu0 0
      %6108 = vmatpush1.bf16.msra.mxu0 %v6001
      %6109 = vmatprep.subr.bf16.mxu0 0
      %6110 = vmatpush1.bf16.msra.mxu0 %v6002
      %6111 = vmatprep.subr.bf16.mxu0 0
      %6112 = vmatpush1.bf16.msra.mxu0 %v6003
      %6113 = vmatprep.subr.bf16.mxu0 0
      %6114 = vmatpush1.bf16.msra.mxu0 %v6004
      %6115 = vmatprep.subr.bf16.mxu0 0
      %6116 = vmatpush1.bf16.msra.mxu0 %v6005
      %6117 = vmatprep.subr.bf16.mxu0 0
      %6118 = vmatpush1.bf16.msra.mxu0 %v6006
      %6119 = vmatprep.subr.bf16.mxu0 0
      %6120 = vmatpush1.bf16.msra.mxu0 %v6101
      %6121 = vmatprep.subr.bf16.mxu0 0
      %6122 = vmatpush1.bf16.msra.mxu0 0
      %6123 = vmatprep.subr.bf16.mxu0 0
      %6124 = vmatpush1.bf16.msra.mxu0 0
      %6125 = vmatprep.subr.bf16.mxu0 0
      %6126 = vmatpush1.bf16.msra.mxu0 0
      %6127 = vmatprep.subr.bf16.mxu0 0
      %6128 = vmatpush1.bf16.msra.mxu0 0
      %6129 = vmatprep.subr.bf16.mxu0 0
      %6130 = vmatpush1.bf16.msra.mxu0 0
      %6131 = vmatprep.subr.bf16.mxu0 0
      %6132 = vmatpush1.bf16.msra.mxu0 0
      %6133 = vmatprep.subr.bf16.mxu0 0
      %6134 = vmatpush1.bf16.msra.mxu0 0
      %6135 = vmatprep.mubr.bf16.mxu0 %v6017
      %6136 = vmatmul.mubr.bf16.gmra.mrb[0].mxu0 %v5891
      %v6137 = vpop.f32.mrb[0].mxu0
      %v6138 = vadd.f32 0.0, %v6137
      %v6139 = vpop.f32.mrb[0].mxu0
      %v6140 = vpop.f32.mrb[0].mxu0
      %v6141 = vadd.f32 0.0, %v6140
      %v6142 = vpop.f32.mrb[0].mxu0
      %6143 = vmatprep.mubr.bf16.mxu0 %v6020
      %6144 = vmatmul.mubr.bf16.gmra.mrb[0].mxu0 %v5893
      %v6145 = vpop.f32.mrb[0].mxu0
      %v6146 = vadd.f32 0.0, %v6145
      %v6147 = vpop.f32.mrb[0].mxu0
      %v6148 = vpop.f32.mrb[0].mxu0
      %v6149 = vadd.f32 0.0, %v6148
      %v6150 = vpop.f32.mrb[0].mxu0
      %6151 = vmatprep.mubr.bf16.mxu0 %v6023
      %6152 = vmatmul.mubr.bf16.gmra.mrb[0].mxu0 %v5895
      %v6153 = vpop.f32.mrb[0].mxu0
      %v6154 = vadd.f32 0.0, %v6153
      %v6155 = vpop.f32.mrb[0].mxu0
      %v6156 = vpop.f32.mrb[0].mxu0
      %v6157 = vadd.f32 0.0, %v6156
      %v6158 = vpop.f32.mrb[0].mxu0
      %6159 = vmatprep.mubr.bf16.mxu0 %v6026
      %6160 = vmatmul.mubr.bf16.gmra.mrb[0].mxu0 %v5897
      %v6161 = vpop.f32.mrb[0].mxu0
      %v6162 = vadd.f32 0.0, %v6161
      %v6163 = vpop.f32.mrb[0].mxu0
      %v6164 = vpop.f32.mrb[0].mxu0
      %v6165 = vadd.f32 0.0, %v6164
      %v6166 = vpop.f32.mrb[0].mxu0
      %6167 = vmatprep.mubr.bf16.mxu0 %v6029
      %6168 = vmatmul.mubr.bf16.gmra.mrb[0].mxu0 %v5899
      %v6169 = vpop.f32.mrb[0].mxu0
      %v6170 = vadd.f32 0.0, %v6169
      %v6171 = vpop.f32.mrb[0].mxu0
      %v6172 = vpop.f32.mrb[0].mxu0
      %v6173 = vadd.f32 0.0, %v6172
      %v6174 = vpop.f32.mrb[0].mxu0
      %6175 = vmatprep.mubr.bf16.mxu0 %v6032
      %6176 = vmatmul.mubr.bf16.gmra.mrb[0].mxu0 %v5901
      %v6177 = vpop.f32.mrb[0].mxu0
      %v6178 = vadd.f32 0.0, %v6177
      %v6179 = vpop.f32.mrb[0].mxu0
      %v6180 = vpop.f32.mrb[0].mxu0
      %v6181 = vadd.f32 0.0, %v6180
      %v6182 = vpop.f32.mrb[0].mxu0
      %6183 = vmatprep.mubr.bf16.mxu0 %v6035
      %6184 = vmatmul.mubr.bf16.gmra.mrb[0].mxu0 %v5903
      %v6185 = vpop.f32.mrb[0].mxu0
      %v6186 = vadd.f32 0.0, %v6185
      %v6187 = vpop.f32.mrb[0].mxu0
      %v6188 = vpop.f32.mrb[0].mxu0
      %v6189 = vadd.f32 0.0, %v6188
      %v6190 = vpop.f32.mrb[0].mxu0
      %6191 = vmatprep.mubr.bf16.mxu0 %v6038
      %6192 = vmatmul.mubr.bf16.gmra.mrb[0].mxu0 %v5905
      %v6193 = vpop.f32.mrb[0].mxu0
      %v6194 = vadd.f32 0.0, %v6193
      %v6195 = vpop.f32.mrb[0].mxu0
      %v6196 = vpop.f32.mrb[0].mxu0
      %v6197 = vadd.f32 0.0, %v6196
      %v6198 = vpop.f32.mrb[0].mxu0
      %6199 = vmatprep.mubr.bf16.mxu0 %v6041
      %6200 = vmatmul.mubr.bf16.gmra.mrb[0].mxu0 %v5907
      %v6201 = vpop.f32.mrb[0].mxu0
      %v6202 = vadd.f32 0.0, %v6201
      %v6203 = vpop.f32.mrb[0].mxu0
      %v6204 = vpop.f32.mrb[0].mxu0
      %v6205 = vadd.f32 0.0, %v6204
      %v6206 = vpop.f32.mrb[0].mxu0
      %6207 = vmatprep.mubr.bf16.mxu0 %v6044
      %6208 = vmatmul.mubr.bf16.gmra.mrb[0].mxu0 %v5909
      %v6209 = vpop.f32.mrb[0].mxu0
      %v6210 = vadd.f32 0.0, %v6209
      %v6211 = vpop.f32.mrb[0].mxu0
      %v6212 = vpop.f32.mrb[0].mxu0
      %v6213 = vadd.f32 0.0, %v6212
      %v6214 = vpop.f32.mrb[0].mxu0
      %6215 = vmatprep.mubr.bf16.mxu0 %v6047
      %6216 = vmatmul.mubr.bf16.gmra.mrb[0].mxu0 %v5911
      %v6217 = vpop.f32.mrb[0].mxu0
      %v6218 = vadd.f32 0.0, %v6217
      %v6219 = vpop.f32.mrb[0].mxu0
      %v6220 = vpop.f32.mrb[0].mxu0
      %v6221 = vadd.f32 0.0, %v6220
      %v6222 = vpop.f32.mrb[0].mxu0
      %6223 = vmatprep.mubr.bf16.mxu0 %v6050
      %6224 = vmatmul.mubr.bf16.gmra.mrb[0].mxu0 %v5913
      %v6225 = vpop.f32.mrb[0].mxu0
      %v6226 = vadd.f32 0.0, %v6225
      %v6227 = vpop.f32.mrb[0].mxu0
      %v6228 = vpop.f32.mrb[0].mxu0
      %v6229 = vadd.f32 0.0, %v6228
      %v6230 = vpop.f32.mrb[0].mxu0
      %6231 = vmatprep.mubr.bf16.mxu0 %v6053
      %6232 = vmatmul.mubr.bf16.gmra.mrb[0].mxu0 %v5915
      %v6233 = vpop.f32.mrb[0].mxu0
      %v6234 = vadd.f32 0.0, %v6233
      %v6235 = vpop.f32.mrb[0].mxu0
      %v6236 = vpop.f32.mrb[0].mxu0
      %v6237 = vadd.f32 0.0, %v6236
      %v6238 = vpop.f32.mrb[0].mxu0
      %6239 = vmatprep.mubr.bf16.mxu0 %v6056
      %6240 = vmatmul.mubr.bf16.gmra.mrb[0].mxu0 %v5917
      %v6241 = vpop.f32.mrb[0].mxu0
      %v6242 = vadd.f32 0.0, %v6241
      %v6243 = vpop.f32.mrb[0].mxu0
      %v6244 = vpop.f32.mrb[0].mxu0
      %v6245 = vadd.f32 0.0, %v6244
      %v6246 = vpop.f32.mrb[0].mxu0
      %6247 = vmatprep.mubr.bf16.mxu0 %v6059
      %6248 = vmatmul.mubr.bf16.gmra.mrb[0].mxu0 %v5919
      %v6249 = vpop.f32.mrb[0].mxu0
      %v6250 = vadd.f32 0.0, %v6249
      %v6251 = vpop.f32.mrb[0].mxu0
      %v6252 = vpop.f32.mrb[0].mxu0
      %v6253 = vadd.f32 0.0, %v6252
      %v6254 = vpop.f32.mrb[0].mxu0
      %6255 = vmatprep.mubr.bf16.mxu0 %v6062
      %6256 = vmatmul.mubr.bf16.gmra.mrb[0].mxu0 %v5921
      %v6257 = vpop.f32.mrb[0].mxu0
      %v6258 = vadd.f32 0.0, %v6257
      %v6259 = vpop.f32.mrb[0].mxu0
      %v6260 = vpop.f32.mrb[0].mxu0
      %v6261 = vadd.f32 0.0, %v6260
      %v6262 = vpop.f32.mrb[0].mxu0
      %6263 = vmatprep.mubr.bf16.mxu0 %v6065
      %6264 = vmatmul.mubr.bf16.gmra.mrb[0].mxu0 %v5923
      %v6265 = vpop.f32.mrb[0].mxu0
      %v6266 = vadd.f32 0.0, %v6265
      %v6267 = vpop.f32.mrb[0].mxu0
      %v6268 = vpop.f32.mrb[0].mxu0
      %v6269 = vadd.f32 0.0, %v6268
      %v6270 = vpop.f32.mrb[0].mxu0
      %6271 = vmatprep.mubr.bf16.mxu0 %v6068
      %6272 = vmatmul.mubr.bf16.gmra.mrb[0].mxu0 %v5925
      %v6273 = vpop.f32.mrb[0].mxu0
      %v6274 = vadd.f32 0.0, %v6273
      %v6275 = vpop.f32.mrb[0].mxu0
      %v6276 = vpop.f32.mrb[0].mxu0
      %v6277 = vadd.f32 0.0, %v6276
      %v6278 = vpop.f32.mrb[0].mxu0
      %6279 = vmatprep.mubr.bf16.mxu0 %v6071
      %6280 = vmatmul.mubr.bf16.gmra.mrb[0].mxu0 %v5927
      %v6281 = vpop.f32.mrb[0].mxu0
      %v6282 = vadd.f32 0.0, %v6281
      %v6283 = vpop.f32.mrb[0].mxu0
      %v6284 = vpop.f32.mrb[0].mxu0
      %v6285 = vadd.f32 0.0, %v6284
      %v6286 = vpop.f32.mrb[0].mxu0
      %6287 = vmatprep.mubr.bf16.mxu0 %v6074
      %6288 = vmatmul.mubr.bf16.gmra.mrb[0].mxu0 %v5929
      %v6289 = vpop.f32.mrb[0].mxu0
      %v6290 = vadd.f32 0.0, %v6289
      %v6291 = vpop.f32.mrb[0].mxu0
      %v6292 = vpop.f32.mrb[0].mxu0
      %v6293 = vadd.f32 0.0, %v6292
      %v6294 = vpop.f32.mrb[0].mxu0
      %6295 = vmatprep.mubr.bf16.mxu0 %v6077
      %6296 = vmatmul.mubr.bf16.gmra.mrb[0].mxu0 %v5931
      %v6297 = vpop.f32.mrb[0].mxu0
      %v6298 = vadd.f32 0.0, %v6297
      %v6299 = vpop.f32.mrb[0].mxu0
      %v6300 = vpop.f32.mrb[0].mxu0
      %v6301 = vadd.f32 0.0, %v6300
      %v6302 = vpop.f32.mrb[0].mxu0
      %6303 = vmatprep.mubr.bf16.mxu0 %v6080
      %6304 = vmatmul.mubr.bf16.gmra.mrb[0].mxu0 %v5933
      %v6305 = vpop.f32.mrb[0].mxu0
      %v6306 = vadd.f32 0.0, %v6305
      %v6307 = vpop.f32.mrb[0].mxu0
      %v6308 = vpop.f32.mrb[0].mxu0
      %v6309 = vadd.f32 0.0, %v6308
      %v6310 = vpop.f32.mrb[0].mxu0
      %6311 = vmatprep.mubr.bf16.mxu0 %v6083
      %6312 = vmatmul.mubr.bf16.gmra.mrb[0].mxu0 %v5935
      %v6313 = vpop.f32.mrb[0].mxu0
      %v6314 = vadd.f32 0.0, %v6313
      %v6315 = vpop.f32.mrb[0].mxu0
      %v6316 = vpop.f32.mrb[0].mxu0
      %v6317 = vadd.f32 0.0, %v6316
      %v6318 = vpop.f32.mrb[0].mxu0
      %6319 = vmatprep.mubr.bf16.mxu0 %v6086
      %6320 = vmatmul.mubr.bf16.gmra.mrb[0].mxu0 %v5937
      %v6321 = vpop.f32.mrb[0].mxu0
      %v6322 = vadd.f32 0.0, %v6321
      %v6323 = vpop.f32.mrb[0].mxu0
      %v6324 = vpop.f32.mrb[0].mxu0
      %v6325 = vadd.f32 0.0, %v6324
      %v6326 = vpop.f32.mrb[0].mxu0
      %6327 = vmatprep.mubr.bf16.mxu0 %v6089
      %6328 = vmatmul.mubr.bf16.gmra.mrb[0].mxu0 %v5939
      %v6329 = vpop.f32.mrb[0].mxu0
      %v6330 = vadd.f32 0.0, %v6329
      %v6331 = vpop.f32.mrb[0].mxu0
      %v6332 = vpop.f32.mrb[0].mxu0
      %v6333 = vadd.f32 0.0, %v6332
      %v6334 = vpop.f32.mrb[0].mxu0
      %6335 = vmatprep.mubr.bf16.mxu0 %v6092
      %6336 = vmatmul.mubr.bf16.gmra.mrb[0].mxu0 %v5941
      %v6337 = vpop.f32.mrb[0].mxu0
      %v6338 = vadd.f32 0.0, %v6337
      %v6339 = vpop.f32.mrb[0].mxu0
      %v6340 = vpop.f32.mrb[0].mxu0
      %v6341 = vadd.f32 0.0, %v6340
      %v6342 = vpop.f32.mrb[0].mxu0
      %6343 = vmatprep.mubr.bf16.mxu0 %v6095
      %6344 = vmatmul.mubr.bf16.gmra.mrb[0].mxu0 %v5943
      %v6345 = vpop.f32.mrb[0].mxu0
      %v6346 = vadd.f32 0.0, %v6345
      %v6347 = vpop.f32.mrb[0].mxu0
      %v6348 = vpop.f32.mrb[0].mxu0
      %v6349 = vadd.f32 0.0, %v6348
      %v6350 = vpop.f32.mrb[0].mxu0
      %6351 = vmatprep.mubr.bf16.mxu0 %v6098
      %6352 = vmatmul.mubr.bf16.gmra.mrb[0].mxu0 %v5945
      %v6353 = vpop.f32.mrb[0].mxu0
      %v6354 = vadd.f32 0.0, %v6353
      %v6355 = vpop.f32.mrb[0].mxu0
      %v6356 = vpop.f32.mrb[0].mxu0
      %v6357 = vadd.f32 0.0, %v6356
      %v6358 = vpop.f32.mrb[0].mxu0
      %6359 = vdwg.mxu0
      %v6360 = vadd.f32 %v5835, %v6138
      %v6361 = vadd.f32 %v5836, %v6141
      %v6362 = vadd.f32 %v5837, %v6146
      %v6363 = vadd.f32 %v5838, %v6149
      %v6364 = vadd.f32 %v5839, %v6154
      %v6365 = vadd.f32 %v5840, %v6157
      %v6366 = vadd.f32 %v5841, %v6162
      %v6367 = vadd.f32 %v5842, %v6165
      %v6368 = vadd.f32 %v5843, %v6170
      %v6369 = vadd.f32 %v5844, %v6173
      %v6370 = vadd.f32 %v5845, %v6178
      %v6371 = vadd.f32 %v5846, %v6181
      %v6372 = vadd.f32 %v5847, %v6186
      %v6373 = vadd.f32 %v5848, %v6189
      %v6374 = vadd.f32 %v5849, %v6194
      %v6375 = vadd.f32 %v5850, %v6197
      %v6376 = vadd.f32 %v5851, %v6202
      %v6377 = vadd.f32 %v5852, %v6205
      %v6378 = vadd.f32 %v5853, %v6210
      %v6379 = vadd.f32 %v5854, %v6213
      %v6380 = vadd.f32 %v5855, %v6218
      %v6381 = vadd.f32 %v5856, %v6221
      %v6382 = vadd.f32 %v5857, %v6226
      %v6383 = vadd.f32 %v5858, %v6229
      %v6384 = vadd.f32 %v5859, %v6234
      %v6385 = vadd.f32 %v5860, %v6237
      %v6386 = vadd.f32 %v5861, %v6242
      %v6387 = vadd.f32 %v5862, %v6245
      %v6388 = vadd.f32 %v5863, %v6250
      %v6389 = vadd.f32 %v5864, %v6253
      %v6390 = vadd.f32 %v5865, %v6258
      %v6391 = vadd.f32 %v5866, %v6261
      %v6392 = vadd.f32 %v5867, %v6266
      %v6393 = vadd.f32 %v5868, %v6269
      %v6394 = vadd.f32 %v5869, %v6274
      %v6395 = vadd.f32 %v5870, %v6277
      %v6396 = vadd.f32 %v5871, %v6282
      %v6397 = vadd.f32 %v5872, %v6285
      %v6398 = vadd.f32 %v5873, %v6290
      %v6399 = vadd.f32 %v5874, %v6293
      %v6400 = vadd.f32 %v5875, %v6298
      %v6401 = vadd.f32 %v5876, %v6301
      %v6402 = vadd.f32 %v5877, %v6306
      %v6403 = vadd.f32 %v5878, %v6309
      %v6404 = vadd.f32 %v5879, %v6314
      %v6405 = vadd.f32 %v5880, %v6317
      %v6406 = vadd.f32 %v5881, %v6322
      %v6407 = vadd.f32 %v5882, %v6325
      %v6408 = vadd.f32 %v5883, %v6330
      %v6409 = vadd.f32 %v5884, %v6333
      %v6410 = vadd.f32 %v5885, %v6338
      %v6411 = vadd.f32 %v5886, %v6341
      %v6412 = vadd.f32 %v5887, %v6346
      %v6413 = vadd.f32 %v5888, %v6349
      %v6414 = vadd.f32 %v5889, %v6354
      %v6415 = vadd.f32 %v5890, %v6357
      %v6416 = vld [vmem:[%s8] sm:$0x1]
      %v6418 = vlaneseq
      %v6419 = vshrl.u32 %v6418, 7
      %v6420 = vsub.s32 0, %v6419
      %v6421 = vrot.slane %v6416, %v6420
      %v6423 = vadd.f32 %v6360, %v6421
      %v6424 = vadd.f32 %v6361, %v6421
      %v6425 = vadd.f32 %v6362, %v6421
      %v6426 = vadd.f32 %v6363, %v6421
      %v6427 = vadd.f32 %v6364, %v6421
      %v6428 = vadd.f32 %v6365, %v6421
      %v6429 = vadd.f32 %v6366, %v6421
      %v6430 = vadd.f32 %v6367, %v6421
      %v6431 = vadd.f32 %v6368, %v6421
      %v6432 = vadd.f32 %v6369, %v6421
      %v6433 = vadd.f32 %v6370, %v6421
      %v6434 = vadd.f32 %v6371, %v6421
      %v6435 = vadd.f32 %v6372, %v6421
      %v6436 = vadd.f32 %v6373, %v6421
      %v6437 = vadd.f32 %v6374, %v6421
      %v6438 = vadd.f32 %v6375, %v6421
      %v6439 = vadd.f32 %v6376, %v6421
      %v6440 = vadd.f32 %v6377, %v6421
      %v6441 = vadd.f32 %v6378, %v6421
      %v6442 = vadd.f32 %v6379, %v6421
      %v6443 = vadd.f32 %v6380, %v6421
      %v6444 = vadd.f32 %v6381, %v6421
      %v6445 = vadd.f32 %v6382, %v6421
      %v6446 = vadd.f32 %v6383, %v6421
      %v6447 = vadd.f32 %v6384, %v6421
      %v6448 = vadd.f32 %v6385, %v6421
      %v6449 = vadd.f32 %v6386, %v6421
      %v6450 = vadd.f32 %v6387, %v6421
      %v6451 = vadd.f32 %v6388, %v6421
      %v6452 = vadd.f32 %v6389, %v6421
      %v6453 = vadd.f32 %v6390, %v6421
      %v6454 = vadd.f32 %v6391, %v6421
      %v6455 = vadd.f32 %v6392, %v6421
      %v6456 = vadd.f32 %v6393, %v6421
      %v6457 = vadd.f32 %v6394, %v6421
      %v6458 = vadd.f32 %v6395, %v6421
      %v6459 = vadd.f32 %v6396, %v6421
      %v6460 = vadd.f32 %v6397, %v6421
      %v6461 = vadd.f32 %v6398, %v6421
      %v6462 = vadd.f32 %v6399, %v6421
      %v6463 = vadd.f32 %v6400, %v6421
      %v6464 = vadd.f32 %v6401, %v6421
      %v6465 = vadd.f32 %v6402, %v6421
      %v6466 = vadd.f32 %v6403, %v6421
      %v6467 = vadd.f32 %v6404, %v6421
      %v6468 = vadd.f32 %v6405, %v6421
      %v6469 = vadd.f32 %v6406, %v6421
      %v6470 = vadd.f32 %v6407, %v6421
      %v6471 = vadd.f32 %v6408, %v6421
      %v6472 = vadd.f32 %v6409, %v6421
      %v6473 = vadd.f32 %v6410, %v6421
      %v6474 = vadd.f32 %v6411, %v6421
      %v6475 = vadd.f32 %v6412, %v6421
      %v6476 = vadd.f32 %v6413, %v6421
      %v6477 = vadd.f32 %v6414, %v6421
      %v6478 = vadd.f32 %v6415, %v6421
      %v6479 = vmax.f32 %v6423, 0.0
      %v6480 = vmax.f32 %v6424, 0.0
      %v6481 = vmax.f32 %v6425, 0.0
      %v6482 = vmax.f32 %v6426, 0.0
      %v6483 = vmax.f32 %v6427, 0.0
      %v6484 = vmax.f32 %v6428, 0.0
      %v6485 = vmax.f32 %v6429, 0.0
      %v6486 = vmax.f32 %v6430, 0.0
      %v6487 = vmax.f32 %v6431, 0.0
      %v6488 = vmax.f32 %v6432, 0.0
      %v6489 = vmax.f32 %v6433, 0.0
      %v6490 = vmax.f32 %v6434, 0.0
      %v6491 = vmax.f32 %v6435, 0.0
      %v6492 = vmax.f32 %v6436, 0.0
      %v6493 = vmax.f32 %v6437, 0.0
      %v6494 = vmax.f32 %v6438, 0.0
      %v6495 = vmax.f32 %v6439, 0.0
      %v6496 = vmax.f32 %v6440, 0.0
      %v6497 = vmax.f32 %v6441, 0.0
      %v6498 = vmax.f32 %v6442, 0.0
      %v6499 = vmax.f32 %v6443, 0.0
      %v6500 = vmax.f32 %v6444, 0.0
      %v6501 = vmax.f32 %v6445, 0.0
      %v6502 = vmax.f32 %v6446, 0.0
      %v6503 = vmax.f32 %v6447, 0.0
      %v6504 = vmax.f32 %v6448, 0.0
      %v6505 = vmax.f32 %v6449, 0.0
      %v6506 = vmax.f32 %v6450, 0.0
      %v6507 = vmax.f32 %v6451, 0.0
      %v6508 = vmax.f32 %v6452, 0.0
      %v6509 = vmax.f32 %v6453, 0.0
      %v6510 = vmax.f32 %v6454, 0.0
      %v6511 = vmax.f32 %v6455, 0.0
      %v6512 = vmax.f32 %v6456, 0.0
      %v6513 = vmax.f32 %v6457, 0.0
      %v6514 = vmax.f32 %v6458, 0.0
      %v6515 = vmax.f32 %v6459, 0.0
      %v6516 = vmax.f32 %v6460, 0.0
      %v6517 = vmax.f32 %v6461, 0.0
      %v6518 = vmax.f32 %v6462, 0.0
      %v6519 = vmax.f32 %v6463, 0.0
      %v6520 = vmax.f32 %v6464, 0.0
      %v6521 = vmax.f32 %v6465, 0.0
      %v6522 = vmax.f32 %v6466, 0.0
      %v6523 = vmax.f32 %v6467, 0.0
      %v6524 = vmax.f32 %v6468, 0.0
      %v6525 = vmax.f32 %v6469, 0.0
      %v6526 = vmax.f32 %v6470, 0.0
      %v6527 = vmax.f32 %v6471, 0.0
      %v6528 = vmax.f32 %v6472, 0.0
      %v6529 = vmax.f32 %v6473, 0.0
      %v6530 = vmax.f32 %v6474, 0.0
      %v6531 = vmax.f32 %v6475, 0.0
      %v6532 = vmax.f32 %v6476, 0.0
      %v6533 = vmax.f32 %v6477, 0.0
      %v6534 = vmax.f32 %v6478, 0.0
      %v6535 = vpack.c.bf16 %v6480, %v6479
      %v6536 = vpack.c.bf16 %v6482, %v6481
      %v6537 = vpack.c.bf16 %v6484, %v6483
      %v6538 = vpack.c.bf16 %v6486, %v6485
      %v6539 = vpack.c.bf16 %v6488, %v6487
      %v6540 = vpack.c.bf16 %v6490, %v6489
      %v6541 = vpack.c.bf16 %v6492, %v6491
      %v6542 = vpack.c.bf16 %v6494, %v6493
      %v6543 = vpack.c.bf16 %v6496, %v6495
      %v6544 = vpack.c.bf16 %v6498, %v6497
      %v6545 = vpack.c.bf16 %v6500, %v6499
      %v6546 = vpack.c.bf16 %v6502, %v6501
      %v6547 = vpack.c.bf16 %v6504, %v6503
      %v6548 = vpack.c.bf16 %v6506, %v6505
      %v6549 = vpack.c.bf16 %v6508, %v6507
      %v6550 = vpack.c.bf16 %v6510, %v6509
      %v6551 = vpack.c.bf16 %v6512, %v6511
      %v6552 = vpack.c.bf16 %v6514, %v6513
      %v6553 = vpack.c.bf16 %v6516, %v6515
      %v6554 = vpack.c.bf16 %v6518, %v6517
      %v6555 = vpack.c.bf16 %v6520, %v6519
      %v6556 = vpack.c.bf16 %v6522, %v6521
      %v6557 = vpack.c.bf16 %v6524, %v6523
      %v6558 = vpack.c.bf16 %v6526, %v6525
      %v6559 = vpack.c.bf16 %v6528, %v6527
      %v6560 = vpack.c.bf16 %v6530, %v6529
      %v6561 = vpack.c.bf16 %v6532, %v6531
      %v6562 = vpack.c.bf16 %v6534, %v6533
      %6563 = vst [vmem:[#allocation5 + $0x20] sm:$0xff] %v6535
      %6564 = vst [vmem:[#allocation5 + $0x28] sm:$0xff] %v6536
      %6565 = vst [vmem:[#allocation5 + $0x40] sm:$0xff] %v6537
      %6566 = vst [vmem:[#allocation5 + $0x48] sm:$0xff] %v6538
      %6567 = vst [vmem:[#allocation5 + $0x60] sm:$0xff] %v6539
      %6568 = vst [vmem:[#allocation5 + $0x68] sm:$0xff] %v6540
      %6569 = vst [vmem:[#allocation5 + $0x80] sm:$0xff] %v6541
      %6570 = vst [vmem:[#allocation5 + $0x88] sm:$0xff] %v6542
      %6571 = vst [vmem:[#allocation5 + $0xa0] sm:$0xff] %v6543
      %6572 = vst [vmem:[#allocation5 + $0xa8] sm:$0xff] %v6544
      %6573 = vst [vmem:[#allocation5 + $0xc0] sm:$0xff] %v6545
      %6574 = vst [vmem:[#allocation5 + $0xc8] sm:$0xff] %v6546
      %6575 = vst [vmem:[#allocation5 + $0xe0] sm:$0xff] %v6547
      %6576 = vst [vmem:[#allocation5 + $0xe8] sm:$0xff] %v6548
      %6577 = vst [vmem:[#allocation5 + $0x100] sm:$0xff] %v6549
      %6578 = vst [vmem:[#allocation5 + $0x108] sm:$0xff] %v6550
      %6579 = vst [vmem:[#allocation5 + $0x120] sm:$0xff] %v6551
      %6580 = vst [vmem:[#allocation5 + $0x128] sm:$0xff] %v6552
      %6581 = vst [vmem:[#allocation5 + $0x140] sm:$0xff] %v6553
      %6582 = vst [vmem:[#allocation5 + $0x148] sm:$0xff] %v6554
      %6583 = vst [vmem:[#allocation5 + $0x160] sm:$0xff] %v6555
      %6584 = vst [vmem:[#allocation5 + $0x168] sm:$0xff] %v6556
      %6585 = vst [vmem:[#allocation5 + $0x180] sm:$0xff] %v6557
      %6586 = vst [vmem:[#allocation5 + $0x188] sm:$0xff] %v6558
      %6587 = vst [vmem:[#allocation5 + $0x1a0] sm:$0xff] %v6559
      %6588 = vst [vmem:[#allocation5 + $0x1a8] sm:$0xff] %v6560
      %6589 = vst [vmem:[#allocation5 + $0x1c0] sm:$0xff] %v6561
      %6590 = vst [vmem:[#allocation5 + $0x1c8] sm:$0xff] %v6562
      %v6591 = vld [vmem:[#allocation5] sm:$0xff]
      %v6592 = vld [vmem:[#allocation5 + $0x8] sm:$0xff]
      %v6593 = vld [vmem:[#allocation5 + $0x10] sm:$0xff]
      %v6594 = vld [vmem:[#allocation5 + $0x18] sm:$0xff]
      %v6595 = vld [vmem:[#allocation5 + $0x20] sm:$0xff]
      %v6596 = vld [vmem:[#allocation5 + $0x28] sm:$0xff]
      %v6597 = vld [vmem:[#allocation5 + $0x30] sm:$0xff]
      %v6598 = vld [vmem:[#allocation5 + $0x38] sm:$0xff]
      %v6599 = vld [vmem:[#allocation5 + $0x40] sm:$0xff]
      %v6600 = vld [vmem:[#allocation5 + $0x48] sm:$0xff]
      %v6601 = vld [vmem:[#allocation5 + $0x50] sm:$0xff]
      %v6602 = vld [vmem:[#allocation5 + $0x58] sm:$0xff]
      %v6603 = vld [vmem:[#allocation5 + $0x60] sm:$0xff]
      %v6604 = vld [vmem:[#allocation5 + $0x68] sm:$0xff]
      %v6605 = vld [vmem:[#allocation5 + $0x70] sm:$0xff]
      %v6606 = vld [vmem:[#allocation5 + $0x78] sm:$0xff]
      %v6607 = vld [vmem:[#allocation5 + $0x80] sm:$0xff]
      %v6608 = vld [vmem:[#allocation5 + $0x88] sm:$0xff]
      %v6609 = vld [vmem:[#allocation5 + $0x90] sm:$0xff]
      %v6610 = vld [vmem:[#allocation5 + $0x98] sm:$0xff]
      %v6611 = vld [vmem:[#allocation5 + $0xa0] sm:$0xff]
      %v6612 = vld [vmem:[#allocation5 + $0xa8] sm:$0xff]
      %v6613 = vld [vmem:[#allocation5 + $0xb0] sm:$0xff]
      %v6614 = vld [vmem:[#allocation5 + $0xb8] sm:$0xff]
      %v6615 = vld [vmem:[#allocation5 + $0xc0] sm:$0xff]
      %v6616 = vld [vmem:[#allocation5 + $0xc8] sm:$0xff]
      %v6617 = vld [vmem:[#allocation5 + $0xd0] sm:$0xff]
      %v6618 = vld [vmem:[#allocation5 + $0xd8] sm:$0xff]
      %v6619 = vld [vmem:[#allocation5 + $0xe0] sm:$0xff]
      %v6620 = vld [vmem:[#allocation5 + $0xe8] sm:$0xff]
      %v6621 = vld [vmem:[#allocation5 + $0xf0] sm:$0xff]
      %v6622 = vld [vmem:[#allocation5 + $0xf8] sm:$0xff]
      %v6623 = vld [vmem:[#allocation5 + $0x100] sm:$0xff]
      %v6624 = vld [vmem:[#allocation5 + $0x108] sm:$0xff]
      %v6625 = vld [vmem:[#allocation5 + $0x110] sm:$0xff]
      %v6626 = vld [vmem:[#allocation5 + $0x118] sm:$0xff]
      %v6627 = vld [vmem:[#allocation5 + $0x120] sm:$0xff]
      %v6628 = vld [vmem:[#allocation5 + $0x128] sm:$0xff]
      %v6629 = vld [vmem:[#allocation5 + $0x130] sm:$0xff]
      %v6630 = vld [vmem:[#allocation5 + $0x138] sm:$0xff]
      %v6631 = vld [vmem:[#allocation5 + $0x140] sm:$0xff]
      %v6632 = vld [vmem:[#allocation5 + $0x148] sm:$0xff]
      %v6633 = vld [vmem:[#allocation5 + $0x150] sm:$0xff]
      %v6634 = vld [vmem:[#allocation5 + $0x158] sm:$0xff]
      %v6635 = vld [vmem:[#allocation5 + $0x160] sm:$0xff]
      %v6636 = vld [vmem:[#allocation5 + $0x168] sm:$0xff]
      %v6637 = vld [vmem:[#allocation5 + $0x170] sm:$0xff]
      %v6638 = vld [vmem:[#allocation5 + $0x178] sm:$0xff]
      %v6639 = vld [vmem:[#allocation5 + $0x180] sm:$0xff]
      %v6640 = vld [vmem:[#allocation5 + $0x188] sm:$0xff]
      %v6641 = vld [vmem:[#allocation5 + $0x190] sm:$0xff]
      %v6642 = vld [vmem:[#allocation5 + $0x198] sm:$0xff]
      %v6643 = vld [vmem:[#allocation5 + $0x1a0] sm:$0xff]
      %v6644 = vld [vmem:[#allocation5 + $0x1a8] sm:$0xff]
      %v6645 = vld [vmem:[#allocation5 + $0x1b0] sm:$0xff]
      %v6646 = vld [vmem:[#allocation5 + $0x1b8] sm:$0xff]
      %v6647 = vld [vmem:[%s9] sm:$0xf]
      %v6648 = vld [vmem:[%s9 + $0x4] sm:$0xf]
      %v6649 = vld [vmem:[%s9 + $0x8] sm:$0xf]
      %v6650 = vld [vmem:[%s9 + $0xc] sm:$0xf]
      %v6651 = vld [vmem:[%s9 + $0x10] sm:$0xf]
      %v6652 = vld [vmem:[%s9 + $0x14] sm:$0xf]
      %v6653 = vld [vmem:[%s9 + $0x18] sm:$0xf]
      %v6654 = vld [vmem:[%s9 + $0x1c] sm:$0xf]
      %v6655 = vld [vmem:[%s9 + $0x20] sm:$0xf]
      %v6656 = vld [vmem:[%s9 + $0x24] sm:$0xf]
      %v6657 = vld [vmem:[%s9 + $0x28] sm:$0xf]
      %v6658 = vld [vmem:[%s9 + $0x2c] sm:$0xf]
      %v6659 = vld [vmem:[%s9 + $0x30] sm:$0xf]
      %v6660 = vld [vmem:[%s9 + $0x34] sm:$0xf]
      %v6661 = vld [vmem:[%s9 + $0x38] sm:$0xf]
      %v6662 = vld [vmem:[%s9 + $0x3c] sm:$0xf]
      %v6663 = vld [vmem:[#allocation5 + $0x1c0] sm:$0xff]
      %v6664 = vld [vmem:[#allocation5 + $0x1c8] sm:$0xff]
      %s6665 = scalar_lea.vmem %s9, 64
      %v6666 = vld [vmem:[%s6665] sm:$0xf]
      %v6667 = vld [vmem:[%s6665 + $0x4] sm:$0xf]
      %v6668 = vld [vmem:[%s6665 + $0x8] sm:$0xf]
      %v6669 = vld [vmem:[%s6665 + $0xc] sm:$0xf]
      %v6670 = vld [vmem:[%s6665 + $0x10] sm:$0xf]
      %v6671 = vld [vmem:[%s6665 + $0x14] sm:$0xf]
      %v6672 = vld [vmem:[%s6665 + $0x18] sm:$0xf]
      %v6673 = vld [vmem:[%s6665 + $0x1c] sm:$0xf]
      %v6674 = vld [vmem:[%s6665 + $0x20] sm:$0xf]
      %v6675 = vld [vmem:[%s6665 + $0x24] sm:$0xf]
      %v6676 = vld [vmem:[%s6665 + $0x28] sm:$0xf]
      %v6677 = vld [vmem:[%s6665 + $0x2c] sm:$0xf]
      %v6678 = vld [vmem:[%s6665 + $0x30] sm:$0xf]
      %v6679 = vld [vmem:[%s6665 + $0x34] sm:$0xf]
      %v6680 = vld [vmem:[%s6665 + $0x38] sm:$0xf]
      %v6681 = vld [vmem:[%s6665 + $0x3c] sm:$0xf]
      %v6698 = vunpack.c.l.b16 %v6666
      %v6699 = vunpack.c.l.b16 %v6667
      %v6700 = vunpack.c.l.b16 %v6668
      %v6701 = vunpack.c.l.b16 %v6669
      %v6702 = vunpack.c.l.b16 %v6670
      %v6703 = vunpack.c.l.b16 %v6671
      %v6704 = vunpack.c.l.b16 %v6672
      %v6705 = vunpack.c.l.b16 %v6673
      %v6706 = vunpack.c.l.b16 %v6674
      %v6707 = vunpack.c.l.b16 %v6675
      %v6708 = vunpack.c.l.b16 %v6676
      %v6709 = vunpack.c.l.b16 %v6677
      %v6710 = vunpack.c.l.b16 %v6678
      %v6711 = vunpack.c.l.b16 %v6679
      %v6712 = vunpack.c.l.b16 %v6680
      %v6713 = vunpack.c.l.b16 %v6681
      %v6714 = vpack.c.b16 %v6699, %v6698
      %v6715 = vpack.c.b16 %v6701, %v6700
      %v6716 = vpack.c.b16 %v6703, %v6702
      %v6717 = vpack.c.b16 %v6705, %v6704
      %v6718 = vpack.c.b16 %v6707, %v6706
      %v6719 = vpack.c.b16 %v6709, %v6708
      %v6720 = vpack.c.b16 %v6711, %v6710
      %v6721 = vpack.c.b16 %v6713, %v6712
      %6730 = vmatprep.subr.bf16.mxu0 0
      %6731 = vmatpush1.bf16.msra.mxu0 %v6714
      %6732 = vmatprep.subr.bf16.mxu0 0
      %6733 = vmatpush1.bf16.msra.mxu0 %v6715
      %6734 = vmatprep.subr.bf16.mxu0 0
      %6735 = vmatpush1.bf16.msra.mxu0 %v6716
      %6736 = vmatprep.subr.bf16.mxu0 0
      %6737 = vmatpush1.bf16.msra.mxu0 %v6717
      %6738 = vmatprep.subr.bf16.mxu0 0
      %6739 = vmatpush1.bf16.msra.mxu0 %v6718
      %6740 = vmatprep.subr.bf16.mxu0 0
      %6741 = vmatpush1.bf16.msra.mxu0 %v6719
      %6742 = vmatprep.subr.bf16.mxu0 0
      %6743 = vmatpush1.bf16.msra.mxu0 %v6720
      %6744 = vmatprep.subr.bf16.mxu0 0
      %6745 = vmatpush1.bf16.msra.mxu0 %v6721
      %6746 = vmatprep.subr.bf16.mxu0 0
      %6747 = vmatpush1.bf16.msra.mxu0 0
      %6748 = vmatprep.subr.bf16.mxu0 0
      %6749 = vmatpush1.bf16.msra.mxu0 0
      %6750 = vmatprep.subr.bf16.mxu0 0
      %6751 = vmatpush1.bf16.msra.mxu0 0
      %6752 = vmatprep.subr.bf16.mxu0 0
      %6753 = vmatpush1.bf16.msra.mxu0 0
      %6754 = vmatprep.subr.bf16.mxu0 0
      %6755 = vmatpush1.bf16.msra.mxu0 0
      %6756 = vmatprep.subr.bf16.mxu0 0
      %6757 = vmatpush1.bf16.msra.mxu0 0
      %6758 = vmatprep.subr.bf16.mxu0 0
      %6759 = vmatpush1.bf16.msra.mxu0 0
      %6760 = vmatprep.subr.bf16.mxu0 0
      %6761 = vmatpush1.bf16.msra.mxu0 0
      %6762 = vmatprep.mubr.bf16.mxu0 0
      %6763 = vmatmul.mubr.bf16.gmra.mrb[0].mxu0 %v6593
      %v6764 = vpop.f32.mrb[0].mxu0
      %v6765 = vadd.f32 0.0, %v6764
      %v6766 = vpop.f32.mrb[0].mxu0
      %v6767 = vpop.f32.mrb[0].mxu0
      %v6768 = vadd.f32 0.0, %v6767
      %v6769 = vpop.f32.mrb[0].mxu0
      %6770 = vmatprep.mubr.bf16.mxu0 0
      %6771 = vmatmul.mubr.bf16.gmra.mrb[0].mxu0 %v6594
      %v6772 = vpop.f32.mrb[0].mxu0
      %v6773 = vadd.f32 0.0, %v6772
      %v6774 = vpop.f32.mrb[0].mxu0
      %v6775 = vpop.f32.mrb[0].mxu0
      %v6776 = vadd.f32 0.0, %v6775
      %v6777 = vpop.f32.mrb[0].mxu0
      %6778 = vmatprep.mubr.bf16.mxu0 0
      %6779 = vmatmul.mubr.bf16.gmra.mrb[0].mxu0 %v6595
      %v6780 = vpop.f32.mrb[0].mxu0
      %v6781 = vadd.f32 0.0, %v6780
      %v6782 = vpop.f32.mrb[0].mxu0
      %v6783 = vpop.f32.mrb[0].mxu0
      %v6784 = vadd.f32 0.0, %v6783
      %v6785 = vpop.f32.mrb[0].mxu0
      %6786 = vmatprep.mubr.bf16.mxu0 0
      %6787 = vmatmul.mubr.bf16.gmra.mrb[0].mxu0 %v6596
      %v6788 = vpop.f32.mrb[0].mxu0
      %v6789 = vadd.f32 0.0, %v6788
      %v6790 = vpop.f32.mrb[0].mxu0
      %v6791 = vpop.f32.mrb[0].mxu0
      %v6792 = vadd.f32 0.0, %v6791
      %v6793 = vpop.f32.mrb[0].mxu0
      %6794 = vmatprep.mubr.bf16.mxu0 0
      %6795 = vmatmul.mubr.bf16.gmra.mrb[0].mxu0 %v6597
      %v6796 = vpop.f32.mrb[0].mxu0
      %v6797 = vadd.f32 0.0, %v6796
      %v6798 = vpop.f32.mrb[0].mxu0
      %v6799 = vpop.f32.mrb[0].mxu0
      %v6800 = vadd.f32 0.0, %v6799
      %v6801 = vpop.f32.mrb[0].mxu0
      %6802 = vmatprep.mubr.bf16.mxu0 0
      %6803 = vmatmul.mubr.bf16.gmra.mrb[0].mxu0 %v6598
      %v6804 = vpop.f32.mrb[0].mxu0
      %v6805 = vadd.f32 0.0, %v6804
      %v6806 = vpop.f32.mrb[0].mxu0
      %v6807 = vpop.f32.mrb[0].mxu0
      %v6808 = vadd.f32 0.0, %v6807
      %v6809 = vpop.f32.mrb[0].mxu0
      %6810 = vmatprep.mubr.bf16.mxu0 0
      %6811 = vmatmul.mubr.bf16.gmra.mrb[0].mxu0 %v6599
      %v6812 = vpop.f32.mrb[0].mxu0
      %v6813 = vadd.f32 0.0, %v6812
      %v6814 = vpop.f32.mrb[0].mxu0
      %v6815 = vpop.f32.mrb[0].mxu0
      %v6816 = vadd.f32 0.0, %v6815
      %v6817 = vpop.f32.mrb[0].mxu0
      %6818 = vmatprep.mubr.bf16.mxu0 0
      %6819 = vmatmul.mubr.bf16.gmra.mrb[0].mxu0 %v6600
      %v6820 = vpop.f32.mrb[0].mxu0
      %v6821 = vadd.f32 0.0, %v6820
      %v6822 = vpop.f32.mrb[0].mxu0
      %v6823 = vpop.f32.mrb[0].mxu0
      %v6824 = vadd.f32 0.0, %v6823
      %v6825 = vpop.f32.mrb[0].mxu0
      %6826 = vmatprep.mubr.bf16.mxu0 0
      %6827 = vmatmul.mubr.bf16.gmra.mrb[0].mxu0 %v6601
      %v6828 = vpop.f32.mrb[0].mxu0
      %v6829 = vadd.f32 0.0, %v6828
      %v6830 = vpop.f32.mrb[0].mxu0
      %v6831 = vpop.f32.mrb[0].mxu0
      %v6832 = vadd.f32 0.0, %v6831
      %v6833 = vpop.f32.mrb[0].mxu0
      %6834 = vmatprep.mubr.bf16.mxu0 0
      %6835 = vmatmul.mubr.bf16.gmra.mrb[0].mxu0 %v6602
      %v6836 = vpop.f32.mrb[0].mxu0
      %v6837 = vadd.f32 0.0, %v6836
      %v6838 = vpop.f32.mrb[0].mxu0
      %v6839 = vpop.f32.mrb[0].mxu0
      %v6840 = vadd.f32 0.0, %v6839
      %v6841 = vpop.f32.mrb[0].mxu0
      %6842 = vmatprep.mubr.bf16.mxu0 0
      %6843 = vmatmul.mubr.bf16.gmra.mrb[0].mxu0 %v6603
      %v6844 = vpop.f32.mrb[0].mxu0
      %v6845 = vadd.f32 0.0, %v6844
      %v6846 = vpop.f32.mrb[0].mxu0
      %v6847 = vpop.f32.mrb[0].mxu0
      %v6848 = vadd.f32 0.0, %v6847
      %v6849 = vpop.f32.mrb[0].mxu0
      %6850 = vmatprep.mubr.bf16.mxu0 0
      %6851 = vmatmul.mubr.bf16.gmra.mrb[0].mxu0 %v6604
      %v6852 = vpop.f32.mrb[0].mxu0
      %v6853 = vadd.f32 0.0, %v6852
      %v6854 = vpop.f32.mrb[0].mxu0
      %v6855 = vpop.f32.mrb[0].mxu0
      %v6856 = vadd.f32 0.0, %v6855
      %v6857 = vpop.f32.mrb[0].mxu0
      %6858 = vmatprep.mubr.bf16.mxu0 0
      %6859 = vmatmul.mubr.bf16.gmra.mrb[0].mxu0 %v6605
      %v6860 = vpop.f32.mrb[0].mxu0
      %v6861 = vadd.f32 0.0, %v6860
      %v6862 = vpop.f32.mrb[0].mxu0
      %v6863 = vpop.f32.mrb[0].mxu0
      %v6864 = vadd.f32 0.0, %v6863
      %v6865 = vpop.f32.mrb[0].mxu0
      %6866 = vmatprep.mubr.bf16.mxu0 0
      %6867 = vmatmul.mubr.bf16.gmra.mrb[0].mxu0 %v6606
      %v6868 = vpop.f32.mrb[0].mxu0
      %v6869 = vadd.f32 0.0, %v6868
      %v6870 = vpop.f32.mrb[0].mxu0
      %v6871 = vpop.f32.mrb[0].mxu0
      %v6872 = vadd.f32 0.0, %v6871
      %v6873 = vpop.f32.mrb[0].mxu0
      %6874 = vmatprep.mubr.bf16.mxu0 0
      %6875 = vmatmul.mubr.bf16.gmra.mrb[0].mxu0 %v6607
      %v6876 = vpop.f32.mrb[0].mxu0
      %v6877 = vadd.f32 0.0, %v6876
      %v6878 = vpop.f32.mrb[0].mxu0
      %v6879 = vpop.f32.mrb[0].mxu0
      %v6880 = vadd.f32 0.0, %v6879
      %v6881 = vpop.f32.mrb[0].mxu0
      %6882 = vmatprep.mubr.bf16.mxu0 0
      %6883 = vmatmul.mubr.bf16.gmra.mrb[0].mxu0 %v6608
      %v6884 = vpop.f32.mrb[0].mxu0
      %v6885 = vadd.f32 0.0, %v6884
      %v6886 = vpop.f32.mrb[0].mxu0
      %v6887 = vpop.f32.mrb[0].mxu0
      %v6888 = vadd.f32 0.0, %v6887
      %v6889 = vpop.f32.mrb[0].mxu0
      %6890 = vmatprep.mubr.bf16.mxu0 0
      %6891 = vmatmul.mubr.bf16.gmra.mrb[0].mxu0 %v6609
      %v6892 = vpop.f32.mrb[0].mxu0
      %v6893 = vadd.f32 0.0, %v6892
      %v6894 = vpop.f32.mrb[0].mxu0
      %v6895 = vpop.f32.mrb[0].mxu0
      %v6896 = vadd.f32 0.0, %v6895
      %v6897 = vpop.f32.mrb[0].mxu0
      %6898 = vmatprep.mubr.bf16.mxu0 0
      %6899 = vmatmul.mubr.bf16.gmra.mrb[0].mxu0 %v6610
      %v6900 = vpop.f32.mrb[0].mxu0
      %v6901 = vadd.f32 0.0, %v6900
      %v6902 = vpop.f32.mrb[0].mxu0
      %v6903 = vpop.f32.mrb[0].mxu0
      %v6904 = vadd.f32 0.0, %v6903
      %v6905 = vpop.f32.mrb[0].mxu0
      %6906 = vmatprep.mubr.bf16.mxu0 0
      %6907 = vmatmul.mubr.bf16.gmra.mrb[0].mxu0 %v6611
      %v6908 = vpop.f32.mrb[0].mxu0
      %v6909 = vadd.f32 0.0, %v6908
      %v6910 = vpop.f32.mrb[0].mxu0
      %v6911 = vpop.f32.mrb[0].mxu0
      %v6912 = vadd.f32 0.0, %v6911
      %v6913 = vpop.f32.mrb[0].mxu0
      %6914 = vmatprep.mubr.bf16.mxu0 0
      %6915 = vmatmul.mubr.bf16.gmra.mrb[0].mxu0 %v6612
      %v6916 = vpop.f32.mrb[0].mxu0
      %v6917 = vadd.f32 0.0, %v6916
      %v6918 = vpop.f32.mrb[0].mxu0
      %v6919 = vpop.f32.mrb[0].mxu0
      %v6920 = vadd.f32 0.0, %v6919
      %v6921 = vpop.f32.mrb[0].mxu0
      %6922 = vmatprep.mubr.bf16.mxu0 0
      %6923 = vmatmul.mubr.bf16.gmra.mrb[0].mxu0 %v6613
      %v6924 = vpop.f32.mrb[0].mxu0
      %v6925 = vadd.f32 0.0, %v6924
      %v6926 = vpop.f32.mrb[0].mxu0
      %v6927 = vpop.f32.mrb[0].mxu0
      %v6928 = vadd.f32 0.0, %v6927
      %v6929 = vpop.f32.mrb[0].mxu0
      %6930 = vmatprep.mubr.bf16.mxu0 0
      %6931 = vmatmul.mubr.bf16.gmra.mrb[0].mxu0 %v6614
      %v6932 = vpop.f32.mrb[0].mxu0
      %v6933 = vadd.f32 0.0, %v6932
      %v6934 = vpop.f32.mrb[0].mxu0
      %v6935 = vpop.f32.mrb[0].mxu0
      %v6936 = vadd.f32 0.0, %v6935
      %v6937 = vpop.f32.mrb[0].mxu0
      %6938 = vmatprep.mubr.bf16.mxu0 0
      %6939 = vmatmul.mubr.bf16.gmra.mrb[0].mxu0 %v6615
      %v6940 = vpop.f32.mrb[0].mxu0
      %v6941 = vadd.f32 0.0, %v6940
      %v6942 = vpop.f32.mrb[0].mxu0
      %v6943 = vpop.f32.mrb[0].mxu0
      %v6944 = vadd.f32 0.0, %v6943
      %v6945 = vpop.f32.mrb[0].mxu0
      %6946 = vmatprep.mubr.bf16.mxu0 0
      %6947 = vmatmul.mubr.bf16.gmra.mrb[0].mxu0 %v6616
      %v6948 = vpop.f32.mrb[0].mxu0
      %v6949 = vadd.f32 0.0, %v6948
      %v6950 = vpop.f32.mrb[0].mxu0
      %v6951 = vpop.f32.mrb[0].mxu0
      %v6952 = vadd.f32 0.0, %v6951
      %v6953 = vpop.f32.mrb[0].mxu0
      %6954 = vmatprep.mubr.bf16.mxu0 0
      %6955 = vmatmul.mubr.bf16.gmra.mrb[0].mxu0 %v6617
      %v6956 = vpop.f32.mrb[0].mxu0
      %v6957 = vadd.f32 0.0, %v6956
      %v6958 = vpop.f32.mrb[0].mxu0
      %v6959 = vpop.f32.mrb[0].mxu0
      %v6960 = vadd.f32 0.0, %v6959
      %v6961 = vpop.f32.mrb[0].mxu0
      %6962 = vmatprep.mubr.bf16.mxu0 0
      %6963 = vmatmul.mubr.bf16.gmra.mrb[0].mxu0 %v6618
      %v6964 = vpop.f32.mrb[0].mxu0
      %v6965 = vadd.f32 0.0, %v6964
      %v6966 = vpop.f32.mrb[0].mxu0
      %v6967 = vpop.f32.mrb[0].mxu0
      %v6968 = vadd.f32 0.0, %v6967
      %v6969 = vpop.f32.mrb[0].mxu0
      %6970 = vmatprep.mubr.bf16.mxu0 0
      %6971 = vmatmul.mubr.bf16.gmra.mrb[0].mxu0 %v6619
      %v6972 = vpop.f32.mrb[0].mxu0
      %v6973 = vadd.f32 0.0, %v6972
      %v6974 = vpop.f32.mrb[0].mxu0
      %v6975 = vpop.f32.mrb[0].mxu0
      %v6976 = vadd.f32 0.0, %v6975
      %v6977 = vpop.f32.mrb[0].mxu0
      %6978 = vmatprep.mubr.bf16.mxu0 0
      %6979 = vmatmul.mubr.bf16.gmra.mrb[0].mxu0 %v6620
      %v6980 = vpop.f32.mrb[0].mxu0
      %v6981 = vadd.f32 0.0, %v6980
      %v6982 = vpop.f32.mrb[0].mxu0
      %v6983 = vpop.f32.mrb[0].mxu0
      %v6984 = vadd.f32 0.0, %v6983
      %v6985 = vpop.f32.mrb[0].mxu0
      %6986 = vmatprep.mubr.bf16.mxu0 0
      %6987 = vmatmul.mubr.bf16.gmra.mrb[0].mxu0 %v6621
      %v6988 = vpop.f32.mrb[0].mxu0
      %v6989 = vadd.f32 0.0, %v6988
      %v6990 = vpop.f32.mrb[0].mxu0
      %v6991 = vpop.f32.mrb[0].mxu0
      %v6992 = vadd.f32 0.0, %v6991
      %v6993 = vpop.f32.mrb[0].mxu0
      %6994 = vmatprep.mubr.bf16.mxu0 0
      %6995 = vmatmul.mubr.bf16.gmra.mrb[0].mxu0 %v6622
      %v6996 = vpop.f32.mrb[0].mxu0
      %v6997 = vadd.f32 0.0, %v6996
      %v6998 = vpop.f32.mrb[0].mxu0
      %v6999 = vpop.f32.mrb[0].mxu0
      %v7000 = vadd.f32 0.0, %v6999
      %v7001 = vpop.f32.mrb[0].mxu0
      %7002 = vmatprep.mubr.bf16.mxu0 0
      %7003 = vmatmul.mubr.bf16.gmra.mrb[0].mxu0 %v6623
      %v7004 = vpop.f32.mrb[0].mxu0
      %v7005 = vadd.f32 0.0, %v7004
      %v7006 = vpop.f32.mrb[0].mxu0
      %v7007 = vpop.f32.mrb[0].mxu0
      %v7008 = vadd.f32 0.0, %v7007
      %v7009 = vpop.f32.mrb[0].mxu0
      %7010 = vmatprep.mubr.bf16.mxu0 0
      %7011 = vmatmul.mubr.bf16.gmra.mrb[0].mxu0 %v6624
      %v7012 = vpop.f32.mrb[0].mxu0
      %v7013 = vadd.f32 0.0, %v7012
      %v7014 = vpop.f32.mrb[0].mxu0
      %v7015 = vpop.f32.mrb[0].mxu0
      %v7016 = vadd.f32 0.0, %v7015
      %v7017 = vpop.f32.mrb[0].mxu0
      %7018 = vmatprep.mubr.bf16.mxu0 0
      %7019 = vmatmul.mubr.bf16.gmra.mrb[0].mxu0 %v6625
      %v7020 = vpop.f32.mrb[0].mxu0
      %v7021 = vadd.f32 0.0, %v7020
      %v7022 = vpop.f32.mrb[0].mxu0
      %v7023 = vpop.f32.mrb[0].mxu0
      %v7024 = vadd.f32 0.0, %v7023
      %v7025 = vpop.f32.mrb[0].mxu0
      %7026 = vmatprep.mubr.bf16.mxu0 0
      %7027 = vmatmul.mubr.bf16.gmra.mrb[0].mxu0 %v6626
      %v7028 = vpop.f32.mrb[0].mxu0
      %v7029 = vadd.f32 0.0, %v7028
      %v7030 = vpop.f32.mrb[0].mxu0
      %v7031 = vpop.f32.mrb[0].mxu0
      %v7032 = vadd.f32 0.0, %v7031
      %v7033 = vpop.f32.mrb[0].mxu0
      %7034 = vmatprep.mubr.bf16.mxu0 0
      %7035 = vmatmul.mubr.bf16.gmra.mrb[0].mxu0 %v6627
      %v7036 = vpop.f32.mrb[0].mxu0
      %v7037 = vadd.f32 0.0, %v7036
      %v7038 = vpop.f32.mrb[0].mxu0
      %v7039 = vpop.f32.mrb[0].mxu0
      %v7040 = vadd.f32 0.0, %v7039
      %v7041 = vpop.f32.mrb[0].mxu0
      %7042 = vmatprep.mubr.bf16.mxu0 0
      %7043 = vmatmul.mubr.bf16.gmra.mrb[0].mxu0 %v6628
      %v7044 = vpop.f32.mrb[0].mxu0
      %v7045 = vadd.f32 0.0, %v7044
      %v7046 = vpop.f32.mrb[0].mxu0
      %v7047 = vpop.f32.mrb[0].mxu0
      %v7048 = vadd.f32 0.0, %v7047
      %v7049 = vpop.f32.mrb[0].mxu0
      %7050 = vmatprep.mubr.bf16.mxu0 0
      %7051 = vmatmul.mubr.bf16.gmra.mrb[0].mxu0 %v6629
      %v7052 = vpop.f32.mrb[0].mxu0
      %v7053 = vadd.f32 0.0, %v7052
      %v7054 = vpop.f32.mrb[0].mxu0
      %v7055 = vpop.f32.mrb[0].mxu0
      %v7056 = vadd.f32 0.0, %v7055
      %v7057 = vpop.f32.mrb[0].mxu0
      %7058 = vmatprep.mubr.bf16.mxu0 0
      %7059 = vmatmul.mubr.bf16.gmra.mrb[0].mxu0 %v6630
      %v7060 = vpop.f32.mrb[0].mxu0
      %v7061 = vadd.f32 0.0, %v7060
      %v7062 = vpop.f32.mrb[0].mxu0
      %v7063 = vpop.f32.mrb[0].mxu0
      %v7064 = vadd.f32 0.0, %v7063
      %v7065 = vpop.f32.mrb[0].mxu0
      %7066 = vmatprep.mubr.bf16.mxu0 0
      %7067 = vmatmul.mubr.bf16.gmra.mrb[0].mxu0 %v6631
      %v7068 = vpop.f32.mrb[0].mxu0
      %v7069 = vadd.f32 0.0, %v7068
      %v7070 = vpop.f32.mrb[0].mxu0
      %v7071 = vpop.f32.mrb[0].mxu0
      %v7072 = vadd.f32 0.0, %v7071
      %v7073 = vpop.f32.mrb[0].mxu0
      %7074 = vmatprep.mubr.bf16.mxu0 0
      %7075 = vmatmul.mubr.bf16.gmra.mrb[0].mxu0 %v6632
      %v7076 = vpop.f32.mrb[0].mxu0
      %v7077 = vadd.f32 0.0, %v7076
      %v7078 = vpop.f32.mrb[0].mxu0
      %v7079 = vpop.f32.mrb[0].mxu0
      %v7080 = vadd.f32 0.0, %v7079
      %v7081 = vpop.f32.mrb[0].mxu0
      %7082 = vmatprep.mubr.bf16.mxu0 0
      %7083 = vmatmul.mubr.bf16.gmra.mrb[0].mxu0 %v6633
      %v7084 = vpop.f32.mrb[0].mxu0
      %v7085 = vadd.f32 0.0, %v7084
      %v7086 = vpop.f32.mrb[0].mxu0
      %v7087 = vpop.f32.mrb[0].mxu0
      %v7088 = vadd.f32 0.0, %v7087
      %v7089 = vpop.f32.mrb[0].mxu0
      %7090 = vmatprep.mubr.bf16.mxu0 0
      %7091 = vmatmul.mubr.bf16.gmra.mrb[0].mxu0 %v6634
      %v7092 = vpop.f32.mrb[0].mxu0
      %v7093 = vadd.f32 0.0, %v7092
      %v7094 = vpop.f32.mrb[0].mxu0
      %v7095 = vpop.f32.mrb[0].mxu0
      %v7096 = vadd.f32 0.0, %v7095
      %v7097 = vpop.f32.mrb[0].mxu0
      %7098 = vmatprep.mubr.bf16.mxu0 0
      %7099 = vmatmul.mubr.bf16.gmra.mrb[0].mxu0 %v6635
      %v7100 = vpop.f32.mrb[0].mxu0
      %v7101 = vadd.f32 0.0, %v7100
      %v7102 = vpop.f32.mrb[0].mxu0
      %v7103 = vpop.f32.mrb[0].mxu0
      %v7104 = vadd.f32 0.0, %v7103
      %v7105 = vpop.f32.mrb[0].mxu0
      %7106 = vmatprep.mubr.bf16.mxu0 0
      %7107 = vmatmul.mubr.bf16.gmra.mrb[0].mxu0 %v6636
      %v7108 = vpop.f32.mrb[0].mxu0
      %v7109 = vadd.f32 0.0, %v7108
      %v7110 = vpop.f32.mrb[0].mxu0
      %v7111 = vpop.f32.mrb[0].mxu0
      %v7112 = vadd.f32 0.0, %v7111
      %v7113 = vpop.f32.mrb[0].mxu0
      %7114 = vmatprep.mubr.bf16.mxu0 0
      %7115 = vmatmul.mubr.bf16.gmra.mrb[0].mxu0 %v6637
      %v7116 = vpop.f32.mrb[0].mxu0
      %v7117 = vadd.f32 0.0, %v7116
      %v7118 = vpop.f32.mrb[0].mxu0
      %v7119 = vpop.f32.mrb[0].mxu0
      %v7120 = vadd.f32 0.0, %v7119
      %v7121 = vpop.f32.mrb[0].mxu0
      %7122 = vmatprep.mubr.bf16.mxu0 0
      %7123 = vmatmul.mubr.bf16.gmra.mrb[0].mxu0 %v6638
      %v7124 = vpop.f32.mrb[0].mxu0
      %v7125 = vadd.f32 0.0, %v7124
      %v7126 = vpop.f32.mrb[0].mxu0
      %v7127 = vpop.f32.mrb[0].mxu0
      %v7128 = vadd.f32 0.0, %v7127
      %v7129 = vpop.f32.mrb[0].mxu0
      %7130 = vmatprep.mubr.bf16.mxu0 0
      %7131 = vmatmul.mubr.bf16.gmra.mrb[0].mxu0 %v6639
      %v7132 = vpop.f32.mrb[0].mxu0
      %v7133 = vadd.f32 0.0, %v7132
      %v7134 = vpop.f32.mrb[0].mxu0
      %v7135 = vpop.f32.mrb[0].mxu0
      %v7136 = vadd.f32 0.0, %v7135
      %v7137 = vpop.f32.mrb[0].mxu0
      %7138 = vmatprep.mubr.bf16.mxu0 0
      %7139 = vmatmul.mubr.bf16.gmra.mrb[0].mxu0 %v6640
      %v7140 = vpop.f32.mrb[0].mxu0
      %v7141 = vadd.f32 0.0, %v7140
      %v7142 = vpop.f32.mrb[0].mxu0
      %v7143 = vpop.f32.mrb[0].mxu0
      %v7144 = vadd.f32 0.0, %v7143
      %v7145 = vpop.f32.mrb[0].mxu0
      %7146 = vmatprep.mubr.bf16.mxu0 0
      %7147 = vmatmul.mubr.bf16.gmra.mrb[0].mxu0 %v6641
      %v7148 = vpop.f32.mrb[0].mxu0
      %v7149 = vadd.f32 0.0, %v7148
      %v7150 = vpop.f32.mrb[0].mxu0
      %v7151 = vpop.f32.mrb[0].mxu0
      %v7152 = vadd.f32 0.0, %v7151
      %v7153 = vpop.f32.mrb[0].mxu0
      %7154 = vmatprep.mubr.bf16.mxu0 0
      %7155 = vmatmul.mubr.bf16.gmra.mrb[0].mxu0 %v6642
      %v7156 = vpop.f32.mrb[0].mxu0
      %v7157 = vadd.f32 0.0, %v7156
      %v7158 = vpop.f32.mrb[0].mxu0
      %v7159 = vpop.f32.mrb[0].mxu0
      %v7160 = vadd.f32 0.0, %v7159
      %v7161 = vpop.f32.mrb[0].mxu0
      %7162 = vmatprep.mubr.bf16.mxu0 0
      %7163 = vmatmul.mubr.bf16.gmra.mrb[0].mxu0 %v6643
      %v7164 = vpop.f32.mrb[0].mxu0
      %v7165 = vadd.f32 0.0, %v7164
      %v7166 = vpop.f32.mrb[0].mxu0
      %v7167 = vpop.f32.mrb[0].mxu0
      %v7168 = vadd.f32 0.0, %v7167
      %v7169 = vpop.f32.mrb[0].mxu0
      %7170 = vmatprep.mubr.bf16.mxu0 0
      %7171 = vmatmul.mubr.bf16.gmra.mrb[0].mxu0 %v6644
      %v7172 = vpop.f32.mrb[0].mxu0
      %v7173 = vadd.f32 0.0, %v7172
      %v7174 = vpop.f32.mrb[0].mxu0
      %v7175 = vpop.f32.mrb[0].mxu0
      %v7176 = vadd.f32 0.0, %v7175
      %v7177 = vpop.f32.mrb[0].mxu0
      %7178 = vmatprep.mubr.bf16.mxu0 0
      %7179 = vmatmul.mubr.bf16.gmra.mrb[0].mxu0 %v6645
      %v7180 = vpop.f32.mrb[0].mxu0
      %v7181 = vadd.f32 0.0, %v7180
      %v7182 = vpop.f32.mrb[0].mxu0
      %v7183 = vpop.f32.mrb[0].mxu0
      %v7184 = vadd.f32 0.0, %v7183
      %v7185 = vpop.f32.mrb[0].mxu0
      %7186 = vmatprep.mubr.bf16.mxu0 0
      %7187 = vmatmul.mubr.bf16.gmra.mrb[0].mxu0 %v6646
      %v7188 = vpop.f32.mrb[0].mxu0
      %v7189 = vadd.f32 0.0, %v7188
      %v7190 = vpop.f32.mrb[0].mxu0
      %v7191 = vpop.f32.mrb[0].mxu0
      %v7192 = vadd.f32 0.0, %v7191
      %v7193 = vpop.f32.mrb[0].mxu0
      %7194 = vmatprep.mubr.bf16.mxu0 0
      %7195 = vmatmul.mubr.bf16.gmra.mrb[0].mxu0 %v6663
      %v7196 = vpop.f32.mrb[0].mxu0
      %v7197 = vadd.f32 0.0, %v7196
      %v7198 = vpop.f32.mrb[0].mxu0
      %v7199 = vpop.f32.mrb[0].mxu0
      %v7200 = vadd.f32 0.0, %v7199
      %v7201 = vpop.f32.mrb[0].mxu0
      %7202 = vmatprep.mubr.bf16.mxu0 0
      %7203 = vmatmul.mubr.bf16.gmra.mrb[0].mxu0 %v6664
      %v7204 = vpop.f32.mrb[0].mxu0
      %v7205 = vadd.f32 0.0, %v7204
      %v7206 = vpop.f32.mrb[0].mxu0
      %v7207 = vpop.f32.mrb[0].mxu0
      %v7208 = vadd.f32 0.0, %v7207
      %v7209 = vpop.f32.mrb[0].mxu0
      %7210 = vdwg.mxu0
      %v7227 = vunpack.c.l.b16 %v6647
      %v7228 = vunpack.c.l.b16 %v6648
      %v7229 = vunpack.c.l.b16 %v6649
      %v7230 = vunpack.c.l.b16 %v6650
      %v7231 = vunpack.c.l.b16 %v6651
      %v7232 = vunpack.c.l.b16 %v6652
      %v7233 = vunpack.c.l.b16 %v6653
      %v7234 = vunpack.c.l.b16 %v6654
      %v7235 = vunpack.c.l.b16 %v6655
      %v7236 = vunpack.c.l.b16 %v6656
      %v7237 = vunpack.c.l.b16 %v6657
      %v7238 = vunpack.c.l.b16 %v6658
      %v7239 = vunpack.c.l.b16 %v6659
      %v7240 = vunpack.c.l.b16 %v6660
      %v7241 = vunpack.c.l.b16 %v6661
      %v7242 = vunpack.c.l.b16 %v6662
      %v7243 = vpack.c.b16 %v7228, %v7227
      %v7244 = vpack.c.b16 %v7230, %v7229
      %v7245 = vpack.c.b16 %v7232, %v7231
      %v7246 = vpack.c.b16 %v7234, %v7233
      %v7247 = vpack.c.b16 %v7236, %v7235
      %v7248 = vpack.c.b16 %v7238, %v7237
      %v7249 = vpack.c.b16 %v7240, %v7239
      %v7250 = vpack.c.b16 %v7242, %v7241
      %7259 = vmatprep.subr.bf16.mxu0 0
      %7260 = vmatpush1.bf16.msra.mxu0 %v7243
      %7261 = vmatprep.subr.bf16.mxu0 0
      %7262 = vmatpush1.bf16.msra.mxu0 %v7244
      %7263 = vmatprep.subr.bf16.mxu0 0
      %7264 = vmatpush1.bf16.msra.mxu0 %v7245
      %7265 = vmatprep.subr.bf16.mxu0 0
      %7266 = vmatpush1.bf16.msra.mxu0 %v7246
      %7267 = vmatprep.subr.bf16.mxu0 0
      %7268 = vmatpush1.bf16.msra.mxu0 %v7247
      %7269 = vmatprep.subr.bf16.mxu0 0
      %7270 = vmatpush1.bf16.msra.mxu0 %v7248
      %7271 = vmatprep.subr.bf16.mxu0 0
      %7272 = vmatpush1.bf16.msra.mxu0 %v7249
      %7273 = vmatprep.subr.bf16.mxu0 0
      %7274 = vmatpush1.bf16.msra.mxu0 %v7250
      %7275 = vmatprep.subr.bf16.mxu0 0
      %7276 = vmatpush1.bf16.msra.mxu0 0
      %7277 = vmatprep.subr.bf16.mxu0 0
      %7278 = vmatpush1.bf16.msra.mxu0 0
      %7279 = vmatprep.subr.bf16.mxu0 0
      %7280 = vmatpush1.bf16.msra.mxu0 0
      %7281 = vmatprep.subr.bf16.mxu0 0
      %7282 = vmatpush1.bf16.msra.mxu0 0
      %7283 = vmatprep.subr.bf16.mxu0 0
      %7284 = vmatpush1.bf16.msra.mxu0 0
      %7285 = vmatprep.subr.bf16.mxu0 0
      %7286 = vmatpush1.bf16.msra.mxu0 0
      %7287 = vmatprep.subr.bf16.mxu0 0
      %7288 = vmatpush1.bf16.msra.mxu0 0
      %7289 = vmatprep.subr.bf16.mxu0 0
      %7290 = vmatpush1.bf16.msra.mxu0 0
      %7291 = vmatprep.mubr.bf16.mxu0 0
      %7292 = vmatmul.mubr.bf16.gmra.mrb[0].mxu0 %v6591
      %v7293 = vpop.f32.mrb[0].mxu0
      %v7294 = vadd.f32 %v6765, %v7293
      %v7295 = vpop.f32.mrb[0].mxu0
      %v7296 = vpop.f32.mrb[0].mxu0
      %v7297 = vadd.f32 %v6768, %v7296
      %v7298 = vpop.f32.mrb[0].mxu0
      %7299 = vmatprep.mubr.bf16.mxu0 0
      %7300 = vmatmul.mubr.bf16.gmra.mrb[0].mxu0 %v6592
      %v7301 = vpop.f32.mrb[0].mxu0
      %v7302 = vadd.f32 %v6773, %v7301
      %v7303 = vpop.f32.mrb[0].mxu0
      %v7304 = vpop.f32.mrb[0].mxu0
      %v7305 = vadd.f32 %v6776, %v7304
      %v7306 = vpop.f32.mrb[0].mxu0
      %7307 = vmatprep.mubr.bf16.mxu0 0
      %7308 = vmatmul.mubr.bf16.gmra.mrb[0].mxu0 %v6593
      %v7309 = vpop.f32.mrb[0].mxu0
      %v7310 = vadd.f32 %v6781, %v7309
      %v7311 = vpop.f32.mrb[0].mxu0
      %v7312 = vpop.f32.mrb[0].mxu0
      %v7313 = vadd.f32 %v6784, %v7312
      %v7314 = vpop.f32.mrb[0].mxu0
      %7315 = vmatprep.mubr.bf16.mxu0 0
      %7316 = vmatmul.mubr.bf16.gmra.mrb[0].mxu0 %v6594
      %v7317 = vpop.f32.mrb[0].mxu0
      %v7318 = vadd.f32 %v6789, %v7317
      %v7319 = vpop.f32.mrb[0].mxu0
      %v7320 = vpop.f32.mrb[0].mxu0
      %v7321 = vadd.f32 %v6792, %v7320
      %v7322 = vpop.f32.mrb[0].mxu0
      %7323 = vmatprep.mubr.bf16.mxu0 0
      %7324 = vmatmul.mubr.bf16.gmra.mrb[0].mxu0 %v6595
      %v7325 = vpop.f32.mrb[0].mxu0
      %v7326 = vadd.f32 %v6797, %v7325
      %v7327 = vpop.f32.mrb[0].mxu0
      %v7328 = vpop.f32.mrb[0].mxu0
      %v7329 = vadd.f32 %v6800, %v7328
      %v7330 = vpop.f32.mrb[0].mxu0
      %7331 = vmatprep.mubr.bf16.mxu0 0
      %7332 = vmatmul.mubr.bf16.gmra.mrb[0].mxu0 %v6596
      %v7333 = vpop.f32.mrb[0].mxu0
      %v7334 = vadd.f32 %v6805, %v7333
      %v7335 = vpop.f32.mrb[0].mxu0
      %v7336 = vpop.f32.mrb[0].mxu0
      %v7337 = vadd.f32 %v6808, %v7336
      %v7338 = vpop.f32.mrb[0].mxu0
      %7339 = vmatprep.mubr.bf16.mxu0 0
      %7340 = vmatmul.mubr.bf16.gmra.mrb[0].mxu0 %v6597
      %v7341 = vpop.f32.mrb[0].mxu0
      %v7342 = vadd.f32 %v6813, %v7341
      %v7343 = vpop.f32.mrb[0].mxu0
      %v7344 = vpop.f32.mrb[0].mxu0
      %v7345 = vadd.f32 %v6816, %v7344
      %v7346 = vpop.f32.mrb[0].mxu0
      %7347 = vmatprep.mubr.bf16.mxu0 0
      %7348 = vmatmul.mubr.bf16.gmra.mrb[0].mxu0 %v6598
      %v7349 = vpop.f32.mrb[0].mxu0
      %v7350 = vadd.f32 %v6821, %v7349
      %v7351 = vpop.f32.mrb[0].mxu0
      %v7352 = vpop.f32.mrb[0].mxu0
      %v7353 = vadd.f32 %v6824, %v7352
      %v7354 = vpop.f32.mrb[0].mxu0
      %7355 = vmatprep.mubr.bf16.mxu0 0
      %7356 = vmatmul.mubr.bf16.gmra.mrb[0].mxu0 %v6599
      %v7357 = vpop.f32.mrb[0].mxu0
      %v7358 = vadd.f32 %v6829, %v7357
      %v7359 = vpop.f32.mrb[0].mxu0
      %v7360 = vpop.f32.mrb[0].mxu0
      %v7361 = vadd.f32 %v6832, %v7360
      %v7362 = vpop.f32.mrb[0].mxu0
      %7363 = vmatprep.mubr.bf16.mxu0 0
      %7364 = vmatmul.mubr.bf16.gmra.mrb[0].mxu0 %v6600
      %v7365 = vpop.f32.mrb[0].mxu0
      %v7366 = vadd.f32 %v6837, %v7365
      %v7367 = vpop.f32.mrb[0].mxu0
      %v7368 = vpop.f32.mrb[0].mxu0
      %v7369 = vadd.f32 %v6840, %v7368
      %v7370 = vpop.f32.mrb[0].mxu0
      %7371 = vmatprep.mubr.bf16.mxu0 0
      %7372 = vmatmul.mubr.bf16.gmra.mrb[0].mxu0 %v6601
      %v7373 = vpop.f32.mrb[0].mxu0
      %v7374 = vadd.f32 %v6845, %v7373
      %v7375 = vpop.f32.mrb[0].mxu0
      %v7376 = vpop.f32.mrb[0].mxu0
      %v7377 = vadd.f32 %v6848, %v7376
      %v7378 = vpop.f32.mrb[0].mxu0
      %7379 = vmatprep.mubr.bf16.mxu0 0
      %7380 = vmatmul.mubr.bf16.gmra.mrb[0].mxu0 %v6602
      %v7381 = vpop.f32.mrb[0].mxu0
      %v7382 = vadd.f32 %v6853, %v7381
      %v7383 = vpop.f32.mrb[0].mxu0
      %v7384 = vpop.f32.mrb[0].mxu0
      %v7385 = vadd.f32 %v6856, %v7384
      %v7386 = vpop.f32.mrb[0].mxu0
      %7387 = vmatprep.mubr.bf16.mxu0 0
      %7388 = vmatmul.mubr.bf16.gmra.mrb[0].mxu0 %v6603
      %v7389 = vpop.f32.mrb[0].mxu0
      %v7390 = vadd.f32 %v6861, %v7389
      %v7391 = vpop.f32.mrb[0].mxu0
      %v7392 = vpop.f32.mrb[0].mxu0
      %v7393 = vadd.f32 %v6864, %v7392
      %v7394 = vpop.f32.mrb[0].mxu0
      %7395 = vmatprep.mubr.bf16.mxu0 0
      %7396 = vmatmul.mubr.bf16.gmra.mrb[0].mxu0 %v6604
      %v7397 = vpop.f32.mrb[0].mxu0
      %v7398 = vadd.f32 %v6869, %v7397
      %v7399 = vpop.f32.mrb[0].mxu0
      %v7400 = vpop.f32.mrb[0].mxu0
      %v7401 = vadd.f32 %v6872, %v7400
      %v7402 = vpop.f32.mrb[0].mxu0
      %7403 = vmatprep.mubr.bf16.mxu0 0
      %7404 = vmatmul.mubr.bf16.gmra.mrb[0].mxu0 %v6605
      %v7405 = vpop.f32.mrb[0].mxu0
      %v7406 = vadd.f32 %v6877, %v7405
      %v7407 = vpop.f32.mrb[0].mxu0
      %v7408 = vpop.f32.mrb[0].mxu0
      %v7409 = vadd.f32 %v6880, %v7408
      %v7410 = vpop.f32.mrb[0].mxu0
      %7411 = vmatprep.mubr.bf16.mxu0 0
      %7412 = vmatmul.mubr.bf16.gmra.mrb[0].mxu0 %v6606
      %v7413 = vpop.f32.mrb[0].mxu0
      %v7414 = vadd.f32 %v6885, %v7413
      %v7415 = vpop.f32.mrb[0].mxu0
      %v7416 = vpop.f32.mrb[0].mxu0
      %v7417 = vadd.f32 %v6888, %v7416
      %v7418 = vpop.f32.mrb[0].mxu0
      %7419 = vmatprep.mubr.bf16.mxu0 0
      %7420 = vmatmul.mubr.bf16.gmra.mrb[0].mxu0 %v6607
      %v7421 = vpop.f32.mrb[0].mxu0
      %v7422 = vadd.f32 %v6893, %v7421
      %v7423 = vpop.f32.mrb[0].mxu0
      %v7424 = vpop.f32.mrb[0].mxu0
      %v7425 = vadd.f32 %v6896, %v7424
      %v7426 = vpop.f32.mrb[0].mxu0
      %7427 = vmatprep.mubr.bf16.mxu0 0
      %7428 = vmatmul.mubr.bf16.gmra.mrb[0].mxu0 %v6608
      %v7429 = vpop.f32.mrb[0].mxu0
      %v7430 = vadd.f32 %v6901, %v7429
      %v7431 = vpop.f32.mrb[0].mxu0
      %v7432 = vpop.f32.mrb[0].mxu0
      %v7433 = vadd.f32 %v6904, %v7432
      %v7434 = vpop.f32.mrb[0].mxu0
      %7435 = vmatprep.mubr.bf16.mxu0 0
      %7436 = vmatmul.mubr.bf16.gmra.mrb[0].mxu0 %v6609
      %v7437 = vpop.f32.mrb[0].mxu0
      %v7438 = vadd.f32 %v6909, %v7437
      %v7439 = vpop.f32.mrb[0].mxu0
      %v7440 = vpop.f32.mrb[0].mxu0
      %v7441 = vadd.f32 %v6912, %v7440
      %v7442 = vpop.f32.mrb[0].mxu0
      %7443 = vmatprep.mubr.bf16.mxu0 0
      %7444 = vmatmul.mubr.bf16.gmra.mrb[0].mxu0 %v6610
      %v7445 = vpop.f32.mrb[0].mxu0
      %v7446 = vadd.f32 %v6917, %v7445
      %v7447 = vpop.f32.mrb[0].mxu0
      %v7448 = vpop.f32.mrb[0].mxu0
      %v7449 = vadd.f32 %v6920, %v7448
      %v7450 = vpop.f32.mrb[0].mxu0
      %7451 = vmatprep.mubr.bf16.mxu0 0
      %7452 = vmatmul.mubr.bf16.gmra.mrb[0].mxu0 %v6611
      %v7453 = vpop.f32.mrb[0].mxu0
      %v7454 = vadd.f32 %v6925, %v7453
      %v7455 = vpop.f32.mrb[0].mxu0
      %v7456 = vpop.f32.mrb[0].mxu0
      %v7457 = vadd.f32 %v6928, %v7456
      %v7458 = vpop.f32.mrb[0].mxu0
      %7459 = vmatprep.mubr.bf16.mxu0 0
      %7460 = vmatmul.mubr.bf16.gmra.mrb[0].mxu0 %v6612
      %v7461 = vpop.f32.mrb[0].mxu0
      %v7462 = vadd.f32 %v6933, %v7461
      %v7463 = vpop.f32.mrb[0].mxu0
      %v7464 = vpop.f32.mrb[0].mxu0
      %v7465 = vadd.f32 %v6936, %v7464
      %v7466 = vpop.f32.mrb[0].mxu0
      %7467 = vmatprep.mubr.bf16.mxu0 0
      %7468 = vmatmul.mubr.bf16.gmra.mrb[0].mxu0 %v6613
      %v7469 = vpop.f32.mrb[0].mxu0
      %v7470 = vadd.f32 %v6941, %v7469
      %v7471 = vpop.f32.mrb[0].mxu0
      %v7472 = vpop.f32.mrb[0].mxu0
      %v7473 = vadd.f32 %v6944, %v7472
      %v7474 = vpop.f32.mrb[0].mxu0
      %7475 = vmatprep.mubr.bf16.mxu0 0
      %7476 = vmatmul.mubr.bf16.gmra.mrb[0].mxu0 %v6614
      %v7477 = vpop.f32.mrb[0].mxu0
      %v7478 = vadd.f32 %v6949, %v7477
      %v7479 = vpop.f32.mrb[0].mxu0
      %v7480 = vpop.f32.mrb[0].mxu0
      %v7481 = vadd.f32 %v6952, %v7480
      %v7482 = vpop.f32.mrb[0].mxu0
      %7483 = vmatprep.mubr.bf16.mxu0 0
      %7484 = vmatmul.mubr.bf16.gmra.mrb[0].mxu0 %v6615
      %v7485 = vpop.f32.mrb[0].mxu0
      %v7486 = vadd.f32 %v6957, %v7485
      %v7487 = vpop.f32.mrb[0].mxu0
      %v7488 = vpop.f32.mrb[0].mxu0
      %v7489 = vadd.f32 %v6960, %v7488
      %v7490 = vpop.f32.mrb[0].mxu0
      %7491 = vmatprep.mubr.bf16.mxu0 0
      %7492 = vmatmul.mubr.bf16.gmra.mrb[0].mxu0 %v6616
      %v7493 = vpop.f32.mrb[0].mxu0
      %v7494 = vadd.f32 %v6965, %v7493
      %v7495 = vpop.f32.mrb[0].mxu0
      %v7496 = vpop.f32.mrb[0].mxu0
      %v7497 = vadd.f32 %v6968, %v7496
      %v7498 = vpop.f32.mrb[0].mxu0
      %7499 = vmatprep.mubr.bf16.mxu0 0
      %7500 = vmatmul.mubr.bf16.gmra.mrb[0].mxu0 %v6617
      %v7501 = vpop.f32.mrb[0].mxu0
      %v7502 = vadd.f32 %v6973, %v7501
      %v7503 = vpop.f32.mrb[0].mxu0
      %v7504 = vpop.f32.mrb[0].mxu0
      %v7505 = vadd.f32 %v6976, %v7504
      %v7506 = vpop.f32.mrb[0].mxu0
      %7507 = vmatprep.mubr.bf16.mxu0 0
      %7508 = vmatmul.mubr.bf16.gmra.mrb[0].mxu0 %v6618
      %v7509 = vpop.f32.mrb[0].mxu0
      %v7510 = vadd.f32 %v6981, %v7509
      %v7511 = vpop.f32.mrb[0].mxu0
      %v7512 = vpop.f32.mrb[0].mxu0
      %v7513 = vadd.f32 %v6984, %v7512
      %v7514 = vpop.f32.mrb[0].mxu0
      %7515 = vmatprep.mubr.bf16.mxu0 0
      %7516 = vmatmul.mubr.bf16.gmra.mrb[0].mxu0 %v6619
      %v7517 = vpop.f32.mrb[0].mxu0
      %v7518 = vadd.f32 %v6989, %v7517
      %v7519 = vpop.f32.mrb[0].mxu0
      %v7520 = vpop.f32.mrb[0].mxu0
      %v7521 = vadd.f32 %v6992, %v7520
      %v7522 = vpop.f32.mrb[0].mxu0
      %7523 = vmatprep.mubr.bf16.mxu0 0
      %7524 = vmatmul.mubr.bf16.gmra.mrb[0].mxu0 %v6620
      %v7525 = vpop.f32.mrb[0].mxu0
      %v7526 = vadd.f32 %v6997, %v7525
      %v7527 = vpop.f32.mrb[0].mxu0
      %v7528 = vpop.f32.mrb[0].mxu0
      %v7529 = vadd.f32 %v7000, %v7528
      %v7530 = vpop.f32.mrb[0].mxu0
      %7531 = vmatprep.mubr.bf16.mxu0 0
      %7532 = vmatmul.mubr.bf16.gmra.mrb[0].mxu0 %v6621
      %v7533 = vpop.f32.mrb[0].mxu0
      %v7534 = vadd.f32 %v7005, %v7533
      %v7535 = vpop.f32.mrb[0].mxu0
      %v7536 = vpop.f32.mrb[0].mxu0
      %v7537 = vadd.f32 %v7008, %v7536
      %v7538 = vpop.f32.mrb[0].mxu0
      %7539 = vmatprep.mubr.bf16.mxu0 0
      %7540 = vmatmul.mubr.bf16.gmra.mrb[0].mxu0 %v6622
      %v7541 = vpop.f32.mrb[0].mxu0
      %v7542 = vadd.f32 %v7013, %v7541
      %v7543 = vpop.f32.mrb[0].mxu0
      %v7544 = vpop.f32.mrb[0].mxu0
      %v7545 = vadd.f32 %v7016, %v7544
      %v7546 = vpop.f32.mrb[0].mxu0
      %7547 = vmatprep.mubr.bf16.mxu0 0
      %7548 = vmatmul.mubr.bf16.gmra.mrb[0].mxu0 %v6623
      %v7549 = vpop.f32.mrb[0].mxu0
      %v7550 = vadd.f32 %v7021, %v7549
      %v7551 = vpop.f32.mrb[0].mxu0
      %v7552 = vpop.f32.mrb[0].mxu0
      %v7553 = vadd.f32 %v7024, %v7552
      %v7554 = vpop.f32.mrb[0].mxu0
      %7555 = vmatprep.mubr.bf16.mxu0 0
      %7556 = vmatmul.mubr.bf16.gmra.mrb[0].mxu0 %v6624
      %v7557 = vpop.f32.mrb[0].mxu0
      %v7558 = vadd.f32 %v7029, %v7557
      %v7559 = vpop.f32.mrb[0].mxu0
      %v7560 = vpop.f32.mrb[0].mxu0
      %v7561 = vadd.f32 %v7032, %v7560
      %v7562 = vpop.f32.mrb[0].mxu0
      %7563 = vmatprep.mubr.bf16.mxu0 0
      %7564 = vmatmul.mubr.bf16.gmra.mrb[0].mxu0 %v6625
      %v7565 = vpop.f32.mrb[0].mxu0
      %v7566 = vadd.f32 %v7037, %v7565
      %v7567 = vpop.f32.mrb[0].mxu0
      %v7568 = vpop.f32.mrb[0].mxu0
      %v7569 = vadd.f32 %v7040, %v7568
      %v7570 = vpop.f32.mrb[0].mxu0
      %7571 = vmatprep.mubr.bf16.mxu0 0
      %7572 = vmatmul.mubr.bf16.gmra.mrb[0].mxu0 %v6626
      %v7573 = vpop.f32.mrb[0].mxu0
      %v7574 = vadd.f32 %v7045, %v7573
      %v7575 = vpop.f32.mrb[0].mxu0
      %v7576 = vpop.f32.mrb[0].mxu0
      %v7577 = vadd.f32 %v7048, %v7576
      %v7578 = vpop.f32.mrb[0].mxu0
      %7579 = vmatprep.mubr.bf16.mxu0 0
      %7580 = vmatmul.mubr.bf16.gmra.mrb[0].mxu0 %v6627
      %v7581 = vpop.f32.mrb[0].mxu0
      %v7582 = vadd.f32 %v7053, %v7581
      %v7583 = vpop.f32.mrb[0].mxu0
      %v7584 = vpop.f32.mrb[0].mxu0
      %v7585 = vadd.f32 %v7056, %v7584
      %v7586 = vpop.f32.mrb[0].mxu0
      %7587 = vmatprep.mubr.bf16.mxu0 0
      %7588 = vmatmul.mubr.bf16.gmra.mrb[0].mxu0 %v6628
      %v7589 = vpop.f32.mrb[0].mxu0
      %v7590 = vadd.f32 %v7061, %v7589
      %v7591 = vpop.f32.mrb[0].mxu0
      %v7592 = vpop.f32.mrb[0].mxu0
      %v7593 = vadd.f32 %v7064, %v7592
      %v7594 = vpop.f32.mrb[0].mxu0
      %7595 = vmatprep.mubr.bf16.mxu0 0
      %7596 = vmatmul.mubr.bf16.gmra.mrb[0].mxu0 %v6629
      %v7597 = vpop.f32.mrb[0].mxu0
      %v7598 = vadd.f32 %v7069, %v7597
      %v7599 = vpop.f32.mrb[0].mxu0
      %v7600 = vpop.f32.mrb[0].mxu0
      %v7601 = vadd.f32 %v7072, %v7600
      %v7602 = vpop.f32.mrb[0].mxu0
      %7603 = vmatprep.mubr.bf16.mxu0 0
      %7604 = vmatmul.mubr.bf16.gmra.mrb[0].mxu0 %v6630
      %v7605 = vpop.f32.mrb[0].mxu0
      %v7606 = vadd.f32 %v7077, %v7605
      %v7607 = vpop.f32.mrb[0].mxu0
      %v7608 = vpop.f32.mrb[0].mxu0
      %v7609 = vadd.f32 %v7080, %v7608
      %v7610 = vpop.f32.mrb[0].mxu0
      %7611 = vmatprep.mubr.bf16.mxu0 0
      %7612 = vmatmul.mubr.bf16.gmra.mrb[0].mxu0 %v6631
      %v7613 = vpop.f32.mrb[0].mxu0
      %v7614 = vadd.f32 %v7085, %v7613
      %v7615 = vpop.f32.mrb[0].mxu0
      %v7616 = vpop.f32.mrb[0].mxu0
      %v7617 = vadd.f32 %v7088, %v7616
      %v7618 = vpop.f32.mrb[0].mxu0
      %7619 = vmatprep.mubr.bf16.mxu0 0
      %7620 = vmatmul.mubr.bf16.gmra.mrb[0].mxu0 %v6632
      %v7621 = vpop.f32.mrb[0].mxu0
      %v7622 = vadd.f32 %v7093, %v7621
      %v7623 = vpop.f32.mrb[0].mxu0
      %v7624 = vpop.f32.mrb[0].mxu0
      %v7625 = vadd.f32 %v7096, %v7624
      %v7626 = vpop.f32.mrb[0].mxu0
      %7627 = vmatprep.mubr.bf16.mxu0 0
      %7628 = vmatmul.mubr.bf16.gmra.mrb[0].mxu0 %v6633
      %v7629 = vpop.f32.mrb[0].mxu0
      %v7630 = vadd.f32 %v7101, %v7629
      %v7631 = vpop.f32.mrb[0].mxu0
      %v7632 = vpop.f32.mrb[0].mxu0
      %v7633 = vadd.f32 %v7104, %v7632
      %v7634 = vpop.f32.mrb[0].mxu0
      %7635 = vmatprep.mubr.bf16.mxu0 0
      %7636 = vmatmul.mubr.bf16.gmra.mrb[0].mxu0 %v6634
      %v7637 = vpop.f32.mrb[0].mxu0
      %v7638 = vadd.f32 %v7109, %v7637
      %v7639 = vpop.f32.mrb[0].mxu0
      %v7640 = vpop.f32.mrb[0].mxu0
      %v7641 = vadd.f32 %v7112, %v7640
      %v7642 = vpop.f32.mrb[0].mxu0
      %7643 = vmatprep.mubr.bf16.mxu0 0
      %7644 = vmatmul.mubr.bf16.gmra.mrb[0].mxu0 %v6635
      %v7645 = vpop.f32.mrb[0].mxu0
      %v7646 = vadd.f32 %v7117, %v7645
      %v7647 = vpop.f32.mrb[0].mxu0
      %v7648 = vpop.f32.mrb[0].mxu0
      %v7649 = vadd.f32 %v7120, %v7648
      %v7650 = vpop.f32.mrb[0].mxu0
      %7651 = vmatprep.mubr.bf16.mxu0 0
      %7652 = vmatmul.mubr.bf16.gmra.mrb[0].mxu0 %v6636
      %v7653 = vpop.f32.mrb[0].mxu0
      %v7654 = vadd.f32 %v7125, %v7653
      %v7655 = vpop.f32.mrb[0].mxu0
      %v7656 = vpop.f32.mrb[0].mxu0
      %v7657 = vadd.f32 %v7128, %v7656
      %v7658 = vpop.f32.mrb[0].mxu0
      %7659 = vmatprep.mubr.bf16.mxu0 0
      %7660 = vmatmul.mubr.bf16.gmra.mrb[0].mxu0 %v6637
      %v7661 = vpop.f32.mrb[0].mxu0
      %v7662 = vadd.f32 %v7133, %v7661
      %v7663 = vpop.f32.mrb[0].mxu0
      %v7664 = vpop.f32.mrb[0].mxu0
      %v7665 = vadd.f32 %v7136, %v7664
      %v7666 = vpop.f32.mrb[0].mxu0
      %7667 = vmatprep.mubr.bf16.mxu0 0
      %7668 = vmatmul.mubr.bf16.gmra.mrb[0].mxu0 %v6638
      %v7669 = vpop.f32.mrb[0].mxu0
      %v7670 = vadd.f32 %v7141, %v7669
      %v7671 = vpop.f32.mrb[0].mxu0
      %v7672 = vpop.f32.mrb[0].mxu0
      %v7673 = vadd.f32 %v7144, %v7672
      %v7674 = vpop.f32.mrb[0].mxu0
      %7675 = vmatprep.mubr.bf16.mxu0 0
      %7676 = vmatmul.mubr.bf16.gmra.mrb[0].mxu0 %v6639
      %v7677 = vpop.f32.mrb[0].mxu0
      %v7678 = vadd.f32 %v7149, %v7677
      %v7679 = vpop.f32.mrb[0].mxu0
      %v7680 = vpop.f32.mrb[0].mxu0
      %v7681 = vadd.f32 %v7152, %v7680
      %v7682 = vpop.f32.mrb[0].mxu0
      %7683 = vmatprep.mubr.bf16.mxu0 0
      %7684 = vmatmul.mubr.bf16.gmra.mrb[0].mxu0 %v6640
      %v7685 = vpop.f32.mrb[0].mxu0
      %v7686 = vadd.f32 %v7157, %v7685
      %v7687 = vpop.f32.mrb[0].mxu0
      %v7688 = vpop.f32.mrb[0].mxu0
      %v7689 = vadd.f32 %v7160, %v7688
      %v7690 = vpop.f32.mrb[0].mxu0
      %7691 = vmatprep.mubr.bf16.mxu0 0
      %7692 = vmatmul.mubr.bf16.gmra.mrb[0].mxu0 %v6641
      %v7693 = vpop.f32.mrb[0].mxu0
      %v7694 = vadd.f32 %v7165, %v7693
      %v7695 = vpop.f32.mrb[0].mxu0
      %v7696 = vpop.f32.mrb[0].mxu0
      %v7697 = vadd.f32 %v7168, %v7696
      %v7698 = vpop.f32.mrb[0].mxu0
      %7699 = vmatprep.mubr.bf16.mxu0 0
      %7700 = vmatmul.mubr.bf16.gmra.mrb[0].mxu0 %v6642
      %v7701 = vpop.f32.mrb[0].mxu0
      %v7702 = vadd.f32 %v7173, %v7701
      %v7703 = vpop.f32.mrb[0].mxu0
      %v7704 = vpop.f32.mrb[0].mxu0
      %v7705 = vadd.f32 %v7176, %v7704
      %v7706 = vpop.f32.mrb[0].mxu0
      %7707 = vmatprep.mubr.bf16.mxu0 0
      %7708 = vmatmul.mubr.bf16.gmra.mrb[0].mxu0 %v6643
      %v7709 = vpop.f32.mrb[0].mxu0
      %v7710 = vadd.f32 %v7181, %v7709
      %v7711 = vpop.f32.mrb[0].mxu0
      %v7712 = vpop.f32.mrb[0].mxu0
      %v7713 = vadd.f32 %v7184, %v7712
      %v7714 = vpop.f32.mrb[0].mxu0
      %7715 = vmatprep.mubr.bf16.mxu0 0
      %7716 = vmatmul.mubr.bf16.gmra.mrb[0].mxu0 %v6644
      %v7717 = vpop.f32.mrb[0].mxu0
      %v7718 = vadd.f32 %v7189, %v7717
      %v7719 = vpop.f32.mrb[0].mxu0
      %v7720 = vpop.f32.mrb[0].mxu0
      %v7721 = vadd.f32 %v7192, %v7720
      %v7722 = vpop.f32.mrb[0].mxu0
      %7723 = vmatprep.mubr.bf16.mxu0 0
      %7724 = vmatmul.mubr.bf16.gmra.mrb[0].mxu0 %v6645
      %v7725 = vpop.f32.mrb[0].mxu0
      %v7726 = vadd.f32 %v7197, %v7725
      %v7727 = vpop.f32.mrb[0].mxu0
      %v7728 = vpop.f32.mrb[0].mxu0
      %v7729 = vadd.f32 %v7200, %v7728
      %v7730 = vpop.f32.mrb[0].mxu0
      %7731 = vmatprep.mubr.bf16.mxu0 0
      %7732 = vmatmul.mubr.bf16.gmra.mrb[0].mxu0 %v6646
      %v7733 = vpop.f32.mrb[0].mxu0
      %v7734 = vadd.f32 %v7205, %v7733
      %v7735 = vpop.f32.mrb[0].mxu0
      %v7736 = vpop.f32.mrb[0].mxu0
      %v7737 = vadd.f32 %v7208, %v7736
      %v7738 = vpop.f32.mrb[0].mxu0
      %7739 = vdwg.mxu0
      %v7740 = vld [vmem:[#allocation5 + $0x20] sm:$0xff]
      %v7741 = vld [vmem:[#allocation5 + $0x28] sm:$0xff]
      %v7742 = vld [vmem:[#allocation5 + $0x30] sm:$0xff]
      %v7743 = vld [vmem:[#allocation5 + $0x38] sm:$0xff]
      %v7744 = vld [vmem:[#allocation5 + $0x40] sm:$0xff]
      %v7745 = vld [vmem:[#allocation5 + $0x48] sm:$0xff]
      %v7746 = vld [vmem:[#allocation5 + $0x50] sm:$0xff]
      %v7747 = vld [vmem:[#allocation5 + $0x58] sm:$0xff]
      %v7748 = vld [vmem:[#allocation5 + $0x60] sm:$0xff]
      %v7749 = vld [vmem:[#allocation5 + $0x68] sm:$0xff]
      %v7750 = vld [vmem:[#allocation5 + $0x70] sm:$0xff]
      %v7751 = vld [vmem:[#allocation5 + $0x78] sm:$0xff]
      %v7752 = vld [vmem:[#allocation5 + $0x80] sm:$0xff]
      %v7753 = vld [vmem:[#allocation5 + $0x88] sm:$0xff]
      %v7754 = vld [vmem:[#allocation5 + $0x90] sm:$0xff]
      %v7755 = vld [vmem:[#allocation5 + $0x98] sm:$0xff]
      %v7756 = vld [vmem:[#allocation5 + $0xa0] sm:$0xff]
      %v7757 = vld [vmem:[#allocation5 + $0xa8] sm:$0xff]
      %v7758 = vld [vmem:[#allocation5 + $0xb0] sm:$0xff]
      %v7759 = vld [vmem:[#allocation5 + $0xb8] sm:$0xff]
      %v7760 = vld [vmem:[#allocation5 + $0xc0] sm:$0xff]
      %v7761 = vld [vmem:[#allocation5 + $0xc8] sm:$0xff]
      %v7762 = vld [vmem:[#allocation5 + $0xd0] sm:$0xff]
      %v7763 = vld [vmem:[#allocation5 + $0xd8] sm:$0xff]
      %v7764 = vld [vmem:[#allocation5 + $0xe0] sm:$0xff]
      %v7765 = vld [vmem:[#allocation5 + $0xe8] sm:$0xff]
      %v7766 = vld [vmem:[#allocation5 + $0xf0] sm:$0xff]
      %v7767 = vld [vmem:[#allocation5 + $0xf8] sm:$0xff]
      %v7768 = vld [vmem:[#allocation5 + $0x100] sm:$0xff]
      %v7769 = vld [vmem:[#allocation5 + $0x108] sm:$0xff]
      %v7770 = vld [vmem:[#allocation5 + $0x110] sm:$0xff]
      %v7771 = vld [vmem:[#allocation5 + $0x118] sm:$0xff]
      %v7772 = vld [vmem:[#allocation5 + $0x120] sm:$0xff]
      %v7773 = vld [vmem:[#allocation5 + $0x128] sm:$0xff]
      %v7774 = vld [vmem:[#allocation5 + $0x130] sm:$0xff]
      %v7775 = vld [vmem:[#allocation5 + $0x138] sm:$0xff]
      %v7776 = vld [vmem:[#allocation5 + $0x140] sm:$0xff]
      %v7777 = vld [vmem:[#allocation5 + $0x148] sm:$0xff]
      %v7778 = vld [vmem:[#allocation5 + $0x150] sm:$0xff]
      %v7779 = vld [vmem:[#allocation5 + $0x158] sm:$0xff]
      %v7780 = vld [vmem:[#allocation5 + $0x160] sm:$0xff]
      %v7781 = vld [vmem:[#allocation5 + $0x168] sm:$0xff]
      %v7782 = vld [vmem:[#allocation5 + $0x170] sm:$0xff]
      %v7783 = vld [vmem:[#allocation5 + $0x178] sm:$0xff]
      %v7784 = vld [vmem:[#allocation5 + $0x180] sm:$0xff]
      %v7785 = vld [vmem:[#allocation5 + $0x188] sm:$0xff]
      %v7786 = vld [vmem:[#allocation5 + $0x190] sm:$0xff]
      %v7787 = vld [vmem:[#allocation5 + $0x198] sm:$0xff]
      %v7788 = vld [vmem:[#allocation5 + $0x1a0] sm:$0xff]
      %v7789 = vld [vmem:[#allocation5 + $0x1a8] sm:$0xff]
      %v7790 = vld [vmem:[#allocation5 + $0x1b0] sm:$0xff]
      %v7791 = vld [vmem:[#allocation5 + $0x1b8] sm:$0xff]
      %v7792 = vld [vmem:[#allocation5 + $0x1c0] sm:$0xff]
      %v7793 = vld [vmem:[#allocation5 + $0x1c8] sm:$0xff]
      %v7794 = vld [vmem:[#allocation5 + $0x1d0] sm:$0xff]
      %v7795 = vld [vmem:[#allocation5 + $0x1d8] sm:$0xff]
      %s7796 = scalar_lea.vmem %s9, 128
      %v7797 = vld [vmem:[%s7796] sm:$0xf]
      %v7798 = vld [vmem:[%s7796 + $0x4] sm:$0xf]
      %v7799 = vld [vmem:[%s7796 + $0x8] sm:$0xf]
      %v7800 = vld [vmem:[%s7796 + $0xc] sm:$0xf]
      %v7801 = vld [vmem:[%s7796 + $0x10] sm:$0xf]
      %v7802 = vld [vmem:[%s7796 + $0x14] sm:$0xf]
      %v7803 = vld [vmem:[%s7796 + $0x18] sm:$0xf]
      %v7804 = vld [vmem:[%s7796 + $0x1c] sm:$0xf]
      %v7805 = vld [vmem:[%s7796 + $0x20] sm:$0xf]
      %v7806 = vld [vmem:[%s7796 + $0x24] sm:$0xf]
      %v7807 = vld [vmem:[%s7796 + $0x28] sm:$0xf]
      %v7808 = vld [vmem:[%s7796 + $0x2c] sm:$0xf]
      %v7809 = vld [vmem:[%s7796 + $0x30] sm:$0xf]
      %v7810 = vld [vmem:[%s7796 + $0x34] sm:$0xf]
      %v7811 = vld [vmem:[%s7796 + $0x38] sm:$0xf]
      %v7812 = vld [vmem:[%s7796 + $0x3c] sm:$0xf]
      %v7829 = vunpack.c.l.b16 %v7797
      %v7830 = vunpack.c.l.b16 %v7798
      %v7831 = vunpack.c.l.b16 %v7799
      %v7832 = vunpack.c.l.b16 %v7800
      %v7833 = vunpack.c.l.b16 %v7801
      %v7834 = vunpack.c.l.b16 %v7802
      %v7835 = vunpack.c.l.b16 %v7803
      %v7836 = vunpack.c.l.b16 %v7804
      %v7837 = vunpack.c.l.b16 %v7805
      %v7838 = vunpack.c.l.b16 %v7806
      %v7839 = vunpack.c.l.b16 %v7807
      %v7840 = vunpack.c.l.b16 %v7808
      %v7841 = vunpack.c.l.b16 %v7809
      %v7842 = vunpack.c.l.b16 %v7810
      %v7843 = vunpack.c.l.b16 %v7811
      %v7844 = vunpack.c.l.b16 %v7812
      %v7845 = vpack.c.b16 %v7830, %v7829
      %v7846 = vpack.c.b16 %v7832, %v7831
      %v7847 = vpack.c.b16 %v7834, %v7833
      %v7848 = vpack.c.b16 %v7836, %v7835
      %v7849 = vpack.c.b16 %v7838, %v7837
      %v7850 = vpack.c.b16 %v7840, %v7839
      %v7851 = vpack.c.b16 %v7842, %v7841
      %v7852 = vpack.c.b16 %v7844, %v7843
      %7861 = vmatprep.subr.bf16.mxu0 0
      %7862 = vmatpush1.bf16.msra.mxu0 %v7845
      %7863 = vmatprep.subr.bf16.mxu0 0
      %7864 = vmatpush1.bf16.msra.mxu0 %v7846
      %7865 = vmatprep.subr.bf16.mxu0 0
      %7866 = vmatpush1.bf16.msra.mxu0 %v7847
      %7867 = vmatprep.subr.bf16.mxu0 0
      %7868 = vmatpush1.bf16.msra.mxu0 %v7848
      %7869 = vmatprep.subr.bf16.mxu0 0
      %7870 = vmatpush1.bf16.msra.mxu0 %v7849
      %7871 = vmatprep.subr.bf16.mxu0 0
      %7872 = vmatpush1.bf16.msra.mxu0 %v7850
      %7873 = vmatprep.subr.bf16.mxu0 0
      %7874 = vmatpush1.bf16.msra.mxu0 %v7851
      %7875 = vmatprep.subr.bf16.mxu0 0
      %7876 = vmatpush1.bf16.msra.mxu0 %v7852
      %7877 = vmatprep.subr.bf16.mxu0 0
      %7878 = vmatpush1.bf16.msra.mxu0 0
      %7879 = vmatprep.subr.bf16.mxu0 0
      %7880 = vmatpush1.bf16.msra.mxu0 0
      %7881 = vmatprep.subr.bf16.mxu0 0
      %7882 = vmatpush1.bf16.msra.mxu0 0
      %7883 = vmatprep.subr.bf16.mxu0 0
      %7884 = vmatpush1.bf16.msra.mxu0 0
      %7885 = vmatprep.subr.bf16.mxu0 0
      %7886 = vmatpush1.bf16.msra.mxu0 0
      %7887 = vmatprep.subr.bf16.mxu0 0
      %7888 = vmatpush1.bf16.msra.mxu0 0
      %7889 = vmatprep.subr.bf16.mxu0 0
      %7890 = vmatpush1.bf16.msra.mxu0 0
      %7891 = vmatprep.subr.bf16.mxu0 0
      %7892 = vmatpush1.bf16.msra.mxu0 0
      %7893 = vmatprep.mubr.bf16.mxu0 0
      %7894 = vmatmul.mubr.bf16.gmra.mrb[0].mxu0 %v7740
      %v7895 = vpop.f32.mrb[0].mxu0
      %v7896 = vadd.f32 0.0, %v7895
      %v7897 = vpop.f32.mrb[0].mxu0
      %v7898 = vpop.f32.mrb[0].mxu0
      %v7899 = vadd.f32 0.0, %v7898
      %v7900 = vpop.f32.mrb[0].mxu0
      %7901 = vmatprep.mubr.bf16.mxu0 0
      %7902 = vmatmul.mubr.bf16.gmra.mrb[0].mxu0 %v7741
      %v7903 = vpop.f32.mrb[0].mxu0
      %v7904 = vadd.f32 0.0, %v7903
      %v7905 = vpop.f32.mrb[0].mxu0
      %v7906 = vpop.f32.mrb[0].mxu0
      %v7907 = vadd.f32 0.0, %v7906
      %v7908 = vpop.f32.mrb[0].mxu0
      %7909 = vmatprep.mubr.bf16.mxu0 0
      %7910 = vmatmul.mubr.bf16.gmra.mrb[0].mxu0 %v7742
      %v7911 = vpop.f32.mrb[0].mxu0
      %v7912 = vadd.f32 0.0, %v7911
      %v7913 = vpop.f32.mrb[0].mxu0
      %v7914 = vpop.f32.mrb[0].mxu0
      %v7915 = vadd.f32 0.0, %v7914
      %v7916 = vpop.f32.mrb[0].mxu0
      %7917 = vmatprep.mubr.bf16.mxu0 0
      %7918 = vmatmul.mubr.bf16.gmra.mrb[0].mxu0 %v7743
      %v7919 = vpop.f32.mrb[0].mxu0
      %v7920 = vadd.f32 0.0, %v7919
      %v7921 = vpop.f32.mrb[0].mxu0
      %v7922 = vpop.f32.mrb[0].mxu0
      %v7923 = vadd.f32 0.0, %v7922
      %v7924 = vpop.f32.mrb[0].mxu0
      %7925 = vmatprep.mubr.bf16.mxu0 0
      %7926 = vmatmul.mubr.bf16.gmra.mrb[0].mxu0 %v7744
      %v7927 = vpop.f32.mrb[0].mxu0
      %v7928 = vadd.f32 0.0, %v7927
      %v7929 = vpop.f32.mrb[0].mxu0
      %v7930 = vpop.f32.mrb[0].mxu0
      %v7931 = vadd.f32 0.0, %v7930
      %v7932 = vpop.f32.mrb[0].mxu0
      %7933 = vmatprep.mubr.bf16.mxu0 0
      %7934 = vmatmul.mubr.bf16.gmra.mrb[0].mxu0 %v7745
      %v7935 = vpop.f32.mrb[0].mxu0
      %v7936 = vadd.f32 0.0, %v7935
      %v7937 = vpop.f32.mrb[0].mxu0
      %v7938 = vpop.f32.mrb[0].mxu0
      %v7939 = vadd.f32 0.0, %v7938
      %v7940 = vpop.f32.mrb[0].mxu0
      %7941 = vmatprep.mubr.bf16.mxu0 0
      %7942 = vmatmul.mubr.bf16.gmra.mrb[0].mxu0 %v7746
      %v7943 = vpop.f32.mrb[0].mxu0
      %v7944 = vadd.f32 0.0, %v7943
      %v7945 = vpop.f32.mrb[0].mxu0
      %v7946 = vpop.f32.mrb[0].mxu0
      %v7947 = vadd.f32 0.0, %v7946
      %v7948 = vpop.f32.mrb[0].mxu0
      %7949 = vmatprep.mubr.bf16.mxu0 0
      %7950 = vmatmul.mubr.bf16.gmra.mrb[0].mxu0 %v7747
      %v7951 = vpop.f32.mrb[0].mxu0
      %v7952 = vadd.f32 0.0, %v7951
      %v7953 = vpop.f32.mrb[0].mxu0
      %v7954 = vpop.f32.mrb[0].mxu0
      %v7955 = vadd.f32 0.0, %v7954
      %v7956 = vpop.f32.mrb[0].mxu0
      %7957 = vmatprep.mubr.bf16.mxu0 0
      %7958 = vmatmul.mubr.bf16.gmra.mrb[0].mxu0 %v7748
      %v7959 = vpop.f32.mrb[0].mxu0
      %v7960 = vadd.f32 0.0, %v7959
      %v7961 = vpop.f32.mrb[0].mxu0
      %v7962 = vpop.f32.mrb[0].mxu0
      %v7963 = vadd.f32 0.0, %v7962
      %v7964 = vpop.f32.mrb[0].mxu0
      %7965 = vmatprep.mubr.bf16.mxu0 0
      %7966 = vmatmul.mubr.bf16.gmra.mrb[0].mxu0 %v7749
      %v7967 = vpop.f32.mrb[0].mxu0
      %v7968 = vadd.f32 0.0, %v7967
      %v7969 = vpop.f32.mrb[0].mxu0
      %v7970 = vpop.f32.mrb[0].mxu0
      %v7971 = vadd.f32 0.0, %v7970
      %v7972 = vpop.f32.mrb[0].mxu0
      %7973 = vmatprep.mubr.bf16.mxu0 0
      %7974 = vmatmul.mubr.bf16.gmra.mrb[0].mxu0 %v7750
      %v7975 = vpop.f32.mrb[0].mxu0
      %v7976 = vadd.f32 0.0, %v7975
      %v7977 = vpop.f32.mrb[0].mxu0
      %v7978 = vpop.f32.mrb[0].mxu0
      %v7979 = vadd.f32 0.0, %v7978
      %v7980 = vpop.f32.mrb[0].mxu0
      %7981 = vmatprep.mubr.bf16.mxu0 0
      %7982 = vmatmul.mubr.bf16.gmra.mrb[0].mxu0 %v7751
      %v7983 = vpop.f32.mrb[0].mxu0
      %v7984 = vadd.f32 0.0, %v7983
      %v7985 = vpop.f32.mrb[0].mxu0
      %v7986 = vpop.f32.mrb[0].mxu0
      %v7987 = vadd.f32 0.0, %v7986
      %v7988 = vpop.f32.mrb[0].mxu0
      %7989 = vmatprep.mubr.bf16.mxu0 0
      %7990 = vmatmul.mubr.bf16.gmra.mrb[0].mxu0 %v7752
      %v7991 = vpop.f32.mrb[0].mxu0
      %v7992 = vadd.f32 0.0, %v7991
      %v7993 = vpop.f32.mrb[0].mxu0
      %v7994 = vpop.f32.mrb[0].mxu0
      %v7995 = vadd.f32 0.0, %v7994
      %v7996 = vpop.f32.mrb[0].mxu0
      %7997 = vmatprep.mubr.bf16.mxu0 0
      %7998 = vmatmul.mubr.bf16.gmra.mrb[0].mxu0 %v7753
      %v7999 = vpop.f32.mrb[0].mxu0
      %v8000 = vadd.f32 0.0, %v7999
      %v8001 = vpop.f32.mrb[0].mxu0
      %v8002 = vpop.f32.mrb[0].mxu0
      %v8003 = vadd.f32 0.0, %v8002
      %v8004 = vpop.f32.mrb[0].mxu0
      %8005 = vmatprep.mubr.bf16.mxu0 0
      %8006 = vmatmul.mubr.bf16.gmra.mrb[0].mxu0 %v7754
      %v8007 = vpop.f32.mrb[0].mxu0
      %v8008 = vadd.f32 0.0, %v8007
      %v8009 = vpop.f32.mrb[0].mxu0
      %v8010 = vpop.f32.mrb[0].mxu0
      %v8011 = vadd.f32 0.0, %v8010
      %v8012 = vpop.f32.mrb[0].mxu0
      %8013 = vmatprep.mubr.bf16.mxu0 0
      %8014 = vmatmul.mubr.bf16.gmra.mrb[0].mxu0 %v7755
      %v8015 = vpop.f32.mrb[0].mxu0
      %v8016 = vadd.f32 0.0, %v8015
      %v8017 = vpop.f32.mrb[0].mxu0
      %v8018 = vpop.f32.mrb[0].mxu0
      %v8019 = vadd.f32 0.0, %v8018
      %v8020 = vpop.f32.mrb[0].mxu0
      %8021 = vmatprep.mubr.bf16.mxu0 0
      %8022 = vmatmul.mubr.bf16.gmra.mrb[0].mxu0 %v7756
      %v8023 = vpop.f32.mrb[0].mxu0
      %v8024 = vadd.f32 0.0, %v8023
      %v8025 = vpop.f32.mrb[0].mxu0
      %v8026 = vpop.f32.mrb[0].mxu0
      %v8027 = vadd.f32 0.0, %v8026
      %v8028 = vpop.f32.mrb[0].mxu0
      %8029 = vmatprep.mubr.bf16.mxu0 0
      %8030 = vmatmul.mubr.bf16.gmra.mrb[0].mxu0 %v7757
      %v8031 = vpop.f32.mrb[0].mxu0
      %v8032 = vadd.f32 0.0, %v8031
      %v8033 = vpop.f32.mrb[0].mxu0
      %v8034 = vpop.f32.mrb[0].mxu0
      %v8035 = vadd.f32 0.0, %v8034
      %v8036 = vpop.f32.mrb[0].mxu0
      %8037 = vmatprep.mubr.bf16.mxu0 0
      %8038 = vmatmul.mubr.bf16.gmra.mrb[0].mxu0 %v7758
      %v8039 = vpop.f32.mrb[0].mxu0
      %v8040 = vadd.f32 0.0, %v8039
      %v8041 = vpop.f32.mrb[0].mxu0
      %v8042 = vpop.f32.mrb[0].mxu0
      %v8043 = vadd.f32 0.0, %v8042
      %v8044 = vpop.f32.mrb[0].mxu0
      %8045 = vmatprep.mubr.bf16.mxu0 0
      %8046 = vmatmul.mubr.bf16.gmra.mrb[0].mxu0 %v7759
      %v8047 = vpop.f32.mrb[0].mxu0
      %v8048 = vadd.f32 0.0, %v8047
      %v8049 = vpop.f32.mrb[0].mxu0
      %v8050 = vpop.f32.mrb[0].mxu0
      %v8051 = vadd.f32 0.0, %v8050
      %v8052 = vpop.f32.mrb[0].mxu0
      %8053 = vmatprep.mubr.bf16.mxu0 0
      %8054 = vmatmul.mubr.bf16.gmra.mrb[0].mxu0 %v7760
      %v8055 = vpop.f32.mrb[0].mxu0
      %v8056 = vadd.f32 0.0, %v8055
      %v8057 = vpop.f32.mrb[0].mxu0
      %v8058 = vpop.f32.mrb[0].mxu0
      %v8059 = vadd.f32 0.0, %v8058
      %v8060 = vpop.f32.mrb[0].mxu0
      %8061 = vmatprep.mubr.bf16.mxu0 0
      %8062 = vmatmul.mubr.bf16.gmra.mrb[0].mxu0 %v7761
      %v8063 = vpop.f32.mrb[0].mxu0
      %v8064 = vadd.f32 0.0, %v8063
      %v8065 = vpop.f32.mrb[0].mxu0
      %v8066 = vpop.f32.mrb[0].mxu0
      %v8067 = vadd.f32 0.0, %v8066
      %v8068 = vpop.f32.mrb[0].mxu0
      %8069 = vmatprep.mubr.bf16.mxu0 0
      %8070 = vmatmul.mubr.bf16.gmra.mrb[0].mxu0 %v7762
      %v8071 = vpop.f32.mrb[0].mxu0
      %v8072 = vadd.f32 0.0, %v8071
      %v8073 = vpop.f32.mrb[0].mxu0
      %v8074 = vpop.f32.mrb[0].mxu0
      %v8075 = vadd.f32 0.0, %v8074
      %v8076 = vpop.f32.mrb[0].mxu0
      %8077 = vmatprep.mubr.bf16.mxu0 0
      %8078 = vmatmul.mubr.bf16.gmra.mrb[0].mxu0 %v7763
      %v8079 = vpop.f32.mrb[0].mxu0
      %v8080 = vadd.f32 0.0, %v8079
      %v8081 = vpop.f32.mrb[0].mxu0
      %v8082 = vpop.f32.mrb[0].mxu0
      %v8083 = vadd.f32 0.0, %v8082
      %v8084 = vpop.f32.mrb[0].mxu0
      %8085 = vmatprep.mubr.bf16.mxu0 0
      %8086 = vmatmul.mubr.bf16.gmra.mrb[0].mxu0 %v7764
      %v8087 = vpop.f32.mrb[0].mxu0
      %v8088 = vadd.f32 0.0, %v8087
      %v8089 = vpop.f32.mrb[0].mxu0
      %v8090 = vpop.f32.mrb[0].mxu0
      %v8091 = vadd.f32 0.0, %v8090
      %v8092 = vpop.f32.mrb[0].mxu0
      %8093 = vmatprep.mubr.bf16.mxu0 0
      %8094 = vmatmul.mubr.bf16.gmra.mrb[0].mxu0 %v7765
      %v8095 = vpop.f32.mrb[0].mxu0
      %v8096 = vadd.f32 0.0, %v8095
      %v8097 = vpop.f32.mrb[0].mxu0
      %v8098 = vpop.f32.mrb[0].mxu0
      %v8099 = vadd.f32 0.0, %v8098
      %v8100 = vpop.f32.mrb[0].mxu0
      %8101 = vmatprep.mubr.bf16.mxu0 0
      %8102 = vmatmul.mubr.bf16.gmra.mrb[0].mxu0 %v7766
      %v8103 = vpop.f32.mrb[0].mxu0
      %v8104 = vadd.f32 0.0, %v8103
      %v8105 = vpop.f32.mrb[0].mxu0
      %v8106 = vpop.f32.mrb[0].mxu0
      %v8107 = vadd.f32 0.0, %v8106
      %v8108 = vpop.f32.mrb[0].mxu0
      %8109 = vmatprep.mubr.bf16.mxu0 0
      %8110 = vmatmul.mubr.bf16.gmra.mrb[0].mxu0 %v7767
      %v8111 = vpop.f32.mrb[0].mxu0
      %v8112 = vadd.f32 0.0, %v8111
      %v8113 = vpop.f32.mrb[0].mxu0
      %v8114 = vpop.f32.mrb[0].mxu0
      %v8115 = vadd.f32 0.0, %v8114
      %v8116 = vpop.f32.mrb[0].mxu0
      %8117 = vmatprep.mubr.bf16.mxu0 0
      %8118 = vmatmul.mubr.bf16.gmra.mrb[0].mxu0 %v7768
      %v8119 = vpop.f32.mrb[0].mxu0
      %v8120 = vadd.f32 0.0, %v8119
      %v8121 = vpop.f32.mrb[0].mxu0
      %v8122 = vpop.f32.mrb[0].mxu0
      %v8123 = vadd.f32 0.0, %v8122
      %v8124 = vpop.f32.mrb[0].mxu0
      %8125 = vmatprep.mubr.bf16.mxu0 0
      %8126 = vmatmul.mubr.bf16.gmra.mrb[0].mxu0 %v7769
      %v8127 = vpop.f32.mrb[0].mxu0
      %v8128 = vadd.f32 0.0, %v8127
      %v8129 = vpop.f32.mrb[0].mxu0
      %v8130 = vpop.f32.mrb[0].mxu0
      %v8131 = vadd.f32 0.0, %v8130
      %v8132 = vpop.f32.mrb[0].mxu0
      %8133 = vmatprep.mubr.bf16.mxu0 0
      %8134 = vmatmul.mubr.bf16.gmra.mrb[0].mxu0 %v7770
      %v8135 = vpop.f32.mrb[0].mxu0
      %v8136 = vadd.f32 0.0, %v8135
      %v8137 = vpop.f32.mrb[0].mxu0
      %v8138 = vpop.f32.mrb[0].mxu0
      %v8139 = vadd.f32 0.0, %v8138
      %v8140 = vpop.f32.mrb[0].mxu0
      %8141 = vmatprep.mubr.bf16.mxu0 0
      %8142 = vmatmul.mubr.bf16.gmra.mrb[0].mxu0 %v7771
      %v8143 = vpop.f32.mrb[0].mxu0
      %v8144 = vadd.f32 0.0, %v8143
      %v8145 = vpop.f32.mrb[0].mxu0
      %v8146 = vpop.f32.mrb[0].mxu0
      %v8147 = vadd.f32 0.0, %v8146
      %v8148 = vpop.f32.mrb[0].mxu0
      %8149 = vmatprep.mubr.bf16.mxu0 0
      %8150 = vmatmul.mubr.bf16.gmra.mrb[0].mxu0 %v7772
      %v8151 = vpop.f32.mrb[0].mxu0
      %v8152 = vadd.f32 0.0, %v8151
      %v8153 = vpop.f32.mrb[0].mxu0
      %v8154 = vpop.f32.mrb[0].mxu0
      %v8155 = vadd.f32 0.0, %v8154
      %v8156 = vpop.f32.mrb[0].mxu0
      %8157 = vmatprep.mubr.bf16.mxu0 0
      %8158 = vmatmul.mubr.bf16.gmra.mrb[0].mxu0 %v7773
      %v8159 = vpop.f32.mrb[0].mxu0
      %v8160 = vadd.f32 0.0, %v8159
      %v8161 = vpop.f32.mrb[0].mxu0
      %v8162 = vpop.f32.mrb[0].mxu0
      %v8163 = vadd.f32 0.0, %v8162
      %v8164 = vpop.f32.mrb[0].mxu0
      %8165 = vmatprep.mubr.bf16.mxu0 0
      %8166 = vmatmul.mubr.bf16.gmra.mrb[0].mxu0 %v7774
      %v8167 = vpop.f32.mrb[0].mxu0
      %v8168 = vadd.f32 0.0, %v8167
      %v8169 = vpop.f32.mrb[0].mxu0
      %v8170 = vpop.f32.mrb[0].mxu0
      %v8171 = vadd.f32 0.0, %v8170
      %v8172 = vpop.f32.mrb[0].mxu0
      %8173 = vmatprep.mubr.bf16.mxu0 0
      %8174 = vmatmul.mubr.bf16.gmra.mrb[0].mxu0 %v7775
      %v8175 = vpop.f32.mrb[0].mxu0
      %v8176 = vadd.f32 0.0, %v8175
      %v8177 = vpop.f32.mrb[0].mxu0
      %v8178 = vpop.f32.mrb[0].mxu0
      %v8179 = vadd.f32 0.0, %v8178
      %v8180 = vpop.f32.mrb[0].mxu0
      %8181 = vmatprep.mubr.bf16.mxu0 0
      %8182 = vmatmul.mubr.bf16.gmra.mrb[0].mxu0 %v7776
      %v8183 = vpop.f32.mrb[0].mxu0
      %v8184 = vadd.f32 0.0, %v8183
      %v8185 = vpop.f32.mrb[0].mxu0
      %v8186 = vpop.f32.mrb[0].mxu0
      %v8187 = vadd.f32 0.0, %v8186
      %v8188 = vpop.f32.mrb[0].mxu0
      %8189 = vmatprep.mubr.bf16.mxu0 0
      %8190 = vmatmul.mubr.bf16.gmra.mrb[0].mxu0 %v7777
      %v8191 = vpop.f32.mrb[0].mxu0
      %v8192 = vadd.f32 0.0, %v8191
      %v8193 = vpop.f32.mrb[0].mxu0
      %v8194 = vpop.f32.mrb[0].mxu0
      %v8195 = vadd.f32 0.0, %v8194
      %v8196 = vpop.f32.mrb[0].mxu0
      %8197 = vmatprep.mubr.bf16.mxu0 0
      %8198 = vmatmul.mubr.bf16.gmra.mrb[0].mxu0 %v7778
      %v8199 = vpop.f32.mrb[0].mxu0
      %v8200 = vadd.f32 0.0, %v8199
      %v8201 = vpop.f32.mrb[0].mxu0
      %v8202 = vpop.f32.mrb[0].mxu0
      %v8203 = vadd.f32 0.0, %v8202
      %v8204 = vpop.f32.mrb[0].mxu0
      %8205 = vmatprep.mubr.bf16.mxu0 0
      %8206 = vmatmul.mubr.bf16.gmra.mrb[0].mxu0 %v7779
      %v8207 = vpop.f32.mrb[0].mxu0
      %v8208 = vadd.f32 0.0, %v8207
      %v8209 = vpop.f32.mrb[0].mxu0
      %v8210 = vpop.f32.mrb[0].mxu0
      %v8211 = vadd.f32 0.0, %v8210
      %v8212 = vpop.f32.mrb[0].mxu0
      %8213 = vmatprep.mubr.bf16.mxu0 0
      %8214 = vmatmul.mubr.bf16.gmra.mrb[0].mxu0 %v7780
      %v8215 = vpop.f32.mrb[0].mxu0
      %v8216 = vadd.f32 0.0, %v8215
      %v8217 = vpop.f32.mrb[0].mxu0
      %v8218 = vpop.f32.mrb[0].mxu0
      %v8219 = vadd.f32 0.0, %v8218
      %v8220 = vpop.f32.mrb[0].mxu0
      %8221 = vmatprep.mubr.bf16.mxu0 0
      %8222 = vmatmul.mubr.bf16.gmra.mrb[0].mxu0 %v7781
      %v8223 = vpop.f32.mrb[0].mxu0
      %v8224 = vadd.f32 0.0, %v8223
      %v8225 = vpop.f32.mrb[0].mxu0
      %v8226 = vpop.f32.mrb[0].mxu0
      %v8227 = vadd.f32 0.0, %v8226
      %v8228 = vpop.f32.mrb[0].mxu0
      %8229 = vmatprep.mubr.bf16.mxu0 0
      %8230 = vmatmul.mubr.bf16.gmra.mrb[0].mxu0 %v7782
      %v8231 = vpop.f32.mrb[0].mxu0
      %v8232 = vadd.f32 0.0, %v8231
      %v8233 = vpop.f32.mrb[0].mxu0
      %v8234 = vpop.f32.mrb[0].mxu0
      %v8235 = vadd.f32 0.0, %v8234
      %v8236 = vpop.f32.mrb[0].mxu0
      %8237 = vmatprep.mubr.bf16.mxu0 0
      %8238 = vmatmul.mubr.bf16.gmra.mrb[0].mxu0 %v7783
      %v8239 = vpop.f32.mrb[0].mxu0
      %v8240 = vadd.f32 0.0, %v8239
      %v8241 = vpop.f32.mrb[0].mxu0
      %v8242 = vpop.f32.mrb[0].mxu0
      %v8243 = vadd.f32 0.0, %v8242
      %v8244 = vpop.f32.mrb[0].mxu0
      %8245 = vmatprep.mubr.bf16.mxu0 0
      %8246 = vmatmul.mubr.bf16.gmra.mrb[0].mxu0 %v7784
      %v8247 = vpop.f32.mrb[0].mxu0
      %v8248 = vadd.f32 0.0, %v8247
      %v8249 = vpop.f32.mrb[0].mxu0
      %v8250 = vpop.f32.mrb[0].mxu0
      %v8251 = vadd.f32 0.0, %v8250
      %v8252 = vpop.f32.mrb[0].mxu0
      %8253 = vmatprep.mubr.bf16.mxu0 0
      %8254 = vmatmul.mubr.bf16.gmra.mrb[0].mxu0 %v7785
      %v8255 = vpop.f32.mrb[0].mxu0
      %v8256 = vadd.f32 0.0, %v8255
      %v8257 = vpop.f32.mrb[0].mxu0
      %v8258 = vpop.f32.mrb[0].mxu0
      %v8259 = vadd.f32 0.0, %v8258
      %v8260 = vpop.f32.mrb[0].mxu0
      %8261 = vmatprep.mubr.bf16.mxu0 0
      %8262 = vmatmul.mubr.bf16.gmra.mrb[0].mxu0 %v7786
      %v8263 = vpop.f32.mrb[0].mxu0
      %v8264 = vadd.f32 0.0, %v8263
      %v8265 = vpop.f32.mrb[0].mxu0
      %v8266 = vpop.f32.mrb[0].mxu0
      %v8267 = vadd.f32 0.0, %v8266
      %v8268 = vpop.f32.mrb[0].mxu0
      %8269 = vmatprep.mubr.bf16.mxu0 0
      %8270 = vmatmul.mubr.bf16.gmra.mrb[0].mxu0 %v7787
      %v8271 = vpop.f32.mrb[0].mxu0
      %v8272 = vadd.f32 0.0, %v8271
      %v8273 = vpop.f32.mrb[0].mxu0
      %v8274 = vpop.f32.mrb[0].mxu0
      %v8275 = vadd.f32 0.0, %v8274
      %v8276 = vpop.f32.mrb[0].mxu0
      %8277 = vmatprep.mubr.bf16.mxu0 0
      %8278 = vmatmul.mubr.bf16.gmra.mrb[0].mxu0 %v7788
      %v8279 = vpop.f32.mrb[0].mxu0
      %v8280 = vadd.f32 0.0, %v8279
      %v8281 = vpop.f32.mrb[0].mxu0
      %v8282 = vpop.f32.mrb[0].mxu0
      %v8283 = vadd.f32 0.0, %v8282
      %v8284 = vpop.f32.mrb[0].mxu0
      %8285 = vmatprep.mubr.bf16.mxu0 0
      %8286 = vmatmul.mubr.bf16.gmra.mrb[0].mxu0 %v7789
      %v8287 = vpop.f32.mrb[0].mxu0
      %v8288 = vadd.f32 0.0, %v8287
      %v8289 = vpop.f32.mrb[0].mxu0
      %v8290 = vpop.f32.mrb[0].mxu0
      %v8291 = vadd.f32 0.0, %v8290
      %v8292 = vpop.f32.mrb[0].mxu0
      %8293 = vmatprep.mubr.bf16.mxu0 0
      %8294 = vmatmul.mubr.bf16.gmra.mrb[0].mxu0 %v7790
      %v8295 = vpop.f32.mrb[0].mxu0
      %v8296 = vadd.f32 0.0, %v8295
      %v8297 = vpop.f32.mrb[0].mxu0
      %v8298 = vpop.f32.mrb[0].mxu0
      %v8299 = vadd.f32 0.0, %v8298
      %v8300 = vpop.f32.mrb[0].mxu0
      %8301 = vmatprep.mubr.bf16.mxu0 0
      %8302 = vmatmul.mubr.bf16.gmra.mrb[0].mxu0 %v7791
      %v8303 = vpop.f32.mrb[0].mxu0
      %v8304 = vadd.f32 0.0, %v8303
      %v8305 = vpop.f32.mrb[0].mxu0
      %v8306 = vpop.f32.mrb[0].mxu0
      %v8307 = vadd.f32 0.0, %v8306
      %v8308 = vpop.f32.mrb[0].mxu0
      %8309 = vmatprep.mubr.bf16.mxu0 0
      %8310 = vmatmul.mubr.bf16.gmra.mrb[0].mxu0 %v7792
      %v8311 = vpop.f32.mrb[0].mxu0
      %v8312 = vadd.f32 0.0, %v8311
      %v8313 = vpop.f32.mrb[0].mxu0
      %v8314 = vpop.f32.mrb[0].mxu0
      %v8315 = vadd.f32 0.0, %v8314
      %v8316 = vpop.f32.mrb[0].mxu0
      %8317 = vmatprep.mubr.bf16.mxu0 0
      %8318 = vmatmul.mubr.bf16.gmra.mrb[0].mxu0 %v7793
      %v8319 = vpop.f32.mrb[0].mxu0
      %v8320 = vadd.f32 0.0, %v8319
      %v8321 = vpop.f32.mrb[0].mxu0
      %v8322 = vpop.f32.mrb[0].mxu0
      %v8323 = vadd.f32 0.0, %v8322
      %v8324 = vpop.f32.mrb[0].mxu0
      %8325 = vmatprep.mubr.bf16.mxu0 0
      %8326 = vmatmul.mubr.bf16.gmra.mrb[0].mxu0 %v7794
      %v8327 = vpop.f32.mrb[0].mxu0
      %v8328 = vadd.f32 0.0, %v8327
      %v8329 = vpop.f32.mrb[0].mxu0
      %v8330 = vpop.f32.mrb[0].mxu0
      %v8331 = vadd.f32 0.0, %v8330
      %v8332 = vpop.f32.mrb[0].mxu0
      %8333 = vmatprep.mubr.bf16.mxu0 0
      %8334 = vmatmul.mubr.bf16.gmra.mrb[0].mxu0 %v7795
      %v8335 = vpop.f32.mrb[0].mxu0
      %v8336 = vadd.f32 0.0, %v8335
      %v8337 = vpop.f32.mrb[0].mxu0
      %v8338 = vpop.f32.mrb[0].mxu0
      %v8339 = vadd.f32 0.0, %v8338
      %v8340 = vpop.f32.mrb[0].mxu0
      %8341 = vdwg.mxu0
      %v8342 = vadd.f32 %v7294, %v7896
      %v8343 = vadd.f32 %v7297, %v7899
      %v8344 = vadd.f32 %v7302, %v7904
      %v8345 = vadd.f32 %v7305, %v7907
      %v8346 = vadd.f32 %v7310, %v7912
      %v8347 = vadd.f32 %v7313, %v7915
      %v8348 = vadd.f32 %v7318, %v7920
      %v8349 = vadd.f32 %v7321, %v7923
      %v8350 = vadd.f32 %v7326, %v7928
      %v8351 = vadd.f32 %v7329, %v7931
      %v8352 = vadd.f32 %v7334, %v7936
      %v8353 = vadd.f32 %v7337, %v7939
      %v8354 = vadd.f32 %v7342, %v7944
      %v8355 = vadd.f32 %v7345, %v7947
      %v8356 = vadd.f32 %v7350, %v7952
      %v8357 = vadd.f32 %v7353, %v7955
      %v8358 = vadd.f32 %v7358, %v7960
      %v8359 = vadd.f32 %v7361, %v7963
      %v8360 = vadd.f32 %v7366, %v7968
      %v8361 = vadd.f32 %v7369, %v7971
      %v8362 = vadd.f32 %v7374, %v7976
      %v8363 = vadd.f32 %v7377, %v7979
      %v8364 = vadd.f32 %v7382, %v7984
      %v8365 = vadd.f32 %v7385, %v7987
      %v8366 = vadd.f32 %v7390, %v7992
      %v8367 = vadd.f32 %v7393, %v7995
      %v8368 = vadd.f32 %v7398, %v8000
      %v8369 = vadd.f32 %v7401, %v8003
      %v8370 = vadd.f32 %v7406, %v8008
      %v8371 = vadd.f32 %v7409, %v8011
      %v8372 = vadd.f32 %v7414, %v8016
      %v8373 = vadd.f32 %v7417, %v8019
      %v8374 = vadd.f32 %v7422, %v8024
      %v8375 = vadd.f32 %v7425, %v8027
      %v8376 = vadd.f32 %v7430, %v8032
      %v8377 = vadd.f32 %v7433, %v8035
      %v8378 = vadd.f32 %v7438, %v8040
      %v8379 = vadd.f32 %v7441, %v8043
      %v8380 = vadd.f32 %v7446, %v8048
      %v8381 = vadd.f32 %v7449, %v8051
      %v8382 = vadd.f32 %v7454, %v8056
      %v8383 = vadd.f32 %v7457, %v8059
      %v8384 = vadd.f32 %v7462, %v8064
      %v8385 = vadd.f32 %v7465, %v8067
      %v8386 = vadd.f32 %v7470, %v8072
      %v8387 = vadd.f32 %v7473, %v8075
      %v8388 = vadd.f32 %v7478, %v8080
      %v8389 = vadd.f32 %v7481, %v8083
      %v8390 = vadd.f32 %v7486, %v8088
      %v8391 = vadd.f32 %v7489, %v8091
      %v8392 = vadd.f32 %v7494, %v8096
      %v8393 = vadd.f32 %v7497, %v8099
      %v8394 = vadd.f32 %v7502, %v8104
      %v8395 = vadd.f32 %v7505, %v8107
      %v8396 = vadd.f32 %v7510, %v8112
      %v8397 = vadd.f32 %v7513, %v8115
      %v8398 = vadd.f32 %v7518, %v8120
      %v8399 = vadd.f32 %v7521, %v8123
      %v8400 = vadd.f32 %v7526, %v8128
      %v8401 = vadd.f32 %v7529, %v8131
      %v8402 = vadd.f32 %v7534, %v8136
      %v8403 = vadd.f32 %v7537, %v8139
      %v8404 = vadd.f32 %v7542, %v8144
      %v8405 = vadd.f32 %v7545, %v8147
      %v8406 = vadd.f32 %v7550, %v8152
      %v8407 = vadd.f32 %v7553, %v8155
      %v8408 = vadd.f32 %v7558, %v8160
      %v8409 = vadd.f32 %v7561, %v8163
      %v8410 = vadd.f32 %v7566, %v8168
      %v8411 = vadd.f32 %v7569, %v8171
      %v8412 = vadd.f32 %v7574, %v8176
      %v8413 = vadd.f32 %v7577, %v8179
      %v8414 = vadd.f32 %v7582, %v8184
      %v8415 = vadd.f32 %v7585, %v8187
      %v8416 = vadd.f32 %v7590, %v8192
      %v8417 = vadd.f32 %v7593, %v8195
      %v8418 = vadd.f32 %v7598, %v8200
      %v8419 = vadd.f32 %v7601, %v8203
      %v8420 = vadd.f32 %v7606, %v8208
      %v8421 = vadd.f32 %v7609, %v8211
      %v8422 = vadd.f32 %v7614, %v8216
      %v8423 = vadd.f32 %v7617, %v8219
      %v8424 = vadd.f32 %v7622, %v8224
      %v8425 = vadd.f32 %v7625, %v8227
      %v8426 = vadd.f32 %v7630, %v8232
      %v8427 = vadd.f32 %v7633, %v8235
      %v8428 = vadd.f32 %v7638, %v8240
      %v8429 = vadd.f32 %v7641, %v8243
      %v8430 = vadd.f32 %v7646, %v8248
      %v8431 = vadd.f32 %v7649, %v8251
      %v8432 = vadd.f32 %v7654, %v8256
      %v8433 = vadd.f32 %v7657, %v8259
      %v8434 = vadd.f32 %v7662, %v8264
      %v8435 = vadd.f32 %v7665, %v8267
      %v8436 = vadd.f32 %v7670, %v8272
      %v8437 = vadd.f32 %v7673, %v8275
      %v8438 = vadd.f32 %v7678, %v8280
      %v8439 = vadd.f32 %v7681, %v8283
      %v8440 = vadd.f32 %v7686, %v8288
      %v8441 = vadd.f32 %v7689, %v8291
      %v8442 = vadd.f32 %v7694, %v8296
      %v8443 = vadd.f32 %v7697, %v8299
      %v8444 = vadd.f32 %v7702, %v8304
      %v8445 = vadd.f32 %v7705, %v8307
      %v8446 = vadd.f32 %v7710, %v8312
      %v8447 = vadd.f32 %v7713, %v8315
      %v8448 = vadd.f32 %v7718, %v8320
      %v8449 = vadd.f32 %v7721, %v8323
      %v8450 = vadd.f32 %v7726, %v8328
      %v8451 = vadd.f32 %v7729, %v8331
      %v8452 = vadd.f32 %v7734, %v8336
      %v8453 = vadd.f32 %v7737, %v8339
      %v8454 = vld [vmem:[#allocation5 + $0x30] sm:$0xff]
      %v8455 = vld [vmem:[#allocation5 + $0x38] sm:$0xff]
      %v8456 = vld [vmem:[#allocation5 + $0x40] sm:$0xff]
      %v8457 = vld [vmem:[#allocation5 + $0x48] sm:$0xff]
      %v8458 = vld [vmem:[#allocation5 + $0x50] sm:$0xff]
      %v8459 = vld [vmem:[#allocation5 + $0x58] sm:$0xff]
      %v8460 = vld [vmem:[#allocation5 + $0x60] sm:$0xff]
      %v8461 = vld [vmem:[#allocation5 + $0x68] sm:$0xff]
      %v8462 = vld [vmem:[#allocation5 + $0x70] sm:$0xff]
      %v8463 = vld [vmem:[#allocation5 + $0x78] sm:$0xff]
      %v8464 = vld [vmem:[#allocation5 + $0x80] sm:$0xff]
      %v8465 = vld [vmem:[#allocation5 + $0x88] sm:$0xff]
      %v8466 = vld [vmem:[#allocation5 + $0x90] sm:$0xff]
      %v8467 = vld [vmem:[#allocation5 + $0x98] sm:$0xff]
      %v8468 = vld [vmem:[#allocation5 + $0xa0] sm:$0xff]
      %v8469 = vld [vmem:[#allocation5 + $0xa8] sm:$0xff]
      %v8470 = vld [vmem:[#allocation5 + $0xb0] sm:$0xff]
      %v8471 = vld [vmem:[#allocation5 + $0xb8] sm:$0xff]
      %v8472 = vld [vmem:[#allocation5 + $0xc0] sm:$0xff]
      %v8473 = vld [vmem:[#allocation5 + $0xc8] sm:$0xff]
      %v8474 = vld [vmem:[#allocation5 + $0xd0] sm:$0xff]
      %v8475 = vld [vmem:[#allocation5 + $0xd8] sm:$0xff]
      %v8476 = vld [vmem:[#allocation5 + $0xe0] sm:$0xff]
      %v8477 = vld [vmem:[#allocation5 + $0xe8] sm:$0xff]
      %v8478 = vld [vmem:[#allocation5 + $0xf0] sm:$0xff]
      %v8479 = vld [vmem:[#allocation5 + $0xf8] sm:$0xff]
      %v8480 = vld [vmem:[#allocation5 + $0x100] sm:$0xff]
      %v8481 = vld [vmem:[#allocation5 + $0x108] sm:$0xff]
      %v8482 = vld [vmem:[#allocation5 + $0x110] sm:$0xff]
      %v8483 = vld [vmem:[#allocation5 + $0x118] sm:$0xff]
      %v8484 = vld [vmem:[#allocation5 + $0x120] sm:$0xff]
      %v8485 = vld [vmem:[#allocation5 + $0x128] sm:$0xff]
      %v8486 = vld [vmem:[#allocation5 + $0x130] sm:$0xff]
      %v8487 = vld [vmem:[#allocation5 + $0x138] sm:$0xff]
      %v8488 = vld [vmem:[#allocation5 + $0x140] sm:$0xff]
      %v8489 = vld [vmem:[#allocation5 + $0x148] sm:$0xff]
      %v8490 = vld [vmem:[#allocation5 + $0x150] sm:$0xff]
      %v8491 = vld [vmem:[#allocation5 + $0x158] sm:$0xff]
      %v8492 = vld [vmem:[#allocation5 + $0x160] sm:$0xff]
      %v8493 = vld [vmem:[#allocation5 + $0x168] sm:$0xff]
      %v8494 = vld [vmem:[#allocation5 + $0x170] sm:$0xff]
      %v8495 = vld [vmem:[#allocation5 + $0x178] sm:$0xff]
      %v8496 = vld [vmem:[#allocation5 + $0x180] sm:$0xff]
      %v8497 = vld [vmem:[#allocation5 + $0x188] sm:$0xff]
      %v8498 = vld [vmem:[#allocation5 + $0x190] sm:$0xff]
      %v8499 = vld [vmem:[#allocation5 + $0x198] sm:$0xff]
      %v8500 = vld [vmem:[#allocation5 + $0x1a0] sm:$0xff]
      %v8501 = vld [vmem:[#allocation5 + $0x1a8] sm:$0xff]
      %v8502 = vld [vmem:[#allocation5 + $0x1b0] sm:$0xff]
      %v8503 = vld [vmem:[#allocation5 + $0x1b8] sm:$0xff]
      %v8504 = vld [vmem:[#allocation5 + $0x1c0] sm:$0xff]
      %v8505 = vld [vmem:[#allocation5 + $0x1c8] sm:$0xff]
      %v8506 = vld [vmem:[#allocation5 + $0x1d0] sm:$0xff]
      %v8507 = vld [vmem:[#allocation5 + $0x1d8] sm:$0xff]
      %v8508 = vld [vmem:[#allocation5 + $0x1e0] sm:$0xff]
      %v8509 = vld [vmem:[#allocation5 + $0x1e8] sm:$0xff]
      %s8510 = scalar_lea.vmem %s9, 192
      %v8511 = vld [vmem:[%s8510] sm:$0xf]
      %v8512 = vld [vmem:[%s8510 + $0x4] sm:$0xf]
      %v8513 = vld [vmem:[%s8510 + $0x8] sm:$0xf]
      %v8514 = vld [vmem:[%s8510 + $0xc] sm:$0xf]
      %v8515 = vld [vmem:[%s8510 + $0x10] sm:$0xf]
      %v8516 = vld [vmem:[%s8510 + $0x14] sm:$0xf]
      %v8517 = vld [vmem:[%s8510 + $0x18] sm:$0xf]
      %v8518 = vld [vmem:[%s8510 + $0x1c] sm:$0xf]
      %v8519 = vld [vmem:[%s8510 + $0x20] sm:$0xf]
      %v8520 = vld [vmem:[%s8510 + $0x24] sm:$0xf]
      %v8521 = vld [vmem:[%s8510 + $0x28] sm:$0xf]
      %v8522 = vld [vmem:[%s8510 + $0x2c] sm:$0xf]
      %v8523 = vld [vmem:[%s8510 + $0x30] sm:$0xf]
      %v8524 = vld [vmem:[%s8510 + $0x34] sm:$0xf]
      %v8525 = vld [vmem:[%s8510 + $0x38] sm:$0xf]
      %v8526 = vld [vmem:[%s8510 + $0x3c] sm:$0xf]
      %v8543 = vunpack.c.l.b16 %v8511
      %v8544 = vunpack.c.l.b16 %v8512
      %v8545 = vunpack.c.l.b16 %v8513
      %v8546 = vunpack.c.l.b16 %v8514
      %v8547 = vunpack.c.l.b16 %v8515
      %v8548 = vunpack.c.l.b16 %v8516
      %v8549 = vunpack.c.l.b16 %v8517
      %v8550 = vunpack.c.l.b16 %v8518
      %v8551 = vunpack.c.l.b16 %v8519
      %v8552 = vunpack.c.l.b16 %v8520
      %v8553 = vunpack.c.l.b16 %v8521
      %v8554 = vunpack.c.l.b16 %v8522
      %v8555 = vunpack.c.l.b16 %v8523
      %v8556 = vunpack.c.l.b16 %v8524
      %v8557 = vunpack.c.l.b16 %v8525
      %v8558 = vunpack.c.l.b16 %v8526
      %v8559 = vpack.c.b16 %v8544, %v8543
      %v8560 = vpack.c.b16 %v8546, %v8545
      %v8561 = vpack.c.b16 %v8548, %v8547
      %v8562 = vpack.c.b16 %v8550, %v8549
      %v8563 = vpack.c.b16 %v8552, %v8551
      %v8564 = vpack.c.b16 %v8554, %v8553
      %v8565 = vpack.c.b16 %v8556, %v8555
      %v8566 = vpack.c.b16 %v8558, %v8557
      %8575 = vmatprep.subr.bf16.mxu0 0
      %8576 = vmatpush1.bf16.msra.mxu0 %v8559
      %8577 = vmatprep.subr.bf16.mxu0 0
      %8578 = vmatpush1.bf16.msra.mxu0 %v8560
      %8579 = vmatprep.subr.bf16.mxu0 0
      %8580 = vmatpush1.bf16.msra.mxu0 %v8561
      %8581 = vmatprep.subr.bf16.mxu0 0
      %8582 = vmatpush1.bf16.msra.mxu0 %v8562
      %8583 = vmatprep.subr.bf16.mxu0 0
      %8584 = vmatpush1.bf16.msra.mxu0 %v8563
      %8585 = vmatprep.subr.bf16.mxu0 0
      %8586 = vmatpush1.bf16.msra.mxu0 %v8564
      %8587 = vmatprep.subr.bf16.mxu0 0
      %8588 = vmatpush1.bf16.msra.mxu0 %v8565
      %8589 = vmatprep.subr.bf16.mxu0 0
      %8590 = vmatpush1.bf16.msra.mxu0 %v8566
      %8591 = vmatprep.subr.bf16.mxu0 0
      %8592 = vmatpush1.bf16.msra.mxu0 0
      %8593 = vmatprep.subr.bf16.mxu0 0
      %8594 = vmatpush1.bf16.msra.mxu0 0
      %8595 = vmatprep.subr.bf16.mxu0 0
      %8596 = vmatpush1.bf16.msra.mxu0 0
      %8597 = vmatprep.subr.bf16.mxu0 0
      %8598 = vmatpush1.bf16.msra.mxu0 0
      %8599 = vmatprep.subr.bf16.mxu0 0
      %8600 = vmatpush1.bf16.msra.mxu0 0
      %8601 = vmatprep.subr.bf16.mxu0 0
      %8602 = vmatpush1.bf16.msra.mxu0 0
      %8603 = vmatprep.subr.bf16.mxu0 0
      %8604 = vmatpush1.bf16.msra.mxu0 0
      %8605 = vmatprep.subr.bf16.mxu0 0
      %8606 = vmatpush1.bf16.msra.mxu0 0
      %8607 = vmatprep.mubr.bf16.mxu0 0
      %8608 = vmatmul.mubr.bf16.gmra.mrb[0].mxu0 %v8454
      %v8609 = vpop.f32.mrb[0].mxu0
      %v8610 = vadd.f32 0.0, %v8609
      %v8611 = vpop.f32.mrb[0].mxu0
      %v8612 = vpop.f32.mrb[0].mxu0
      %v8613 = vadd.f32 0.0, %v8612
      %v8614 = vpop.f32.mrb[0].mxu0
      %8615 = vmatprep.mubr.bf16.mxu0 0
      %8616 = vmatmul.mubr.bf16.gmra.mrb[0].mxu0 %v8455
      %v8617 = vpop.f32.mrb[0].mxu0
      %v8618 = vadd.f32 0.0, %v8617
      %v8619 = vpop.f32.mrb[0].mxu0
      %v8620 = vpop.f32.mrb[0].mxu0
      %v8621 = vadd.f32 0.0, %v8620
      %v8622 = vpop.f32.mrb[0].mxu0
      %8623 = vmatprep.mubr.bf16.mxu0 0
      %8624 = vmatmul.mubr.bf16.gmra.mrb[0].mxu0 %v8456
      %v8625 = vpop.f32.mrb[0].mxu0
      %v8626 = vadd.f32 0.0, %v8625
      %v8627 = vpop.f32.mrb[0].mxu0
      %v8628 = vpop.f32.mrb[0].mxu0
      %v8629 = vadd.f32 0.0, %v8628
      %v8630 = vpop.f32.mrb[0].mxu0
      %8631 = vmatprep.mubr.bf16.mxu0 0
      %8632 = vmatmul.mubr.bf16.gmra.mrb[0].mxu0 %v8457
      %v8633 = vpop.f32.mrb[0].mxu0
      %v8634 = vadd.f32 0.0, %v8633
      %v8635 = vpop.f32.mrb[0].mxu0
      %v8636 = vpop.f32.mrb[0].mxu0
      %v8637 = vadd.f32 0.0, %v8636
      %v8638 = vpop.f32.mrb[0].mxu0
      %8639 = vmatprep.mubr.bf16.mxu0 0
      %8640 = vmatmul.mubr.bf16.gmra.mrb[0].mxu0 %v8458
      %v8641 = vpop.f32.mrb[0].mxu0
      %v8642 = vadd.f32 0.0, %v8641
      %v8643 = vpop.f32.mrb[0].mxu0
      %v8644 = vpop.f32.mrb[0].mxu0
      %v8645 = vadd.f32 0.0, %v8644
      %v8646 = vpop.f32.mrb[0].mxu0
      %8647 = vmatprep.mubr.bf16.mxu0 0
      %8648 = vmatmul.mubr.bf16.gmra.mrb[0].mxu0 %v8459
      %v8649 = vpop.f32.mrb[0].mxu0
      %v8650 = vadd.f32 0.0, %v8649
      %v8651 = vpop.f32.mrb[0].mxu0
      %v8652 = vpop.f32.mrb[0].mxu0
      %v8653 = vadd.f32 0.0, %v8652
      %v8654 = vpop.f32.mrb[0].mxu0
      %8655 = vmatprep.mubr.bf16.mxu0 0
      %8656 = vmatmul.mubr.bf16.gmra.mrb[0].mxu0 %v8460
      %v8657 = vpop.f32.mrb[0].mxu0
      %v8658 = vadd.f32 0.0, %v8657
      %v8659 = vpop.f32.mrb[0].mxu0
      %v8660 = vpop.f32.mrb[0].mxu0
      %v8661 = vadd.f32 0.0, %v8660
      %v8662 = vpop.f32.mrb[0].mxu0
      %8663 = vmatprep.mubr.bf16.mxu0 0
      %8664 = vmatmul.mubr.bf16.gmra.mrb[0].mxu0 %v8461
      %v8665 = vpop.f32.mrb[0].mxu0
      %v8666 = vadd.f32 0.0, %v8665
      %v8667 = vpop.f32.mrb[0].mxu0
      %v8668 = vpop.f32.mrb[0].mxu0
      %v8669 = vadd.f32 0.0, %v8668
      %v8670 = vpop.f32.mrb[0].mxu0
      %8671 = vmatprep.mubr.bf16.mxu0 0
      %8672 = vmatmul.mubr.bf16.gmra.mrb[0].mxu0 %v8462
      %v8673 = vpop.f32.mrb[0].mxu0
      %v8674 = vadd.f32 0.0, %v8673
      %v8675 = vpop.f32.mrb[0].mxu0
      %v8676 = vpop.f32.mrb[0].mxu0
      %v8677 = vadd.f32 0.0, %v8676
      %v8678 = vpop.f32.mrb[0].mxu0
      %8679 = vmatprep.mubr.bf16.mxu0 0
      %8680 = vmatmul.mubr.bf16.gmra.mrb[0].mxu0 %v8463
      %v8681 = vpop.f32.mrb[0].mxu0
      %v8682 = vadd.f32 0.0, %v8681
      %v8683 = vpop.f32.mrb[0].mxu0
      %v8684 = vpop.f32.mrb[0].mxu0
      %v8685 = vadd.f32 0.0, %v8684
      %v8686 = vpop.f32.mrb[0].mxu0
      %8687 = vmatprep.mubr.bf16.mxu0 0
      %8688 = vmatmul.mubr.bf16.gmra.mrb[0].mxu0 %v8464
      %v8689 = vpop.f32.mrb[0].mxu0
      %v8690 = vadd.f32 0.0, %v8689
      %v8691 = vpop.f32.mrb[0].mxu0
      %v8692 = vpop.f32.mrb[0].mxu0
      %v8693 = vadd.f32 0.0, %v8692
      %v8694 = vpop.f32.mrb[0].mxu0
      %8695 = vmatprep.mubr.bf16.mxu0 0
      %8696 = vmatmul.mubr.bf16.gmra.mrb[0].mxu0 %v8465
      %v8697 = vpop.f32.mrb[0].mxu0
      %v8698 = vadd.f32 0.0, %v8697
      %v8699 = vpop.f32.mrb[0].mxu0
      %v8700 = vpop.f32.mrb[0].mxu0
      %v8701 = vadd.f32 0.0, %v8700
      %v8702 = vpop.f32.mrb[0].mxu0
      %8703 = vmatprep.mubr.bf16.mxu0 0
      %8704 = vmatmul.mubr.bf16.gmra.mrb[0].mxu0 %v8466
      %v8705 = vpop.f32.mrb[0].mxu0
      %v8706 = vadd.f32 0.0, %v8705
      %v8707 = vpop.f32.mrb[0].mxu0
      %v8708 = vpop.f32.mrb[0].mxu0
      %v8709 = vadd.f32 0.0, %v8708
      %v8710 = vpop.f32.mrb[0].mxu0
      %8711 = vmatprep.mubr.bf16.mxu0 0
      %8712 = vmatmul.mubr.bf16.gmra.mrb[0].mxu0 %v8467
      %v8713 = vpop.f32.mrb[0].mxu0
      %v8714 = vadd.f32 0.0, %v8713
      %v8715 = vpop.f32.mrb[0].mxu0
      %v8716 = vpop.f32.mrb[0].mxu0
      %v8717 = vadd.f32 0.0, %v8716
      %v8718 = vpop.f32.mrb[0].mxu0
      %8719 = vmatprep.mubr.bf16.mxu0 0
      %8720 = vmatmul.mubr.bf16.gmra.mrb[0].mxu0 %v8468
      %v8721 = vpop.f32.mrb[0].mxu0
      %v8722 = vadd.f32 0.0, %v8721
      %v8723 = vpop.f32.mrb[0].mxu0
      %v8724 = vpop.f32.mrb[0].mxu0
      %v8725 = vadd.f32 0.0, %v8724
      %v8726 = vpop.f32.mrb[0].mxu0
      %8727 = vmatprep.mubr.bf16.mxu0 0
      %8728 = vmatmul.mubr.bf16.gmra.mrb[0].mxu0 %v8469
      %v8729 = vpop.f32.mrb[0].mxu0
      %v8730 = vadd.f32 0.0, %v8729
      %v8731 = vpop.f32.mrb[0].mxu0
      %v8732 = vpop.f32.mrb[0].mxu0
      %v8733 = vadd.f32 0.0, %v8732
      %v8734 = vpop.f32.mrb[0].mxu0
      %8735 = vmatprep.mubr.bf16.mxu0 0
      %8736 = vmatmul.mubr.bf16.gmra.mrb[0].mxu0 %v8470
      %v8737 = vpop.f32.mrb[0].mxu0
      %v8738 = vadd.f32 0.0, %v8737
      %v8739 = vpop.f32.mrb[0].mxu0
      %v8740 = vpop.f32.mrb[0].mxu0
      %v8741 = vadd.f32 0.0, %v8740
      %v8742 = vpop.f32.mrb[0].mxu0
      %8743 = vmatprep.mubr.bf16.mxu0 0
      %8744 = vmatmul.mubr.bf16.gmra.mrb[0].mxu0 %v8471
      %v8745 = vpop.f32.mrb[0].mxu0
      %v8746 = vadd.f32 0.0, %v8745
      %v8747 = vpop.f32.mrb[0].mxu0
      %v8748 = vpop.f32.mrb[0].mxu0
      %v8749 = vadd.f32 0.0, %v8748
      %v8750 = vpop.f32.mrb[0].mxu0
      %8751 = vmatprep.mubr.bf16.mxu0 0
      %8752 = vmatmul.mubr.bf16.gmra.mrb[0].mxu0 %v8472
      %v8753 = vpop.f32.mrb[0].mxu0
      %v8754 = vadd.f32 0.0, %v8753
      %v8755 = vpop.f32.mrb[0].mxu0
      %v8756 = vpop.f32.mrb[0].mxu0
      %v8757 = vadd.f32 0.0, %v8756
      %v8758 = vpop.f32.mrb[0].mxu0
      %8759 = vmatprep.mubr.bf16.mxu0 0
      %8760 = vmatmul.mubr.bf16.gmra.mrb[0].mxu0 %v8473
      %v8761 = vpop.f32.mrb[0].mxu0
      %v8762 = vadd.f32 0.0, %v8761
      %v8763 = vpop.f32.mrb[0].mxu0
      %v8764 = vpop.f32.mrb[0].mxu0
      %v8765 = vadd.f32 0.0, %v8764
      %v8766 = vpop.f32.mrb[0].mxu0
      %8767 = vmatprep.mubr.bf16.mxu0 0
      %8768 = vmatmul.mubr.bf16.gmra.mrb[0].mxu0 %v8474
      %v8769 = vpop.f32.mrb[0].mxu0
      %v8770 = vadd.f32 0.0, %v8769
      %v8771 = vpop.f32.mrb[0].mxu0
      %v8772 = vpop.f32.mrb[0].mxu0
      %v8773 = vadd.f32 0.0, %v8772
      %v8774 = vpop.f32.mrb[0].mxu0
      %8775 = vmatprep.mubr.bf16.mxu0 0
      %8776 = vmatmul.mubr.bf16.gmra.mrb[0].mxu0 %v8475
      %v8777 = vpop.f32.mrb[0].mxu0
      %v8778 = vadd.f32 0.0, %v8777
      %v8779 = vpop.f32.mrb[0].mxu0
      %v8780 = vpop.f32.mrb[0].mxu0
      %v8781 = vadd.f32 0.0, %v8780
      %v8782 = vpop.f32.mrb[0].mxu0
      %8783 = vmatprep.mubr.bf16.mxu0 0
      %8784 = vmatmul.mubr.bf16.gmra.mrb[0].mxu0 %v8476
      %v8785 = vpop.f32.mrb[0].mxu0
      %v8786 = vadd.f32 0.0, %v8785
      %v8787 = vpop.f32.mrb[0].mxu0
      %v8788 = vpop.f32.mrb[0].mxu0
      %v8789 = vadd.f32 0.0, %v8788
      %v8790 = vpop.f32.mrb[0].mxu0
      %8791 = vmatprep.mubr.bf16.mxu0 0
      %8792 = vmatmul.mubr.bf16.gmra.mrb[0].mxu0 %v8477
      %v8793 = vpop.f32.mrb[0].mxu0
      %v8794 = vadd.f32 0.0, %v8793
      %v8795 = vpop.f32.mrb[0].mxu0
      %v8796 = vpop.f32.mrb[0].mxu0
      %v8797 = vadd.f32 0.0, %v8796
      %v8798 = vpop.f32.mrb[0].mxu0
      %8799 = vmatprep.mubr.bf16.mxu0 0
      %8800 = vmatmul.mubr.bf16.gmra.mrb[0].mxu0 %v8478
      %v8801 = vpop.f32.mrb[0].mxu0
      %v8802 = vadd.f32 0.0, %v8801
      %v8803 = vpop.f32.mrb[0].mxu0
      %v8804 = vpop.f32.mrb[0].mxu0
      %v8805 = vadd.f32 0.0, %v8804
      %v8806 = vpop.f32.mrb[0].mxu0
      %8807 = vmatprep.mubr.bf16.mxu0 0
      %8808 = vmatmul.mubr.bf16.gmra.mrb[0].mxu0 %v8479
      %v8809 = vpop.f32.mrb[0].mxu0
      %v8810 = vadd.f32 0.0, %v8809
      %v8811 = vpop.f32.mrb[0].mxu0
      %v8812 = vpop.f32.mrb[0].mxu0
      %v8813 = vadd.f32 0.0, %v8812
      %v8814 = vpop.f32.mrb[0].mxu0
      %8815 = vmatprep.mubr.bf16.mxu0 0
      %8816 = vmatmul.mubr.bf16.gmra.mrb[0].mxu0 %v8480
      %v8817 = vpop.f32.mrb[0].mxu0
      %v8818 = vadd.f32 0.0, %v8817
      %v8819 = vpop.f32.mrb[0].mxu0
      %v8820 = vpop.f32.mrb[0].mxu0
      %v8821 = vadd.f32 0.0, %v8820
      %v8822 = vpop.f32.mrb[0].mxu0
      %8823 = vmatprep.mubr.bf16.mxu0 0
      %8824 = vmatmul.mubr.bf16.gmra.mrb[0].mxu0 %v8481
      %v8825 = vpop.f32.mrb[0].mxu0
      %v8826 = vadd.f32 0.0, %v8825
      %v8827 = vpop.f32.mrb[0].mxu0
      %v8828 = vpop.f32.mrb[0].mxu0
      %v8829 = vadd.f32 0.0, %v8828
      %v8830 = vpop.f32.mrb[0].mxu0
      %8831 = vmatprep.mubr.bf16.mxu0 0
      %8832 = vmatmul.mubr.bf16.gmra.mrb[0].mxu0 %v8482
      %v8833 = vpop.f32.mrb[0].mxu0
      %v8834 = vadd.f32 0.0, %v8833
      %v8835 = vpop.f32.mrb[0].mxu0
      %v8836 = vpop.f32.mrb[0].mxu0
      %v8837 = vadd.f32 0.0, %v8836
      %v8838 = vpop.f32.mrb[0].mxu0
      %8839 = vmatprep.mubr.bf16.mxu0 0
      %8840 = vmatmul.mubr.bf16.gmra.mrb[0].mxu0 %v8483
      %v8841 = vpop.f32.mrb[0].mxu0
      %v8842 = vadd.f32 0.0, %v8841
      %v8843 = vpop.f32.mrb[0].mxu0
      %v8844 = vpop.f32.mrb[0].mxu0
      %v8845 = vadd.f32 0.0, %v8844
      %v8846 = vpop.f32.mrb[0].mxu0
      %8847 = vmatprep.mubr.bf16.mxu0 0
      %8848 = vmatmul.mubr.bf16.gmra.mrb[0].mxu0 %v8484
      %v8849 = vpop.f32.mrb[0].mxu0
      %v8850 = vadd.f32 0.0, %v8849
      %v8851 = vpop.f32.mrb[0].mxu0
      %v8852 = vpop.f32.mrb[0].mxu0
      %v8853 = vadd.f32 0.0, %v8852
      %v8854 = vpop.f32.mrb[0].mxu0
      %8855 = vmatprep.mubr.bf16.mxu0 0
      %8856 = vmatmul.mubr.bf16.gmra.mrb[0].mxu0 %v8485
      %v8857 = vpop.f32.mrb[0].mxu0
      %v8858 = vadd.f32 0.0, %v8857
      %v8859 = vpop.f32.mrb[0].mxu0
      %v8860 = vpop.f32.mrb[0].mxu0
      %v8861 = vadd.f32 0.0, %v8860
      %v8862 = vpop.f32.mrb[0].mxu0
      %8863 = vmatprep.mubr.bf16.mxu0 0
      %8864 = vmatmul.mubr.bf16.gmra.mrb[0].mxu0 %v8486
      %v8865 = vpop.f32.mrb[0].mxu0
      %v8866 = vadd.f32 0.0, %v8865
      %v8867 = vpop.f32.mrb[0].mxu0
      %v8868 = vpop.f32.mrb[0].mxu0
      %v8869 = vadd.f32 0.0, %v8868
      %v8870 = vpop.f32.mrb[0].mxu0
      %8871 = vmatprep.mubr.bf16.mxu0 0
      %8872 = vmatmul.mubr.bf16.gmra.mrb[0].mxu0 %v8487
      %v8873 = vpop.f32.mrb[0].mxu0
      %v8874 = vadd.f32 0.0, %v8873
      %v8875 = vpop.f32.mrb[0].mxu0
      %v8876 = vpop.f32.mrb[0].mxu0
      %v8877 = vadd.f32 0.0, %v8876
      %v8878 = vpop.f32.mrb[0].mxu0
      %8879 = vmatprep.mubr.bf16.mxu0 0
      %8880 = vmatmul.mubr.bf16.gmra.mrb[0].mxu0 %v8488
      %v8881 = vpop.f32.mrb[0].mxu0
      %v8882 = vadd.f32 0.0, %v8881
      %v8883 = vpop.f32.mrb[0].mxu0
      %v8884 = vpop.f32.mrb[0].mxu0
      %v8885 = vadd.f32 0.0, %v8884
      %v8886 = vpop.f32.mrb[0].mxu0
      %8887 = vmatprep.mubr.bf16.mxu0 0
      %8888 = vmatmul.mubr.bf16.gmra.mrb[0].mxu0 %v8489
      %v8889 = vpop.f32.mrb[0].mxu0
      %v8890 = vadd.f32 0.0, %v8889
      %v8891 = vpop.f32.mrb[0].mxu0
      %v8892 = vpop.f32.mrb[0].mxu0
      %v8893 = vadd.f32 0.0, %v8892
      %v8894 = vpop.f32.mrb[0].mxu0
      %8895 = vmatprep.mubr.bf16.mxu0 0
      %8896 = vmatmul.mubr.bf16.gmra.mrb[0].mxu0 %v8490
      %v8897 = vpop.f32.mrb[0].mxu0
      %v8898 = vadd.f32 0.0, %v8897
      %v8899 = vpop.f32.mrb[0].mxu0
      %v8900 = vpop.f32.mrb[0].mxu0
      %v8901 = vadd.f32 0.0, %v8900
      %v8902 = vpop.f32.mrb[0].mxu0
      %8903 = vmatprep.mubr.bf16.mxu0 0
      %8904 = vmatmul.mubr.bf16.gmra.mrb[0].mxu0 %v8491
      %v8905 = vpop.f32.mrb[0].mxu0
      %v8906 = vadd.f32 0.0, %v8905
      %v8907 = vpop.f32.mrb[0].mxu0
      %v8908 = vpop.f32.mrb[0].mxu0
      %v8909 = vadd.f32 0.0, %v8908
      %v8910 = vpop.f32.mrb[0].mxu0
      %8911 = vmatprep.mubr.bf16.mxu0 0
      %8912 = vmatmul.mubr.bf16.gmra.mrb[0].mxu0 %v8492
      %v8913 = vpop.f32.mrb[0].mxu0
      %v8914 = vadd.f32 0.0, %v8913
      %v8915 = vpop.f32.mrb[0].mxu0
      %v8916 = vpop.f32.mrb[0].mxu0
      %v8917 = vadd.f32 0.0, %v8916
      %v8918 = vpop.f32.mrb[0].mxu0
      %8919 = vmatprep.mubr.bf16.mxu0 0
      %8920 = vmatmul.mubr.bf16.gmra.mrb[0].mxu0 %v8493
      %v8921 = vpop.f32.mrb[0].mxu0
      %v8922 = vadd.f32 0.0, %v8921
      %v8923 = vpop.f32.mrb[0].mxu0
      %v8924 = vpop.f32.mrb[0].mxu0
      %v8925 = vadd.f32 0.0, %v8924
      %v8926 = vpop.f32.mrb[0].mxu0
      %8927 = vmatprep.mubr.bf16.mxu0 0
      %8928 = vmatmul.mubr.bf16.gmra.mrb[0].mxu0 %v8494
      %v8929 = vpop.f32.mrb[0].mxu0
      %v8930 = vadd.f32 0.0, %v8929
      %v8931 = vpop.f32.mrb[0].mxu0
      %v8932 = vpop.f32.mrb[0].mxu0
      %v8933 = vadd.f32 0.0, %v8932
      %v8934 = vpop.f32.mrb[0].mxu0
      %8935 = vmatprep.mubr.bf16.mxu0 0
      %8936 = vmatmul.mubr.bf16.gmra.mrb[0].mxu0 %v8495
      %v8937 = vpop.f32.mrb[0].mxu0
      %v8938 = vadd.f32 0.0, %v8937
      %v8939 = vpop.f32.mrb[0].mxu0
      %v8940 = vpop.f32.mrb[0].mxu0
      %v8941 = vadd.f32 0.0, %v8940
      %v8942 = vpop.f32.mrb[0].mxu0
      %8943 = vmatprep.mubr.bf16.mxu0 0
      %8944 = vmatmul.mubr.bf16.gmra.mrb[0].mxu0 %v8496
      %v8945 = vpop.f32.mrb[0].mxu0
      %v8946 = vadd.f32 0.0, %v8945
      %v8947 = vpop.f32.mrb[0].mxu0
      %v8948 = vpop.f32.mrb[0].mxu0
      %v8949 = vadd.f32 0.0, %v8948
      %v8950 = vpop.f32.mrb[0].mxu0
      %8951 = vmatprep.mubr.bf16.mxu0 0
      %8952 = vmatmul.mubr.bf16.gmra.mrb[0].mxu0 %v8497
      %v8953 = vpop.f32.mrb[0].mxu0
      %v8954 = vadd.f32 0.0, %v8953
      %v8955 = vpop.f32.mrb[0].mxu0
      %v8956 = vpop.f32.mrb[0].mxu0
      %v8957 = vadd.f32 0.0, %v8956
      %v8958 = vpop.f32.mrb[0].mxu0
      %8959 = vmatprep.mubr.bf16.mxu0 0
      %8960 = vmatmul.mubr.bf16.gmra.mrb[0].mxu0 %v8498
      %v8961 = vpop.f32.mrb[0].mxu0
      %v8962 = vadd.f32 0.0, %v8961
      %v8963 = vpop.f32.mrb[0].mxu0
      %v8964 = vpop.f32.mrb[0].mxu0
      %v8965 = vadd.f32 0.0, %v8964
      %v8966 = vpop.f32.mrb[0].mxu0
      %8967 = vmatprep.mubr.bf16.mxu0 0
      %8968 = vmatmul.mubr.bf16.gmra.mrb[0].mxu0 %v8499
      %v8969 = vpop.f32.mrb[0].mxu0
      %v8970 = vadd.f32 0.0, %v8969
      %v8971 = vpop.f32.mrb[0].mxu0
      %v8972 = vpop.f32.mrb[0].mxu0
      %v8973 = vadd.f32 0.0, %v8972
      %v8974 = vpop.f32.mrb[0].mxu0
      %8975 = vmatprep.mubr.bf16.mxu0 0
      %8976 = vmatmul.mubr.bf16.gmra.mrb[0].mxu0 %v8500
      %v8977 = vpop.f32.mrb[0].mxu0
      %v8978 = vadd.f32 0.0, %v8977
      %v8979 = vpop.f32.mrb[0].mxu0
      %v8980 = vpop.f32.mrb[0].mxu0
      %v8981 = vadd.f32 0.0, %v8980
      %v8982 = vpop.f32.mrb[0].mxu0
      %8983 = vmatprep.mubr.bf16.mxu0 0
      %8984 = vmatmul.mubr.bf16.gmra.mrb[0].mxu0 %v8501
      %v8985 = vpop.f32.mrb[0].mxu0
      %v8986 = vadd.f32 0.0, %v8985
      %v8987 = vpop.f32.mrb[0].mxu0
      %v8988 = vpop.f32.mrb[0].mxu0
      %v8989 = vadd.f32 0.0, %v8988
      %v8990 = vpop.f32.mrb[0].mxu0
      %8991 = vmatprep.mubr.bf16.mxu0 0
      %8992 = vmatmul.mubr.bf16.gmra.mrb[0].mxu0 %v8502
      %v8993 = vpop.f32.mrb[0].mxu0
      %v8994 = vadd.f32 0.0, %v8993
      %v8995 = vpop.f32.mrb[0].mxu0
      %v8996 = vpop.f32.mrb[0].mxu0
      %v8997 = vadd.f32 0.0, %v8996
      %v8998 = vpop.f32.mrb[0].mxu0
      %8999 = vmatprep.mubr.bf16.mxu0 0
      %9000 = vmatmul.mubr.bf16.gmra.mrb[0].mxu0 %v8503
      %v9001 = vpop.f32.mrb[0].mxu0
      %v9002 = vadd.f32 0.0, %v9001
      %v9003 = vpop.f32.mrb[0].mxu0
      %v9004 = vpop.f32.mrb[0].mxu0
      %v9005 = vadd.f32 0.0, %v9004
      %v9006 = vpop.f32.mrb[0].mxu0
      %9007 = vmatprep.mubr.bf16.mxu0 0
      %9008 = vmatmul.mubr.bf16.gmra.mrb[0].mxu0 %v8504
      %v9009 = vpop.f32.mrb[0].mxu0
      %v9010 = vadd.f32 0.0, %v9009
      %v9011 = vpop.f32.mrb[0].mxu0
      %v9012 = vpop.f32.mrb[0].mxu0
      %v9013 = vadd.f32 0.0, %v9012
      %v9014 = vpop.f32.mrb[0].mxu0
      %9015 = vmatprep.mubr.bf16.mxu0 0
      %9016 = vmatmul.mubr.bf16.gmra.mrb[0].mxu0 %v8505
      %v9017 = vpop.f32.mrb[0].mxu0
      %v9018 = vadd.f32 0.0, %v9017
      %v9019 = vpop.f32.mrb[0].mxu0
      %v9020 = vpop.f32.mrb[0].mxu0
      %v9021 = vadd.f32 0.0, %v9020
      %v9022 = vpop.f32.mrb[0].mxu0
      %9023 = vmatprep.mubr.bf16.mxu0 0
      %9024 = vmatmul.mubr.bf16.gmra.mrb[0].mxu0 %v8506
      %v9025 = vpop.f32.mrb[0].mxu0
      %v9026 = vadd.f32 0.0, %v9025
      %v9027 = vpop.f32.mrb[0].mxu0
      %v9028 = vpop.f32.mrb[0].mxu0
      %v9029 = vadd.f32 0.0, %v9028
      %v9030 = vpop.f32.mrb[0].mxu0
      %9031 = vmatprep.mubr.bf16.mxu0 0
      %9032 = vmatmul.mubr.bf16.gmra.mrb[0].mxu0 %v8507
      %v9033 = vpop.f32.mrb[0].mxu0
      %v9034 = vadd.f32 0.0, %v9033
      %v9035 = vpop.f32.mrb[0].mxu0
      %v9036 = vpop.f32.mrb[0].mxu0
      %v9037 = vadd.f32 0.0, %v9036
      %v9038 = vpop.f32.mrb[0].mxu0
      %9039 = vmatprep.mubr.bf16.mxu0 0
      %9040 = vmatmul.mubr.bf16.gmra.mrb[0].mxu0 %v8508
      %v9041 = vpop.f32.mrb[0].mxu0
      %v9042 = vadd.f32 0.0, %v9041
      %v9043 = vpop.f32.mrb[0].mxu0
      %v9044 = vpop.f32.mrb[0].mxu0
      %v9045 = vadd.f32 0.0, %v9044
      %v9046 = vpop.f32.mrb[0].mxu0
      %9047 = vmatprep.mubr.bf16.mxu0 0
      %9048 = vmatmul.mubr.bf16.gmra.mrb[0].mxu0 %v8509
      %v9049 = vpop.f32.mrb[0].mxu0
      %v9050 = vadd.f32 0.0, %v9049
      %v9051 = vpop.f32.mrb[0].mxu0
      %v9052 = vpop.f32.mrb[0].mxu0
      %v9053 = vadd.f32 0.0, %v9052
      %v9054 = vpop.f32.mrb[0].mxu0
      %9055 = vdwg.mxu0
      %v9056 = vadd.f32 %v8342, %v8610
      %v9057 = vadd.f32 %v8343, %v8613
      %v9058 = vadd.f32 %v8344, %v8618
      %v9059 = vadd.f32 %v8345, %v8621
      %v9060 = vadd.f32 %v8346, %v8626
      %v9061 = vadd.f32 %v8347, %v8629
      %v9062 = vadd.f32 %v8348, %v8634
      %v9063 = vadd.f32 %v8349, %v8637
      %v9064 = vadd.f32 %v8350, %v8642
      %v9065 = vadd.f32 %v8351, %v8645
      %v9066 = vadd.f32 %v8352, %v8650
      %v9067 = vadd.f32 %v8353, %v8653
      %v9068 = vadd.f32 %v8354, %v8658
      %v9069 = vadd.f32 %v8355, %v8661
      %v9070 = vadd.f32 %v8356, %v8666
      %v9071 = vadd.f32 %v8357, %v8669
      %v9072 = vadd.f32 %v8358, %v8674
      %v9073 = vadd.f32 %v8359, %v8677
      %v9074 = vadd.f32 %v8360, %v8682
      %v9075 = vadd.f32 %v8361, %v8685
      %v9076 = vadd.f32 %v8362, %v8690
      %v9077 = vadd.f32 %v8363, %v8693
      %v9078 = vadd.f32 %v8364, %v8698
      %v9079 = vadd.f32 %v8365, %v8701
      %v9080 = vadd.f32 %v8366, %v8706
      %v9081 = vadd.f32 %v8367, %v8709
      %v9082 = vadd.f32 %v8368, %v8714
      %v9083 = vadd.f32 %v8369, %v8717
      %v9084 = vadd.f32 %v8370, %v8722
      %v9085 = vadd.f32 %v8371, %v8725
      %v9086 = vadd.f32 %v8372, %v8730
      %v9087 = vadd.f32 %v8373, %v8733
      %v9088 = vadd.f32 %v8374, %v8738
      %v9089 = vadd.f32 %v8375, %v8741
      %v9090 = vadd.f32 %v8376, %v8746
      %v9091 = vadd.f32 %v8377, %v8749
      %v9092 = vadd.f32 %v8378, %v8754
      %v9093 = vadd.f32 %v8379, %v8757
      %v9094 = vadd.f32 %v8380, %v8762
      %v9095 = vadd.f32 %v8381, %v8765
      %v9096 = vadd.f32 %v8382, %v8770
      %v9097 = vadd.f32 %v8383, %v8773
      %v9098 = vadd.f32 %v8384, %v8778
      %v9099 = vadd.f32 %v8385, %v8781
      %v9100 = vadd.f32 %v8386, %v8786
      %v9101 = vadd.f32 %v8387, %v8789
      %v9102 = vadd.f32 %v8388, %v8794
      %v9103 = vadd.f32 %v8389, %v8797
      %v9104 = vadd.f32 %v8390, %v8802
      %v9105 = vadd.f32 %v8391, %v8805
      %v9106 = vadd.f32 %v8392, %v8810
      %v9107 = vadd.f32 %v8393, %v8813
      %v9108 = vadd.f32 %v8394, %v8818
      %v9109 = vadd.f32 %v8395, %v8821
      %v9110 = vadd.f32 %v8396, %v8826
      %v9111 = vadd.f32 %v8397, %v8829
      %v9112 = vadd.f32 %v8398, %v8834
      %v9113 = vadd.f32 %v8399, %v8837
      %v9114 = vadd.f32 %v8400, %v8842
      %v9115 = vadd.f32 %v8401, %v8845
      %v9116 = vadd.f32 %v8402, %v8850
      %v9117 = vadd.f32 %v8403, %v8853
      %v9118 = vadd.f32 %v8404, %v8858
      %v9119 = vadd.f32 %v8405, %v8861
      %v9120 = vadd.f32 %v8406, %v8866
      %v9121 = vadd.f32 %v8407, %v8869
      %v9122 = vadd.f32 %v8408, %v8874
      %v9123 = vadd.f32 %v8409, %v8877
      %v9124 = vadd.f32 %v8410, %v8882
      %v9125 = vadd.f32 %v8411, %v8885
      %v9126 = vadd.f32 %v8412, %v8890
      %v9127 = vadd.f32 %v8413, %v8893
      %v9128 = vadd.f32 %v8414, %v8898
      %v9129 = vadd.f32 %v8415, %v8901
      %v9130 = vadd.f32 %v8416, %v8906
      %v9131 = vadd.f32 %v8417, %v8909
      %v9132 = vadd.f32 %v8418, %v8914
      %v9133 = vadd.f32 %v8419, %v8917
      %v9134 = vadd.f32 %v8420, %v8922
      %v9135 = vadd.f32 %v8421, %v8925
      %v9136 = vadd.f32 %v8422, %v8930
      %v9137 = vadd.f32 %v8423, %v8933
      %v9138 = vadd.f32 %v8424, %v8938
      %v9139 = vadd.f32 %v8425, %v8941
      %v9140 = vadd.f32 %v8426, %v8946
      %v9141 = vadd.f32 %v8427, %v8949
      %v9142 = vadd.f32 %v8428, %v8954
      %v9143 = vadd.f32 %v8429, %v8957
      %v9144 = vadd.f32 %v8430, %v8962
      %v9145 = vadd.f32 %v8431, %v8965
      %v9146 = vadd.f32 %v8432, %v8970
      %v9147 = vadd.f32 %v8433, %v8973
      %v9148 = vadd.f32 %v8434, %v8978
      %v9149 = vadd.f32 %v8435, %v8981
      %v9150 = vadd.f32 %v8436, %v8986
      %v9151 = vadd.f32 %v8437, %v8989
      %v9152 = vadd.f32 %v8438, %v8994
      %v9153 = vadd.f32 %v8439, %v8997
      %v9154 = vadd.f32 %v8440, %v9002
      %v9155 = vadd.f32 %v8441, %v9005
      %v9156 = vadd.f32 %v8442, %v9010
      %v9157 = vadd.f32 %v8443, %v9013
      %v9158 = vadd.f32 %v8444, %v9018
      %v9159 = vadd.f32 %v8445, %v9021
      %v9160 = vadd.f32 %v8446, %v9026
      %v9161 = vadd.f32 %v8447, %v9029
      %v9162 = vadd.f32 %v8448, %v9034
      %v9163 = vadd.f32 %v8449, %v9037
      %v9164 = vadd.f32 %v8450, %v9042
      %v9165 = vadd.f32 %v8451, %v9045
      %v9166 = vadd.f32 %v8452, %v9050
      %v9167 = vadd.f32 %v8453, %v9053
      %v9168 = vld [vmem:[%s10] sm:$0x1]
      %v9170 = vlaneseq
      %v9171 = vshrl.u32 %v9170, 7
      %v9172 = vsub.s32 0, %v9171
      %v9173 = vrot.slane %v9168, %v9172
      %v9175 = vadd.f32 %v9056, %v9173
      %v9176 = vadd.f32 %v9057, %v9173
      %v9177 = vadd.f32 %v9058, %v9173
      %v9178 = vadd.f32 %v9059, %v9173
      %v9179 = vadd.f32 %v9060, %v9173
      %v9180 = vadd.f32 %v9061, %v9173
      %v9181 = vadd.f32 %v9062, %v9173
      %v9182 = vadd.f32 %v9063, %v9173
      %v9183 = vadd.f32 %v9064, %v9173
      %v9184 = vadd.f32 %v9065, %v9173
      %v9185 = vadd.f32 %v9066, %v9173
      %v9186 = vadd.f32 %v9067, %v9173
      %v9187 = vadd.f32 %v9068, %v9173
      %v9188 = vadd.f32 %v9069, %v9173
      %v9189 = vadd.f32 %v9070, %v9173
      %v9190 = vadd.f32 %v9071, %v9173
      %v9191 = vadd.f32 %v9072, %v9173
      %v9192 = vadd.f32 %v9073, %v9173
      %v9193 = vadd.f32 %v9074, %v9173
      %v9194 = vadd.f32 %v9075, %v9173
      %v9195 = vadd.f32 %v9076, %v9173
      %v9196 = vadd.f32 %v9077, %v9173
      %v9197 = vadd.f32 %v9078, %v9173
      %v9198 = vadd.f32 %v9079, %v9173
      %v9199 = vadd.f32 %v9080, %v9173
      %v9200 = vadd.f32 %v9081, %v9173
      %v9201 = vadd.f32 %v9082, %v9173
      %v9202 = vadd.f32 %v9083, %v9173
      %v9203 = vadd.f32 %v9084, %v9173
      %v9204 = vadd.f32 %v9085, %v9173
      %v9205 = vadd.f32 %v9086, %v9173
      %v9206 = vadd.f32 %v9087, %v9173
      %v9207 = vadd.f32 %v9088, %v9173
      %v9208 = vadd.f32 %v9089, %v9173
      %v9209 = vadd.f32 %v9090, %v9173
      %v9210 = vadd.f32 %v9091, %v9173
      %v9211 = vadd.f32 %v9092, %v9173
      %v9212 = vadd.f32 %v9093, %v9173
      %v9213 = vadd.f32 %v9094, %v9173
      %v9214 = vadd.f32 %v9095, %v9173
      %v9215 = vadd.f32 %v9096, %v9173
      %v9216 = vadd.f32 %v9097, %v9173
      %v9217 = vadd.f32 %v9098, %v9173
      %v9218 = vadd.f32 %v9099, %v9173
      %v9219 = vadd.f32 %v9100, %v9173
      %v9220 = vadd.f32 %v9101, %v9173
      %v9221 = vadd.f32 %v9102, %v9173
      %v9222 = vadd.f32 %v9103, %v9173
      %v9223 = vadd.f32 %v9104, %v9173
      %v9224 = vadd.f32 %v9105, %v9173
      %v9225 = vadd.f32 %v9106, %v9173
      %v9226 = vadd.f32 %v9107, %v9173
      %v9227 = vadd.f32 %v9108, %v9173
      %v9228 = vadd.f32 %v9109, %v9173
      %v9229 = vadd.f32 %v9110, %v9173
      %v9230 = vadd.f32 %v9111, %v9173
      %v9231 = vadd.f32 %v9112, %v9173
      %v9232 = vadd.f32 %v9113, %v9173
      %v9233 = vadd.f32 %v9114, %v9173
      %v9234 = vadd.f32 %v9115, %v9173
      %v9235 = vadd.f32 %v9116, %v9173
      %v9236 = vadd.f32 %v9117, %v9173
      %v9237 = vadd.f32 %v9118, %v9173
      %v9238 = vadd.f32 %v9119, %v9173
      %v9239 = vadd.f32 %v9120, %v9173
      %v9240 = vadd.f32 %v9121, %v9173
      %v9241 = vadd.f32 %v9122, %v9173
      %v9242 = vadd.f32 %v9123, %v9173
      %v9243 = vadd.f32 %v9124, %v9173
      %v9244 = vadd.f32 %v9125, %v9173
      %v9245 = vadd.f32 %v9126, %v9173
      %v9246 = vadd.f32 %v9127, %v9173
      %v9247 = vadd.f32 %v9128, %v9173
      %v9248 = vadd.f32 %v9129, %v9173
      %v9249 = vadd.f32 %v9130, %v9173
      %v9250 = vadd.f32 %v9131, %v9173
      %v9251 = vadd.f32 %v9132, %v9173
      %v9252 = vadd.f32 %v9133, %v9173
      %v9253 = vadd.f32 %v9134, %v9173
      %v9254 = vadd.f32 %v9135, %v9173
      %v9255 = vadd.f32 %v9136, %v9173
      %v9256 = vadd.f32 %v9137, %v9173
      %v9257 = vadd.f32 %v9138, %v9173
      %v9258 = vadd.f32 %v9139, %v9173
      %v9259 = vadd.f32 %v9140, %v9173
      %v9260 = vadd.f32 %v9141, %v9173
      %v9261 = vadd.f32 %v9142, %v9173
      %v9262 = vadd.f32 %v9143, %v9173
      %v9263 = vadd.f32 %v9144, %v9173
      %v9264 = vadd.f32 %v9145, %v9173
      %v9265 = vadd.f32 %v9146, %v9173
      %v9266 = vadd.f32 %v9147, %v9173
      %v9267 = vadd.f32 %v9148, %v9173
      %v9268 = vadd.f32 %v9149, %v9173
      %v9269 = vadd.f32 %v9150, %v9173
      %v9270 = vadd.f32 %v9151, %v9173
      %v9271 = vadd.f32 %v9152, %v9173
      %v9272 = vadd.f32 %v9153, %v9173
      %v9273 = vadd.f32 %v9154, %v9173
      %v9274 = vadd.f32 %v9155, %v9173
      %v9275 = vadd.f32 %v9156, %v9173
      %v9276 = vadd.f32 %v9157, %v9173
      %v9277 = vadd.f32 %v9158, %v9173
      %v9278 = vadd.f32 %v9159, %v9173
      %v9279 = vadd.f32 %v9160, %v9173
      %v9280 = vadd.f32 %v9161, %v9173
      %v9281 = vadd.f32 %v9162, %v9173
      %v9282 = vadd.f32 %v9163, %v9173
      %v9283 = vadd.f32 %v9164, %v9173
      %v9284 = vadd.f32 %v9165, %v9173
      %v9285 = vadd.f32 %v9166, %v9173
      %v9286 = vadd.f32 %v9167, %v9173
      %vm9287 = vcmask 228352
      %9288 = vst.msk [vmem:[%s388] sm:$0xff] %vm9287, %v9175
      %9289 = vst.msk [vmem:[%s388 + $0x8] sm:$0xff] %vm9287, %v9176
      %9290 = vst.msk [vmem:[%s388 + $0x10] sm:$0xff] %vm9287, %v9177
      %9291 = vst.msk [vmem:[%s388 + $0x18] sm:$0xff] %vm9287, %v9178
      %9292 = vst.msk [vmem:[%s388 + $0x20] sm:$0xff] %vm9287, %v9179
      %9293 = vst.msk [vmem:[%s388 + $0x28] sm:$0xff] %vm9287, %v9180
      %9294 = vst.msk [vmem:[%s388 + $0x30] sm:$0xff] %vm9287, %v9181
      %9295 = vst.msk [vmem:[%s388 + $0x38] sm:$0xff] %vm9287, %v9182
      %9296 = vst.msk [vmem:[%s388 + $0x40] sm:$0xff] %vm9287, %v9183
      %9297 = vst.msk [vmem:[%s388 + $0x48] sm:$0xff] %vm9287, %v9184
      %9298 = vst.msk [vmem:[%s388 + $0x50] sm:$0xff] %vm9287, %v9185
      %9299 = vst.msk [vmem:[%s388 + $0x58] sm:$0xff] %vm9287, %v9186
      %9300 = vst.msk [vmem:[%s388 + $0x60] sm:$0xff] %vm9287, %v9187
      %9301 = vst.msk [vmem:[%s388 + $0x68] sm:$0xff] %vm9287, %v9188
      %9302 = vst.msk [vmem:[%s388 + $0x70] sm:$0xff] %vm9287, %v9189
      %9303 = vst.msk [vmem:[%s388 + $0x78] sm:$0xff] %vm9287, %v9190
      %9304 = vst.msk [vmem:[%s388 + $0x80] sm:$0xff] %vm9287, %v9191
      %9305 = vst.msk [vmem:[%s388 + $0x88] sm:$0xff] %vm9287, %v9192
      %9306 = vst.msk [vmem:[%s388 + $0x90] sm:$0xff] %vm9287, %v9193
      %9307 = vst.msk [vmem:[%s388 + $0x98] sm:$0xff] %vm9287, %v9194
      %9308 = vst.msk [vmem:[%s388 + $0xa0] sm:$0xff] %vm9287, %v9195
      %9309 = vst.msk [vmem:[%s388 + $0xa8] sm:$0xff] %vm9287, %v9196
      %9310 = vst.msk [vmem:[%s388 + $0xb0] sm:$0xff] %vm9287, %v9197
      %9311 = vst.msk [vmem:[%s388 + $0xb8] sm:$0xff] %vm9287, %v9198
      %9312 = vst.msk [vmem:[%s388 + $0xc0] sm:$0xff] %vm9287, %v9199
      %9313 = vst.msk [vmem:[%s388 + $0xc8] sm:$0xff] %vm9287, %v9200
      %9314 = vst.msk [vmem:[%s388 + $0xd0] sm:$0xff] %vm9287, %v9201
      %9315 = vst.msk [vmem:[%s388 + $0xd8] sm:$0xff] %vm9287, %v9202
      %9316 = vst.msk [vmem:[%s388 + $0xe0] sm:$0xff] %vm9287, %v9203
      %9317 = vst.msk [vmem:[%s388 + $0xe8] sm:$0xff] %vm9287, %v9204
      %9318 = vst.msk [vmem:[%s388 + $0xf0] sm:$0xff] %vm9287, %v9205
      %9319 = vst.msk [vmem:[%s388 + $0xf8] sm:$0xff] %vm9287, %v9206
      %9320 = vst.msk [vmem:[%s388 + $0x100] sm:$0xff] %vm9287, %v9207
      %9321 = vst.msk [vmem:[%s388 + $0x108] sm:$0xff] %vm9287, %v9208
      %9322 = vst.msk [vmem:[%s388 + $0x110] sm:$0xff] %vm9287, %v9209
      %9323 = vst.msk [vmem:[%s388 + $0x118] sm:$0xff] %vm9287, %v9210
      %9324 = vst.msk [vmem:[%s388 + $0x120] sm:$0xff] %vm9287, %v9211
      %9325 = vst.msk [vmem:[%s388 + $0x128] sm:$0xff] %vm9287, %v9212
      %9326 = vst.msk [vmem:[%s388 + $0x130] sm:$0xff] %vm9287, %v9213
      %9327 = vst.msk [vmem:[%s388 + $0x138] sm:$0xff] %vm9287, %v9214
      %9328 = vst.msk [vmem:[%s388 + $0x140] sm:$0xff] %vm9287, %v9215
      %9329 = vst.msk [vmem:[%s388 + $0x148] sm:$0xff] %vm9287, %v9216
      %9330 = vst.msk [vmem:[%s388 + $0x150] sm:$0xff] %vm9287, %v9217
      %9331 = vst.msk [vmem:[%s388 + $0x158] sm:$0xff] %vm9287, %v9218
      %9332 = vst.msk [vmem:[%s388 + $0x160] sm:$0xff] %vm9287, %v9219
      %9333 = vst.msk [vmem:[%s388 + $0x168] sm:$0xff] %vm9287, %v9220
      %9334 = vst.msk [vmem:[%s388 + $0x170] sm:$0xff] %vm9287, %v9221
      %9335 = vst.msk [vmem:[%s388 + $0x178] sm:$0xff] %vm9287, %v9222
      %9336 = vst.msk [vmem:[%s388 + $0x180] sm:$0xff] %vm9287, %v9223
      %9337 = vst.msk [vmem:[%s388 + $0x188] sm:$0xff] %vm9287, %v9224
      %9338 = vst.msk [vmem:[%s388 + $0x190] sm:$0xff] %vm9287, %v9225
      %9339 = vst.msk [vmem:[%s388 + $0x198] sm:$0xff] %vm9287, %v9226
      %9340 = vst.msk [vmem:[%s388 + $0x1a0] sm:$0xff] %vm9287, %v9227
      %9341 = vst.msk [vmem:[%s388 + $0x1a8] sm:$0xff] %vm9287, %v9228
      %9342 = vst.msk [vmem:[%s388 + $0x1b0] sm:$0xff] %vm9287, %v9229
      %9343 = vst.msk [vmem:[%s388 + $0x1b8] sm:$0xff] %vm9287, %v9230
      %9344 = vst.msk [vmem:[%s388 + $0x1c0] sm:$0xff] %vm9287, %v9231
      %9345 = vst.msk [vmem:[%s388 + $0x1c8] sm:$0xff] %vm9287, %v9232
      %9346 = vst.msk [vmem:[%s388 + $0x1d0] sm:$0xff] %vm9287, %v9233
      %9347 = vst.msk [vmem:[%s388 + $0x1d8] sm:$0xff] %vm9287, %v9234
      %9348 = vst.msk [vmem:[%s388 + $0x1e0] sm:$0xff] %vm9287, %v9235
      %9349 = vst.msk [vmem:[%s388 + $0x1e8] sm:$0xff] %vm9287, %v9236
      %9350 = vst.msk [vmem:[%s388 + $0x1f0] sm:$0xff] %vm9287, %v9237
      %9351 = vst.msk [vmem:[%s388 + $0x1f8] sm:$0xff] %vm9287, %v9238
      %9352 = vst.msk [vmem:[%s388 + $0x200] sm:$0xff] %vm9287, %v9239
      %9353 = vst.msk [vmem:[%s388 + $0x208] sm:$0xff] %vm9287, %v9240
      %9354 = vst.msk [vmem:[%s388 + $0x210] sm:$0xff] %vm9287, %v9241
      %9355 = vst.msk [vmem:[%s388 + $0x218] sm:$0xff] %vm9287, %v9242
      %9356 = vst.msk [vmem:[%s388 + $0x220] sm:$0xff] %vm9287, %v9243
      %9357 = vst.msk [vmem:[%s388 + $0x228] sm:$0xff] %vm9287, %v9244
      %9358 = vst.msk [vmem:[%s388 + $0x230] sm:$0xff] %vm9287, %v9245
      %9359 = vst.msk [vmem:[%s388 + $0x238] sm:$0xff] %vm9287, %v9246
      %9360 = vst.msk [vmem:[%s388 + $0x240] sm:$0xff] %vm9287, %v9247
      %9361 = vst.msk [vmem:[%s388 + $0x248] sm:$0xff] %vm9287, %v9248
      %9362 = vst.msk [vmem:[%s388 + $0x250] sm:$0xff] %vm9287, %v9249
      %9363 = vst.msk [vmem:[%s388 + $0x258] sm:$0xff] %vm9287, %v9250
      %9364 = vst.msk [vmem:[%s388 + $0x260] sm:$0xff] %vm9287, %v9251
      %9365 = vst.msk [vmem:[%s388 + $0x268] sm:$0xff] %vm9287, %v9252
      %9366 = vst.msk [vmem:[%s388 + $0x270] sm:$0xff] %vm9287, %v9253
      %9367 = vst.msk [vmem:[%s388 + $0x278] sm:$0xff] %vm9287, %v9254
      %9368 = vst.msk [vmem:[%s388 + $0x280] sm:$0xff] %vm9287, %v9255
      %9369 = vst.msk [vmem:[%s388 + $0x288] sm:$0xff] %vm9287, %v9256
      %9370 = vst.msk [vmem:[%s388 + $0x290] sm:$0xff] %vm9287, %v9257
      %9371 = vst.msk [vmem:[%s388 + $0x298] sm:$0xff] %vm9287, %v9258
      %9372 = vst.msk [vmem:[%s388 + $0x2a0] sm:$0xff] %vm9287, %v9259
      %9373 = vst.msk [vmem:[%s388 + $0x2a8] sm:$0xff] %vm9287, %v9260
      %9374 = vst.msk [vmem:[%s388 + $0x2b0] sm:$0xff] %vm9287, %v9261
      %9375 = vst.msk [vmem:[%s388 + $0x2b8] sm:$0xff] %vm9287, %v9262
      %9376 = vst.msk [vmem:[%s388 + $0x2c0] sm:$0xff] %vm9287, %v9263
      %9377 = vst.msk [vmem:[%s388 + $0x2c8] sm:$0xff] %vm9287, %v9264
      %9378 = vst.msk [vmem:[%s388 + $0x2d0] sm:$0xff] %vm9287, %v9265
      %9379 = vst.msk [vmem:[%s388 + $0x2d8] sm:$0xff] %vm9287, %v9266
      %9380 = vst.msk [vmem:[%s388 + $0x2e0] sm:$0xff] %vm9287, %v9267
      %9381 = vst.msk [vmem:[%s388 + $0x2e8] sm:$0xff] %vm9287, %v9268
      %9382 = vst.msk [vmem:[%s388 + $0x2f0] sm:$0xff] %vm9287, %v9269
      %9383 = vst.msk [vmem:[%s388 + $0x2f8] sm:$0xff] %vm9287, %v9270
      %9384 = vst.msk [vmem:[%s388 + $0x300] sm:$0xff] %vm9287, %v9271
      %9385 = vst.msk [vmem:[%s388 + $0x308] sm:$0xff] %vm9287, %v9272
      %9386 = vst.msk [vmem:[%s388 + $0x310] sm:$0xff] %vm9287, %v9273
      %9387 = vst.msk [vmem:[%s388 + $0x318] sm:$0xff] %vm9287, %v9274
      %9388 = vst.msk [vmem:[%s388 + $0x320] sm:$0xff] %vm9287, %v9275
      %9389 = vst.msk [vmem:[%s388 + $0x328] sm:$0xff] %vm9287, %v9276
      %9390 = vst.msk [vmem:[%s388 + $0x330] sm:$0xff] %vm9287, %v9277
      %9391 = vst.msk [vmem:[%s388 + $0x338] sm:$0xff] %vm9287, %v9278
      %9392 = vst.msk [vmem:[%s388 + $0x340] sm:$0xff] %vm9287, %v9279
      %9393 = vst.msk [vmem:[%s388 + $0x348] sm:$0xff] %vm9287, %v9280
      %9394 = vst.msk [vmem:[%s388 + $0x350] sm:$0xff] %vm9287, %v9281
      %9395 = vst.msk [vmem:[%s388 + $0x358] sm:$0xff] %vm9287, %v9282
      %9396 = vst.msk [vmem:[%s388 + $0x360] sm:$0xff] %vm9287, %v9283
      %9397 = vst.msk [vmem:[%s388 + $0x368] sm:$0xff] %vm9287, %v9284
      %9398 = vst.msk [vmem:[%s388 + $0x370] sm:$0xff] %vm9287, %v9285
      %9399 = vst.msk [vmem:[%s388 + $0x378] sm:$0xff] %vm9287, %v9286
      %s9400 = smul.u32 112, %s22
      %p9401 = scmp.lt.s32.totalorder %s9400, 223
      %s9402 = scalar_select %p9401, %s9400, 223
      %s9403 = smul.addr %s9402, 8
      %s9404 = scalar_lea.vmem %s11, %s9403
      // Predicated region
      $region65: #{decoder2_forward.1} parent=63 // pred_check
        %p9405 = pneg %p276
      $region66: #{decoder2_forward.1} parent=63 // pred_check_branch
        %9407 = sbr.rel (%p9405) target = $region68
      $region67: #{decoder2_forward.1} parent=63 // pred_region
        %s9408 = smul.u32 112, %s22
      $region68: #{decoder2_forward.1} parent=63 // pred_fallthru
        _
    $region64: #{decoder2_forward.1} parent=5 // pred_fallthru
      _
    %p9409 = scmp.le.s32.totalorder 2, %s17
    // Predicated region
    $region69: #{decoder2_forward.1} parent=5 // pred_check
      %p9410 = pneg %p9409
    $region70: #{decoder2_forward.1} parent=5 // pred_check_branch
      %9412 = sbr.rel (%p9410) target = $region72
    $region71: #{decoder2_forward.1} parent=5 // pred_region
      %s9413 = ssub.s32 %s17, 2
      // Predicated region
      $region73: #{decoder2_forward.1} parent=71 // pred_check
        %p9414 = pneg %p282
      $region74: #{decoder2_forward.1} parent=71 // pred_check_branch
        %9416 = sbr.rel (%p9414) target = $region76
      $region75: #{decoder2_forward.1} parent=71 // pred_region
        %s9417 = smul.u32 112, %s23
        %p9418 = scmp.lt.s32.totalorder %s9417, 223
        %s9419 = scalar_select %p9418, %s9417, 223
        %s9420 = smul.addr %s9419, 8
        %s9421 = scalar_lea.vmem %s11, %s9420
      $region76: #{decoder2_forward.1} parent=71 // pred_fallthru
        _
    $region72: #{decoder2_forward.1} parent=5 // pred_fallthru
      _
  $region6: #{decoder2_forward.1} parent=0 // loop_footer
    %s21 = sadd.s32 1, %s17
  $region7: #{decoder2_forward.1} parent=0 // loop_footer_branch
    %16 = sbr.rel target = $region3
  $region8: #{decoder2_forward.1} parent=0 // loop_exit
    _

</llo_original>
